<compile_context>
chip_gen: v5e
topology: v5e:2x2
jax: 0.10.0
libtpu: 0.0.40
codegen_flags: <defaults>
</compile_context>

<pallas_src>
import jax
import jax.numpy as jnp
from jax.experimental import pallas as pl
from jax.experimental.pallas import tpu as pltpu

F_IN = 784
F_PAD = 896          # 7 * 128, lane-aligned contraction dim for layer 1
H1 = 512
H2 = 256


def _round_up(x, m):
    return ((x + m - 1) // m) * m


def _pick_tb(batch):
    # 256-multiple batch tile (fills the 256x256 MXU rows on v6e/v7x), aiming
    # for >= 4 grid steps on large batches so the "parallel" axis shards
    # across both v7x TensorCores; capped at 1024 rows (~10 MiB footprint).
    bp = _round_up(max(batch, 1), 256)
    return min(1024, max(256, _round_up(bp // 4, 256)))


def _leaky_relu(x, slope=0.2):
    return jnp.where(x > 0, x, slope * x)


def disc_mlp_kernel(x_ref, w1_ref, b1_ref, w2_ref, b2_ref, w3_ref, b3_ref,
                    o_ref, xb_ref):
    tb = x_ref.shape[0]

    # Stage the raw input tile into a lane-padded bf16 scratch (784 -> 896).
    # Pad lanes are re-zeroed every step (scratch is per-core; with megacore
    # sharding this core's first step may not be program_id 0).
    xb_ref[:, F_IN:] = jnp.zeros((tb, F_PAD - F_IN), jnp.bfloat16)
    xb_ref[:, :F_IN] = x_ref[...].astype(jnp.bfloat16)

    # layer 1: (tb, 896)bf16 @ (896, 512)bf16 -> f32 accum, bf16 epilogue
    h1 = jnp.dot(xb_ref[...], w1_ref[...], preferred_element_type=jnp.float32)
    h1 = _leaky_relu(h1.astype(jnp.bfloat16) + b1_ref[...])

    # layer 2: (tb, 512)bf16 @ (512, 256)bf16 -> f32 accum, bf16 epilogue
    h2 = jnp.dot(h1, w2_ref[...], preferred_element_type=jnp.float32)
    h2 = _leaky_relu(h2.astype(jnp.bfloat16) + b2_ref[...])

    # layer 3 (256 -> 1): bf16 VPU multiply, bf16 XLU transpose (half the vreg
    # traffic of f32), f32 sublane reduce -> lane-dense (1, tb) row.
    p = h2 * w3_ref[...]                                   # (tb, 256) bf16
    pt = p.T                                               # (256, tb) bf16
    logits = jnp.sum(pt.astype(jnp.float32), axis=0, keepdims=True)  # (1, tb)
    logits = logits + b3_ref[0]                            # scalar bias (SMEM)
    o_ref[...] = jax.nn.sigmoid(logits).astype(o_ref.dtype)


def discriminator_forward(x, params, *, tb=None):
    """x: any shape flattening to (-1, 784). Returns (B, 1) float32."""
    w1, b1, w2, b2, w3, b3 = params

    x2d = x.reshape(-1, F_IN)
    B = x2d.shape[0]
    if tb is None:
        tb = _pick_tb(B)
    Bp = _round_up(B, tb)
    n_tiles = Bp // tb

    # Only the batch dimension is padded (and only when needed); the feature
    # pad + bf16 cast happen inside the kernel (no extra HBM round trip for x).
    if Bp != B:
        x2d = jnp.pad(x2d, ((0, Bp - B), (0, 0)))

    # Param prep (in production, cache these outside the forward call).
    w1p = jnp.pad(w1.astype(jnp.bfloat16), ((0, F_PAD - F_IN), (0, 0)))  # (896, 512)
    w2b = w2.astype(jnp.bfloat16)                                        # (512, 256)
    b1b = b1.astype(jnp.bfloat16).reshape(1, H1)
    b2b = b2.astype(jnp.bfloat16).reshape(1, H2)
    w3b = w3.astype(jnp.bfloat16).reshape(1, H2)                         # row vector
    b3f = b3.astype(jnp.float32).reshape(1,)                             # SMEM scalar

    flops = 2 * Bp * (F_PAD * H1 + H1 * H2 + H2)
    bytes_accessed = (x2d.size * x2d.dtype.itemsize
                      + (w1p.size + w2b.size + b1b.size + b2b.size + w3b.size) * 2
                      + b3f.size * 4 + Bp * 4)
    cost = pl.CostEstimate(flops=flops, transcendentals=Bp,
                           bytes_accessed=bytes_accessed)

    out = pl.pallas_call(
        disc_mlp_kernel,
        out_shape=jax.ShapeDtypeStruct((1, Bp), jnp.float32),
        grid_spec=pltpu.PrefetchScalarGridSpec(
            num_scalar_prefetch=0,
            grid=(n_tiles,),
            in_specs=[
                pl.BlockSpec((tb, F_IN), lambda i: (i, 0)),     # x tile (raw dtype)
                pl.BlockSpec((F_PAD, H1), lambda i: (0, 0)),    # W1 (resident, bf16)
                pl.BlockSpec((1, H1), lambda i: (0, 0)),        # b1 (bf16)
                pl.BlockSpec((H1, H2), lambda i: (0, 0)),       # W2 (resident, bf16)
                pl.BlockSpec((1, H2), lambda i: (0, 0)),        # b2 (bf16)
                pl.BlockSpec((1, H2), lambda i: (0, 0)),        # w3 row (bf16)
                pl.BlockSpec(memory_space=pltpu.MemorySpace.SMEM),  # b3 scalar
            ],
            out_specs=pl.BlockSpec((1, tb), lambda i: (0, i)),  # lane-dense row
            scratch_shapes=[pltpu.VMEM((tb, F_PAD), jnp.bfloat16)],
        ),
        compiler_params=pltpu.CompilerParams(
            dimension_semantics=("parallel",),
        ),
        cost_estimate=cost,
    )(x2d, w1p, b1b, w2b, b2b, w3b, b3f)

    return out.reshape(Bp)[:B].reshape(B, 1)


def init_params(key):
    """Deterministic synthetic parameters matching the nn.Linear shapes."""
    k1, k2, k3, k4, k5, k6 = jax.random.split(key, 6)
    # stored as (in, out) so the kernel computes x @ W + b (== x @ weight.T + bias)
    w1 = jax.random.normal(k1, (F_IN, H1), jnp.float32) * (1.0 / F_IN ** 0.5)
    b1 = jax.random.normal(k2, (1, H1), jnp.float32) * 0.01
    w2 = jax.random.normal(k3, (H1, H2), jnp.float32) * (1.0 / H1 ** 0.5)
    b2 = jax.random.normal(k4, (1, H2), jnp.float32) * 0.01
    w3 = jax.random.normal(k5, (H2, 1), jnp.float32) * (1.0 / H2 ** 0.5)
    b3 = jax.random.normal(k6, (1, 1), jnp.float32) * 0.01
    return (w1, b1, w2, b2, w3, b3)


def reference_forward(x, params):
    """Pure-JAX reference mirroring the kernel's bf16/f32 precision choices.

    (A true f32 PyTorch Discriminator would differ by the usual bf16 matmul /
    epilogue drift, ~1e-2 pre-sigmoid.)
    """
    w1, b1, w2, b2, w3, b3 = params
    xb = x.reshape(-1, F_IN).astype(jnp.bfloat16)
    t = jnp.dot(xb, w1.astype(jnp.bfloat16), preferred_element_type=jnp.float32)
    h1 = jnp.where(t > 0, t.astype(jnp.bfloat16), 0.2 * t.astype(jnp.bfloat16))
    h1 = h1 + 0  # keep bf16
    h1 = jnp.where((t.astype(jnp.bfloat16) + b1.astype(jnp.bfloat16)) > 0,
                   t.astype(jnp.bfloat16) + b1.astype(jnp.bfloat16),
                   0.2 * (t.astype(jnp.bfloat16) + b1.astype(jnp.bfloat16)))
    t = jnp.dot(h1, w2.astype(jnp.bfloat16), preferred_element_type=jnp.float32)
    a2 = t.astype(jnp.bfloat16) + b2.astype(jnp.bfloat16)
    h2 = jnp.where(a2 > 0, a2, 0.2 * a2)
    p = (h2 * w3.astype(jnp.bfloat16).reshape(1, H2)).astype(jnp.float32)
    logits = jnp.sum(p, axis=-1, keepdims=True) + b3.reshape(1, 1)
    return jax.nn.sigmoid(logits)


if __name__ == "__main__":
    key = jax.random.PRNGKey(0)
    kp, kx = jax.random.split(key)
    params = init_params(kp)

    # MNIST-like input: batch=8, 1x28x28 images (flattened to 784 in forward)
    x = jax.random.normal(kx, (8, 1, 28, 28), jnp.float32)

    y = discriminator_forward(x, params)
    y = jax.block_until_ready(y)

    y_ref = reference_forward(x, params)
    assert y.shape == (8, 1), y.shape
    assert jnp.allclose(y, y_ref, atol=5e-3, rtol=5e-3), float(
        jnp.max(jnp.abs(y - y_ref)))

    print("KERNEL_OK")
</pallas_src>

<mosaic_0001>
module attributes {stable_mosaic.version = 11 : i64} {
  func.func @disc_mlp_kernel(%arg0: i32, %arg1: memref<256x784xf32, #tpu.memory_space<vmem>>, %arg2: memref<896x512xbf16, #tpu.memory_space<vmem>>, %arg3: memref<1x512xbf16, #tpu.memory_space<vmem>>, %arg4: memref<512x256xbf16, #tpu.memory_space<vmem>>, %arg5: memref<1x256xbf16, #tpu.memory_space<vmem>>, %arg6: memref<1x256xbf16, #tpu.memory_space<vmem>>, %arg7: memref<1xf32, #tpu.memory_space<smem>>, %arg8: memref<1x256xf32, #tpu.memory_space<vmem>>, %arg9: memref<256x896xbf16, #tpu.memory_space<vmem>>) attributes {dimension_semantics = [#tpu.dimension_semantics<parallel>], iteration_bounds = array<i64: 1>, scalar_prefetch = 0 : i64, scratch_operands = 1 : i64, tpu.core_type = #tpu.core_type<tc>, window_params = [{transform_indices = @transform_0, window_bounds = array<i64: 256, 784>}, {pipeline_mode = #tpu.pipeline_mode<synchronous>, transform_indices = @transform_1, window_bounds = array<i64: 896, 512>}, {pipeline_mode = #tpu.pipeline_mode<synchronous>, transform_indices = @transform_2, window_bounds = array<i64: 1, 512>}, {pipeline_mode = #tpu.pipeline_mode<synchronous>, transform_indices = @transform_3, window_bounds = array<i64: 512, 256>}, {pipeline_mode = #tpu.pipeline_mode<synchronous>, transform_indices = @transform_4, window_bounds = array<i64: 1, 256>}, {pipeline_mode = #tpu.pipeline_mode<synchronous>, transform_indices = @transform_5, window_bounds = array<i64: 1, 256>}, {transform_indices = @transform_6, window_bounds = array<i64: 1>}, {transform_indices = @transform_7, window_bounds = array<i64: 1, 256>}]} {
    %cst = arith.constant 0.000000e+00 : bf16
    %0 = vector.broadcast %cst : bf16 to vector<256x112xbf16>
    %c0 = arith.constant 0 : index
    %c784 = arith.constant 784 : index
    %1 = vector.load %arg9[%c0, %c784] : memref<256x896xbf16, #tpu.memory_space<vmem>>, vector<256x112xbf16>
    tpu.vector_store %arg9[%c0, %c784], %0 {strides = array<i32>} : memref<256x896xbf16, #tpu.memory_space<vmem>>, vector<256x112xbf16>,
    %c0_0 = arith.constant 0 : index
    %c0_1 = arith.constant 0 : index
    %2 = vector.load %arg1[%c0_0, %c0_1] : memref<256x784xf32, #tpu.memory_space<vmem>>, vector<256x784xf32>
    %3 = arith.truncf %2 : vector<256x784xf32> to vector<256x784xbf16>
    %c0_2 = arith.constant 0 : index
    %c0_3 = arith.constant 0 : index
    %4 = vector.load %arg9[%c0_2, %c0_3] : memref<256x896xbf16, #tpu.memory_space<vmem>>, vector<256x784xbf16>
    tpu.vector_store %arg9[%c0_2, %c0_3], %3 {strides = array<i32>} : memref<256x896xbf16, #tpu.memory_space<vmem>>, vector<256x784xbf16>,
    %c0_4 = arith.constant 0 : index
    %c0_5 = arith.constant 0 : index
    %5 = vector.load %arg9[%c0_4, %c0_5] : memref<256x896xbf16, #tpu.memory_space<vmem>>, vector<256x896xbf16>
    %c0_6 = arith.constant 0 : index
    %c0_7 = arith.constant 0 : index
    %6 = vector.load %arg2[%c0_6, %c0_7] : memref<896x512xbf16, #tpu.memory_space<vmem>>, vector<896x512xbf16>
    %cst_8 = arith.constant dense<0.000000e+00> : vector<256x512xf32>
    %7 = tpu.matmul %5, %6, %cst_8 {dimension_numbers = #tpu.dot_dimension_numbers<[1], [0], [0], [1], [0, 0, 1, 1], [], []>} : vector<256x896xbf16>, vector<896x512xbf16>, vector<256x512xf32> -> vector<256x512xf32>
    %8 = arith.truncf %7 : vector<256x512xf32> to vector<256x512xbf16>
    %c0_9 = arith.constant 0 : index
    %c0_10 = arith.constant 0 : index
    %9 = vector.load %arg3[%c0_9, %c0_10] : memref<1x512xbf16, #tpu.memory_space<vmem>>, vector<1x512xbf16>
    %10 = vector.broadcast %9 : vector<1x512xbf16> to vector<256x512xbf16>
    %11 = arith.addf %8, %10 : vector<256x512xbf16>
    %cst_11 = arith.constant 0.000000e+00 : bf16
    %12 = vector.broadcast %cst_11 : bf16 to vector<256x512xbf16>
    %13 = arith.cmpf ogt, %11, %12 : vector<256x512xbf16>
    %cst_12 = arith.constant 2.001950e-01 : bf16
    %14 = vector.broadcast %cst_12 : bf16 to vector<256x512xbf16>
    %15 = arith.mulf %14, %11 : vector<256x512xbf16>
    %16 = arith.select %13, %11, %15 : vector<256x512xi1>, vector<256x512xbf16>
    %c0_13 = arith.constant 0 : index
    %c0_14 = arith.constant 0 : index
    %17 = vector.load %arg4[%c0_13, %c0_14] : memref<512x256xbf16, #tpu.memory_space<vmem>>, vector<512x256xbf16>
    %cst_15 = arith.constant dense<0.000000e+00> : vector<256x256xf32>
    %18 = tpu.matmul %16, %17, %cst_15 {dimension_numbers = #tpu.dot_dimension_numbers<[1], [0], [0], [1], [0, 0, 1, 1], [], []>} : vector<256x512xbf16>, vector<512x256xbf16>, vector<256x256xf32> -> vector<256x256xf32>
    %19 = arith.truncf %18 : vector<256x256xf32> to vector<256x256xbf16>
    %c0_16 = arith.constant 0 : index
    %c0_17 = arith.constant 0 : index
    %20 = vector.load %arg5[%c0_16, %c0_17] : memref<1x256xbf16, #tpu.memory_space<vmem>>, vector<1x256xbf16>
    %21 = vector.broadcast %20 : vector<1x256xbf16> to vector<256x256xbf16>
    %22 = arith.addf %19, %21 : vector<256x256xbf16>
    %cst_18 = arith.constant 0.000000e+00 : bf16
    %23 = vector.broadcast %cst_18 : bf16 to vector<256x256xbf16>
    %24 = arith.cmpf ogt, %22, %23 : vector<256x256xbf16>
    %cst_19 = arith.constant 2.001950e-01 : bf16
    %25 = vector.broadcast %cst_19 : bf16 to vector<256x256xbf16>
    %26 = arith.mulf %25, %22 : vector<256x256xbf16>
    %27 = arith.select %24, %22, %26 : vector<256x256xi1>, vector<256x256xbf16>
    %c0_20 = arith.constant 0 : index
    %c0_21 = arith.constant 0 : index
    %28 = vector.load %arg6[%c0_20, %c0_21] : memref<1x256xbf16, #tpu.memory_space<vmem>>, vector<1x256xbf16>
    %29 = vector.broadcast %28 : vector<1x256xbf16> to vector<256x256xbf16>
    %30 = arith.mulf %27, %29 : vector<256x256xbf16>
    %31 = tpu.transpose %30, [1, 0] : vector<256x256xbf16> -> vector<256x256xbf16>
    %32 = arith.extf %31 : vector<256x256xbf16> to vector<256x256xf32>
    %cst_22 = arith.constant dense<0.000000e+00> : vector<256xf32>
    %33 = vector.multi_reduction <add>, %32, %cst_22 [0] : vector<256x256xf32> to vector<256xf32>
    %34 = vector.shape_cast %33 : vector<256xf32> to vector<1x256xf32>
    %c0_23 = arith.constant 0 : index
    %35 = memref.load %arg7[%c0_23] : memref<1xf32, #tpu.memory_space<smem>>
    %36 = vector.broadcast %35 : f32 to vector<1x256xf32>
    %37 = arith.addf %34, %36 : vector<1x256xf32>
    %38 = arith.negf %37 : vector<1x256xf32>
    %39 = math.exp %38 : vector<1x256xf32>
    %cst_24 = arith.constant 1.000000e+00 : f32
    %40 = vector.broadcast %cst_24 : f32 to vector<1x256xf32>
    %41 = arith.addf %40, %39 : vector<1x256xf32>
    %42 = arith.divf %40, %41 : vector<1x256xf32>
    %c0_25 = arith.constant 0 : index
    %c0_26 = arith.constant 0 : index
    %43 = vector.load %arg8[%c0_25, %c0_26] : memref<1x256xf32, #tpu.memory_space<vmem>>, vector<1x256xf32>
    tpu.vector_store %arg8[%c0_25, %c0_26], %42 {strides = array<i32>} : memref<1x256xf32, #tpu.memory_space<vmem>>, vector<1x256xf32>,
    return
  }
  func.func @transform_0(%arg0: i32) -> (i32, i32) {
    %c0_i32 = arith.constant 0 : i32
    %c0_i32_0 = arith.constant 0 : i32
    return %arg0, %c0_i32 : i32, i32
  }
  func.func @transform_1(%arg0: i32) -> (i32, i32) {
    %c0_i32 = arith.constant 0 : i32
    %c0_i32_0 = arith.constant 0 : i32
    %c0_i32_1 = arith.constant 0 : i32
    return %c0_i32, %c0_i32_0 : i32, i32
  }
  func.func @transform_2(%arg0: i32) -> (i32, i32) {
    %c0_i32 = arith.constant 0 : i32
    %c0_i32_0 = arith.constant 0 : i32
    %c0_i32_1 = arith.constant 0 : i32
    return %c0_i32, %c0_i32_0 : i32, i32
  }
  func.func @transform_3(%arg0: i32) -> (i32, i32) {
    %c0_i32 = arith.constant 0 : i32
    %c0_i32_0 = arith.constant 0 : i32
    %c0_i32_1 = arith.constant 0 : i32
    return %c0_i32, %c0_i32_0 : i32, i32
  }
  func.func @transform_4(%arg0: i32) -> (i32, i32) {
    %c0_i32 = arith.constant 0 : i32
    %c0_i32_0 = arith.constant 0 : i32
    %c0_i32_1 = arith.constant 0 : i32
    return %c0_i32, %c0_i32_0 : i32, i32
  }
  func.func @transform_5(%arg0: i32) -> (i32, i32) {
    %c0_i32 = arith.constant 0 : i32
    %c0_i32_0 = arith.constant 0 : i32
    %c0_i32_1 = arith.constant 0 : i32
    return %c0_i32, %c0_i32_0 : i32, i32
  }
  func.func @transform_6(%arg0: i32) -> i32 {
    %c0_i32 = arith.constant 0 : i32
    %c0_i32_0 = arith.constant 0 : i32
    return %c0_i32 : i32
  }
  func.func @transform_7(%arg0: i32) -> (i32, i32) {
    %c0_i32 = arith.constant 0 : i32
    %c0_i32_0 = arith.constant 0 : i32
    return %c0_i32, %arg0 : i32, i32
  }
}

</mosaic_0001>

<llo_original>
// kernel: tpu_custom_call.1
$region0: #{tpu_custom_call.1}
  #allocation0 [shape = 'u32[]', space=smem, size = 0x4, offset = 0x4, fixed_abs, tag = 'smem constant byte address 0x4 - core index']
  #allocation1 [shape = 'u32[72,128]{1,0:T(1,128)}', space=vmem, size = 0x9000, scoped, tag = 'internal scratch']
  #allocation2 [shape = 'bf16[256,896]{1,0:T(8,128)(2,1)}', space=vmem, size = 0x70000, scoped, tag = 'scratch operand']
  #allocation3 [shape = 'f32[1]{0:T(128)S(6)}', space=smem, size = 0x200, scoped, tag = 'scoped memory for tpu_custom_call.1']
  %s0 = inlined_call_operand.vmem [shape: f32[256,784], index: 0, kind: input, shape index: {}]
  %s1 = inlined_call_operand.vmem [shape: bf16[896,512], index: 1, kind: input, shape index: {}]
  %s2 = inlined_call_operand.vmem [shape: bf16[1,512], index: 2, kind: input, shape index: {}]
  %s3 = inlined_call_operand.vmem [shape: bf16[512,256], index: 3, kind: input, shape index: {}]
  %s4 = inlined_call_operand.vmem [shape: bf16[1,256], index: 4, kind: input, shape index: {}]
  %s5 = inlined_call_operand.vmem [shape: bf16[1,256], index: 5, kind: input, shape index: {}]
  %s6 = inlined_call_operand.<no memory space> [shape: f32[1], index: 6, kind: input, shape index: {}]
  %s7 = inlined_call_operand.hbm [shape: f32[1,256], index: 7, kind: output, shape index: {}]
  %s8 = sld [smem:[#allocation0]]
  $region38: #{tpu_custom_call.1} parent=0
    _
  %s10 = ssub.s32 1, %s8
  %s11 = scalar_select 0, %s10, %s8
  %12 = sst [smem:[#allocation3]] %s6
  $region1: #{tpu_custom_call.1} parent=0
    #allocation4 [shape = 'u8[1024]{0}', space=vmem, size = 0x400, scoped, tag = 'output window, operand 0, single buffered']
    #allocation5 [shape = 's32[1]{0}', space=sflag, size = 0x4, scoped, tag = 'scoped memory for tpu_custom_call.1']
    %13 = vsyncpa [#allocation5], 0
    // Predicated region
    $region2: #{tpu_custom_call.1} parent=1 // pred_check
      _
    $region3: #{tpu_custom_call.1} parent=1 // pred_check_branch
      %15 = sbr.rel (0) target = $region5
    $region4: #{tpu_custom_call.1} parent=1 // pred_region
      _
    $region5: #{tpu_custom_call.1} parent=1 // pred_fallthru
      _
    // Predicated region
    $region6: #{tpu_custom_call.1} parent=1 // pred_check
      _
    $region7: #{tpu_custom_call.1} parent=1 // pred_check_branch
      %17 = sbr.rel (0) target = $region9
    $region8: #{tpu_custom_call.1} parent=1 // pred_region
      _
    $region9: #{tpu_custom_call.1} parent=1 // pred_fallthru
      _
    // Predicated region
    $region10: #{tpu_custom_call.1} parent=1 // pred_check
      _
    $region11: #{tpu_custom_call.1} parent=1 // pred_check_branch
      %19 = sbr.rel (0) target = $region13
    $region12: #{tpu_custom_call.1} parent=1 // pred_region
      _
    $region13: #{tpu_custom_call.1} parent=1 // pred_fallthru
      _
    // Predicated region
    $region14: #{tpu_custom_call.1} parent=1 // pred_check
      _
    $region15: #{tpu_custom_call.1} parent=1 // pred_check_branch
      %21 = sbr.rel (0) target = $region17
    $region16: #{tpu_custom_call.1} parent=1 // pred_region
      _
    $region17: #{tpu_custom_call.1} parent=1 // pred_fallthru
      _
    // Predicated region
    $region18: #{tpu_custom_call.1} parent=1 // pred_check
      _
    $region19: #{tpu_custom_call.1} parent=1 // pred_check_branch
      %23 = sbr.rel (0) target = $region21
    $region20: #{tpu_custom_call.1} parent=1 // pred_region
      _
    $region21: #{tpu_custom_call.1} parent=1 // pred_fallthru
      _
    // Predicated region
    $region22: #{tpu_custom_call.1} parent=1 // pred_check
      _
    $region23: #{tpu_custom_call.1} parent=1 // pred_check_branch
      %25 = sbr.rel (0) target = $region25
    $region24: #{tpu_custom_call.1} parent=1 // pred_region
      _
    $region25: #{tpu_custom_call.1} parent=1 // pred_fallthru
      _
    // Predicated region
    $region26: #{tpu_custom_call.1} parent=1 // pred_check
      _
    $region27: #{tpu_custom_call.1} parent=1 // pred_check_branch
      %27 = sbr.rel (0) target = $region29
    $region28: #{tpu_custom_call.1} parent=1 // pred_region
      _
    $region29: #{tpu_custom_call.1} parent=1 // pred_fallthru
      _
    %vm29 = vcmask 1043584
    %30 = vst.msk [vmem:[#allocation2 + $0x18] sm:$0xf] %vm29, 0
    %31 = vst.msk [vmem:[#allocation2 + $0x34] sm:$0xf] %vm29, 0
    %32 = vst.msk [vmem:[#allocation2 + $0x50] sm:$0xf] %vm29, 0
    %33 = vst.msk [vmem:[#allocation2 + $0x6c] sm:$0xf] %vm29, 0
    %34 = vst.msk [vmem:[#allocation2 + $0x88] sm:$0xf] %vm29, 0
    %35 = vst.msk [vmem:[#allocation2 + $0xa4] sm:$0xf] %vm29, 0
    %36 = vst.msk [vmem:[#allocation2 + $0xc0] sm:$0xf] %vm29, 0
    %37 = vst.msk [vmem:[#allocation2 + $0xdc] sm:$0xf] %vm29, 0
    %38 = vst.msk [vmem:[#allocation2 + $0xf8] sm:$0xf] %vm29, 0
    %39 = vst.msk [vmem:[#allocation2 + $0x114] sm:$0xf] %vm29, 0
    %40 = vst.msk [vmem:[#allocation2 + $0x130] sm:$0xf] %vm29, 0
    %41 = vst.msk [vmem:[#allocation2 + $0x14c] sm:$0xf] %vm29, 0
    %42 = vst.msk [vmem:[#allocation2 + $0x168] sm:$0xf] %vm29, 0
    %43 = vst.msk [vmem:[#allocation2 + $0x184] sm:$0xf] %vm29, 0
    %44 = vst.msk [vmem:[#allocation2 + $0x1a0] sm:$0xf] %vm29, 0
    %45 = vst.msk [vmem:[#allocation2 + $0x1bc] sm:$0xf] %vm29, 0
    %46 = vst.msk [vmem:[#allocation2 + $0x1d8] sm:$0xf] %vm29, 0
    %47 = vst.msk [vmem:[#allocation2 + $0x1f4] sm:$0xf] %vm29, 0
    %48 = vst.msk [vmem:[#allocation2 + $0x210] sm:$0xf] %vm29, 0
    %49 = vst.msk [vmem:[#allocation2 + $0x22c] sm:$0xf] %vm29, 0
    %50 = vst.msk [vmem:[#allocation2 + $0x248] sm:$0xf] %vm29, 0
    %51 = vst.msk [vmem:[#allocation2 + $0x264] sm:$0xf] %vm29, 0
    %52 = vst.msk [vmem:[#allocation2 + $0x280] sm:$0xf] %vm29, 0
    %53 = vst.msk [vmem:[#allocation2 + $0x29c] sm:$0xf] %vm29, 0
    %54 = vst.msk [vmem:[#allocation2 + $0x2b8] sm:$0xf] %vm29, 0
    %55 = vst.msk [vmem:[#allocation2 + $0x2d4] sm:$0xf] %vm29, 0
    %56 = vst.msk [vmem:[#allocation2 + $0x2f0] sm:$0xf] %vm29, 0
    %57 = vst.msk [vmem:[#allocation2 + $0x30c] sm:$0xf] %vm29, 0
    %58 = vst.msk [vmem:[#allocation2 + $0x328] sm:$0xf] %vm29, 0
    %59 = vst.msk [vmem:[#allocation2 + $0x344] sm:$0xf] %vm29, 0
    %60 = vst.msk [vmem:[#allocation2 + $0x360] sm:$0xf] %vm29, 0
    %61 = vst.msk [vmem:[#allocation2 + $0x37c] sm:$0xf] %vm29, 0
    %v62 = vld [vmem:[%s0] sm:$0xff]
    %v63 = vld [vmem:[%s0 + $0x8] sm:$0xff]
    %v64 = vld [vmem:[%s0 + $0x10] sm:$0xff]
    %v65 = vld [vmem:[%s0 + $0x18] sm:$0xff]
    %v66 = vld [vmem:[%s0 + $0x20] sm:$0xff]
    %v67 = vld [vmem:[%s0 + $0x28] sm:$0xff]
    %v68 = vld [vmem:[%s0 + $0x30] sm:$0xff]
    %v69 = vld [vmem:[%s0 + $0x38] sm:$0xff]
    %v70 = vld [vmem:[%s0 + $0x40] sm:$0xff]
    %v71 = vld [vmem:[%s0 + $0x48] sm:$0xff]
    %v72 = vld [vmem:[%s0 + $0x50] sm:$0xff]
    %v73 = vld [vmem:[%s0 + $0x58] sm:$0xff]
    %v74 = vld [vmem:[%s0 + $0x60] sm:$0xff]
    %v75 = vld [vmem:[%s0 + $0x68] sm:$0xff]
    %v76 = vld [vmem:[%s0 + $0x70] sm:$0xff]
    %v77 = vld [vmem:[%s0 + $0x78] sm:$0xff]
    %v78 = vld [vmem:[%s0 + $0x80] sm:$0xff]
    %v79 = vld [vmem:[%s0 + $0x88] sm:$0xff]
    %v80 = vld [vmem:[%s0 + $0x90] sm:$0xff]
    %v81 = vld [vmem:[%s0 + $0x98] sm:$0xff]
    %v82 = vld [vmem:[%s0 + $0xa0] sm:$0xff]
    %v83 = vld [vmem:[%s0 + $0xa8] sm:$0xff]
    %v84 = vld [vmem:[%s0 + $0xb0] sm:$0xff]
    %v85 = vld [vmem:[%s0 + $0xb8] sm:$0xff]
    %v86 = vld [vmem:[%s0 + $0xc0] sm:$0xff]
    %v87 = vld [vmem:[%s0 + $0xc8] sm:$0xff]
    %v88 = vld [vmem:[%s0 + $0xd0] sm:$0xff]
    %v89 = vld [vmem:[%s0 + $0xd8] sm:$0xff]
    %v90 = vld [vmem:[%s0 + $0xe0] sm:$0xff]
    %v91 = vld [vmem:[%s0 + $0xe8] sm:$0xff]
    %v92 = vld [vmem:[%s0 + $0xf0] sm:$0xff]
    %v93 = vld [vmem:[%s0 + $0xf8] sm:$0xff]
    %v94 = vld [vmem:[%s0 + $0x100] sm:$0xff]
    %v95 = vld [vmem:[%s0 + $0x108] sm:$0xff]
    %v96 = vld [vmem:[%s0 + $0x110] sm:$0xff]
    %v97 = vld [vmem:[%s0 + $0x118] sm:$0xff]
    %v98 = vld [vmem:[%s0 + $0x120] sm:$0xff]
    %v99 = vld [vmem:[%s0 + $0x128] sm:$0xff]
    %v100 = vld [vmem:[%s0 + $0x130] sm:$0xff]
    %v101 = vld [vmem:[%s0 + $0x138] sm:$0xff]
    %v102 = vld [vmem:[%s0 + $0x140] sm:$0xff]
    %v103 = vld [vmem:[%s0 + $0x148] sm:$0xff]
    %v104 = vld [vmem:[%s0 + $0x150] sm:$0xff]
    %v105 = vld [vmem:[%s0 + $0x158] sm:$0xff]
    %v106 = vld [vmem:[%s0 + $0x160] sm:$0xff]
    %v107 = vld [vmem:[%s0 + $0x168] sm:$0xff]
    %v108 = vld [vmem:[%s0 + $0x170] sm:$0xff]
    %v109 = vld [vmem:[%s0 + $0x178] sm:$0xff]
    %v110 = vld [vmem:[%s0 + $0x180] sm:$0xff]
    %v111 = vld [vmem:[%s0 + $0x188] sm:$0xff]
    %v112 = vld [vmem:[%s0 + $0x190] sm:$0xff]
    %v113 = vld [vmem:[%s0 + $0x198] sm:$0xff]
    %v114 = vld [vmem:[%s0 + $0x1a0] sm:$0xff]
    %v115 = vld [vmem:[%s0 + $0x1a8] sm:$0xff]
    %v116 = vld [vmem:[%s0 + $0x1b0] sm:$0xff]
    %v117 = vld [vmem:[%s0 + $0x1b8] sm:$0xff]
    %v118 = vld [vmem:[%s0 + $0x1c0] sm:$0xff]
    %v119 = vld [vmem:[%s0 + $0x1c8] sm:$0xff]
    %v120 = vld [vmem:[%s0 + $0x1d0] sm:$0xff]
    %v121 = vld [vmem:[%s0 + $0x1d8] sm:$0xff]
    %v122 = vld [vmem:[%s0 + $0x1e0] sm:$0xff]
    %v123 = vld [vmem:[%s0 + $0x1e8] sm:$0xff]
    %v124 = vld [vmem:[%s0 + $0x1f0] sm:$0xff]
    %v125 = vld [vmem:[%s0 + $0x1f8] sm:$0xff]
    %v126 = vld [vmem:[%s0 + $0x200] sm:$0xff]
    %v127 = vld [vmem:[%s0 + $0x208] sm:$0xff]
    %v128 = vld [vmem:[%s0 + $0x210] sm:$0xff]
    %v129 = vld [vmem:[%s0 + $0x218] sm:$0xff]
    %v130 = vld [vmem:[%s0 + $0x220] sm:$0xff]
    %v131 = vld [vmem:[%s0 + $0x228] sm:$0xff]
    %v132 = vld [vmem:[%s0 + $0x230] sm:$0xff]
    %v133 = vld [vmem:[%s0 + $0x238] sm:$0xff]
    %v134 = vld [vmem:[%s0 + $0x240] sm:$0xff]
    %v135 = vld [vmem:[%s0 + $0x248] sm:$0xff]
    %v136 = vld [vmem:[%s0 + $0x250] sm:$0xff]
    %v137 = vld [vmem:[%s0 + $0x258] sm:$0xff]
    %v138 = vld [vmem:[%s0 + $0x260] sm:$0xff]
    %v139 = vld [vmem:[%s0 + $0x268] sm:$0xff]
    %v140 = vld [vmem:[%s0 + $0x270] sm:$0xff]
    %v141 = vld [vmem:[%s0 + $0x278] sm:$0xff]
    %v142 = vld [vmem:[%s0 + $0x280] sm:$0xff]
    %v143 = vld [vmem:[%s0 + $0x288] sm:$0xff]
    %v144 = vld [vmem:[%s0 + $0x290] sm:$0xff]
    %v145 = vld [vmem:[%s0 + $0x298] sm:$0xff]
    %v146 = vld [vmem:[%s0 + $0x2a0] sm:$0xff]
    %v147 = vld [vmem:[%s0 + $0x2a8] sm:$0xff]
    %v148 = vld [vmem:[%s0 + $0x2b0] sm:$0xff]
    %v149 = vld [vmem:[%s0 + $0x2b8] sm:$0xff]
    %v150 = vld [vmem:[%s0 + $0x2c0] sm:$0xff]
    %v151 = vld [vmem:[%s0 + $0x2c8] sm:$0xff]
    %v152 = vld [vmem:[%s0 + $0x2d0] sm:$0xff]
    %v153 = vld [vmem:[%s0 + $0x2d8] sm:$0xff]
    %v154 = vld [vmem:[%s0 + $0x2e0] sm:$0xff]
    %v155 = vld [vmem:[%s0 + $0x2e8] sm:$0xff]
    %v156 = vld [vmem:[%s0 + $0x2f0] sm:$0xff]
    %v157 = vld [vmem:[%s0 + $0x2f8] sm:$0xff]
    %v158 = vld [vmem:[%s0 + $0x300] sm:$0xff]
    %v159 = vld [vmem:[%s0 + $0x308] sm:$0xff]
    %v160 = vld [vmem:[%s0 + $0x310] sm:$0xff]
    %v161 = vld [vmem:[%s0 + $0x318] sm:$0xff]
    %v162 = vld [vmem:[%s0 + $0x320] sm:$0xff]
    %v163 = vld [vmem:[%s0 + $0x328] sm:$0xff]
    %v164 = vld [vmem:[%s0 + $0x330] sm:$0xff]
    %v165 = vld [vmem:[%s0 + $0x338] sm:$0xff]
    %v166 = vld [vmem:[%s0 + $0x340] sm:$0xff]
    %v167 = vld [vmem:[%s0 + $0x348] sm:$0xff]
    %v168 = vld [vmem:[%s0 + $0x350] sm:$0xff]
    %v169 = vld [vmem:[%s0 + $0x358] sm:$0xff]
    %v170 = vld [vmem:[%s0 + $0x360] sm:$0xff]
    %v171 = vld [vmem:[%s0 + $0x368] sm:$0xff]
    %v172 = vld [vmem:[%s0 + $0x370] sm:$0xff]
    %v173 = vld [vmem:[%s0 + $0x378] sm:$0xff]
    %v174 = vld [vmem:[%s0 + $0x380] sm:$0xff]
    %v175 = vld [vmem:[%s0 + $0x388] sm:$0xff]
    %v176 = vld [vmem:[%s0 + $0x390] sm:$0xff]
    %v177 = vld [vmem:[%s0 + $0x398] sm:$0xff]
    %v178 = vld [vmem:[%s0 + $0x3a0] sm:$0xff]
    %v179 = vld [vmem:[%s0 + $0x3a8] sm:$0xff]
    %v180 = vld [vmem:[%s0 + $0x3b0] sm:$0xff]
    %v181 = vld [vmem:[%s0 + $0x3b8] sm:$0xff]
    %v182 = vld [vmem:[%s0 + $0x3c0] sm:$0xff]
    %v183 = vld [vmem:[%s0 + $0x3c8] sm:$0xff]
    %v184 = vld [vmem:[%s0 + $0x3d0] sm:$0xff]
    %v185 = vld [vmem:[%s0 + $0x3d8] sm:$0xff]
    %v186 = vld [vmem:[%s0 + $0x3e0] sm:$0xff]
    %v187 = vld [vmem:[%s0 + $0x3e8] sm:$0xff]
    %v188 = vld [vmem:[%s0 + $0x3f0] sm:$0xff]
    %v189 = vld [vmem:[%s0 + $0x3f8] sm:$0xff]
    %v190 = vld [vmem:[%s0 + $0x400] sm:$0xff]
    %v191 = vld [vmem:[%s0 + $0x408] sm:$0xff]
    %v192 = vld [vmem:[%s0 + $0x410] sm:$0xff]
    %v193 = vld [vmem:[%s0 + $0x418] sm:$0xff]
    %v194 = vld [vmem:[%s0 + $0x420] sm:$0xff]
    %v195 = vld [vmem:[%s0 + $0x428] sm:$0xff]
    %v196 = vld [vmem:[%s0 + $0x430] sm:$0xff]
    %v197 = vld [vmem:[%s0 + $0x438] sm:$0xff]
    %v198 = vld [vmem:[%s0 + $0x440] sm:$0xff]
    %v199 = vld [vmem:[%s0 + $0x448] sm:$0xff]
    %v200 = vld [vmem:[%s0 + $0x450] sm:$0xff]
    %v201 = vld [vmem:[%s0 + $0x458] sm:$0xff]
    %v202 = vld [vmem:[%s0 + $0x460] sm:$0xff]
    %v203 = vld [vmem:[%s0 + $0x468] sm:$0xff]
    %v204 = vld [vmem:[%s0 + $0x470] sm:$0xff]
    %v205 = vld [vmem:[%s0 + $0x478] sm:$0xff]
    %v206 = vld [vmem:[%s0 + $0x480] sm:$0xff]
    %v207 = vld [vmem:[%s0 + $0x488] sm:$0xff]
    %v208 = vld [vmem:[%s0 + $0x490] sm:$0xff]
    %v209 = vld [vmem:[%s0 + $0x498] sm:$0xff]
    %v210 = vld [vmem:[%s0 + $0x4a0] sm:$0xff]
    %v211 = vld [vmem:[%s0 + $0x4a8] sm:$0xff]
    %v212 = vld [vmem:[%s0 + $0x4b0] sm:$0xff]
    %v213 = vld [vmem:[%s0 + $0x4b8] sm:$0xff]
    %v214 = vld [vmem:[%s0 + $0x4c0] sm:$0xff]
    %v215 = vld [vmem:[%s0 + $0x4c8] sm:$0xff]
    %v216 = vld [vmem:[%s0 + $0x4d0] sm:$0xff]
    %v217 = vld [vmem:[%s0 + $0x4d8] sm:$0xff]
    %v218 = vld [vmem:[%s0 + $0x4e0] sm:$0xff]
    %v219 = vld [vmem:[%s0 + $0x4e8] sm:$0xff]
    %v220 = vld [vmem:[%s0 + $0x4f0] sm:$0xff]
    %v221 = vld [vmem:[%s0 + $0x4f8] sm:$0xff]
    %v222 = vld [vmem:[%s0 + $0x500] sm:$0xff]
    %v223 = vld [vmem:[%s0 + $0x508] sm:$0xff]
    %v224 = vld [vmem:[%s0 + $0x510] sm:$0xff]
    %v225 = vld [vmem:[%s0 + $0x518] sm:$0xff]
    %v226 = vld [vmem:[%s0 + $0x520] sm:$0xff]
    %v227 = vld [vmem:[%s0 + $0x528] sm:$0xff]
    %v228 = vld [vmem:[%s0 + $0x530] sm:$0xff]
    %v229 = vld [vmem:[%s0 + $0x538] sm:$0xff]
    %v230 = vld [vmem:[%s0 + $0x540] sm:$0xff]
    %v231 = vld [vmem:[%s0 + $0x548] sm:$0xff]
    %v232 = vld [vmem:[%s0 + $0x550] sm:$0xff]
    %v233 = vld [vmem:[%s0 + $0x558] sm:$0xff]
    %v234 = vld [vmem:[%s0 + $0x560] sm:$0xff]
    %v235 = vld [vmem:[%s0 + $0x568] sm:$0xff]
    %v236 = vld [vmem:[%s0 + $0x570] sm:$0xff]
    %v237 = vld [vmem:[%s0 + $0x578] sm:$0xff]
    %v238 = vld [vmem:[%s0 + $0x580] sm:$0xff]
    %v239 = vld [vmem:[%s0 + $0x588] sm:$0xff]
    %v240 = vld [vmem:[%s0 + $0x590] sm:$0xff]
    %v241 = vld [vmem:[%s0 + $0x598] sm:$0xff]
    %v242 = vld [vmem:[%s0 + $0x5a0] sm:$0xff]
    %v243 = vld [vmem:[%s0 + $0x5a8] sm:$0xff]
    %v244 = vld [vmem:[%s0 + $0x5b0] sm:$0xff]
    %v245 = vld [vmem:[%s0 + $0x5b8] sm:$0xff]
    %v246 = vld [vmem:[%s0 + $0x5c0] sm:$0xff]
    %v247 = vld [vmem:[%s0 + $0x5c8] sm:$0xff]
    %v248 = vld [vmem:[%s0 + $0x5d0] sm:$0xff]
    %v249 = vld [vmem:[%s0 + $0x5d8] sm:$0xff]
    %v250 = vld [vmem:[%s0 + $0x5e0] sm:$0xff]
    %v251 = vld [vmem:[%s0 + $0x5e8] sm:$0xff]
    %v252 = vld [vmem:[%s0 + $0x5f0] sm:$0xff]
    %v253 = vld [vmem:[%s0 + $0x5f8] sm:$0xff]
    %v254 = vld [vmem:[%s0 + $0x600] sm:$0xff]
    %v255 = vld [vmem:[%s0 + $0x608] sm:$0xff]
    %v256 = vld [vmem:[%s0 + $0x610] sm:$0xff]
    %v257 = vld [vmem:[%s0 + $0x618] sm:$0xff]
    %v258 = vld [vmem:[%s0 + $0x620] sm:$0xff]
    %v259 = vld [vmem:[%s0 + $0x628] sm:$0xff]
    %v260 = vld [vmem:[%s0 + $0x630] sm:$0xff]
    %v261 = vld [vmem:[%s0 + $0x638] sm:$0xff]
    %v262 = vld [vmem:[%s0 + $0x640] sm:$0xff]
    %v263 = vld [vmem:[%s0 + $0x648] sm:$0xff]
    %v264 = vld [vmem:[%s0 + $0x650] sm:$0xff]
    %v265 = vld [vmem:[%s0 + $0x658] sm:$0xff]
    %v266 = vld [vmem:[%s0 + $0x660] sm:$0xff]
    %v267 = vld [vmem:[%s0 + $0x668] sm:$0xff]
    %v268 = vld [vmem:[%s0 + $0x670] sm:$0xff]
    %v269 = vld [vmem:[%s0 + $0x678] sm:$0xff]
    %v270 = vld [vmem:[%s0 + $0x680] sm:$0xff]
    %v271 = vld [vmem:[%s0 + $0x688] sm:$0xff]
    %v272 = vld [vmem:[%s0 + $0x690] sm:$0xff]
    %v273 = vld [vmem:[%s0 + $0x698] sm:$0xff]
    %v274 = vld [vmem:[%s0 + $0x6a0] sm:$0xff]
    %v275 = vld [vmem:[%s0 + $0x6a8] sm:$0xff]
    %v276 = vld [vmem:[%s0 + $0x6b0] sm:$0xff]
    %v277 = vld [vmem:[%s0 + $0x6b8] sm:$0xff]
    %v278 = vld [vmem:[%s0 + $0x6c0] sm:$0xff]
    %v279 = vld [vmem:[%s0 + $0x6c8] sm:$0xff]
    %v280 = vld [vmem:[%s0 + $0x6d0] sm:$0xff]
    %v281 = vld [vmem:[%s0 + $0x6d8] sm:$0xff]
    %v282 = vld [vmem:[%s0 + $0x6e0] sm:$0xff]
    %v283 = vld [vmem:[%s0 + $0x6e8] sm:$0xff]
    %v284 = vld [vmem:[%s0 + $0x6f0] sm:$0xff]
    %v285 = vld [vmem:[%s0 + $0x6f8] sm:$0xff]
    %v286 = vpack.c.bf16 %v63, %v62
    %v287 = vpack.c.bf16 %v65, %v64
    %v288 = vpack.c.bf16 %v67, %v66
    %v289 = vpack.c.bf16 %v68, %v68
    %v290 = vpack.c.bf16 %v70, %v69
    %v291 = vpack.c.bf16 %v72, %v71
    %v292 = vpack.c.bf16 %v74, %v73
    %v293 = vpack.c.bf16 %v75, %v75
    %v294 = vpack.c.bf16 %v77, %v76
    %v295 = vpack.c.bf16 %v79, %v78
    %v296 = vpack.c.bf16 %v81, %v80
    %v297 = vpack.c.bf16 %v82, %v82
    %v298 = vpack.c.bf16 %v84, %v83
    %v299 = vpack.c.bf16 %v86, %v85
    %v300 = vpack.c.bf16 %v88, %v87
    %v301 = vpack.c.bf16 %v89, %v89
    %v302 = vpack.c.bf16 %v91, %v90
    %v303 = vpack.c.bf16 %v93, %v92
    %v304 = vpack.c.bf16 %v95, %v94
    %v305 = vpack.c.bf16 %v96, %v96
    %v306 = vpack.c.bf16 %v98, %v97
    %v307 = vpack.c.bf16 %v100, %v99
    %v308 = vpack.c.bf16 %v102, %v101
    %v309 = vpack.c.bf16 %v103, %v103
    %v310 = vpack.c.bf16 %v105, %v104
    %v311 = vpack.c.bf16 %v107, %v106
    %v312 = vpack.c.bf16 %v109, %v108
    %v313 = vpack.c.bf16 %v110, %v110
    %v314 = vpack.c.bf16 %v112, %v111
    %v315 = vpack.c.bf16 %v114, %v113
    %v316 = vpack.c.bf16 %v116, %v115
    %v317 = vpack.c.bf16 %v117, %v117
    %v318 = vpack.c.bf16 %v119, %v118
    %v319 = vpack.c.bf16 %v121, %v120
    %v320 = vpack.c.bf16 %v123, %v122
    %v321 = vpack.c.bf16 %v124, %v124
    %v322 = vpack.c.bf16 %v126, %v125
    %v323 = vpack.c.bf16 %v128, %v127
    %v324 = vpack.c.bf16 %v130, %v129
    %v325 = vpack.c.bf16 %v131, %v131
    %v326 = vpack.c.bf16 %v133, %v132
    %v327 = vpack.c.bf16 %v135, %v134
    %v328 = vpack.c.bf16 %v137, %v136
    %v329 = vpack.c.bf16 %v138, %v138
    %v330 = vpack.c.bf16 %v140, %v139
    %v331 = vpack.c.bf16 %v142, %v141
    %v332 = vpack.c.bf16 %v144, %v143
    %v333 = vpack.c.bf16 %v145, %v145
    %v334 = vpack.c.bf16 %v147, %v146
    %v335 = vpack.c.bf16 %v149, %v148
    %v336 = vpack.c.bf16 %v151, %v150
    %v337 = vpack.c.bf16 %v152, %v152
    %v338 = vpack.c.bf16 %v154, %v153
    %v339 = vpack.c.bf16 %v156, %v155
    %v340 = vpack.c.bf16 %v158, %v157
    %v341 = vpack.c.bf16 %v159, %v159
    %v342 = vpack.c.bf16 %v161, %v160
    %v343 = vpack.c.bf16 %v163, %v162
    %v344 = vpack.c.bf16 %v165, %v164
    %v345 = vpack.c.bf16 %v166, %v166
    %v346 = vpack.c.bf16 %v168, %v167
    %v347 = vpack.c.bf16 %v170, %v169
    %v348 = vpack.c.bf16 %v172, %v171
    %v349 = vpack.c.bf16 %v173, %v173
    %v350 = vpack.c.bf16 %v175, %v174
    %v351 = vpack.c.bf16 %v177, %v176
    %v352 = vpack.c.bf16 %v179, %v178
    %v353 = vpack.c.bf16 %v180, %v180
    %v354 = vpack.c.bf16 %v182, %v181
    %v355 = vpack.c.bf16 %v184, %v183
    %v356 = vpack.c.bf16 %v186, %v185
    %v357 = vpack.c.bf16 %v187, %v187
    %v358 = vpack.c.bf16 %v189, %v188
    %v359 = vpack.c.bf16 %v191, %v190
    %v360 = vpack.c.bf16 %v193, %v192
    %v361 = vpack.c.bf16 %v194, %v194
    %v362 = vpack.c.bf16 %v196, %v195
    %v363 = vpack.c.bf16 %v198, %v197
    %v364 = vpack.c.bf16 %v200, %v199
    %v365 = vpack.c.bf16 %v201, %v201
    %v366 = vpack.c.bf16 %v203, %v202
    %v367 = vpack.c.bf16 %v205, %v204
    %v368 = vpack.c.bf16 %v207, %v206
    %v369 = vpack.c.bf16 %v208, %v208
    %v370 = vpack.c.bf16 %v210, %v209
    %v371 = vpack.c.bf16 %v212, %v211
    %v372 = vpack.c.bf16 %v214, %v213
    %v373 = vpack.c.bf16 %v215, %v215
    %v374 = vpack.c.bf16 %v217, %v216
    %v375 = vpack.c.bf16 %v219, %v218
    %v376 = vpack.c.bf16 %v221, %v220
    %v377 = vpack.c.bf16 %v222, %v222
    %v378 = vpack.c.bf16 %v224, %v223
    %v379 = vpack.c.bf16 %v226, %v225
    %v380 = vpack.c.bf16 %v228, %v227
    %v381 = vpack.c.bf16 %v229, %v229
    %v382 = vpack.c.bf16 %v231, %v230
    %v383 = vpack.c.bf16 %v233, %v232
    %v384 = vpack.c.bf16 %v235, %v234
    %v385 = vpack.c.bf16 %v236, %v236
    %v386 = vpack.c.bf16 %v238, %v237
    %v387 = vpack.c.bf16 %v240, %v239
    %v388 = vpack.c.bf16 %v242, %v241
    %v389 = vpack.c.bf16 %v243, %v243
    %v390 = vpack.c.bf16 %v245, %v244
    %v391 = vpack.c.bf16 %v247, %v246
    %v392 = vpack.c.bf16 %v249, %v248
    %v393 = vpack.c.bf16 %v250, %v250
    %v394 = vpack.c.bf16 %v252, %v251
    %v395 = vpack.c.bf16 %v254, %v253
    %v396 = vpack.c.bf16 %v256, %v255
    %v397 = vpack.c.bf16 %v257, %v257
    %v398 = vpack.c.bf16 %v259, %v258
    %v399 = vpack.c.bf16 %v261, %v260
    %v400 = vpack.c.bf16 %v263, %v262
    %v401 = vpack.c.bf16 %v264, %v264
    %v402 = vpack.c.bf16 %v266, %v265
    %v403 = vpack.c.bf16 %v268, %v267
    %v404 = vpack.c.bf16 %v270, %v269
    %v405 = vpack.c.bf16 %v271, %v271
    %v406 = vpack.c.bf16 %v273, %v272
    %v407 = vpack.c.bf16 %v275, %v274
    %v408 = vpack.c.bf16 %v277, %v276
    %v409 = vpack.c.bf16 %v278, %v278
    %v410 = vpack.c.bf16 %v280, %v279
    %v411 = vpack.c.bf16 %v282, %v281
    %v412 = vpack.c.bf16 %v284, %v283
    %v413 = vpack.c.bf16 %v285, %v285
    %414 = vst [vmem:[#allocation2] sm:$0xff] %v286
    %415 = vst [vmem:[#allocation2 + $0x8] sm:$0xff] %v287
    %416 = vst [vmem:[#allocation2 + $0x10] sm:$0xff] %v288
    %vm417 = vcmask 125952
    %418 = vst.msk [vmem:[#allocation2 + $0x18] sm:$0xf] %vm417, %v289
    %419 = vst [vmem:[#allocation2 + $0x1c] sm:$0xff] %v290
    %420 = vst [vmem:[#allocation2 + $0x24] sm:$0xff] %v291
    %421 = vst [vmem:[#allocation2 + $0x2c] sm:$0xff] %v292
    %422 = vst.msk [vmem:[#allocation2 + $0x34] sm:$0xf] %vm417, %v293
    %423 = vst [vmem:[#allocation2 + $0x38] sm:$0xff] %v294
    %424 = vst [vmem:[#allocation2 + $0x40] sm:$0xff] %v295
    %425 = vst [vmem:[#allocation2 + $0x48] sm:$0xff] %v296
    %426 = vst.msk [vmem:[#allocation2 + $0x50] sm:$0xf] %vm417, %v297
    %427 = vst [vmem:[#allocation2 + $0x54] sm:$0xff] %v298
    %428 = vst [vmem:[#allocation2 + $0x5c] sm:$0xff] %v299
    %429 = vst [vmem:[#allocation2 + $0x64] sm:$0xff] %v300
    %430 = vst.msk [vmem:[#allocation2 + $0x6c] sm:$0xf] %vm417, %v301
    %431 = vst [vmem:[#allocation2 + $0x70] sm:$0xff] %v302
    %432 = vst [vmem:[#allocation2 + $0x78] sm:$0xff] %v303
    %433 = vst [vmem:[#allocation2 + $0x80] sm:$0xff] %v304
    %434 = vst.msk [vmem:[#allocation2 + $0x88] sm:$0xf] %vm417, %v305
    %435 = vst [vmem:[#allocation2 + $0x8c] sm:$0xff] %v306
    %436 = vst [vmem:[#allocation2 + $0x94] sm:$0xff] %v307
    %437 = vst [vmem:[#allocation2 + $0x9c] sm:$0xff] %v308
    %438 = vst.msk [vmem:[#allocation2 + $0xa4] sm:$0xf] %vm417, %v309
    %439 = vst [vmem:[#allocation2 + $0xa8] sm:$0xff] %v310
    %440 = vst [vmem:[#allocation2 + $0xb0] sm:$0xff] %v311
    %441 = vst [vmem:[#allocation2 + $0xb8] sm:$0xff] %v312
    %442 = vst.msk [vmem:[#allocation2 + $0xc0] sm:$0xf] %vm417, %v313
    %443 = vst [vmem:[#allocation2 + $0xc4] sm:$0xff] %v314
    %444 = vst [vmem:[#allocation2 + $0xcc] sm:$0xff] %v315
    %445 = vst [vmem:[#allocation2 + $0xd4] sm:$0xff] %v316
    %446 = vst.msk [vmem:[#allocation2 + $0xdc] sm:$0xf] %vm417, %v317
    %447 = vst [vmem:[#allocation2 + $0xe0] sm:$0xff] %v318
    %448 = vst [vmem:[#allocation2 + $0xe8] sm:$0xff] %v319
    %449 = vst [vmem:[#allocation2 + $0xf0] sm:$0xff] %v320
    %450 = vst.msk [vmem:[#allocation2 + $0xf8] sm:$0xf] %vm417, %v321
    %451 = vst [vmem:[#allocation2 + $0xfc] sm:$0xff] %v322
    %452 = vst [vmem:[#allocation2 + $0x104] sm:$0xff] %v323
    %453 = vst [vmem:[#allocation2 + $0x10c] sm:$0xff] %v324
    %454 = vst.msk [vmem:[#allocation2 + $0x114] sm:$0xf] %vm417, %v325
    %455 = vst [vmem:[#allocation2 + $0x118] sm:$0xff] %v326
    %456 = vst [vmem:[#allocation2 + $0x120] sm:$0xff] %v327
    %457 = vst [vmem:[#allocation2 + $0x128] sm:$0xff] %v328
    %458 = vst.msk [vmem:[#allocation2 + $0x130] sm:$0xf] %vm417, %v329
    %459 = vst [vmem:[#allocation2 + $0x134] sm:$0xff] %v330
    %460 = vst [vmem:[#allocation2 + $0x13c] sm:$0xff] %v331
    %461 = vst [vmem:[#allocation2 + $0x144] sm:$0xff] %v332
    %462 = vst.msk [vmem:[#allocation2 + $0x14c] sm:$0xf] %vm417, %v333
    %463 = vst [vmem:[#allocation2 + $0x150] sm:$0xff] %v334
    %464 = vst [vmem:[#allocation2 + $0x158] sm:$0xff] %v335
    %465 = vst [vmem:[#allocation2 + $0x160] sm:$0xff] %v336
    %466 = vst.msk [vmem:[#allocation2 + $0x168] sm:$0xf] %vm417, %v337
    %467 = vst [vmem:[#allocation2 + $0x16c] sm:$0xff] %v338
    %468 = vst [vmem:[#allocation2 + $0x174] sm:$0xff] %v339
    %469 = vst [vmem:[#allocation2 + $0x17c] sm:$0xff] %v340
    %470 = vst.msk [vmem:[#allocation2 + $0x184] sm:$0xf] %vm417, %v341
    %471 = vst [vmem:[#allocation2 + $0x188] sm:$0xff] %v342
    %472 = vst [vmem:[#allocation2 + $0x190] sm:$0xff] %v343
    %473 = vst [vmem:[#allocation2 + $0x198] sm:$0xff] %v344
    %474 = vst.msk [vmem:[#allocation2 + $0x1a0] sm:$0xf] %vm417, %v345
    %475 = vst [vmem:[#allocation2 + $0x1a4] sm:$0xff] %v346
    %476 = vst [vmem:[#allocation2 + $0x1ac] sm:$0xff] %v347
    %477 = vst [vmem:[#allocation2 + $0x1b4] sm:$0xff] %v348
    %478 = vst.msk [vmem:[#allocation2 + $0x1bc] sm:$0xf] %vm417, %v349
    %479 = vst [vmem:[#allocation2 + $0x1c0] sm:$0xff] %v350
    %480 = vst [vmem:[#allocation2 + $0x1c8] sm:$0xff] %v351
    %481 = vst [vmem:[#allocation2 + $0x1d0] sm:$0xff] %v352
    %482 = vst.msk [vmem:[#allocation2 + $0x1d8] sm:$0xf] %vm417, %v353
    %483 = vst [vmem:[#allocation2 + $0x1dc] sm:$0xff] %v354
    %484 = vst [vmem:[#allocation2 + $0x1e4] sm:$0xff] %v355
    %485 = vst [vmem:[#allocation2 + $0x1ec] sm:$0xff] %v356
    %486 = vst.msk [vmem:[#allocation2 + $0x1f4] sm:$0xf] %vm417, %v357
    %487 = vst [vmem:[#allocation2 + $0x1f8] sm:$0xff] %v358
    %488 = vst [vmem:[#allocation2 + $0x200] sm:$0xff] %v359
    %489 = vst [vmem:[#allocation2 + $0x208] sm:$0xff] %v360
    %490 = vst.msk [vmem:[#allocation2 + $0x210] sm:$0xf] %vm417, %v361
    %491 = vst [vmem:[#allocation2 + $0x214] sm:$0xff] %v362
    %492 = vst [vmem:[#allocation2 + $0x21c] sm:$0xff] %v363
    %493 = vst [vmem:[#allocation2 + $0x224] sm:$0xff] %v364
    %494 = vst.msk [vmem:[#allocation2 + $0x22c] sm:$0xf] %vm417, %v365
    %495 = vst [vmem:[#allocation2 + $0x230] sm:$0xff] %v366
    %496 = vst [vmem:[#allocation2 + $0x238] sm:$0xff] %v367
    %497 = vst [vmem:[#allocation2 + $0x240] sm:$0xff] %v368
    %498 = vst.msk [vmem:[#allocation2 + $0x248] sm:$0xf] %vm417, %v369
    %499 = vst [vmem:[#allocation2 + $0x24c] sm:$0xff] %v370
    %500 = vst [vmem:[#allocation2 + $0x254] sm:$0xff] %v371
    %501 = vst [vmem:[#allocation2 + $0x25c] sm:$0xff] %v372
    %502 = vst.msk [vmem:[#allocation2 + $0x264] sm:$0xf] %vm417, %v373
    %503 = vst [vmem:[#allocation2 + $0x268] sm:$0xff] %v374
    %504 = vst [vmem:[#allocation2 + $0x270] sm:$0xff] %v375
    %505 = vst [vmem:[#allocation2 + $0x278] sm:$0xff] %v376
    %506 = vst.msk [vmem:[#allocation2 + $0x280] sm:$0xf] %vm417, %v377
    %507 = vst [vmem:[#allocation2 + $0x284] sm:$0xff] %v378
    %508 = vst [vmem:[#allocation2 + $0x28c] sm:$0xff] %v379
    %509 = vst [vmem:[#allocation2 + $0x294] sm:$0xff] %v380
    %510 = vst.msk [vmem:[#allocation2 + $0x29c] sm:$0xf] %vm417, %v381
    %511 = vst [vmem:[#allocation2 + $0x2a0] sm:$0xff] %v382
    %512 = vst [vmem:[#allocation2 + $0x2a8] sm:$0xff] %v383
    %513 = vst [vmem:[#allocation2 + $0x2b0] sm:$0xff] %v384
    %514 = vst.msk [vmem:[#allocation2 + $0x2b8] sm:$0xf] %vm417, %v385
    %515 = vst [vmem:[#allocation2 + $0x2bc] sm:$0xff] %v386
    %516 = vst [vmem:[#allocation2 + $0x2c4] sm:$0xff] %v387
    %517 = vst [vmem:[#allocation2 + $0x2cc] sm:$0xff] %v388
    %518 = vst.msk [vmem:[#allocation2 + $0x2d4] sm:$0xf] %vm417, %v389
    %519 = vst [vmem:[#allocation2 + $0x2d8] sm:$0xff] %v390
    %520 = vst [vmem:[#allocation2 + $0x2e0] sm:$0xff] %v391
    %521 = vst [vmem:[#allocation2 + $0x2e8] sm:$0xff] %v392
    %522 = vst.msk [vmem:[#allocation2 + $0x2f0] sm:$0xf] %vm417, %v393
    %523 = vst [vmem:[#allocation2 + $0x2f4] sm:$0xff] %v394
    %524 = vst [vmem:[#allocation2 + $0x2fc] sm:$0xff] %v395
    %525 = vst [vmem:[#allocation2 + $0x304] sm:$0xff] %v396
    %526 = vst.msk [vmem:[#allocation2 + $0x30c] sm:$0xf] %vm417, %v397
    %527 = vst [vmem:[#allocation2 + $0x310] sm:$0xff] %v398
    %528 = vst [vmem:[#allocation2 + $0x318] sm:$0xff] %v399
    %529 = vst [vmem:[#allocation2 + $0x320] sm:$0xff] %v400
    %530 = vst.msk [vmem:[#allocation2 + $0x328] sm:$0xf] %vm417, %v401
    %531 = vst [vmem:[#allocation2 + $0x32c] sm:$0xff] %v402
    %532 = vst [vmem:[#allocation2 + $0x334] sm:$0xff] %v403
    %533 = vst [vmem:[#allocation2 + $0x33c] sm:$0xff] %v404
    %534 = vst.msk [vmem:[#allocation2 + $0x344] sm:$0xf] %vm417, %v405
    %535 = vst [vmem:[#allocation2 + $0x348] sm:$0xff] %v406
    %536 = vst [vmem:[#allocation2 + $0x350] sm:$0xff] %v407
    %537 = vst [vmem:[#allocation2 + $0x358] sm:$0xff] %v408
    %538 = vst.msk [vmem:[#allocation2 + $0x360] sm:$0xf] %vm417, %v409
    %539 = vst [vmem:[#allocation2 + $0x364] sm:$0xff] %v410
    %540 = vst [vmem:[#allocation2 + $0x36c] sm:$0xff] %v411
    %541 = vst [vmem:[#allocation2 + $0x374] sm:$0xff] %v412
    %542 = vst.msk [vmem:[#allocation2 + $0x37c] sm:$0xf] %vm417, %v413
    %v543 = vld [vmem:[#allocation2] sm:$0xff]
    %v544 = vld [vmem:[#allocation2 + $0x8] sm:$0xff]
    %v545 = vld [vmem:[#allocation2 + $0x10] sm:$0xff]
    %v546 = vld [vmem:[#allocation2 + $0x18] sm:$0xf]
    %v547 = vld [vmem:[#allocation2 + $0x1c] sm:$0xff]
    %v548 = vld [vmem:[#allocation2 + $0x24] sm:$0xff]
    %v549 = vld [vmem:[#allocation2 + $0x2c] sm:$0xff]
    %v550 = vld [vmem:[#allocation2 + $0x34] sm:$0xf]
    %v551 = vld [vmem:[#allocation2 + $0x38] sm:$0xff]
    %v552 = vld [vmem:[#allocation2 + $0x40] sm:$0xff]
    %v553 = vld [vmem:[#allocation2 + $0x48] sm:$0xff]
    %v554 = vld [vmem:[#allocation2 + $0x50] sm:$0xf]
    %v555 = vld [vmem:[#allocation2 + $0x54] sm:$0xff]
    %v556 = vld [vmem:[#allocation2 + $0x5c] sm:$0xff]
    %v557 = vld [vmem:[#allocation2 + $0x64] sm:$0xff]
    %v558 = vld [vmem:[#allocation2 + $0x6c] sm:$0xf]
    %v559 = vld [vmem:[#allocation2 + $0x70] sm:$0xff]
    %v560 = vld [vmem:[#allocation2 + $0x78] sm:$0xff]
    %v561 = vld [vmem:[#allocation2 + $0x80] sm:$0xff]
    %v562 = vld [vmem:[#allocation2 + $0x88] sm:$0xf]
    %v563 = vld [vmem:[#allocation2 + $0x8c] sm:$0xff]
    %v564 = vld [vmem:[#allocation2 + $0x94] sm:$0xff]
    %v565 = vld [vmem:[#allocation2 + $0x9c] sm:$0xff]
    %v566 = vld [vmem:[#allocation2 + $0xa4] sm:$0xf]
    %v567 = vld [vmem:[#allocation2 + $0xa8] sm:$0xff]
    %v568 = vld [vmem:[#allocation2 + $0xb0] sm:$0xff]
    %v569 = vld [vmem:[#allocation2 + $0xb8] sm:$0xff]
    %v570 = vld [vmem:[#allocation2 + $0xc0] sm:$0xf]
    %v571 = vld [vmem:[#allocation2 + $0xc4] sm:$0xff]
    %v572 = vld [vmem:[#allocation2 + $0xcc] sm:$0xff]
    %v573 = vld [vmem:[#allocation2 + $0xd4] sm:$0xff]
    %v574 = vld [vmem:[#allocation2 + $0xdc] sm:$0xf]
    %v575 = vld [vmem:[#allocation2 + $0xe0] sm:$0xff]
    %v576 = vld [vmem:[#allocation2 + $0xe8] sm:$0xff]
    %v577 = vld [vmem:[#allocation2 + $0xf0] sm:$0xff]
    %v578 = vld [vmem:[#allocation2 + $0xf8] sm:$0xf]
    %v579 = vld [vmem:[#allocation2 + $0xfc] sm:$0xff]
    %v580 = vld [vmem:[#allocation2 + $0x104] sm:$0xff]
    %v581 = vld [vmem:[#allocation2 + $0x10c] sm:$0xff]
    %v582 = vld [vmem:[#allocation2 + $0x114] sm:$0xf]
    %v583 = vld [vmem:[#allocation2 + $0x118] sm:$0xff]
    %v584 = vld [vmem:[#allocation2 + $0x120] sm:$0xff]
    %v585 = vld [vmem:[#allocation2 + $0x128] sm:$0xff]
    %v586 = vld [vmem:[#allocation2 + $0x130] sm:$0xf]
    %v587 = vld [vmem:[#allocation2 + $0x134] sm:$0xff]
    %v588 = vld [vmem:[#allocation2 + $0x13c] sm:$0xff]
    %v589 = vld [vmem:[#allocation2 + $0x144] sm:$0xff]
    %v590 = vld [vmem:[#allocation2 + $0x14c] sm:$0xf]
    %v591 = vld [vmem:[#allocation2 + $0x150] sm:$0xff]
    %v592 = vld [vmem:[#allocation2 + $0x158] sm:$0xff]
    %v593 = vld [vmem:[#allocation2 + $0x160] sm:$0xff]
    %v594 = vld [vmem:[#allocation2 + $0x168] sm:$0xf]
    %v595 = vld [vmem:[#allocation2 + $0x16c] sm:$0xff]
    %v596 = vld [vmem:[#allocation2 + $0x174] sm:$0xff]
    %v597 = vld [vmem:[#allocation2 + $0x17c] sm:$0xff]
    %v598 = vld [vmem:[#allocation2 + $0x184] sm:$0xf]
    %v599 = vld [vmem:[#allocation2 + $0x188] sm:$0xff]
    %v600 = vld [vmem:[#allocation2 + $0x190] sm:$0xff]
    %v601 = vld [vmem:[#allocation2 + $0x198] sm:$0xff]
    %v602 = vld [vmem:[#allocation2 + $0x1a0] sm:$0xf]
    %v603 = vld [vmem:[#allocation2 + $0x1a4] sm:$0xff]
    %v604 = vld [vmem:[#allocation2 + $0x1ac] sm:$0xff]
    %v605 = vld [vmem:[#allocation2 + $0x1b4] sm:$0xff]
    %v606 = vld [vmem:[#allocation2 + $0x1bc] sm:$0xf]
    %v607 = vld [vmem:[#allocation2 + $0x1c0] sm:$0xff]
    %v608 = vld [vmem:[#allocation2 + $0x1c8] sm:$0xff]
    %v609 = vld [vmem:[#allocation2 + $0x1d0] sm:$0xff]
    %v610 = vld [vmem:[#allocation2 + $0x1d8] sm:$0xf]
    %v611 = vld [vmem:[#allocation2 + $0x1dc] sm:$0xff]
    %v612 = vld [vmem:[#allocation2 + $0x1e4] sm:$0xff]
    %v613 = vld [vmem:[#allocation2 + $0x1ec] sm:$0xff]
    %v614 = vld [vmem:[#allocation2 + $0x1f4] sm:$0xf]
    %v615 = vld [vmem:[#allocation2 + $0x1f8] sm:$0xff]
    %v616 = vld [vmem:[#allocation2 + $0x200] sm:$0xff]
    %v617 = vld [vmem:[#allocation2 + $0x208] sm:$0xff]
    %v618 = vld [vmem:[#allocation2 + $0x210] sm:$0xf]
    %v619 = vld [vmem:[#allocation2 + $0x214] sm:$0xff]
    %v620 = vld [vmem:[#allocation2 + $0x21c] sm:$0xff]
    %v621 = vld [vmem:[#allocation2 + $0x224] sm:$0xff]
    %v622 = vld [vmem:[#allocation2 + $0x22c] sm:$0xf]
    %v623 = vld [vmem:[#allocation2 + $0x230] sm:$0xff]
    %v624 = vld [vmem:[#allocation2 + $0x238] sm:$0xff]
    %v625 = vld [vmem:[#allocation2 + $0x240] sm:$0xff]
    %v626 = vld [vmem:[#allocation2 + $0x248] sm:$0xf]
    %v627 = vld [vmem:[#allocation2 + $0x24c] sm:$0xff]
    %v628 = vld [vmem:[#allocation2 + $0x254] sm:$0xff]
    %v629 = vld [vmem:[#allocation2 + $0x25c] sm:$0xff]
    %v630 = vld [vmem:[#allocation2 + $0x264] sm:$0xf]
    %v631 = vld [vmem:[#allocation2 + $0x268] sm:$0xff]
    %v632 = vld [vmem:[#allocation2 + $0x270] sm:$0xff]
    %v633 = vld [vmem:[#allocation2 + $0x278] sm:$0xff]
    %v634 = vld [vmem:[#allocation2 + $0x280] sm:$0xf]
    %v635 = vld [vmem:[#allocation2 + $0x284] sm:$0xff]
    %v636 = vld [vmem:[#allocation2 + $0x28c] sm:$0xff]
    %v637 = vld [vmem:[#allocation2 + $0x294] sm:$0xff]
    %v638 = vld [vmem:[#allocation2 + $0x29c] sm:$0xf]
    %v639 = vld [vmem:[#allocation2 + $0x2a0] sm:$0xff]
    %v640 = vld [vmem:[#allocation2 + $0x2a8] sm:$0xff]
    %v641 = vld [vmem:[#allocation2 + $0x2b0] sm:$0xff]
    %v642 = vld [vmem:[#allocation2 + $0x2b8] sm:$0xf]
    %v643 = vld [vmem:[#allocation2 + $0x2bc] sm:$0xff]
    %v644 = vld [vmem:[#allocation2 + $0x2c4] sm:$0xff]
    %v645 = vld [vmem:[#allocation2 + $0x2cc] sm:$0xff]
    %v646 = vld [vmem:[#allocation2 + $0x2d4] sm:$0xf]
    %v647 = vld [vmem:[#allocation2 + $0x2d8] sm:$0xff]
    %v648 = vld [vmem:[#allocation2 + $0x2e0] sm:$0xff]
    %v649 = vld [vmem:[#allocation2 + $0x2e8] sm:$0xff]
    %v650 = vld [vmem:[#allocation2 + $0x2f0] sm:$0xf]
    %v651 = vld [vmem:[#allocation2 + $0x2f4] sm:$0xff]
    %v652 = vld [vmem:[#allocation2 + $0x2fc] sm:$0xff]
    %v653 = vld [vmem:[#allocation2 + $0x304] sm:$0xff]
    %v654 = vld [vmem:[#allocation2 + $0x30c] sm:$0xf]
    %v655 = vld [vmem:[#allocation2 + $0x310] sm:$0xff]
    %v656 = vld [vmem:[#allocation2 + $0x318] sm:$0xff]
    %v657 = vld [vmem:[#allocation2 + $0x320] sm:$0xff]
    %v658 = vld [vmem:[#allocation2 + $0x328] sm:$0xf]
    %v659 = vld [vmem:[#allocation2 + $0x32c] sm:$0xff]
    %v660 = vld [vmem:[#allocation2 + $0x334] sm:$0xff]
    %v661 = vld [vmem:[#allocation2 + $0x33c] sm:$0xff]
    %v662 = vld [vmem:[#allocation2 + $0x344] sm:$0xf]
    %v663 = vld [vmem:[#allocation2 + $0x348] sm:$0xff]
    %v664 = vld [vmem:[#allocation2 + $0x350] sm:$0xff]
    %v665 = vld [vmem:[#allocation2 + $0x358] sm:$0xff]
    %v666 = vld [vmem:[#allocation2 + $0x360] sm:$0xf]
    %v667 = vld [vmem:[#allocation2 + $0x364] sm:$0xff]
    %v668 = vld [vmem:[#allocation2 + $0x36c] sm:$0xff]
    %v669 = vld [vmem:[#allocation2 + $0x374] sm:$0xff]
    %v670 = vld [vmem:[#allocation2 + $0x37c] sm:$0xf]
    %v671 = vld [vmem:[%s1] sm:$0xff]
    %v672 = vld [vmem:[%s1 + $0x8] sm:$0xff]
    %v673 = vld [vmem:[%s1 + $0x10] sm:$0xff]
    %v674 = vld [vmem:[%s1 + $0x18] sm:$0xff]
    %v675 = vld [vmem:[%s1 + $0x20] sm:$0xff]
    %v676 = vld [vmem:[%s1 + $0x28] sm:$0xff]
    %v677 = vld [vmem:[%s1 + $0x30] sm:$0xff]
    %v678 = vld [vmem:[%s1 + $0x38] sm:$0xff]
    %v679 = vld [vmem:[%s1 + $0x40] sm:$0xff]
    %v680 = vld [vmem:[%s1 + $0x48] sm:$0xff]
    %v681 = vld [vmem:[%s1 + $0x50] sm:$0xff]
    %v682 = vld [vmem:[%s1 + $0x58] sm:$0xff]
    %v683 = vld [vmem:[%s1 + $0x60] sm:$0xff]
    %v684 = vld [vmem:[%s1 + $0x68] sm:$0xff]
    %v685 = vld [vmem:[%s1 + $0x70] sm:$0xff]
    %v686 = vld [vmem:[%s1 + $0x78] sm:$0xff]
    %v687 = vld [vmem:[%s1 + $0x80] sm:$0xff]
    %v688 = vld [vmem:[%s1 + $0x88] sm:$0xff]
    %v689 = vld [vmem:[%s1 + $0x90] sm:$0xff]
    %v690 = vld [vmem:[%s1 + $0x98] sm:$0xff]
    %v691 = vld [vmem:[%s1 + $0xa0] sm:$0xff]
    %v692 = vld [vmem:[%s1 + $0xa8] sm:$0xff]
    %v693 = vld [vmem:[%s1 + $0xb0] sm:$0xff]
    %v694 = vld [vmem:[%s1 + $0xb8] sm:$0xff]
    %v695 = vld [vmem:[%s1 + $0xc0] sm:$0xff]
    %v696 = vld [vmem:[%s1 + $0xc8] sm:$0xff]
    %v697 = vld [vmem:[%s1 + $0xd0] sm:$0xff]
    %v698 = vld [vmem:[%s1 + $0xd8] sm:$0xff]
    %v699 = vld [vmem:[%s1 + $0xe0] sm:$0xff]
    %v700 = vld [vmem:[%s1 + $0xe8] sm:$0xff]
    %v701 = vld [vmem:[%s1 + $0xf0] sm:$0xff]
    %v702 = vld [vmem:[%s1 + $0xf8] sm:$0xff]
    %v703 = vld [vmem:[%s1 + $0x100] sm:$0xff]
    %v704 = vld [vmem:[%s1 + $0x108] sm:$0xff]
    %v705 = vld [vmem:[%s1 + $0x110] sm:$0xff]
    %v706 = vld [vmem:[%s1 + $0x118] sm:$0xff]
    %v707 = vld [vmem:[%s1 + $0x120] sm:$0xff]
    %v708 = vld [vmem:[%s1 + $0x128] sm:$0xff]
    %v709 = vld [vmem:[%s1 + $0x130] sm:$0xff]
    %v710 = vld [vmem:[%s1 + $0x138] sm:$0xff]
    %v711 = vld [vmem:[%s1 + $0x140] sm:$0xff]
    %v712 = vld [vmem:[%s1 + $0x148] sm:$0xff]
    %v713 = vld [vmem:[%s1 + $0x150] sm:$0xff]
    %v714 = vld [vmem:[%s1 + $0x158] sm:$0xff]
    %v715 = vld [vmem:[%s1 + $0x160] sm:$0xff]
    %v716 = vld [vmem:[%s1 + $0x168] sm:$0xff]
    %v717 = vld [vmem:[%s1 + $0x170] sm:$0xff]
    %v718 = vld [vmem:[%s1 + $0x178] sm:$0xff]
    %v719 = vld [vmem:[%s1 + $0x180] sm:$0xff]
    %v720 = vld [vmem:[%s1 + $0x188] sm:$0xff]
    %v721 = vld [vmem:[%s1 + $0x190] sm:$0xff]
    %v722 = vld [vmem:[%s1 + $0x198] sm:$0xff]
    %v723 = vld [vmem:[%s1 + $0x1a0] sm:$0xff]
    %v724 = vld [vmem:[%s1 + $0x1a8] sm:$0xff]
    %v725 = vld [vmem:[%s1 + $0x1b0] sm:$0xff]
    %v726 = vld [vmem:[%s1 + $0x1b8] sm:$0xff]
    %v727 = vld [vmem:[%s1 + $0x1c0] sm:$0xff]
    %v728 = vld [vmem:[%s1 + $0x1c8] sm:$0xff]
    %v729 = vld [vmem:[%s1 + $0x1d0] sm:$0xff]
    %v730 = vld [vmem:[%s1 + $0x1d8] sm:$0xff]
    %v731 = vld [vmem:[%s1 + $0x1e0] sm:$0xff]
    %v732 = vld [vmem:[%s1 + $0x1e8] sm:$0xff]
    %v733 = vld [vmem:[%s1 + $0x1f0] sm:$0xff]
    %v734 = vld [vmem:[%s1 + $0x1f8] sm:$0xff]
    %v735 = vld [vmem:[%s1 + $0x200] sm:$0xff]
    %v736 = vld [vmem:[%s1 + $0x208] sm:$0xff]
    %v737 = vld [vmem:[%s1 + $0x210] sm:$0xff]
    %v738 = vld [vmem:[%s1 + $0x218] sm:$0xff]
    %v739 = vld [vmem:[%s1 + $0x220] sm:$0xff]
    %v740 = vld [vmem:[%s1 + $0x228] sm:$0xff]
    %v741 = vld [vmem:[%s1 + $0x230] sm:$0xff]
    %v742 = vld [vmem:[%s1 + $0x238] sm:$0xff]
    %v743 = vld [vmem:[%s1 + $0x240] sm:$0xff]
    %v744 = vld [vmem:[%s1 + $0x248] sm:$0xff]
    %v745 = vld [vmem:[%s1 + $0x250] sm:$0xff]
    %v746 = vld [vmem:[%s1 + $0x258] sm:$0xff]
    %v747 = vld [vmem:[%s1 + $0x260] sm:$0xff]
    %v748 = vld [vmem:[%s1 + $0x268] sm:$0xff]
    %v749 = vld [vmem:[%s1 + $0x270] sm:$0xff]
    %v750 = vld [vmem:[%s1 + $0x278] sm:$0xff]
    %v751 = vld [vmem:[%s1 + $0x280] sm:$0xff]
    %v752 = vld [vmem:[%s1 + $0x288] sm:$0xff]
    %v753 = vld [vmem:[%s1 + $0x290] sm:$0xff]
    %v754 = vld [vmem:[%s1 + $0x298] sm:$0xff]
    %v755 = vld [vmem:[%s1 + $0x2a0] sm:$0xff]
    %v756 = vld [vmem:[%s1 + $0x2a8] sm:$0xff]
    %v757 = vld [vmem:[%s1 + $0x2b0] sm:$0xff]
    %v758 = vld [vmem:[%s1 + $0x2b8] sm:$0xff]
    %v759 = vld [vmem:[%s1 + $0x2c0] sm:$0xff]
    %v760 = vld [vmem:[%s1 + $0x2c8] sm:$0xff]
    %v761 = vld [vmem:[%s1 + $0x2d0] sm:$0xff]
    %v762 = vld [vmem:[%s1 + $0x2d8] sm:$0xff]
    %v763 = vld [vmem:[%s1 + $0x2e0] sm:$0xff]
    %v764 = vld [vmem:[%s1 + $0x2e8] sm:$0xff]
    %v765 = vld [vmem:[%s1 + $0x2f0] sm:$0xff]
    %v766 = vld [vmem:[%s1 + $0x2f8] sm:$0xff]
    %v767 = vld [vmem:[%s1 + $0x300] sm:$0xff]
    %v768 = vld [vmem:[%s1 + $0x308] sm:$0xff]
    %v769 = vld [vmem:[%s1 + $0x310] sm:$0xff]
    %v770 = vld [vmem:[%s1 + $0x318] sm:$0xff]
    %v771 = vld [vmem:[%s1 + $0x320] sm:$0xff]
    %v772 = vld [vmem:[%s1 + $0x328] sm:$0xff]
    %v773 = vld [vmem:[%s1 + $0x330] sm:$0xff]
    %v774 = vld [vmem:[%s1 + $0x338] sm:$0xff]
    %v775 = vld [vmem:[%s1 + $0x340] sm:$0xff]
    %v776 = vld [vmem:[%s1 + $0x348] sm:$0xff]
    %v777 = vld [vmem:[%s1 + $0x350] sm:$0xff]
    %v778 = vld [vmem:[%s1 + $0x358] sm:$0xff]
    %v779 = vld [vmem:[%s1 + $0x360] sm:$0xff]
    %v780 = vld [vmem:[%s1 + $0x368] sm:$0xff]
    %v781 = vld [vmem:[%s1 + $0x370] sm:$0xff]
    %v782 = vld [vmem:[%s1 + $0x378] sm:$0xff]
    %v783 = vld [vmem:[%s1 + $0x380] sm:$0xff]
    %v784 = vld [vmem:[%s1 + $0x388] sm:$0xff]
    %v785 = vld [vmem:[%s1 + $0x390] sm:$0xff]
    %v786 = vld [vmem:[%s1 + $0x398] sm:$0xff]
    %v787 = vld [vmem:[%s1 + $0x3a0] sm:$0xff]
    %v788 = vld [vmem:[%s1 + $0x3a8] sm:$0xff]
    %v789 = vld [vmem:[%s1 + $0x3b0] sm:$0xff]
    %v790 = vld [vmem:[%s1 + $0x3b8] sm:$0xff]
    %v791 = vld [vmem:[%s1 + $0x3c0] sm:$0xff]
    %v792 = vld [vmem:[%s1 + $0x3c8] sm:$0xff]
    %v793 = vld [vmem:[%s1 + $0x3d0] sm:$0xff]
    %v794 = vld [vmem:[%s1 + $0x3d8] sm:$0xff]
    %v795 = vld [vmem:[%s1 + $0x3e0] sm:$0xff]
    %v796 = vld [vmem:[%s1 + $0x3e8] sm:$0xff]
    %v797 = vld [vmem:[%s1 + $0x3f0] sm:$0xff]
    %v798 = vld [vmem:[%s1 + $0x3f8] sm:$0xff]
    %v799 = vld [vmem:[%s1 + $0x400] sm:$0xff]
    %v800 = vld [vmem:[%s1 + $0x408] sm:$0xff]
    %v801 = vld [vmem:[%s1 + $0x410] sm:$0xff]
    %v802 = vld [vmem:[%s1 + $0x418] sm:$0xff]
    %v803 = vld [vmem:[%s1 + $0x420] sm:$0xff]
    %v804 = vld [vmem:[%s1 + $0x428] sm:$0xff]
    %v805 = vld [vmem:[%s1 + $0x430] sm:$0xff]
    %v806 = vld [vmem:[%s1 + $0x438] sm:$0xff]
    %v807 = vld [vmem:[%s1 + $0x440] sm:$0xff]
    %v808 = vld [vmem:[%s1 + $0x448] sm:$0xff]
    %v809 = vld [vmem:[%s1 + $0x450] sm:$0xff]
    %v810 = vld [vmem:[%s1 + $0x458] sm:$0xff]
    %v811 = vld [vmem:[%s1 + $0x460] sm:$0xff]
    %v812 = vld [vmem:[%s1 + $0x468] sm:$0xff]
    %v813 = vld [vmem:[%s1 + $0x470] sm:$0xff]
    %v814 = vld [vmem:[%s1 + $0x478] sm:$0xff]
    %v815 = vld [vmem:[%s1 + $0x480] sm:$0xff]
    %v816 = vld [vmem:[%s1 + $0x488] sm:$0xff]
    %v817 = vld [vmem:[%s1 + $0x490] sm:$0xff]
    %v818 = vld [vmem:[%s1 + $0x498] sm:$0xff]
    %v819 = vld [vmem:[%s1 + $0x4a0] sm:$0xff]
    %v820 = vld [vmem:[%s1 + $0x4a8] sm:$0xff]
    %v821 = vld [vmem:[%s1 + $0x4b0] sm:$0xff]
    %v822 = vld [vmem:[%s1 + $0x4b8] sm:$0xff]
    %v823 = vld [vmem:[%s1 + $0x4c0] sm:$0xff]
    %v824 = vld [vmem:[%s1 + $0x4c8] sm:$0xff]
    %v825 = vld [vmem:[%s1 + $0x4d0] sm:$0xff]
    %v826 = vld [vmem:[%s1 + $0x4d8] sm:$0xff]
    %v827 = vld [vmem:[%s1 + $0x4e0] sm:$0xff]
    %v828 = vld [vmem:[%s1 + $0x4e8] sm:$0xff]
    %v829 = vld [vmem:[%s1 + $0x4f0] sm:$0xff]
    %v830 = vld [vmem:[%s1 + $0x4f8] sm:$0xff]
    %v831 = vld [vmem:[%s1 + $0x500] sm:$0xff]
    %v832 = vld [vmem:[%s1 + $0x508] sm:$0xff]
    %v833 = vld [vmem:[%s1 + $0x510] sm:$0xff]
    %v834 = vld [vmem:[%s1 + $0x518] sm:$0xff]
    %v835 = vld [vmem:[%s1 + $0x520] sm:$0xff]
    %v836 = vld [vmem:[%s1 + $0x528] sm:$0xff]
    %v837 = vld [vmem:[%s1 + $0x530] sm:$0xff]
    %v838 = vld [vmem:[%s1 + $0x538] sm:$0xff]
    %v839 = vld [vmem:[%s1 + $0x540] sm:$0xff]
    %v840 = vld [vmem:[%s1 + $0x548] sm:$0xff]
    %v841 = vld [vmem:[%s1 + $0x550] sm:$0xff]
    %v842 = vld [vmem:[%s1 + $0x558] sm:$0xff]
    %v843 = vld [vmem:[%s1 + $0x560] sm:$0xff]
    %v844 = vld [vmem:[%s1 + $0x568] sm:$0xff]
    %v845 = vld [vmem:[%s1 + $0x570] sm:$0xff]
    %v846 = vld [vmem:[%s1 + $0x578] sm:$0xff]
    %v847 = vld [vmem:[%s1 + $0x580] sm:$0xff]
    %v848 = vld [vmem:[%s1 + $0x588] sm:$0xff]
    %v849 = vld [vmem:[%s1 + $0x590] sm:$0xff]
    %v850 = vld [vmem:[%s1 + $0x598] sm:$0xff]
    %v851 = vld [vmem:[%s1 + $0x5a0] sm:$0xff]
    %v852 = vld [vmem:[%s1 + $0x5a8] sm:$0xff]
    %v853 = vld [vmem:[%s1 + $0x5b0] sm:$0xff]
    %v854 = vld [vmem:[%s1 + $0x5b8] sm:$0xff]
    %v855 = vld [vmem:[%s1 + $0x5c0] sm:$0xff]
    %v856 = vld [vmem:[%s1 + $0x5c8] sm:$0xff]
    %v857 = vld [vmem:[%s1 + $0x5d0] sm:$0xff]
    %v858 = vld [vmem:[%s1 + $0x5d8] sm:$0xff]
    %v859 = vld [vmem:[%s1 + $0x5e0] sm:$0xff]
    %v860 = vld [vmem:[%s1 + $0x5e8] sm:$0xff]
    %v861 = vld [vmem:[%s1 + $0x5f0] sm:$0xff]
    %v862 = vld [vmem:[%s1 + $0x5f8] sm:$0xff]
    %v863 = vld [vmem:[%s1 + $0x600] sm:$0xff]
    %v864 = vld [vmem:[%s1 + $0x608] sm:$0xff]
    %v865 = vld [vmem:[%s1 + $0x610] sm:$0xff]
    %v866 = vld [vmem:[%s1 + $0x618] sm:$0xff]
    %v867 = vld [vmem:[%s1 + $0x620] sm:$0xff]
    %v868 = vld [vmem:[%s1 + $0x628] sm:$0xff]
    %v869 = vld [vmem:[%s1 + $0x630] sm:$0xff]
    %v870 = vld [vmem:[%s1 + $0x638] sm:$0xff]
    %v871 = vld [vmem:[%s1 + $0x640] sm:$0xff]
    %v872 = vld [vmem:[%s1 + $0x648] sm:$0xff]
    %v873 = vld [vmem:[%s1 + $0x650] sm:$0xff]
    %v874 = vld [vmem:[%s1 + $0x658] sm:$0xff]
    %v875 = vld [vmem:[%s1 + $0x660] sm:$0xff]
    %v876 = vld [vmem:[%s1 + $0x668] sm:$0xff]
    %v877 = vld [vmem:[%s1 + $0x670] sm:$0xff]
    %v878 = vld [vmem:[%s1 + $0x678] sm:$0xff]
    %v879 = vld [vmem:[%s1 + $0x680] sm:$0xff]
    %v880 = vld [vmem:[%s1 + $0x688] sm:$0xff]
    %v881 = vld [vmem:[%s1 + $0x690] sm:$0xff]
    %v882 = vld [vmem:[%s1 + $0x698] sm:$0xff]
    %v883 = vld [vmem:[%s1 + $0x6a0] sm:$0xff]
    %v884 = vld [vmem:[%s1 + $0x6a8] sm:$0xff]
    %v885 = vld [vmem:[%s1 + $0x6b0] sm:$0xff]
    %v886 = vld [vmem:[%s1 + $0x6b8] sm:$0xff]
    %v887 = vld [vmem:[%s1 + $0x6c0] sm:$0xff]
    %v888 = vld [vmem:[%s1 + $0x6c8] sm:$0xff]
    %v889 = vld [vmem:[%s1 + $0x6d0] sm:$0xff]
    %v890 = vld [vmem:[%s1 + $0x6d8] sm:$0xff]
    %v891 = vld [vmem:[%s1 + $0x6e0] sm:$0xff]
    %v892 = vld [vmem:[%s1 + $0x6e8] sm:$0xff]
    %v893 = vld [vmem:[%s1 + $0x6f0] sm:$0xff]
    %v894 = vld [vmem:[%s1 + $0x6f8] sm:$0xff]
    %v1023 = vunpack.c.l.b16 %v543
    %v1024 = vunpack.c.h.b16 %v543
    %v1025 = vunpack.c.l.b16 %v544
    %v1026 = vunpack.c.h.b16 %v544
    %v1027 = vunpack.c.l.b16 %v545
    %v1028 = vunpack.c.h.b16 %v545
    %v1029 = vunpack.c.l.b16 %v546
    %v1030 = vunpack.c.l.b16 %v547
    %v1031 = vunpack.c.h.b16 %v547
    %v1032 = vunpack.c.l.b16 %v548
    %v1033 = vunpack.c.h.b16 %v548
    %v1034 = vunpack.c.l.b16 %v549
    %v1035 = vunpack.c.h.b16 %v549
    %v1036 = vunpack.c.l.b16 %v550
    %v1037 = vunpack.c.l.b16 %v551
    %v1038 = vunpack.c.h.b16 %v551
    %v1039 = vunpack.c.l.b16 %v552
    %v1040 = vunpack.c.h.b16 %v552
    %v1041 = vunpack.c.l.b16 %v553
    %v1042 = vunpack.c.h.b16 %v553
    %v1043 = vunpack.c.l.b16 %v554
    %v1044 = vunpack.c.l.b16 %v555
    %v1045 = vunpack.c.h.b16 %v555
    %v1046 = vunpack.c.l.b16 %v556
    %v1047 = vunpack.c.h.b16 %v556
    %v1048 = vunpack.c.l.b16 %v557
    %v1049 = vunpack.c.h.b16 %v557
    %v1050 = vunpack.c.l.b16 %v558
    %v1051 = vunpack.c.l.b16 %v559
    %v1052 = vunpack.c.h.b16 %v559
    %v1053 = vunpack.c.l.b16 %v560
    %v1054 = vunpack.c.h.b16 %v560
    %v1055 = vunpack.c.l.b16 %v561
    %v1056 = vunpack.c.h.b16 %v561
    %v1057 = vunpack.c.l.b16 %v562
    %v1058 = vunpack.c.l.b16 %v563
    %v1059 = vunpack.c.h.b16 %v563
    %v1060 = vunpack.c.l.b16 %v564
    %v1061 = vunpack.c.h.b16 %v564
    %v1062 = vunpack.c.l.b16 %v565
    %v1063 = vunpack.c.h.b16 %v565
    %v1064 = vunpack.c.l.b16 %v566
    %v1065 = vunpack.c.l.b16 %v567
    %v1066 = vunpack.c.h.b16 %v567
    %v1067 = vunpack.c.l.b16 %v568
    %v1068 = vunpack.c.h.b16 %v568
    %v1069 = vunpack.c.l.b16 %v569
    %v1070 = vunpack.c.h.b16 %v569
    %v1071 = vunpack.c.l.b16 %v570
    %v1072 = vunpack.c.l.b16 %v571
    %v1073 = vunpack.c.h.b16 %v571
    %v1074 = vunpack.c.l.b16 %v572
    %v1075 = vunpack.c.h.b16 %v572
    %v1076 = vunpack.c.l.b16 %v573
    %v1077 = vunpack.c.h.b16 %v573
    %v1078 = vunpack.c.l.b16 %v574
    %v1079 = vunpack.c.l.b16 %v575
    %v1080 = vunpack.c.h.b16 %v575
    %v1081 = vunpack.c.l.b16 %v576
    %v1082 = vunpack.c.h.b16 %v576
    %v1083 = vunpack.c.l.b16 %v577
    %v1084 = vunpack.c.h.b16 %v577
    %v1085 = vunpack.c.l.b16 %v578
    %v1086 = vunpack.c.l.b16 %v579
    %v1087 = vunpack.c.h.b16 %v579
    %v1088 = vunpack.c.l.b16 %v580
    %v1089 = vunpack.c.h.b16 %v580
    %v1090 = vunpack.c.l.b16 %v581
    %v1091 = vunpack.c.h.b16 %v581
    %v1092 = vunpack.c.l.b16 %v582
    %v1093 = vunpack.c.l.b16 %v583
    %v1094 = vunpack.c.h.b16 %v583
    %v1095 = vunpack.c.l.b16 %v584
    %v1096 = vunpack.c.h.b16 %v584
    %v1097 = vunpack.c.l.b16 %v585
    %v1098 = vunpack.c.h.b16 %v585
    %v1099 = vunpack.c.l.b16 %v586
    %v1100 = vunpack.c.l.b16 %v587
    %v1101 = vunpack.c.h.b16 %v587
    %v1102 = vunpack.c.l.b16 %v588
    %v1103 = vunpack.c.h.b16 %v588
    %v1104 = vunpack.c.l.b16 %v589
    %v1105 = vunpack.c.h.b16 %v589
    %v1106 = vunpack.c.l.b16 %v590
    %v1107 = vunpack.c.l.b16 %v591
    %v1108 = vunpack.c.h.b16 %v591
    %v1109 = vunpack.c.l.b16 %v592
    %v1110 = vunpack.c.h.b16 %v592
    %v1111 = vunpack.c.l.b16 %v593
    %v1112 = vunpack.c.h.b16 %v593
    %v1113 = vunpack.c.l.b16 %v594
    %v1114 = vunpack.c.l.b16 %v595
    %v1115 = vunpack.c.h.b16 %v595
    %v1116 = vunpack.c.l.b16 %v596
    %v1117 = vunpack.c.h.b16 %v596
    %v1118 = vunpack.c.l.b16 %v597
    %v1119 = vunpack.c.h.b16 %v597
    %v1120 = vunpack.c.l.b16 %v598
    %v1121 = vunpack.c.l.b16 %v599
    %v1122 = vunpack.c.h.b16 %v599
    %v1123 = vunpack.c.l.b16 %v600
    %v1124 = vunpack.c.h.b16 %v600
    %v1125 = vunpack.c.l.b16 %v601
    %v1126 = vunpack.c.h.b16 %v601
    %v1127 = vunpack.c.l.b16 %v602
    %v1128 = vunpack.c.l.b16 %v603
    %v1129 = vunpack.c.h.b16 %v603
    %v1130 = vunpack.c.l.b16 %v604
    %v1131 = vunpack.c.h.b16 %v604
    %v1132 = vunpack.c.l.b16 %v605
    %v1133 = vunpack.c.h.b16 %v605
    %v1134 = vunpack.c.l.b16 %v606
    %v1135 = vunpack.c.l.b16 %v607
    %v1136 = vunpack.c.h.b16 %v607
    %v1137 = vunpack.c.l.b16 %v608
    %v1138 = vunpack.c.h.b16 %v608
    %v1139 = vunpack.c.l.b16 %v609
    %v1140 = vunpack.c.h.b16 %v609
    %v1141 = vunpack.c.l.b16 %v610
    %v1142 = vunpack.c.l.b16 %v611
    %v1143 = vunpack.c.h.b16 %v611
    %v1144 = vunpack.c.l.b16 %v612
    %v1145 = vunpack.c.h.b16 %v612
    %v1146 = vunpack.c.l.b16 %v613
    %v1147 = vunpack.c.h.b16 %v613
    %v1148 = vunpack.c.l.b16 %v614
    %v1149 = vunpack.c.l.b16 %v615
    %v1150 = vunpack.c.h.b16 %v615
    %v1151 = vunpack.c.l.b16 %v616
    %v1152 = vunpack.c.h.b16 %v616
    %v1153 = vunpack.c.l.b16 %v617
    %v1154 = vunpack.c.h.b16 %v617
    %v1155 = vunpack.c.l.b16 %v618
    %v1156 = vunpack.c.l.b16 %v619
    %v1157 = vunpack.c.h.b16 %v619
    %v1158 = vunpack.c.l.b16 %v620
    %v1159 = vunpack.c.h.b16 %v620
    %v1160 = vunpack.c.l.b16 %v621
    %v1161 = vunpack.c.h.b16 %v621
    %v1162 = vunpack.c.l.b16 %v622
    %v1163 = vunpack.c.l.b16 %v623
    %v1164 = vunpack.c.h.b16 %v623
    %v1165 = vunpack.c.l.b16 %v624
    %v1166 = vunpack.c.h.b16 %v624
    %v1167 = vunpack.c.l.b16 %v625
    %v1168 = vunpack.c.h.b16 %v625
    %v1169 = vunpack.c.l.b16 %v626
    %v1170 = vunpack.c.l.b16 %v627
    %v1171 = vunpack.c.h.b16 %v627
    %v1172 = vunpack.c.l.b16 %v628
    %v1173 = vunpack.c.h.b16 %v628
    %v1174 = vunpack.c.l.b16 %v629
    %v1175 = vunpack.c.h.b16 %v629
    %v1176 = vunpack.c.l.b16 %v630
    %v1177 = vunpack.c.l.b16 %v631
    %v1178 = vunpack.c.h.b16 %v631
    %v1179 = vunpack.c.l.b16 %v632
    %v1180 = vunpack.c.h.b16 %v632
    %v1181 = vunpack.c.l.b16 %v633
    %v1182 = vunpack.c.h.b16 %v633
    %v1183 = vunpack.c.l.b16 %v634
    %v1184 = vunpack.c.l.b16 %v635
    %v1185 = vunpack.c.h.b16 %v635
    %v1186 = vunpack.c.l.b16 %v636
    %v1187 = vunpack.c.h.b16 %v636
    %v1188 = vunpack.c.l.b16 %v637
    %v1189 = vunpack.c.h.b16 %v637
    %v1190 = vunpack.c.l.b16 %v638
    %v1191 = vunpack.c.l.b16 %v639
    %v1192 = vunpack.c.h.b16 %v639
    %v1193 = vunpack.c.l.b16 %v640
    %v1194 = vunpack.c.h.b16 %v640
    %v1195 = vunpack.c.l.b16 %v641
    %v1196 = vunpack.c.h.b16 %v641
    %v1197 = vunpack.c.l.b16 %v642
    %v1198 = vunpack.c.l.b16 %v643
    %v1199 = vunpack.c.h.b16 %v643
    %v1200 = vunpack.c.l.b16 %v644
    %v1201 = vunpack.c.h.b16 %v644
    %v1202 = vunpack.c.l.b16 %v645
    %v1203 = vunpack.c.h.b16 %v645
    %v1204 = vunpack.c.l.b16 %v646
    %v1205 = vunpack.c.l.b16 %v647
    %v1206 = vunpack.c.h.b16 %v647
    %v1207 = vunpack.c.l.b16 %v648
    %v1208 = vunpack.c.h.b16 %v648
    %v1209 = vunpack.c.l.b16 %v649
    %v1210 = vunpack.c.h.b16 %v649
    %v1211 = vunpack.c.l.b16 %v650
    %v1212 = vunpack.c.l.b16 %v651
    %v1213 = vunpack.c.h.b16 %v651
    %v1214 = vunpack.c.l.b16 %v652
    %v1215 = vunpack.c.h.b16 %v652
    %v1216 = vunpack.c.l.b16 %v653
    %v1217 = vunpack.c.h.b16 %v653
    %v1218 = vunpack.c.l.b16 %v654
    %v1219 = vunpack.c.l.b16 %v655
    %v1220 = vunpack.c.h.b16 %v655
    %v1221 = vunpack.c.l.b16 %v656
    %v1222 = vunpack.c.h.b16 %v656
    %v1223 = vunpack.c.l.b16 %v657
    %v1224 = vunpack.c.h.b16 %v657
    %v1225 = vunpack.c.l.b16 %v658
    %v1226 = vunpack.c.l.b16 %v659
    %v1227 = vunpack.c.h.b16 %v659
    %v1228 = vunpack.c.l.b16 %v660
    %v1229 = vunpack.c.h.b16 %v660
    %v1230 = vunpack.c.l.b16 %v661
    %v1231 = vunpack.c.h.b16 %v661
    %v1232 = vunpack.c.l.b16 %v662
    %v1233 = vunpack.c.l.b16 %v663
    %v1234 = vunpack.c.h.b16 %v663
    %v1235 = vunpack.c.l.b16 %v664
    %v1236 = vunpack.c.h.b16 %v664
    %v1237 = vunpack.c.l.b16 %v665
    %v1238 = vunpack.c.h.b16 %v665
    %v1239 = vunpack.c.l.b16 %v666
    %v1240 = vunpack.c.l.b16 %v667
    %v1241 = vunpack.c.h.b16 %v667
    %v1242 = vunpack.c.l.b16 %v668
    %v1243 = vunpack.c.h.b16 %v668
    %v1244 = vunpack.c.l.b16 %v669
    %v1245 = vunpack.c.h.b16 %v669
    %v1246 = vunpack.c.l.b16 %v670
    %v1247 = vpack.c.b16 %v1030, %v1023
    %v1248 = vpack.c.b16 %v1031, %v1024
    %v1249 = vpack.c.b16 %v1032, %v1025
    %v1250 = vpack.c.b16 %v1033, %v1026
    %v1251 = vpack.c.b16 %v1034, %v1027
    %v1252 = vpack.c.b16 %v1035, %v1028
    %v1253 = vpack.c.b16 %v1036, %v1029
    %v1254 = vpack.c.b16 %v1044, %v1037
    %v1255 = vpack.c.b16 %v1045, %v1038
    %v1256 = vpack.c.b16 %v1046, %v1039
    %v1257 = vpack.c.b16 %v1047, %v1040
    %v1258 = vpack.c.b16 %v1048, %v1041
    %v1259 = vpack.c.b16 %v1049, %v1042
    %v1260 = vpack.c.b16 %v1050, %v1043
    %v1261 = vpack.c.b16 %v1058, %v1051
    %v1262 = vpack.c.b16 %v1059, %v1052
    %v1263 = vpack.c.b16 %v1060, %v1053
    %v1264 = vpack.c.b16 %v1061, %v1054
    %v1265 = vpack.c.b16 %v1062, %v1055
    %v1266 = vpack.c.b16 %v1063, %v1056
    %v1267 = vpack.c.b16 %v1064, %v1057
    %v1268 = vpack.c.b16 %v1072, %v1065
    %v1269 = vpack.c.b16 %v1073, %v1066
    %v1270 = vpack.c.b16 %v1074, %v1067
    %v1271 = vpack.c.b16 %v1075, %v1068
    %v1272 = vpack.c.b16 %v1076, %v1069
    %v1273 = vpack.c.b16 %v1077, %v1070
    %v1274 = vpack.c.b16 %v1078, %v1071
    %v1275 = vpack.c.b16 %v1086, %v1079
    %v1276 = vpack.c.b16 %v1087, %v1080
    %v1277 = vpack.c.b16 %v1088, %v1081
    %v1278 = vpack.c.b16 %v1089, %v1082
    %v1279 = vpack.c.b16 %v1090, %v1083
    %v1280 = vpack.c.b16 %v1091, %v1084
    %v1281 = vpack.c.b16 %v1092, %v1085
    %v1282 = vpack.c.b16 %v1100, %v1093
    %v1283 = vpack.c.b16 %v1101, %v1094
    %v1284 = vpack.c.b16 %v1102, %v1095
    %v1285 = vpack.c.b16 %v1103, %v1096
    %v1286 = vpack.c.b16 %v1104, %v1097
    %v1287 = vpack.c.b16 %v1105, %v1098
    %v1288 = vpack.c.b16 %v1106, %v1099
    %v1289 = vpack.c.b16 %v1114, %v1107
    %v1290 = vpack.c.b16 %v1115, %v1108
    %v1291 = vpack.c.b16 %v1116, %v1109
    %v1292 = vpack.c.b16 %v1117, %v1110
    %v1293 = vpack.c.b16 %v1118, %v1111
    %v1294 = vpack.c.b16 %v1119, %v1112
    %v1295 = vpack.c.b16 %v1120, %v1113
    %v1296 = vpack.c.b16 %v1128, %v1121
    %v1297 = vpack.c.b16 %v1129, %v1122
    %v1298 = vpack.c.b16 %v1130, %v1123
    %v1299 = vpack.c.b16 %v1131, %v1124
    %v1300 = vpack.c.b16 %v1132, %v1125
    %v1301 = vpack.c.b16 %v1133, %v1126
    %v1302 = vpack.c.b16 %v1134, %v1127
    %v1303 = vpack.c.b16 %v1142, %v1135
    %v1304 = vpack.c.b16 %v1143, %v1136
    %v1305 = vpack.c.b16 %v1144, %v1137
    %v1306 = vpack.c.b16 %v1145, %v1138
    %v1307 = vpack.c.b16 %v1146, %v1139
    %v1308 = vpack.c.b16 %v1147, %v1140
    %v1309 = vpack.c.b16 %v1148, %v1141
    %v1310 = vpack.c.b16 %v1156, %v1149
    %v1311 = vpack.c.b16 %v1157, %v1150
    %v1312 = vpack.c.b16 %v1158, %v1151
    %v1313 = vpack.c.b16 %v1159, %v1152
    %v1314 = vpack.c.b16 %v1160, %v1153
    %v1315 = vpack.c.b16 %v1161, %v1154
    %v1316 = vpack.c.b16 %v1162, %v1155
    %v1317 = vpack.c.b16 %v1170, %v1163
    %v1318 = vpack.c.b16 %v1171, %v1164
    %v1319 = vpack.c.b16 %v1172, %v1165
    %v1320 = vpack.c.b16 %v1173, %v1166
    %v1321 = vpack.c.b16 %v1174, %v1167
    %v1322 = vpack.c.b16 %v1175, %v1168
    %v1323 = vpack.c.b16 %v1176, %v1169
    %v1324 = vpack.c.b16 %v1184, %v1177
    %v1325 = vpack.c.b16 %v1185, %v1178
    %v1326 = vpack.c.b16 %v1186, %v1179
    %v1327 = vpack.c.b16 %v1187, %v1180
    %v1328 = vpack.c.b16 %v1188, %v1181
    %v1329 = vpack.c.b16 %v1189, %v1182
    %v1330 = vpack.c.b16 %v1190, %v1183
    %v1331 = vpack.c.b16 %v1198, %v1191
    %v1332 = vpack.c.b16 %v1199, %v1192
    %v1333 = vpack.c.b16 %v1200, %v1193
    %v1334 = vpack.c.b16 %v1201, %v1194
    %v1335 = vpack.c.b16 %v1202, %v1195
    %v1336 = vpack.c.b16 %v1203, %v1196
    %v1337 = vpack.c.b16 %v1204, %v1197
    %v1338 = vpack.c.b16 %v1212, %v1205
    %v1339 = vpack.c.b16 %v1213, %v1206
    %v1340 = vpack.c.b16 %v1214, %v1207
    %v1341 = vpack.c.b16 %v1215, %v1208
    %v1342 = vpack.c.b16 %v1216, %v1209
    %v1343 = vpack.c.b16 %v1217, %v1210
    %v1344 = vpack.c.b16 %v1218, %v1211
    %v1345 = vpack.c.b16 %v1226, %v1219
    %v1346 = vpack.c.b16 %v1227, %v1220
    %v1347 = vpack.c.b16 %v1228, %v1221
    %v1348 = vpack.c.b16 %v1229, %v1222
    %v1349 = vpack.c.b16 %v1230, %v1223
    %v1350 = vpack.c.b16 %v1231, %v1224
    %v1351 = vpack.c.b16 %v1232, %v1225
    %v1352 = vpack.c.b16 %v1240, %v1233
    %v1353 = vpack.c.b16 %v1241, %v1234
    %v1354 = vpack.c.b16 %v1242, %v1235
    %v1355 = vpack.c.b16 %v1243, %v1236
    %v1356 = vpack.c.b16 %v1244, %v1237
    %v1357 = vpack.c.b16 %v1245, %v1238
    %v1358 = vpack.c.b16 %v1246, %v1239
    %v1695 = vunpack.c.l.b16 %v671
    %v1696 = vunpack.c.h.b16 %v671
    %v1697 = vunpack.c.l.b16 %v672
    %v1698 = vunpack.c.h.b16 %v672
    %v1699 = vunpack.c.l.b16 %v673
    %v1700 = vunpack.c.h.b16 %v673
    %v1701 = vunpack.c.l.b16 %v674
    %v1702 = vunpack.c.h.b16 %v674
    %v1703 = vunpack.c.l.b16 %v675
    %v1704 = vunpack.c.h.b16 %v675
    %v1705 = vunpack.c.l.b16 %v676
    %v1706 = vunpack.c.h.b16 %v676
    %v1707 = vunpack.c.l.b16 %v677
    %v1708 = vunpack.c.h.b16 %v677
    %v1709 = vunpack.c.l.b16 %v678
    %v1710 = vunpack.c.h.b16 %v678
    %v1711 = vunpack.c.l.b16 %v679
    %v1712 = vunpack.c.h.b16 %v679
    %v1713 = vunpack.c.l.b16 %v680
    %v1714 = vunpack.c.h.b16 %v680
    %v1715 = vunpack.c.l.b16 %v681
    %v1716 = vunpack.c.h.b16 %v681
    %v1717 = vunpack.c.l.b16 %v682
    %v1718 = vunpack.c.h.b16 %v682
    %v1719 = vunpack.c.l.b16 %v683
    %v1720 = vunpack.c.h.b16 %v683
    %v1721 = vunpack.c.l.b16 %v684
    %v1722 = vunpack.c.h.b16 %v684
    %v1723 = vunpack.c.l.b16 %v685
    %v1724 = vunpack.c.h.b16 %v685
    %v1725 = vunpack.c.l.b16 %v686
    %v1726 = vunpack.c.h.b16 %v686
    %v1727 = vunpack.c.l.b16 %v687
    %v1728 = vunpack.c.h.b16 %v687
    %v1729 = vunpack.c.l.b16 %v688
    %v1730 = vunpack.c.h.b16 %v688
    %v1731 = vunpack.c.l.b16 %v689
    %v1732 = vunpack.c.h.b16 %v689
    %v1733 = vunpack.c.l.b16 %v690
    %v1734 = vunpack.c.h.b16 %v690
    %v1735 = vunpack.c.l.b16 %v691
    %v1736 = vunpack.c.h.b16 %v691
    %v1737 = vunpack.c.l.b16 %v692
    %v1738 = vunpack.c.h.b16 %v692
    %v1739 = vunpack.c.l.b16 %v693
    %v1740 = vunpack.c.h.b16 %v693
    %v1741 = vunpack.c.l.b16 %v694
    %v1742 = vunpack.c.h.b16 %v694
    %v1743 = vunpack.c.l.b16 %v695
    %v1744 = vunpack.c.h.b16 %v695
    %v1745 = vunpack.c.l.b16 %v696
    %v1746 = vunpack.c.h.b16 %v696
    %v1747 = vunpack.c.l.b16 %v697
    %v1748 = vunpack.c.h.b16 %v697
    %v1749 = vunpack.c.l.b16 %v698
    %v1750 = vunpack.c.h.b16 %v698
    %v1751 = vunpack.c.l.b16 %v699
    %v1752 = vunpack.c.h.b16 %v699
    %v1753 = vunpack.c.l.b16 %v700
    %v1754 = vunpack.c.h.b16 %v700
    %v1755 = vunpack.c.l.b16 %v701
    %v1756 = vunpack.c.h.b16 %v701
    %v1757 = vunpack.c.l.b16 %v702
    %v1758 = vunpack.c.h.b16 %v702
    %v1759 = vunpack.c.l.b16 %v703
    %v1760 = vunpack.c.h.b16 %v703
    %v1761 = vunpack.c.l.b16 %v704
    %v1762 = vunpack.c.h.b16 %v704
    %v1763 = vunpack.c.l.b16 %v705
    %v1764 = vunpack.c.h.b16 %v705
    %v1765 = vunpack.c.l.b16 %v706
    %v1766 = vunpack.c.h.b16 %v706
    %v1767 = vunpack.c.l.b16 %v707
    %v1768 = vunpack.c.h.b16 %v707
    %v1769 = vunpack.c.l.b16 %v708
    %v1770 = vunpack.c.h.b16 %v708
    %v1771 = vunpack.c.l.b16 %v709
    %v1772 = vunpack.c.h.b16 %v709
    %v1773 = vunpack.c.l.b16 %v710
    %v1774 = vunpack.c.h.b16 %v710
    %v1775 = vunpack.c.l.b16 %v711
    %v1776 = vunpack.c.h.b16 %v711
    %v1777 = vunpack.c.l.b16 %v712
    %v1778 = vunpack.c.h.b16 %v712
    %v1779 = vunpack.c.l.b16 %v713
    %v1780 = vunpack.c.h.b16 %v713
    %v1781 = vunpack.c.l.b16 %v714
    %v1782 = vunpack.c.h.b16 %v714
    %v1783 = vunpack.c.l.b16 %v715
    %v1784 = vunpack.c.h.b16 %v715
    %v1785 = vunpack.c.l.b16 %v716
    %v1786 = vunpack.c.h.b16 %v716
    %v1787 = vunpack.c.l.b16 %v717
    %v1788 = vunpack.c.h.b16 %v717
    %v1789 = vunpack.c.l.b16 %v718
    %v1790 = vunpack.c.h.b16 %v718
    %v1791 = vunpack.c.l.b16 %v719
    %v1792 = vunpack.c.h.b16 %v719
    %v1793 = vunpack.c.l.b16 %v720
    %v1794 = vunpack.c.h.b16 %v720
    %v1795 = vunpack.c.l.b16 %v721
    %v1796 = vunpack.c.h.b16 %v721
    %v1797 = vunpack.c.l.b16 %v722
    %v1798 = vunpack.c.h.b16 %v722
    %v1799 = vunpack.c.l.b16 %v723
    %v1800 = vunpack.c.h.b16 %v723
    %v1801 = vunpack.c.l.b16 %v724
    %v1802 = vunpack.c.h.b16 %v724
    %v1803 = vunpack.c.l.b16 %v725
    %v1804 = vunpack.c.h.b16 %v725
    %v1805 = vunpack.c.l.b16 %v726
    %v1806 = vunpack.c.h.b16 %v726
    %v1807 = vunpack.c.l.b16 %v727
    %v1808 = vunpack.c.h.b16 %v727
    %v1809 = vunpack.c.l.b16 %v728
    %v1810 = vunpack.c.h.b16 %v728
    %v1811 = vunpack.c.l.b16 %v729
    %v1812 = vunpack.c.h.b16 %v729
    %v1813 = vunpack.c.l.b16 %v730
    %v1814 = vunpack.c.h.b16 %v730
    %v1815 = vunpack.c.l.b16 %v731
    %v1816 = vunpack.c.h.b16 %v731
    %v1817 = vunpack.c.l.b16 %v732
    %v1818 = vunpack.c.h.b16 %v732
    %v1819 = vunpack.c.l.b16 %v733
    %v1820 = vunpack.c.h.b16 %v733
    %v1821 = vunpack.c.l.b16 %v734
    %v1822 = vunpack.c.h.b16 %v734
    %v1823 = vunpack.c.l.b16 %v735
    %v1824 = vunpack.c.h.b16 %v735
    %v1825 = vunpack.c.l.b16 %v736
    %v1826 = vunpack.c.h.b16 %v736
    %v1827 = vunpack.c.l.b16 %v737
    %v1828 = vunpack.c.h.b16 %v737
    %v1829 = vunpack.c.l.b16 %v738
    %v1830 = vunpack.c.h.b16 %v738
    %v1831 = vunpack.c.l.b16 %v739
    %v1832 = vunpack.c.h.b16 %v739
    %v1833 = vunpack.c.l.b16 %v740
    %v1834 = vunpack.c.h.b16 %v740
    %v1835 = vunpack.c.l.b16 %v741
    %v1836 = vunpack.c.h.b16 %v741
    %v1837 = vunpack.c.l.b16 %v742
    %v1838 = vunpack.c.h.b16 %v742
    %v1839 = vunpack.c.l.b16 %v743
    %v1840 = vunpack.c.h.b16 %v743
    %v1841 = vunpack.c.l.b16 %v744
    %v1842 = vunpack.c.h.b16 %v744
    %v1843 = vunpack.c.l.b16 %v745
    %v1844 = vunpack.c.h.b16 %v745
    %v1845 = vunpack.c.l.b16 %v746
    %v1846 = vunpack.c.h.b16 %v746
    %v1847 = vunpack.c.l.b16 %v747
    %v1848 = vunpack.c.h.b16 %v747
    %v1849 = vunpack.c.l.b16 %v748
    %v1850 = vunpack.c.h.b16 %v748
    %v1851 = vunpack.c.l.b16 %v749
    %v1852 = vunpack.c.h.b16 %v749
    %v1853 = vunpack.c.l.b16 %v750
    %v1854 = vunpack.c.h.b16 %v750
    %v1855 = vunpack.c.l.b16 %v751
    %v1856 = vunpack.c.h.b16 %v751
    %v1857 = vunpack.c.l.b16 %v752
    %v1858 = vunpack.c.h.b16 %v752
    %v1859 = vunpack.c.l.b16 %v753
    %v1860 = vunpack.c.h.b16 %v753
    %v1861 = vunpack.c.l.b16 %v754
    %v1862 = vunpack.c.h.b16 %v754
    %v1863 = vunpack.c.l.b16 %v755
    %v1864 = vunpack.c.h.b16 %v755
    %v1865 = vunpack.c.l.b16 %v756
    %v1866 = vunpack.c.h.b16 %v756
    %v1867 = vunpack.c.l.b16 %v757
    %v1868 = vunpack.c.h.b16 %v757
    %v1869 = vunpack.c.l.b16 %v758
    %v1870 = vunpack.c.h.b16 %v758
    %v1871 = vunpack.c.l.b16 %v759
    %v1872 = vunpack.c.h.b16 %v759
    %v1873 = vunpack.c.l.b16 %v760
    %v1874 = vunpack.c.h.b16 %v760
    %v1875 = vunpack.c.l.b16 %v761
    %v1876 = vunpack.c.h.b16 %v761
    %v1877 = vunpack.c.l.b16 %v762
    %v1878 = vunpack.c.h.b16 %v762
    %v1879 = vunpack.c.l.b16 %v763
    %v1880 = vunpack.c.h.b16 %v763
    %v1881 = vunpack.c.l.b16 %v764
    %v1882 = vunpack.c.h.b16 %v764
    %v1883 = vunpack.c.l.b16 %v765
    %v1884 = vunpack.c.h.b16 %v765
    %v1885 = vunpack.c.l.b16 %v766
    %v1886 = vunpack.c.h.b16 %v766
    %v1887 = vunpack.c.l.b16 %v767
    %v1888 = vunpack.c.h.b16 %v767
    %v1889 = vunpack.c.l.b16 %v768
    %v1890 = vunpack.c.h.b16 %v768
    %v1891 = vunpack.c.l.b16 %v769
    %v1892 = vunpack.c.h.b16 %v769
    %v1893 = vunpack.c.l.b16 %v770
    %v1894 = vunpack.c.h.b16 %v770
    %v1895 = vunpack.c.l.b16 %v771
    %v1896 = vunpack.c.h.b16 %v771
    %v1897 = vunpack.c.l.b16 %v772
    %v1898 = vunpack.c.h.b16 %v772
    %v1899 = vunpack.c.l.b16 %v773
    %v1900 = vunpack.c.h.b16 %v773
    %v1901 = vunpack.c.l.b16 %v774
    %v1902 = vunpack.c.h.b16 %v774
    %v1903 = vunpack.c.l.b16 %v775
    %v1904 = vunpack.c.h.b16 %v775
    %v1905 = vunpack.c.l.b16 %v776
    %v1906 = vunpack.c.h.b16 %v776
    %v1907 = vunpack.c.l.b16 %v777
    %v1908 = vunpack.c.h.b16 %v777
    %v1909 = vunpack.c.l.b16 %v778
    %v1910 = vunpack.c.h.b16 %v778
    %v1911 = vunpack.c.l.b16 %v779
    %v1912 = vunpack.c.h.b16 %v779
    %v1913 = vunpack.c.l.b16 %v780
    %v1914 = vunpack.c.h.b16 %v780
    %v1915 = vunpack.c.l.b16 %v781
    %v1916 = vunpack.c.h.b16 %v781
    %v1917 = vunpack.c.l.b16 %v782
    %v1918 = vunpack.c.h.b16 %v782
    %v1919 = vunpack.c.l.b16 %v783
    %v1920 = vunpack.c.h.b16 %v783
    %v1921 = vunpack.c.l.b16 %v784
    %v1922 = vunpack.c.h.b16 %v784
    %v1923 = vunpack.c.l.b16 %v785
    %v1924 = vunpack.c.h.b16 %v785
    %v1925 = vunpack.c.l.b16 %v786
    %v1926 = vunpack.c.h.b16 %v786
    %v1927 = vunpack.c.l.b16 %v787
    %v1928 = vunpack.c.h.b16 %v787
    %v1929 = vunpack.c.l.b16 %v788
    %v1930 = vunpack.c.h.b16 %v788
    %v1931 = vunpack.c.l.b16 %v789
    %v1932 = vunpack.c.h.b16 %v789
    %v1933 = vunpack.c.l.b16 %v790
    %v1934 = vunpack.c.h.b16 %v790
    %v1935 = vunpack.c.l.b16 %v791
    %v1936 = vunpack.c.h.b16 %v791
    %v1937 = vunpack.c.l.b16 %v792
    %v1938 = vunpack.c.h.b16 %v792
    %v1939 = vunpack.c.l.b16 %v793
    %v1940 = vunpack.c.h.b16 %v793
    %v1941 = vunpack.c.l.b16 %v794
    %v1942 = vunpack.c.h.b16 %v794
    %v1943 = vunpack.c.l.b16 %v795
    %v1944 = vunpack.c.h.b16 %v795
    %v1945 = vunpack.c.l.b16 %v796
    %v1946 = vunpack.c.h.b16 %v796
    %v1947 = vunpack.c.l.b16 %v797
    %v1948 = vunpack.c.h.b16 %v797
    %v1949 = vunpack.c.l.b16 %v798
    %v1950 = vunpack.c.h.b16 %v798
    %v1951 = vunpack.c.l.b16 %v799
    %v1952 = vunpack.c.h.b16 %v799
    %v1953 = vunpack.c.l.b16 %v800
    %v1954 = vunpack.c.h.b16 %v800
    %v1955 = vunpack.c.l.b16 %v801
    %v1956 = vunpack.c.h.b16 %v801
    %v1957 = vunpack.c.l.b16 %v802
    %v1958 = vunpack.c.h.b16 %v802
    %v1959 = vunpack.c.l.b16 %v803
    %v1960 = vunpack.c.h.b16 %v803
    %v1961 = vunpack.c.l.b16 %v804
    %v1962 = vunpack.c.h.b16 %v804
    %v1963 = vunpack.c.l.b16 %v805
    %v1964 = vunpack.c.h.b16 %v805
    %v1965 = vunpack.c.l.b16 %v806
    %v1966 = vunpack.c.h.b16 %v806
    %v1967 = vunpack.c.l.b16 %v807
    %v1968 = vunpack.c.h.b16 %v807
    %v1969 = vunpack.c.l.b16 %v808
    %v1970 = vunpack.c.h.b16 %v808
    %v1971 = vunpack.c.l.b16 %v809
    %v1972 = vunpack.c.h.b16 %v809
    %v1973 = vunpack.c.l.b16 %v810
    %v1974 = vunpack.c.h.b16 %v810
    %v1975 = vunpack.c.l.b16 %v811
    %v1976 = vunpack.c.h.b16 %v811
    %v1977 = vunpack.c.l.b16 %v812
    %v1978 = vunpack.c.h.b16 %v812
    %v1979 = vunpack.c.l.b16 %v813
    %v1980 = vunpack.c.h.b16 %v813
    %v1981 = vunpack.c.l.b16 %v814
    %v1982 = vunpack.c.h.b16 %v814
    %v1983 = vunpack.c.l.b16 %v815
    %v1984 = vunpack.c.h.b16 %v815
    %v1985 = vunpack.c.l.b16 %v816
    %v1986 = vunpack.c.h.b16 %v816
    %v1987 = vunpack.c.l.b16 %v817
    %v1988 = vunpack.c.h.b16 %v817
    %v1989 = vunpack.c.l.b16 %v818
    %v1990 = vunpack.c.h.b16 %v818
    %v1991 = vunpack.c.l.b16 %v819
    %v1992 = vunpack.c.h.b16 %v819
    %v1993 = vunpack.c.l.b16 %v820
    %v1994 = vunpack.c.h.b16 %v820
    %v1995 = vunpack.c.l.b16 %v821
    %v1996 = vunpack.c.h.b16 %v821
    %v1997 = vunpack.c.l.b16 %v822
    %v1998 = vunpack.c.h.b16 %v822
    %v1999 = vunpack.c.l.b16 %v823
    %v2000 = vunpack.c.h.b16 %v823
    %v2001 = vunpack.c.l.b16 %v824
    %v2002 = vunpack.c.h.b16 %v824
    %v2003 = vunpack.c.l.b16 %v825
    %v2004 = vunpack.c.h.b16 %v825
    %v2005 = vunpack.c.l.b16 %v826
    %v2006 = vunpack.c.h.b16 %v826
    %v2007 = vunpack.c.l.b16 %v827
    %v2008 = vunpack.c.h.b16 %v827
    %v2009 = vunpack.c.l.b16 %v828
    %v2010 = vunpack.c.h.b16 %v828
    %v2011 = vunpack.c.l.b16 %v829
    %v2012 = vunpack.c.h.b16 %v829
    %v2013 = vunpack.c.l.b16 %v830
    %v2014 = vunpack.c.h.b16 %v830
    %v2015 = vunpack.c.l.b16 %v831
    %v2016 = vunpack.c.h.b16 %v831
    %v2017 = vunpack.c.l.b16 %v832
    %v2018 = vunpack.c.h.b16 %v832
    %v2019 = vunpack.c.l.b16 %v833
    %v2020 = vunpack.c.h.b16 %v833
    %v2021 = vunpack.c.l.b16 %v834
    %v2022 = vunpack.c.h.b16 %v834
    %v2023 = vunpack.c.l.b16 %v835
    %v2024 = vunpack.c.h.b16 %v835
    %v2025 = vunpack.c.l.b16 %v836
    %v2026 = vunpack.c.h.b16 %v836
    %v2027 = vunpack.c.l.b16 %v837
    %v2028 = vunpack.c.h.b16 %v837
    %v2029 = vunpack.c.l.b16 %v838
    %v2030 = vunpack.c.h.b16 %v838
    %v2031 = vunpack.c.l.b16 %v839
    %v2032 = vunpack.c.h.b16 %v839
    %v2033 = vunpack.c.l.b16 %v840
    %v2034 = vunpack.c.h.b16 %v840
    %v2035 = vunpack.c.l.b16 %v841
    %v2036 = vunpack.c.h.b16 %v841
    %v2037 = vunpack.c.l.b16 %v842
    %v2038 = vunpack.c.h.b16 %v842
    %v2039 = vunpack.c.l.b16 %v843
    %v2040 = vunpack.c.h.b16 %v843
    %v2041 = vunpack.c.l.b16 %v844
    %v2042 = vunpack.c.h.b16 %v844
    %v2043 = vunpack.c.l.b16 %v845
    %v2044 = vunpack.c.h.b16 %v845
    %v2045 = vunpack.c.l.b16 %v846
    %v2046 = vunpack.c.h.b16 %v846
    %v2047 = vunpack.c.l.b16 %v847
    %v2048 = vunpack.c.h.b16 %v847
    %v2049 = vunpack.c.l.b16 %v848
    %v2050 = vunpack.c.h.b16 %v848
    %v2051 = vunpack.c.l.b16 %v849
    %v2052 = vunpack.c.h.b16 %v849
    %v2053 = vunpack.c.l.b16 %v850
    %v2054 = vunpack.c.h.b16 %v850
    %v2055 = vunpack.c.l.b16 %v851
    %v2056 = vunpack.c.h.b16 %v851
    %v2057 = vunpack.c.l.b16 %v852
    %v2058 = vunpack.c.h.b16 %v852
    %v2059 = vunpack.c.l.b16 %v853
    %v2060 = vunpack.c.h.b16 %v853
    %v2061 = vunpack.c.l.b16 %v854
    %v2062 = vunpack.c.h.b16 %v854
    %v2063 = vunpack.c.l.b16 %v855
    %v2064 = vunpack.c.h.b16 %v855
    %v2065 = vunpack.c.l.b16 %v856
    %v2066 = vunpack.c.h.b16 %v856
    %v2067 = vunpack.c.l.b16 %v857
    %v2068 = vunpack.c.h.b16 %v857
    %v2069 = vunpack.c.l.b16 %v858
    %v2070 = vunpack.c.h.b16 %v858
    %v2071 = vunpack.c.l.b16 %v859
    %v2072 = vunpack.c.h.b16 %v859
    %v2073 = vunpack.c.l.b16 %v860
    %v2074 = vunpack.c.h.b16 %v860
    %v2075 = vunpack.c.l.b16 %v861
    %v2076 = vunpack.c.h.b16 %v861
    %v2077 = vunpack.c.l.b16 %v862
    %v2078 = vunpack.c.h.b16 %v862
    %v2079 = vunpack.c.l.b16 %v863
    %v2080 = vunpack.c.h.b16 %v863
    %v2081 = vunpack.c.l.b16 %v864
    %v2082 = vunpack.c.h.b16 %v864
    %v2083 = vunpack.c.l.b16 %v865
    %v2084 = vunpack.c.h.b16 %v865
    %v2085 = vunpack.c.l.b16 %v866
    %v2086 = vunpack.c.h.b16 %v866
    %v2087 = vunpack.c.l.b16 %v867
    %v2088 = vunpack.c.h.b16 %v867
    %v2089 = vunpack.c.l.b16 %v868
    %v2090 = vunpack.c.h.b16 %v868
    %v2091 = vunpack.c.l.b16 %v869
    %v2092 = vunpack.c.h.b16 %v869
    %v2093 = vunpack.c.l.b16 %v870
    %v2094 = vunpack.c.h.b16 %v870
    %v2095 = vunpack.c.l.b16 %v871
    %v2096 = vunpack.c.h.b16 %v871
    %v2097 = vunpack.c.l.b16 %v872
    %v2098 = vunpack.c.h.b16 %v872
    %v2099 = vunpack.c.l.b16 %v873
    %v2100 = vunpack.c.h.b16 %v873
    %v2101 = vunpack.c.l.b16 %v874
    %v2102 = vunpack.c.h.b16 %v874
    %v2103 = vunpack.c.l.b16 %v875
    %v2104 = vunpack.c.h.b16 %v875
    %v2105 = vunpack.c.l.b16 %v876
    %v2106 = vunpack.c.h.b16 %v876
    %v2107 = vunpack.c.l.b16 %v877
    %v2108 = vunpack.c.h.b16 %v877
    %v2109 = vunpack.c.l.b16 %v878
    %v2110 = vunpack.c.h.b16 %v878
    %v2111 = vunpack.c.l.b16 %v879
    %v2112 = vunpack.c.h.b16 %v879
    %v2113 = vunpack.c.l.b16 %v880
    %v2114 = vunpack.c.h.b16 %v880
    %v2115 = vunpack.c.l.b16 %v881
    %v2116 = vunpack.c.h.b16 %v881
    %v2117 = vunpack.c.l.b16 %v882
    %v2118 = vunpack.c.h.b16 %v882
    %v2119 = vunpack.c.l.b16 %v883
    %v2120 = vunpack.c.h.b16 %v883
    %v2121 = vunpack.c.l.b16 %v884
    %v2122 = vunpack.c.h.b16 %v884
    %v2123 = vunpack.c.l.b16 %v885
    %v2124 = vunpack.c.h.b16 %v885
    %v2125 = vunpack.c.l.b16 %v886
    %v2126 = vunpack.c.h.b16 %v886
    %v2127 = vunpack.c.l.b16 %v887
    %v2128 = vunpack.c.h.b16 %v887
    %v2129 = vunpack.c.l.b16 %v888
    %v2130 = vunpack.c.h.b16 %v888
    %v2131 = vunpack.c.l.b16 %v889
    %v2132 = vunpack.c.h.b16 %v889
    %v2133 = vunpack.c.l.b16 %v890
    %v2134 = vunpack.c.h.b16 %v890
    %v2135 = vunpack.c.l.b16 %v891
    %v2136 = vunpack.c.h.b16 %v891
    %v2137 = vunpack.c.l.b16 %v892
    %v2138 = vunpack.c.h.b16 %v892
    %v2139 = vunpack.c.l.b16 %v893
    %v2140 = vunpack.c.h.b16 %v893
    %v2141 = vunpack.c.l.b16 %v894
    %v2142 = vunpack.c.h.b16 %v894
    %v2143 = vpack.c.b16 %v1699, %v1695
    %v2144 = vpack.c.b16 %v1700, %v1696
    %v2145 = vpack.c.b16 %v1701, %v1697
    %v2146 = vpack.c.b16 %v1702, %v1698
    %v2147 = vpack.c.b16 %v1707, %v1703
    %v2148 = vpack.c.b16 %v1708, %v1704
    %v2149 = vpack.c.b16 %v1709, %v1705
    %v2150 = vpack.c.b16 %v1710, %v1706
    %v2151 = vpack.c.b16 %v1715, %v1711
    %v2152 = vpack.c.b16 %v1716, %v1712
    %v2153 = vpack.c.b16 %v1717, %v1713
    %v2154 = vpack.c.b16 %v1718, %v1714
    %v2155 = vpack.c.b16 %v1723, %v1719
    %v2156 = vpack.c.b16 %v1724, %v1720
    %v2157 = vpack.c.b16 %v1725, %v1721
    %v2158 = vpack.c.b16 %v1726, %v1722
    %v2159 = vpack.c.b16 %v1731, %v1727
    %v2160 = vpack.c.b16 %v1732, %v1728
    %v2161 = vpack.c.b16 %v1733, %v1729
    %v2162 = vpack.c.b16 %v1734, %v1730
    %v2163 = vpack.c.b16 %v1739, %v1735
    %v2164 = vpack.c.b16 %v1740, %v1736
    %v2165 = vpack.c.b16 %v1741, %v1737
    %v2166 = vpack.c.b16 %v1742, %v1738
    %v2167 = vpack.c.b16 %v1747, %v1743
    %v2168 = vpack.c.b16 %v1748, %v1744
    %v2169 = vpack.c.b16 %v1749, %v1745
    %v2170 = vpack.c.b16 %v1750, %v1746
    %v2171 = vpack.c.b16 %v1755, %v1751
    %v2172 = vpack.c.b16 %v1756, %v1752
    %v2173 = vpack.c.b16 %v1757, %v1753
    %v2174 = vpack.c.b16 %v1758, %v1754
    %v2175 = vpack.c.b16 %v1763, %v1759
    %v2176 = vpack.c.b16 %v1764, %v1760
    %v2177 = vpack.c.b16 %v1765, %v1761
    %v2178 = vpack.c.b16 %v1766, %v1762
    %v2179 = vpack.c.b16 %v1771, %v1767
    %v2180 = vpack.c.b16 %v1772, %v1768
    %v2181 = vpack.c.b16 %v1773, %v1769
    %v2182 = vpack.c.b16 %v1774, %v1770
    %v2183 = vpack.c.b16 %v1779, %v1775
    %v2184 = vpack.c.b16 %v1780, %v1776
    %v2185 = vpack.c.b16 %v1781, %v1777
    %v2186 = vpack.c.b16 %v1782, %v1778
    %v2187 = vpack.c.b16 %v1787, %v1783
    %v2188 = vpack.c.b16 %v1788, %v1784
    %v2189 = vpack.c.b16 %v1789, %v1785
    %v2190 = vpack.c.b16 %v1790, %v1786
    %v2191 = vpack.c.b16 %v1795, %v1791
    %v2192 = vpack.c.b16 %v1796, %v1792
    %v2193 = vpack.c.b16 %v1797, %v1793
    %v2194 = vpack.c.b16 %v1798, %v1794
    %v2195 = vpack.c.b16 %v1803, %v1799
    %v2196 = vpack.c.b16 %v1804, %v1800
    %v2197 = vpack.c.b16 %v1805, %v1801
    %v2198 = vpack.c.b16 %v1806, %v1802
    %v2199 = vpack.c.b16 %v1811, %v1807
    %v2200 = vpack.c.b16 %v1812, %v1808
    %v2201 = vpack.c.b16 %v1813, %v1809
    %v2202 = vpack.c.b16 %v1814, %v1810
    %v2203 = vpack.c.b16 %v1819, %v1815
    %v2204 = vpack.c.b16 %v1820, %v1816
    %v2205 = vpack.c.b16 %v1821, %v1817
    %v2206 = vpack.c.b16 %v1822, %v1818
    %v2207 = vpack.c.b16 %v1827, %v1823
    %v2208 = vpack.c.b16 %v1828, %v1824
    %v2209 = vpack.c.b16 %v1829, %v1825
    %v2210 = vpack.c.b16 %v1830, %v1826
    %v2211 = vpack.c.b16 %v1835, %v1831
    %v2212 = vpack.c.b16 %v1836, %v1832
    %v2213 = vpack.c.b16 %v1837, %v1833
    %v2214 = vpack.c.b16 %v1838, %v1834
    %v2215 = vpack.c.b16 %v1843, %v1839
    %v2216 = vpack.c.b16 %v1844, %v1840
    %v2217 = vpack.c.b16 %v1845, %v1841
    %v2218 = vpack.c.b16 %v1846, %v1842
    %v2219 = vpack.c.b16 %v1851, %v1847
    %v2220 = vpack.c.b16 %v1852, %v1848
    %v2221 = vpack.c.b16 %v1853, %v1849
    %v2222 = vpack.c.b16 %v1854, %v1850
    %v2223 = vpack.c.b16 %v1859, %v1855
    %v2224 = vpack.c.b16 %v1860, %v1856
    %v2225 = vpack.c.b16 %v1861, %v1857
    %v2226 = vpack.c.b16 %v1862, %v1858
    %v2227 = vpack.c.b16 %v1867, %v1863
    %v2228 = vpack.c.b16 %v1868, %v1864
    %v2229 = vpack.c.b16 %v1869, %v1865
    %v2230 = vpack.c.b16 %v1870, %v1866
    %v2231 = vpack.c.b16 %v1875, %v1871
    %v2232 = vpack.c.b16 %v1876, %v1872
    %v2233 = vpack.c.b16 %v1877, %v1873
    %v2234 = vpack.c.b16 %v1878, %v1874
    %v2235 = vpack.c.b16 %v1883, %v1879
    %v2236 = vpack.c.b16 %v1884, %v1880
    %v2237 = vpack.c.b16 %v1885, %v1881
    %v2238 = vpack.c.b16 %v1886, %v1882
    %v2239 = vpack.c.b16 %v1891, %v1887
    %v2240 = vpack.c.b16 %v1892, %v1888
    %v2241 = vpack.c.b16 %v1893, %v1889
    %v2242 = vpack.c.b16 %v1894, %v1890
    %v2243 = vpack.c.b16 %v1899, %v1895
    %v2244 = vpack.c.b16 %v1900, %v1896
    %v2245 = vpack.c.b16 %v1901, %v1897
    %v2246 = vpack.c.b16 %v1902, %v1898
    %v2247 = vpack.c.b16 %v1907, %v1903
    %v2248 = vpack.c.b16 %v1908, %v1904
    %v2249 = vpack.c.b16 %v1909, %v1905
    %v2250 = vpack.c.b16 %v1910, %v1906
    %v2251 = vpack.c.b16 %v1915, %v1911
    %v2252 = vpack.c.b16 %v1916, %v1912
    %v2253 = vpack.c.b16 %v1917, %v1913
    %v2254 = vpack.c.b16 %v1918, %v1914
    %v2255 = vpack.c.b16 %v1923, %v1919
    %v2256 = vpack.c.b16 %v1924, %v1920
    %v2257 = vpack.c.b16 %v1925, %v1921
    %v2258 = vpack.c.b16 %v1926, %v1922
    %v2259 = vpack.c.b16 %v1931, %v1927
    %v2260 = vpack.c.b16 %v1932, %v1928
    %v2261 = vpack.c.b16 %v1933, %v1929
    %v2262 = vpack.c.b16 %v1934, %v1930
    %v2263 = vpack.c.b16 %v1939, %v1935
    %v2264 = vpack.c.b16 %v1940, %v1936
    %v2265 = vpack.c.b16 %v1941, %v1937
    %v2266 = vpack.c.b16 %v1942, %v1938
    %v2267 = vpack.c.b16 %v1947, %v1943
    %v2268 = vpack.c.b16 %v1948, %v1944
    %v2269 = vpack.c.b16 %v1949, %v1945
    %v2270 = vpack.c.b16 %v1950, %v1946
    %v2271 = vpack.c.b16 %v1955, %v1951
    %v2272 = vpack.c.b16 %v1956, %v1952
    %v2273 = vpack.c.b16 %v1957, %v1953
    %v2274 = vpack.c.b16 %v1958, %v1954
    %v2275 = vpack.c.b16 %v1963, %v1959
    %v2276 = vpack.c.b16 %v1964, %v1960
    %v2277 = vpack.c.b16 %v1965, %v1961
    %v2278 = vpack.c.b16 %v1966, %v1962
    %v2279 = vpack.c.b16 %v1971, %v1967
    %v2280 = vpack.c.b16 %v1972, %v1968
    %v2281 = vpack.c.b16 %v1973, %v1969
    %v2282 = vpack.c.b16 %v1974, %v1970
    %v2283 = vpack.c.b16 %v1979, %v1975
    %v2284 = vpack.c.b16 %v1980, %v1976
    %v2285 = vpack.c.b16 %v1981, %v1977
    %v2286 = vpack.c.b16 %v1982, %v1978
    %v2287 = vpack.c.b16 %v1987, %v1983
    %v2288 = vpack.c.b16 %v1988, %v1984
    %v2289 = vpack.c.b16 %v1989, %v1985
    %v2290 = vpack.c.b16 %v1990, %v1986
    %v2291 = vpack.c.b16 %v1995, %v1991
    %v2292 = vpack.c.b16 %v1996, %v1992
    %v2293 = vpack.c.b16 %v1997, %v1993
    %v2294 = vpack.c.b16 %v1998, %v1994
    %v2295 = vpack.c.b16 %v2003, %v1999
    %v2296 = vpack.c.b16 %v2004, %v2000
    %v2297 = vpack.c.b16 %v2005, %v2001
    %v2298 = vpack.c.b16 %v2006, %v2002
    %v2299 = vpack.c.b16 %v2011, %v2007
    %v2300 = vpack.c.b16 %v2012, %v2008
    %v2301 = vpack.c.b16 %v2013, %v2009
    %v2302 = vpack.c.b16 %v2014, %v2010
    %v2303 = vpack.c.b16 %v2019, %v2015
    %v2304 = vpack.c.b16 %v2020, %v2016
    %v2305 = vpack.c.b16 %v2021, %v2017
    %v2306 = vpack.c.b16 %v2022, %v2018
    %v2307 = vpack.c.b16 %v2027, %v2023
    %v2308 = vpack.c.b16 %v2028, %v2024
    %v2309 = vpack.c.b16 %v2029, %v2025
    %v2310 = vpack.c.b16 %v2030, %v2026
    %v2311 = vpack.c.b16 %v2035, %v2031
    %v2312 = vpack.c.b16 %v2036, %v2032
    %v2313 = vpack.c.b16 %v2037, %v2033
    %v2314 = vpack.c.b16 %v2038, %v2034
    %v2315 = vpack.c.b16 %v2043, %v2039
    %v2316 = vpack.c.b16 %v2044, %v2040
    %v2317 = vpack.c.b16 %v2045, %v2041
    %v2318 = vpack.c.b16 %v2046, %v2042
    %v2319 = vpack.c.b16 %v2051, %v2047
    %v2320 = vpack.c.b16 %v2052, %v2048
    %v2321 = vpack.c.b16 %v2053, %v2049
    %v2322 = vpack.c.b16 %v2054, %v2050
    %v2323 = vpack.c.b16 %v2059, %v2055
    %v2324 = vpack.c.b16 %v2060, %v2056
    %v2325 = vpack.c.b16 %v2061, %v2057
    %v2326 = vpack.c.b16 %v2062, %v2058
    %v2327 = vpack.c.b16 %v2067, %v2063
    %v2328 = vpack.c.b16 %v2068, %v2064
    %v2329 = vpack.c.b16 %v2069, %v2065
    %v2330 = vpack.c.b16 %v2070, %v2066
    %v2331 = vpack.c.b16 %v2075, %v2071
    %v2332 = vpack.c.b16 %v2076, %v2072
    %v2333 = vpack.c.b16 %v2077, %v2073
    %v2334 = vpack.c.b16 %v2078, %v2074
    %v2335 = vpack.c.b16 %v2083, %v2079
    %v2336 = vpack.c.b16 %v2084, %v2080
    %v2337 = vpack.c.b16 %v2085, %v2081
    %v2338 = vpack.c.b16 %v2086, %v2082
    %v2339 = vpack.c.b16 %v2091, %v2087
    %v2340 = vpack.c.b16 %v2092, %v2088
    %v2341 = vpack.c.b16 %v2093, %v2089
    %v2342 = vpack.c.b16 %v2094, %v2090
    %v2343 = vpack.c.b16 %v2099, %v2095
    %v2344 = vpack.c.b16 %v2100, %v2096
    %v2345 = vpack.c.b16 %v2101, %v2097
    %v2346 = vpack.c.b16 %v2102, %v2098
    %v2347 = vpack.c.b16 %v2107, %v2103
    %v2348 = vpack.c.b16 %v2108, %v2104
    %v2349 = vpack.c.b16 %v2109, %v2105
    %v2350 = vpack.c.b16 %v2110, %v2106
    %v2351 = vpack.c.b16 %v2115, %v2111
    %v2352 = vpack.c.b16 %v2116, %v2112
    %v2353 = vpack.c.b16 %v2117, %v2113
    %v2354 = vpack.c.b16 %v2118, %v2114
    %v2355 = vpack.c.b16 %v2123, %v2119
    %v2356 = vpack.c.b16 %v2124, %v2120
    %v2357 = vpack.c.b16 %v2125, %v2121
    %v2358 = vpack.c.b16 %v2126, %v2122
    %v2359 = vpack.c.b16 %v2131, %v2127
    %v2360 = vpack.c.b16 %v2132, %v2128
    %v2361 = vpack.c.b16 %v2133, %v2129
    %v2362 = vpack.c.b16 %v2134, %v2130
    %v2363 = vpack.c.b16 %v2139, %v2135
    %v2364 = vpack.c.b16 %v2140, %v2136
    %v2365 = vpack.c.b16 %v2141, %v2137
    %v2366 = vpack.c.b16 %v2142, %v2138
    %2591 = vmatpush.bf16.msra.mxu0 %v2171
    %2592 = vmatpush.bf16.msra.mxu0 %v2167
    %2593 = vmatpush.bf16.msra.mxu0 %v2163
    %2594 = vmatpush.bf16.msra.mxu0 %v2159
    %2595 = vmatpush.bf16.msra.mxu0 %v2155
    %2596 = vmatpush.bf16.msra.mxu0 %v2151
    %2597 = vmatpush.bf16.msra.mxu0 %v2147
    %2598 = vmatpush.bf16.msra.mxu0 %v2143
    %2599 = vmatmul.bf16.gmra.mxu0 %v1247
    %v2600 = vpop.f32.mrf.mxu0
    %v2601 = vadd.f32 0.0, %v2600
    %v2602 = vpop.f32.mrf.mxu0
    %v2603 = vadd.f32 0.0, %v2602
    %2604 = vmatmul.bf16.gmra.mxu0 %v1254
    %v2605 = vpop.f32.mrf.mxu0
    %v2606 = vadd.f32 0.0, %v2605
    %v2607 = vpop.f32.mrf.mxu0
    %v2608 = vadd.f32 0.0, %v2607
    %2609 = vmatmul.bf16.gmra.mxu0 %v1261
    %v2610 = vpop.f32.mrf.mxu0
    %v2611 = vadd.f32 0.0, %v2610
    %v2612 = vpop.f32.mrf.mxu0
    %v2613 = vadd.f32 0.0, %v2612
    %2614 = vmatmul.bf16.gmra.mxu0 %v1268
    %v2615 = vpop.f32.mrf.mxu0
    %v2616 = vadd.f32 0.0, %v2615
    %v2617 = vpop.f32.mrf.mxu0
    %v2618 = vadd.f32 0.0, %v2617
    %2619 = vmatmul.bf16.gmra.mxu0 %v1275
    %v2620 = vpop.f32.mrf.mxu0
    %v2621 = vadd.f32 0.0, %v2620
    %v2622 = vpop.f32.mrf.mxu0
    %v2623 = vadd.f32 0.0, %v2622
    %2624 = vmatmul.bf16.gmra.mxu0 %v1282
    %v2625 = vpop.f32.mrf.mxu0
    %v2626 = vadd.f32 0.0, %v2625
    %v2627 = vpop.f32.mrf.mxu0
    %v2628 = vadd.f32 0.0, %v2627
    %2629 = vmatmul.bf16.gmra.mxu0 %v1289
    %v2630 = vpop.f32.mrf.mxu0
    %v2631 = vadd.f32 0.0, %v2630
    %v2632 = vpop.f32.mrf.mxu0
    %v2633 = vadd.f32 0.0, %v2632
    %2634 = vmatmul.bf16.gmra.mxu0 %v1296
    %v2635 = vpop.f32.mrf.mxu0
    %v2636 = vadd.f32 0.0, %v2635
    %v2637 = vpop.f32.mrf.mxu0
    %v2638 = vadd.f32 0.0, %v2637
    %2639 = vmatmul.bf16.gmra.mxu0 %v1303
    %v2640 = vpop.f32.mrf.mxu0
    %v2641 = vadd.f32 0.0, %v2640
    %v2642 = vpop.f32.mrf.mxu0
    %v2643 = vadd.f32 0.0, %v2642
    %2644 = vmatmul.bf16.gmra.mxu0 %v1310
    %v2645 = vpop.f32.mrf.mxu0
    %v2646 = vadd.f32 0.0, %v2645
    %v2647 = vpop.f32.mrf.mxu0
    %v2648 = vadd.f32 0.0, %v2647
    %2649 = vmatmul.bf16.gmra.mxu0 %v1317
    %v2650 = vpop.f32.mrf.mxu0
    %v2651 = vadd.f32 0.0, %v2650
    %v2652 = vpop.f32.mrf.mxu0
    %v2653 = vadd.f32 0.0, %v2652
    %2654 = vmatmul.bf16.gmra.mxu0 %v1324
    %v2655 = vpop.f32.mrf.mxu0
    %v2656 = vadd.f32 0.0, %v2655
    %v2657 = vpop.f32.mrf.mxu0
    %v2658 = vadd.f32 0.0, %v2657
    %2659 = vmatmul.bf16.gmra.mxu0 %v1331
    %v2660 = vpop.f32.mrf.mxu0
    %v2661 = vadd.f32 0.0, %v2660
    %v2662 = vpop.f32.mrf.mxu0
    %v2663 = vadd.f32 0.0, %v2662
    %2664 = vmatmul.bf16.gmra.mxu0 %v1338
    %v2665 = vpop.f32.mrf.mxu0
    %v2666 = vadd.f32 0.0, %v2665
    %v2667 = vpop.f32.mrf.mxu0
    %v2668 = vadd.f32 0.0, %v2667
    %2669 = vmatmul.bf16.gmra.mxu0 %v1345
    %v2670 = vpop.f32.mrf.mxu0
    %v2671 = vadd.f32 0.0, %v2670
    %v2672 = vpop.f32.mrf.mxu0
    %v2673 = vadd.f32 0.0, %v2672
    %2674 = vmatmul.bf16.gmra.mxu0 %v1352
    %v2675 = vpop.f32.mrf.mxu0
    %v2676 = vadd.f32 0.0, %v2675
    %v2677 = vpop.f32.mrf.mxu0
    %v2678 = vadd.f32 0.0, %v2677
    %2679 = vdwg.mxu0
    %2680 = vmatpush.bf16.msra.mxu0 %v2203
    %2681 = vmatpush.bf16.msra.mxu0 %v2199
    %2682 = vmatpush.bf16.msra.mxu0 %v2195
    %2683 = vmatpush.bf16.msra.mxu0 %v2191
    %2684 = vmatpush.bf16.msra.mxu0 %v2187
    %2685 = vmatpush.bf16.msra.mxu0 %v2183
    %2686 = vmatpush.bf16.msra.mxu0 %v2179
    %2687 = vmatpush.bf16.msra.mxu0 %v2175
    %2688 = vmatmul.bf16.gmra.mxu0 %v1248
    %v2689 = vpop.f32.mrf.mxu0
    %v2690 = vadd.f32 %v2601, %v2689
    %v2691 = vpop.f32.mrf.mxu0
    %v2692 = vadd.f32 %v2603, %v2691
    %2693 = vmatmul.bf16.gmra.mxu0 %v1255
    %v2694 = vpop.f32.mrf.mxu0
    %v2695 = vadd.f32 %v2606, %v2694
    %v2696 = vpop.f32.mrf.mxu0
    %v2697 = vadd.f32 %v2608, %v2696
    %2698 = vmatmul.bf16.gmra.mxu0 %v1262
    %v2699 = vpop.f32.mrf.mxu0
    %v2700 = vadd.f32 %v2611, %v2699
    %v2701 = vpop.f32.mrf.mxu0
    %v2702 = vadd.f32 %v2613, %v2701
    %2703 = vmatmul.bf16.gmra.mxu0 %v1269
    %v2704 = vpop.f32.mrf.mxu0
    %v2705 = vadd.f32 %v2616, %v2704
    %v2706 = vpop.f32.mrf.mxu0
    %v2707 = vadd.f32 %v2618, %v2706
    %2708 = vmatmul.bf16.gmra.mxu0 %v1276
    %v2709 = vpop.f32.mrf.mxu0
    %v2710 = vadd.f32 %v2621, %v2709
    %v2711 = vpop.f32.mrf.mxu0
    %v2712 = vadd.f32 %v2623, %v2711
    %2713 = vmatmul.bf16.gmra.mxu0 %v1283
    %v2714 = vpop.f32.mrf.mxu0
    %v2715 = vadd.f32 %v2626, %v2714
    %v2716 = vpop.f32.mrf.mxu0
    %v2717 = vadd.f32 %v2628, %v2716
    %2718 = vmatmul.bf16.gmra.mxu0 %v1290
    %v2719 = vpop.f32.mrf.mxu0
    %v2720 = vadd.f32 %v2631, %v2719
    %v2721 = vpop.f32.mrf.mxu0
    %v2722 = vadd.f32 %v2633, %v2721
    %2723 = vmatmul.bf16.gmra.mxu0 %v1297
    %v2724 = vpop.f32.mrf.mxu0
    %v2725 = vadd.f32 %v2636, %v2724
    %v2726 = vpop.f32.mrf.mxu0
    %v2727 = vadd.f32 %v2638, %v2726
    %2728 = vmatmul.bf16.gmra.mxu0 %v1304
    %v2729 = vpop.f32.mrf.mxu0
    %v2730 = vadd.f32 %v2641, %v2729
    %v2731 = vpop.f32.mrf.mxu0
    %v2732 = vadd.f32 %v2643, %v2731
    %2733 = vmatmul.bf16.gmra.mxu0 %v1311
    %v2734 = vpop.f32.mrf.mxu0
    %v2735 = vadd.f32 %v2646, %v2734
    %v2736 = vpop.f32.mrf.mxu0
    %v2737 = vadd.f32 %v2648, %v2736
    %2738 = vmatmul.bf16.gmra.mxu0 %v1318
    %v2739 = vpop.f32.mrf.mxu0
    %v2740 = vadd.f32 %v2651, %v2739
    %v2741 = vpop.f32.mrf.mxu0
    %v2742 = vadd.f32 %v2653, %v2741
    %2743 = vmatmul.bf16.gmra.mxu0 %v1325
    %v2744 = vpop.f32.mrf.mxu0
    %v2745 = vadd.f32 %v2656, %v2744
    %v2746 = vpop.f32.mrf.mxu0
    %v2747 = vadd.f32 %v2658, %v2746
    %2748 = vmatmul.bf16.gmra.mxu0 %v1332
    %v2749 = vpop.f32.mrf.mxu0
    %v2750 = vadd.f32 %v2661, %v2749
    %v2751 = vpop.f32.mrf.mxu0
    %v2752 = vadd.f32 %v2663, %v2751
    %2753 = vmatmul.bf16.gmra.mxu0 %v1339
    %v2754 = vpop.f32.mrf.mxu0
    %v2755 = vadd.f32 %v2666, %v2754
    %v2756 = vpop.f32.mrf.mxu0
    %v2757 = vadd.f32 %v2668, %v2756
    %2758 = vmatmul.bf16.gmra.mxu0 %v1346
    %v2759 = vpop.f32.mrf.mxu0
    %v2760 = vadd.f32 %v2671, %v2759
    %v2761 = vpop.f32.mrf.mxu0
    %v2762 = vadd.f32 %v2673, %v2761
    %2763 = vmatmul.bf16.gmra.mxu0 %v1353
    %v2764 = vpop.f32.mrf.mxu0
    %v2765 = vadd.f32 %v2676, %v2764
    %v2766 = vpop.f32.mrf.mxu0
    %v2767 = vadd.f32 %v2678, %v2766
    %2768 = vdwg.mxu0
    %2769 = vmatpush.bf16.msra.mxu0 %v2235
    %2770 = vmatpush.bf16.msra.mxu0 %v2231
    %2771 = vmatpush.bf16.msra.mxu0 %v2227
    %2772 = vmatpush.bf16.msra.mxu0 %v2223
    %2773 = vmatpush.bf16.msra.mxu0 %v2219
    %2774 = vmatpush.bf16.msra.mxu0 %v2215
    %2775 = vmatpush.bf16.msra.mxu0 %v2211
    %2776 = vmatpush.bf16.msra.mxu0 %v2207
    %2777 = vmatmul.bf16.gmra.mxu0 %v1249
    %v2778 = vpop.f32.mrf.mxu0
    %v2779 = vadd.f32 %v2690, %v2778
    %v2780 = vpop.f32.mrf.mxu0
    %v2781 = vadd.f32 %v2692, %v2780
    %2782 = vmatmul.bf16.gmra.mxu0 %v1256
    %v2783 = vpop.f32.mrf.mxu0
    %v2784 = vadd.f32 %v2695, %v2783
    %v2785 = vpop.f32.mrf.mxu0
    %v2786 = vadd.f32 %v2697, %v2785
    %2787 = vmatmul.bf16.gmra.mxu0 %v1263
    %v2788 = vpop.f32.mrf.mxu0
    %v2789 = vadd.f32 %v2700, %v2788
    %v2790 = vpop.f32.mrf.mxu0
    %v2791 = vadd.f32 %v2702, %v2790
    %2792 = vmatmul.bf16.gmra.mxu0 %v1270
    %v2793 = vpop.f32.mrf.mxu0
    %v2794 = vadd.f32 %v2705, %v2793
    %v2795 = vpop.f32.mrf.mxu0
    %v2796 = vadd.f32 %v2707, %v2795
    %2797 = vmatmul.bf16.gmra.mxu0 %v1277
    %v2798 = vpop.f32.mrf.mxu0
    %v2799 = vadd.f32 %v2710, %v2798
    %v2800 = vpop.f32.mrf.mxu0
    %v2801 = vadd.f32 %v2712, %v2800
    %2802 = vmatmul.bf16.gmra.mxu0 %v1284
    %v2803 = vpop.f32.mrf.mxu0
    %v2804 = vadd.f32 %v2715, %v2803
    %v2805 = vpop.f32.mrf.mxu0
    %v2806 = vadd.f32 %v2717, %v2805
    %2807 = vmatmul.bf16.gmra.mxu0 %v1291
    %v2808 = vpop.f32.mrf.mxu0
    %v2809 = vadd.f32 %v2720, %v2808
    %v2810 = vpop.f32.mrf.mxu0
    %v2811 = vadd.f32 %v2722, %v2810
    %2812 = vmatmul.bf16.gmra.mxu0 %v1298
    %v2813 = vpop.f32.mrf.mxu0
    %v2814 = vadd.f32 %v2725, %v2813
    %v2815 = vpop.f32.mrf.mxu0
    %v2816 = vadd.f32 %v2727, %v2815
    %2817 = vmatmul.bf16.gmra.mxu0 %v1305
    %v2818 = vpop.f32.mrf.mxu0
    %v2819 = vadd.f32 %v2730, %v2818
    %v2820 = vpop.f32.mrf.mxu0
    %v2821 = vadd.f32 %v2732, %v2820
    %2822 = vmatmul.bf16.gmra.mxu0 %v1312
    %v2823 = vpop.f32.mrf.mxu0
    %v2824 = vadd.f32 %v2735, %v2823
    %v2825 = vpop.f32.mrf.mxu0
    %v2826 = vadd.f32 %v2737, %v2825
    %2827 = vmatmul.bf16.gmra.mxu0 %v1319
    %v2828 = vpop.f32.mrf.mxu0
    %v2829 = vadd.f32 %v2740, %v2828
    %v2830 = vpop.f32.mrf.mxu0
    %v2831 = vadd.f32 %v2742, %v2830
    %2832 = vmatmul.bf16.gmra.mxu0 %v1326
    %v2833 = vpop.f32.mrf.mxu0
    %v2834 = vadd.f32 %v2745, %v2833
    %v2835 = vpop.f32.mrf.mxu0
    %v2836 = vadd.f32 %v2747, %v2835
    %2837 = vmatmul.bf16.gmra.mxu0 %v1333
    %v2838 = vpop.f32.mrf.mxu0
    %v2839 = vadd.f32 %v2750, %v2838
    %v2840 = vpop.f32.mrf.mxu0
    %v2841 = vadd.f32 %v2752, %v2840
    %2842 = vmatmul.bf16.gmra.mxu0 %v1340
    %v2843 = vpop.f32.mrf.mxu0
    %v2844 = vadd.f32 %v2755, %v2843
    %v2845 = vpop.f32.mrf.mxu0
    %v2846 = vadd.f32 %v2757, %v2845
    %2847 = vmatmul.bf16.gmra.mxu0 %v1347
    %v2848 = vpop.f32.mrf.mxu0
    %v2849 = vadd.f32 %v2760, %v2848
    %v2850 = vpop.f32.mrf.mxu0
    %v2851 = vadd.f32 %v2762, %v2850
    %2852 = vmatmul.bf16.gmra.mxu0 %v1354
    %v2853 = vpop.f32.mrf.mxu0
    %v2854 = vadd.f32 %v2765, %v2853
    %v2855 = vpop.f32.mrf.mxu0
    %v2856 = vadd.f32 %v2767, %v2855
    %2857 = vdwg.mxu0
    %2858 = vmatpush.bf16.msra.mxu0 %v2267
    %2859 = vmatpush.bf16.msra.mxu0 %v2263
    %2860 = vmatpush.bf16.msra.mxu0 %v2259
    %2861 = vmatpush.bf16.msra.mxu0 %v2255
    %2862 = vmatpush.bf16.msra.mxu0 %v2251
    %2863 = vmatpush.bf16.msra.mxu0 %v2247
    %2864 = vmatpush.bf16.msra.mxu0 %v2243
    %2865 = vmatpush.bf16.msra.mxu0 %v2239
    %2866 = vmatmul.bf16.gmra.mxu0 %v1250
    %v2867 = vpop.f32.mrf.mxu0
    %v2868 = vadd.f32 %v2779, %v2867
    %v2869 = vpop.f32.mrf.mxu0
    %v2870 = vadd.f32 %v2781, %v2869
    %2871 = vmatmul.bf16.gmra.mxu0 %v1257
    %v2872 = vpop.f32.mrf.mxu0
    %v2873 = vadd.f32 %v2784, %v2872
    %v2874 = vpop.f32.mrf.mxu0
    %v2875 = vadd.f32 %v2786, %v2874
    %2876 = vmatmul.bf16.gmra.mxu0 %v1264
    %v2877 = vpop.f32.mrf.mxu0
    %v2878 = vadd.f32 %v2789, %v2877
    %v2879 = vpop.f32.mrf.mxu0
    %v2880 = vadd.f32 %v2791, %v2879
    %2881 = vmatmul.bf16.gmra.mxu0 %v1271
    %v2882 = vpop.f32.mrf.mxu0
    %v2883 = vadd.f32 %v2794, %v2882
    %v2884 = vpop.f32.mrf.mxu0
    %v2885 = vadd.f32 %v2796, %v2884
    %2886 = vmatmul.bf16.gmra.mxu0 %v1278
    %v2887 = vpop.f32.mrf.mxu0
    %v2888 = vadd.f32 %v2799, %v2887
    %v2889 = vpop.f32.mrf.mxu0
    %v2890 = vadd.f32 %v2801, %v2889
    %2891 = vmatmul.bf16.gmra.mxu0 %v1285
    %v2892 = vpop.f32.mrf.mxu0
    %v2893 = vadd.f32 %v2804, %v2892
    %v2894 = vpop.f32.mrf.mxu0
    %v2895 = vadd.f32 %v2806, %v2894
    %2896 = vmatmul.bf16.gmra.mxu0 %v1292
    %v2897 = vpop.f32.mrf.mxu0
    %v2898 = vadd.f32 %v2809, %v2897
    %v2899 = vpop.f32.mrf.mxu0
    %v2900 = vadd.f32 %v2811, %v2899
    %2901 = vmatmul.bf16.gmra.mxu0 %v1299
    %v2902 = vpop.f32.mrf.mxu0
    %v2903 = vadd.f32 %v2814, %v2902
    %v2904 = vpop.f32.mrf.mxu0
    %v2905 = vadd.f32 %v2816, %v2904
    %2906 = vmatmul.bf16.gmra.mxu0 %v1306
    %v2907 = vpop.f32.mrf.mxu0
    %v2908 = vadd.f32 %v2819, %v2907
    %v2909 = vpop.f32.mrf.mxu0
    %v2910 = vadd.f32 %v2821, %v2909
    %2911 = vmatmul.bf16.gmra.mxu0 %v1313
    %v2912 = vpop.f32.mrf.mxu0
    %v2913 = vadd.f32 %v2824, %v2912
    %v2914 = vpop.f32.mrf.mxu0
    %v2915 = vadd.f32 %v2826, %v2914
    %2916 = vmatmul.bf16.gmra.mxu0 %v1320
    %v2917 = vpop.f32.mrf.mxu0
    %v2918 = vadd.f32 %v2829, %v2917
    %v2919 = vpop.f32.mrf.mxu0
    %v2920 = vadd.f32 %v2831, %v2919
    %2921 = vmatmul.bf16.gmra.mxu0 %v1327
    %v2922 = vpop.f32.mrf.mxu0
    %v2923 = vadd.f32 %v2834, %v2922
    %v2924 = vpop.f32.mrf.mxu0
    %v2925 = vadd.f32 %v2836, %v2924
    %2926 = vmatmul.bf16.gmra.mxu0 %v1334
    %v2927 = vpop.f32.mrf.mxu0
    %v2928 = vadd.f32 %v2839, %v2927
    %v2929 = vpop.f32.mrf.mxu0
    %v2930 = vadd.f32 %v2841, %v2929
    %2931 = vmatmul.bf16.gmra.mxu0 %v1341
    %v2932 = vpop.f32.mrf.mxu0
    %v2933 = vadd.f32 %v2844, %v2932
    %v2934 = vpop.f32.mrf.mxu0
    %v2935 = vadd.f32 %v2846, %v2934
    %2936 = vmatmul.bf16.gmra.mxu0 %v1348
    %v2937 = vpop.f32.mrf.mxu0
    %v2938 = vadd.f32 %v2849, %v2937
    %v2939 = vpop.f32.mrf.mxu0
    %v2940 = vadd.f32 %v2851, %v2939
    %2941 = vmatmul.bf16.gmra.mxu0 %v1355
    %v2942 = vpop.f32.mrf.mxu0
    %v2943 = vadd.f32 %v2854, %v2942
    %v2944 = vpop.f32.mrf.mxu0
    %v2945 = vadd.f32 %v2856, %v2944
    %2946 = vdwg.mxu0
    %2947 = vmatpush.bf16.msra.mxu0 %v2299
    %2948 = vmatpush.bf16.msra.mxu0 %v2295
    %2949 = vmatpush.bf16.msra.mxu0 %v2291
    %2950 = vmatpush.bf16.msra.mxu0 %v2287
    %2951 = vmatpush.bf16.msra.mxu0 %v2283
    %2952 = vmatpush.bf16.msra.mxu0 %v2279
    %2953 = vmatpush.bf16.msra.mxu0 %v2275
    %2954 = vmatpush.bf16.msra.mxu0 %v2271
    %2955 = vmatmul.bf16.gmra.mxu0 %v1251
    %v2956 = vpop.f32.mrf.mxu0
    %v2957 = vadd.f32 %v2868, %v2956
    %v2958 = vpop.f32.mrf.mxu0
    %v2959 = vadd.f32 %v2870, %v2958
    %2960 = vmatmul.bf16.gmra.mxu0 %v1258
    %v2961 = vpop.f32.mrf.mxu0
    %v2962 = vadd.f32 %v2873, %v2961
    %v2963 = vpop.f32.mrf.mxu0
    %v2964 = vadd.f32 %v2875, %v2963
    %2965 = vmatmul.bf16.gmra.mxu0 %v1265
    %v2966 = vpop.f32.mrf.mxu0
    %v2967 = vadd.f32 %v2878, %v2966
    %v2968 = vpop.f32.mrf.mxu0
    %v2969 = vadd.f32 %v2880, %v2968
    %2970 = vmatmul.bf16.gmra.mxu0 %v1272
    %v2971 = vpop.f32.mrf.mxu0
    %v2972 = vadd.f32 %v2883, %v2971
    %v2973 = vpop.f32.mrf.mxu0
    %v2974 = vadd.f32 %v2885, %v2973
    %2975 = vmatmul.bf16.gmra.mxu0 %v1279
    %v2976 = vpop.f32.mrf.mxu0
    %v2977 = vadd.f32 %v2888, %v2976
    %v2978 = vpop.f32.mrf.mxu0
    %v2979 = vadd.f32 %v2890, %v2978
    %2980 = vmatmul.bf16.gmra.mxu0 %v1286
    %v2981 = vpop.f32.mrf.mxu0
    %v2982 = vadd.f32 %v2893, %v2981
    %v2983 = vpop.f32.mrf.mxu0
    %v2984 = vadd.f32 %v2895, %v2983
    %2985 = vmatmul.bf16.gmra.mxu0 %v1293
    %v2986 = vpop.f32.mrf.mxu0
    %v2987 = vadd.f32 %v2898, %v2986
    %v2988 = vpop.f32.mrf.mxu0
    %v2989 = vadd.f32 %v2900, %v2988
    %2990 = vmatmul.bf16.gmra.mxu0 %v1300
    %v2991 = vpop.f32.mrf.mxu0
    %v2992 = vadd.f32 %v2903, %v2991
    %v2993 = vpop.f32.mrf.mxu0
    %v2994 = vadd.f32 %v2905, %v2993
    %2995 = vmatmul.bf16.gmra.mxu0 %v1307
    %v2996 = vpop.f32.mrf.mxu0
    %v2997 = vadd.f32 %v2908, %v2996
    %v2998 = vpop.f32.mrf.mxu0
    %v2999 = vadd.f32 %v2910, %v2998
    %3000 = vmatmul.bf16.gmra.mxu0 %v1314
    %v3001 = vpop.f32.mrf.mxu0
    %v3002 = vadd.f32 %v2913, %v3001
    %v3003 = vpop.f32.mrf.mxu0
    %v3004 = vadd.f32 %v2915, %v3003
    %3005 = vmatmul.bf16.gmra.mxu0 %v1321
    %v3006 = vpop.f32.mrf.mxu0
    %v3007 = vadd.f32 %v2918, %v3006
    %v3008 = vpop.f32.mrf.mxu0
    %v3009 = vadd.f32 %v2920, %v3008
    %3010 = vmatmul.bf16.gmra.mxu0 %v1328
    %v3011 = vpop.f32.mrf.mxu0
    %v3012 = vadd.f32 %v2923, %v3011
    %v3013 = vpop.f32.mrf.mxu0
    %v3014 = vadd.f32 %v2925, %v3013
    %3015 = vmatmul.bf16.gmra.mxu0 %v1335
    %v3016 = vpop.f32.mrf.mxu0
    %v3017 = vadd.f32 %v2928, %v3016
    %v3018 = vpop.f32.mrf.mxu0
    %v3019 = vadd.f32 %v2930, %v3018
    %3020 = vmatmul.bf16.gmra.mxu0 %v1342
    %v3021 = vpop.f32.mrf.mxu0
    %v3022 = vadd.f32 %v2933, %v3021
    %v3023 = vpop.f32.mrf.mxu0
    %v3024 = vadd.f32 %v2935, %v3023
    %3025 = vmatmul.bf16.gmra.mxu0 %v1349
    %v3026 = vpop.f32.mrf.mxu0
    %v3027 = vadd.f32 %v2938, %v3026
    %v3028 = vpop.f32.mrf.mxu0
    %v3029 = vadd.f32 %v2940, %v3028
    %3030 = vmatmul.bf16.gmra.mxu0 %v1356
    %v3031 = vpop.f32.mrf.mxu0
    %v3032 = vadd.f32 %v2943, %v3031
    %v3033 = vpop.f32.mrf.mxu0
    %v3034 = vadd.f32 %v2945, %v3033
    %3035 = vdwg.mxu0
    %3036 = vmatpush.bf16.msra.mxu0 %v2331
    %3037 = vmatpush.bf16.msra.mxu0 %v2327
    %3038 = vmatpush.bf16.msra.mxu0 %v2323
    %3039 = vmatpush.bf16.msra.mxu0 %v2319
    %3040 = vmatpush.bf16.msra.mxu0 %v2315
    %3041 = vmatpush.bf16.msra.mxu0 %v2311
    %3042 = vmatpush.bf16.msra.mxu0 %v2307
    %3043 = vmatpush.bf16.msra.mxu0 %v2303
    %3044 = vmatmul.bf16.gmra.mxu0 %v1252
    %v3045 = vpop.f32.mrf.mxu0
    %v3046 = vadd.f32 %v2957, %v3045
    %v3047 = vpop.f32.mrf.mxu0
    %v3048 = vadd.f32 %v2959, %v3047
    %3049 = vmatmul.bf16.gmra.mxu0 %v1259
    %v3050 = vpop.f32.mrf.mxu0
    %v3051 = vadd.f32 %v2962, %v3050
    %v3052 = vpop.f32.mrf.mxu0
    %v3053 = vadd.f32 %v2964, %v3052
    %3054 = vmatmul.bf16.gmra.mxu0 %v1266
    %v3055 = vpop.f32.mrf.mxu0
    %v3056 = vadd.f32 %v2967, %v3055
    %v3057 = vpop.f32.mrf.mxu0
    %v3058 = vadd.f32 %v2969, %v3057
    %3059 = vmatmul.bf16.gmra.mxu0 %v1273
    %v3060 = vpop.f32.mrf.mxu0
    %v3061 = vadd.f32 %v2972, %v3060
    %v3062 = vpop.f32.mrf.mxu0
    %v3063 = vadd.f32 %v2974, %v3062
    %3064 = vmatmul.bf16.gmra.mxu0 %v1280
    %v3065 = vpop.f32.mrf.mxu0
    %v3066 = vadd.f32 %v2977, %v3065
    %v3067 = vpop.f32.mrf.mxu0
    %v3068 = vadd.f32 %v2979, %v3067
    %3069 = vmatmul.bf16.gmra.mxu0 %v1287
    %v3070 = vpop.f32.mrf.mxu0
    %v3071 = vadd.f32 %v2982, %v3070
    %v3072 = vpop.f32.mrf.mxu0
    %v3073 = vadd.f32 %v2984, %v3072
    %3074 = vmatmul.bf16.gmra.mxu0 %v1294
    %v3075 = vpop.f32.mrf.mxu0
    %v3076 = vadd.f32 %v2987, %v3075
    %v3077 = vpop.f32.mrf.mxu0
    %v3078 = vadd.f32 %v2989, %v3077
    %3079 = vmatmul.bf16.gmra.mxu0 %v1301
    %v3080 = vpop.f32.mrf.mxu0
    %v3081 = vadd.f32 %v2992, %v3080
    %v3082 = vpop.f32.mrf.mxu0
    %v3083 = vadd.f32 %v2994, %v3082
    %3084 = vmatmul.bf16.gmra.mxu0 %v1308
    %v3085 = vpop.f32.mrf.mxu0
    %v3086 = vadd.f32 %v2997, %v3085
    %v3087 = vpop.f32.mrf.mxu0
    %v3088 = vadd.f32 %v2999, %v3087
    %3089 = vmatmul.bf16.gmra.mxu0 %v1315
    %v3090 = vpop.f32.mrf.mxu0
    %v3091 = vadd.f32 %v3002, %v3090
    %v3092 = vpop.f32.mrf.mxu0
    %v3093 = vadd.f32 %v3004, %v3092
    %3094 = vmatmul.bf16.gmra.mxu0 %v1322
    %v3095 = vpop.f32.mrf.mxu0
    %v3096 = vadd.f32 %v3007, %v3095
    %v3097 = vpop.f32.mrf.mxu0
    %v3098 = vadd.f32 %v3009, %v3097
    %3099 = vmatmul.bf16.gmra.mxu0 %v1329
    %v3100 = vpop.f32.mrf.mxu0
    %v3101 = vadd.f32 %v3012, %v3100
    %v3102 = vpop.f32.mrf.mxu0
    %v3103 = vadd.f32 %v3014, %v3102
    %3104 = vmatmul.bf16.gmra.mxu0 %v1336
    %v3105 = vpop.f32.mrf.mxu0
    %v3106 = vadd.f32 %v3017, %v3105
    %v3107 = vpop.f32.mrf.mxu0
    %v3108 = vadd.f32 %v3019, %v3107
    %3109 = vmatmul.bf16.gmra.mxu0 %v1343
    %v3110 = vpop.f32.mrf.mxu0
    %v3111 = vadd.f32 %v3022, %v3110
    %v3112 = vpop.f32.mrf.mxu0
    %v3113 = vadd.f32 %v3024, %v3112
    %3114 = vmatmul.bf16.gmra.mxu0 %v1350
    %v3115 = vpop.f32.mrf.mxu0
    %v3116 = vadd.f32 %v3027, %v3115
    %v3117 = vpop.f32.mrf.mxu0
    %v3118 = vadd.f32 %v3029, %v3117
    %3119 = vmatmul.bf16.gmra.mxu0 %v1357
    %v3120 = vpop.f32.mrf.mxu0
    %v3121 = vadd.f32 %v3032, %v3120
    %v3122 = vpop.f32.mrf.mxu0
    %v3123 = vadd.f32 %v3034, %v3122
    %3124 = vdwg.mxu0
    %3125 = vmatpush.bf16.msra.mxu0 %v2363
    %3126 = vmatpush.bf16.msra.mxu0 %v2359
    %3127 = vmatpush.bf16.msra.mxu0 %v2355
    %3128 = vmatpush.bf16.msra.mxu0 %v2351
    %3129 = vmatpush.bf16.msra.mxu0 %v2347
    %3130 = vmatpush.bf16.msra.mxu0 %v2343
    %3131 = vmatpush.bf16.msra.mxu0 %v2339
    %3132 = vmatpush.bf16.msra.mxu0 %v2335
    %3133 = vmatmul.bf16.gmra.mxu0 %v1253
    %v3134 = vpop.f32.mrf.mxu0
    %v3135 = vadd.f32 %v3046, %v3134
    %v3136 = vpop.f32.mrf.mxu0
    %v3137 = vadd.f32 %v3048, %v3136
    %3138 = vmatmul.bf16.gmra.mxu0 %v1260
    %v3139 = vpop.f32.mrf.mxu0
    %v3140 = vadd.f32 %v3051, %v3139
    %v3141 = vpop.f32.mrf.mxu0
    %v3142 = vadd.f32 %v3053, %v3141
    %3143 = vmatmul.bf16.gmra.mxu0 %v1267
    %v3144 = vpop.f32.mrf.mxu0
    %v3145 = vadd.f32 %v3056, %v3144
    %v3146 = vpop.f32.mrf.mxu0
    %v3147 = vadd.f32 %v3058, %v3146
    %3148 = vmatmul.bf16.gmra.mxu0 %v1274
    %v3149 = vpop.f32.mrf.mxu0
    %v3150 = vadd.f32 %v3061, %v3149
    %v3151 = vpop.f32.mrf.mxu0
    %v3152 = vadd.f32 %v3063, %v3151
    %3153 = vmatmul.bf16.gmra.mxu0 %v1281
    %v3154 = vpop.f32.mrf.mxu0
    %v3155 = vadd.f32 %v3066, %v3154
    %v3156 = vpop.f32.mrf.mxu0
    %v3157 = vadd.f32 %v3068, %v3156
    %3158 = vmatmul.bf16.gmra.mxu0 %v1288
    %v3159 = vpop.f32.mrf.mxu0
    %v3160 = vadd.f32 %v3071, %v3159
    %v3161 = vpop.f32.mrf.mxu0
    %v3162 = vadd.f32 %v3073, %v3161
    %3163 = vmatmul.bf16.gmra.mxu0 %v1295
    %v3164 = vpop.f32.mrf.mxu0
    %v3165 = vadd.f32 %v3076, %v3164
    %v3166 = vpop.f32.mrf.mxu0
    %v3167 = vadd.f32 %v3078, %v3166
    %3168 = vmatmul.bf16.gmra.mxu0 %v1302
    %v3169 = vpop.f32.mrf.mxu0
    %v3170 = vadd.f32 %v3081, %v3169
    %v3171 = vpop.f32.mrf.mxu0
    %v3172 = vadd.f32 %v3083, %v3171
    %3173 = vmatmul.bf16.gmra.mxu0 %v1309
    %v3174 = vpop.f32.mrf.mxu0
    %v3175 = vadd.f32 %v3086, %v3174
    %v3176 = vpop.f32.mrf.mxu0
    %v3177 = vadd.f32 %v3088, %v3176
    %3178 = vmatmul.bf16.gmra.mxu0 %v1316
    %v3179 = vpop.f32.mrf.mxu0
    %v3180 = vadd.f32 %v3091, %v3179
    %v3181 = vpop.f32.mrf.mxu0
    %v3182 = vadd.f32 %v3093, %v3181
    %3183 = vmatmul.bf16.gmra.mxu0 %v1323
    %v3184 = vpop.f32.mrf.mxu0
    %v3185 = vadd.f32 %v3096, %v3184
    %v3186 = vpop.f32.mrf.mxu0
    %v3187 = vadd.f32 %v3098, %v3186
    %3188 = vmatmul.bf16.gmra.mxu0 %v1330
    %v3189 = vpop.f32.mrf.mxu0
    %v3190 = vadd.f32 %v3101, %v3189
    %v3191 = vpop.f32.mrf.mxu0
    %v3192 = vadd.f32 %v3103, %v3191
    %3193 = vmatmul.bf16.gmra.mxu0 %v1337
    %v3194 = vpop.f32.mrf.mxu0
    %v3195 = vadd.f32 %v3106, %v3194
    %v3196 = vpop.f32.mrf.mxu0
    %v3197 = vadd.f32 %v3108, %v3196
    %3198 = vmatmul.bf16.gmra.mxu0 %v1344
    %v3199 = vpop.f32.mrf.mxu0
    %v3200 = vadd.f32 %v3111, %v3199
    %v3201 = vpop.f32.mrf.mxu0
    %v3202 = vadd.f32 %v3113, %v3201
    %3203 = vmatmul.bf16.gmra.mxu0 %v1351
    %v3204 = vpop.f32.mrf.mxu0
    %v3205 = vadd.f32 %v3116, %v3204
    %v3206 = vpop.f32.mrf.mxu0
    %v3207 = vadd.f32 %v3118, %v3206
    %3208 = vmatmul.bf16.gmra.mxu0 %v1358
    %v3209 = vpop.f32.mrf.mxu0
    %v3210 = vadd.f32 %v3121, %v3209
    %v3211 = vpop.f32.mrf.mxu0
    %v3212 = vadd.f32 %v3123, %v3211
    %3213 = vdwg.mxu0
    %3214 = vmatpush.bf16.msra.mxu0 %v2172
    %3215 = vmatpush.bf16.msra.mxu0 %v2168
    %3216 = vmatpush.bf16.msra.mxu0 %v2164
    %3217 = vmatpush.bf16.msra.mxu0 %v2160
    %3218 = vmatpush.bf16.msra.mxu0 %v2156
    %3219 = vmatpush.bf16.msra.mxu0 %v2152
    %3220 = vmatpush.bf16.msra.mxu0 %v2148
    %3221 = vmatpush.bf16.msra.mxu0 %v2144
    %3222 = vmatmul.bf16.gmra.mxu0 %v1247
    %v3223 = vpop.f32.mrf.mxu0
    %v3224 = vadd.f32 0.0, %v3223
    %v3225 = vpop.f32.mrf.mxu0
    %v3226 = vadd.f32 0.0, %v3225
    %3227 = vmatmul.bf16.gmra.mxu0 %v1254
    %v3228 = vpop.f32.mrf.mxu0
    %v3229 = vadd.f32 0.0, %v3228
    %v3230 = vpop.f32.mrf.mxu0
    %v3231 = vadd.f32 0.0, %v3230
    %3232 = vmatmul.bf16.gmra.mxu0 %v1261
    %v3233 = vpop.f32.mrf.mxu0
    %v3234 = vadd.f32 0.0, %v3233
    %v3235 = vpop.f32.mrf.mxu0
    %v3236 = vadd.f32 0.0, %v3235
    %3237 = vmatmul.bf16.gmra.mxu0 %v1268
    %v3238 = vpop.f32.mrf.mxu0
    %v3239 = vadd.f32 0.0, %v3238
    %v3240 = vpop.f32.mrf.mxu0
    %v3241 = vadd.f32 0.0, %v3240
    %3242 = vmatmul.bf16.gmra.mxu0 %v1275
    %v3243 = vpop.f32.mrf.mxu0
    %v3244 = vadd.f32 0.0, %v3243
    %v3245 = vpop.f32.mrf.mxu0
    %v3246 = vadd.f32 0.0, %v3245
    %3247 = vmatmul.bf16.gmra.mxu0 %v1282
    %v3248 = vpop.f32.mrf.mxu0
    %v3249 = vadd.f32 0.0, %v3248
    %v3250 = vpop.f32.mrf.mxu0
    %v3251 = vadd.f32 0.0, %v3250
    %3252 = vmatmul.bf16.gmra.mxu0 %v1289
    %v3253 = vpop.f32.mrf.mxu0
    %v3254 = vadd.f32 0.0, %v3253
    %v3255 = vpop.f32.mrf.mxu0
    %v3256 = vadd.f32 0.0, %v3255
    %3257 = vmatmul.bf16.gmra.mxu0 %v1296
    %v3258 = vpop.f32.mrf.mxu0
    %v3259 = vadd.f32 0.0, %v3258
    %v3260 = vpop.f32.mrf.mxu0
    %v3261 = vadd.f32 0.0, %v3260
    %3262 = vmatmul.bf16.gmra.mxu0 %v1303
    %v3263 = vpop.f32.mrf.mxu0
    %v3264 = vadd.f32 0.0, %v3263
    %v3265 = vpop.f32.mrf.mxu0
    %v3266 = vadd.f32 0.0, %v3265
    %3267 = vmatmul.bf16.gmra.mxu0 %v1310
    %v3268 = vpop.f32.mrf.mxu0
    %v3269 = vadd.f32 0.0, %v3268
    %v3270 = vpop.f32.mrf.mxu0
    %v3271 = vadd.f32 0.0, %v3270
    %3272 = vmatmul.bf16.gmra.mxu0 %v1317
    %v3273 = vpop.f32.mrf.mxu0
    %v3274 = vadd.f32 0.0, %v3273
    %v3275 = vpop.f32.mrf.mxu0
    %v3276 = vadd.f32 0.0, %v3275
    %3277 = vmatmul.bf16.gmra.mxu0 %v1324
    %v3278 = vpop.f32.mrf.mxu0
    %v3279 = vadd.f32 0.0, %v3278
    %v3280 = vpop.f32.mrf.mxu0
    %v3281 = vadd.f32 0.0, %v3280
    %3282 = vmatmul.bf16.gmra.mxu0 %v1331
    %v3283 = vpop.f32.mrf.mxu0
    %v3284 = vadd.f32 0.0, %v3283
    %v3285 = vpop.f32.mrf.mxu0
    %v3286 = vadd.f32 0.0, %v3285
    %3287 = vmatmul.bf16.gmra.mxu0 %v1338
    %v3288 = vpop.f32.mrf.mxu0
    %v3289 = vadd.f32 0.0, %v3288
    %v3290 = vpop.f32.mrf.mxu0
    %v3291 = vadd.f32 0.0, %v3290
    %3292 = vmatmul.bf16.gmra.mxu0 %v1345
    %v3293 = vpop.f32.mrf.mxu0
    %v3294 = vadd.f32 0.0, %v3293
    %v3295 = vpop.f32.mrf.mxu0
    %v3296 = vadd.f32 0.0, %v3295
    %3297 = vmatmul.bf16.gmra.mxu0 %v1352
    %v3298 = vpop.f32.mrf.mxu0
    %v3299 = vadd.f32 0.0, %v3298
    %v3300 = vpop.f32.mrf.mxu0
    %v3301 = vadd.f32 0.0, %v3300
    %3302 = vdwg.mxu0
    %3303 = vmatpush.bf16.msra.mxu0 %v2204
    %3304 = vmatpush.bf16.msra.mxu0 %v2200
    %3305 = vmatpush.bf16.msra.mxu0 %v2196
    %3306 = vmatpush.bf16.msra.mxu0 %v2192
    %3307 = vmatpush.bf16.msra.mxu0 %v2188
    %3308 = vmatpush.bf16.msra.mxu0 %v2184
    %3309 = vmatpush.bf16.msra.mxu0 %v2180
    %3310 = vmatpush.bf16.msra.mxu0 %v2176
    %3311 = vmatmul.bf16.gmra.mxu0 %v1248
    %v3312 = vpop.f32.mrf.mxu0
    %v3313 = vadd.f32 %v3224, %v3312
    %v3314 = vpop.f32.mrf.mxu0
    %v3315 = vadd.f32 %v3226, %v3314
    %3316 = vmatmul.bf16.gmra.mxu0 %v1255
    %v3317 = vpop.f32.mrf.mxu0
    %v3318 = vadd.f32 %v3229, %v3317
    %v3319 = vpop.f32.mrf.mxu0
    %v3320 = vadd.f32 %v3231, %v3319
    %3321 = vmatmul.bf16.gmra.mxu0 %v1262
    %v3322 = vpop.f32.mrf.mxu0
    %v3323 = vadd.f32 %v3234, %v3322
    %v3324 = vpop.f32.mrf.mxu0
    %v3325 = vadd.f32 %v3236, %v3324
    %3326 = vmatmul.bf16.gmra.mxu0 %v1269
    %v3327 = vpop.f32.mrf.mxu0
    %v3328 = vadd.f32 %v3239, %v3327
    %v3329 = vpop.f32.mrf.mxu0
    %v3330 = vadd.f32 %v3241, %v3329
    %3331 = vmatmul.bf16.gmra.mxu0 %v1276
    %v3332 = vpop.f32.mrf.mxu0
    %v3333 = vadd.f32 %v3244, %v3332
    %v3334 = vpop.f32.mrf.mxu0
    %v3335 = vadd.f32 %v3246, %v3334
    %3336 = vmatmul.bf16.gmra.mxu0 %v1283
    %v3337 = vpop.f32.mrf.mxu0
    %v3338 = vadd.f32 %v3249, %v3337
    %v3339 = vpop.f32.mrf.mxu0
    %v3340 = vadd.f32 %v3251, %v3339
    %3341 = vmatmul.bf16.gmra.mxu0 %v1290
    %v3342 = vpop.f32.mrf.mxu0
    %v3343 = vadd.f32 %v3254, %v3342
    %v3344 = vpop.f32.mrf.mxu0
    %v3345 = vadd.f32 %v3256, %v3344
    %3346 = vmatmul.bf16.gmra.mxu0 %v1297
    %v3347 = vpop.f32.mrf.mxu0
    %v3348 = vadd.f32 %v3259, %v3347
    %v3349 = vpop.f32.mrf.mxu0
    %v3350 = vadd.f32 %v3261, %v3349
    %3351 = vmatmul.bf16.gmra.mxu0 %v1304
    %v3352 = vpop.f32.mrf.mxu0
    %v3353 = vadd.f32 %v3264, %v3352
    %v3354 = vpop.f32.mrf.mxu0
    %v3355 = vadd.f32 %v3266, %v3354
    %3356 = vmatmul.bf16.gmra.mxu0 %v1311
    %v3357 = vpop.f32.mrf.mxu0
    %v3358 = vadd.f32 %v3269, %v3357
    %v3359 = vpop.f32.mrf.mxu0
    %v3360 = vadd.f32 %v3271, %v3359
    %3361 = vmatmul.bf16.gmra.mxu0 %v1318
    %v3362 = vpop.f32.mrf.mxu0
    %v3363 = vadd.f32 %v3274, %v3362
    %v3364 = vpop.f32.mrf.mxu0
    %v3365 = vadd.f32 %v3276, %v3364
    %3366 = vmatmul.bf16.gmra.mxu0 %v1325
    %v3367 = vpop.f32.mrf.mxu0
    %v3368 = vadd.f32 %v3279, %v3367
    %v3369 = vpop.f32.mrf.mxu0
    %v3370 = vadd.f32 %v3281, %v3369
    %3371 = vmatmul.bf16.gmra.mxu0 %v1332
    %v3372 = vpop.f32.mrf.mxu0
    %v3373 = vadd.f32 %v3284, %v3372
    %v3374 = vpop.f32.mrf.mxu0
    %v3375 = vadd.f32 %v3286, %v3374
    %3376 = vmatmul.bf16.gmra.mxu0 %v1339
    %v3377 = vpop.f32.mrf.mxu0
    %v3378 = vadd.f32 %v3289, %v3377
    %v3379 = vpop.f32.mrf.mxu0
    %v3380 = vadd.f32 %v3291, %v3379
    %3381 = vmatmul.bf16.gmra.mxu0 %v1346
    %v3382 = vpop.f32.mrf.mxu0
    %v3383 = vadd.f32 %v3294, %v3382
    %v3384 = vpop.f32.mrf.mxu0
    %v3385 = vadd.f32 %v3296, %v3384
    %3386 = vmatmul.bf16.gmra.mxu0 %v1353
    %v3387 = vpop.f32.mrf.mxu0
    %v3388 = vadd.f32 %v3299, %v3387
    %v3389 = vpop.f32.mrf.mxu0
    %v3390 = vadd.f32 %v3301, %v3389
    %3391 = vdwg.mxu0
    %3392 = vmatpush.bf16.msra.mxu0 %v2236
    %3393 = vmatpush.bf16.msra.mxu0 %v2232
    %3394 = vmatpush.bf16.msra.mxu0 %v2228
    %3395 = vmatpush.bf16.msra.mxu0 %v2224
    %3396 = vmatpush.bf16.msra.mxu0 %v2220
    %3397 = vmatpush.bf16.msra.mxu0 %v2216
    %3398 = vmatpush.bf16.msra.mxu0 %v2212
    %3399 = vmatpush.bf16.msra.mxu0 %v2208
    %3400 = vmatmul.bf16.gmra.mxu0 %v1249
    %v3401 = vpop.f32.mrf.mxu0
    %v3402 = vadd.f32 %v3313, %v3401
    %v3403 = vpop.f32.mrf.mxu0
    %v3404 = vadd.f32 %v3315, %v3403
    %3405 = vmatmul.bf16.gmra.mxu0 %v1256
    %v3406 = vpop.f32.mrf.mxu0
    %v3407 = vadd.f32 %v3318, %v3406
    %v3408 = vpop.f32.mrf.mxu0
    %v3409 = vadd.f32 %v3320, %v3408
    %3410 = vmatmul.bf16.gmra.mxu0 %v1263
    %v3411 = vpop.f32.mrf.mxu0
    %v3412 = vadd.f32 %v3323, %v3411
    %v3413 = vpop.f32.mrf.mxu0
    %v3414 = vadd.f32 %v3325, %v3413
    %3415 = vmatmul.bf16.gmra.mxu0 %v1270
    %v3416 = vpop.f32.mrf.mxu0
    %v3417 = vadd.f32 %v3328, %v3416
    %v3418 = vpop.f32.mrf.mxu0
    %v3419 = vadd.f32 %v3330, %v3418
    %3420 = vmatmul.bf16.gmra.mxu0 %v1277
    %v3421 = vpop.f32.mrf.mxu0
    %v3422 = vadd.f32 %v3333, %v3421
    %v3423 = vpop.f32.mrf.mxu0
    %v3424 = vadd.f32 %v3335, %v3423
    %3425 = vmatmul.bf16.gmra.mxu0 %v1284
    %v3426 = vpop.f32.mrf.mxu0
    %v3427 = vadd.f32 %v3338, %v3426
    %v3428 = vpop.f32.mrf.mxu0
    %v3429 = vadd.f32 %v3340, %v3428
    %3430 = vmatmul.bf16.gmra.mxu0 %v1291
    %v3431 = vpop.f32.mrf.mxu0
    %v3432 = vadd.f32 %v3343, %v3431
    %v3433 = vpop.f32.mrf.mxu0
    %v3434 = vadd.f32 %v3345, %v3433
    %3435 = vmatmul.bf16.gmra.mxu0 %v1298
    %v3436 = vpop.f32.mrf.mxu0
    %v3437 = vadd.f32 %v3348, %v3436
    %v3438 = vpop.f32.mrf.mxu0
    %v3439 = vadd.f32 %v3350, %v3438
    %3440 = vmatmul.bf16.gmra.mxu0 %v1305
    %v3441 = vpop.f32.mrf.mxu0
    %v3442 = vadd.f32 %v3353, %v3441
    %v3443 = vpop.f32.mrf.mxu0
    %v3444 = vadd.f32 %v3355, %v3443
    %3445 = vmatmul.bf16.gmra.mxu0 %v1312
    %v3446 = vpop.f32.mrf.mxu0
    %v3447 = vadd.f32 %v3358, %v3446
    %v3448 = vpop.f32.mrf.mxu0
    %v3449 = vadd.f32 %v3360, %v3448
    %3450 = vmatmul.bf16.gmra.mxu0 %v1319
    %v3451 = vpop.f32.mrf.mxu0
    %v3452 = vadd.f32 %v3363, %v3451
    %v3453 = vpop.f32.mrf.mxu0
    %v3454 = vadd.f32 %v3365, %v3453
    %3455 = vmatmul.bf16.gmra.mxu0 %v1326
    %v3456 = vpop.f32.mrf.mxu0
    %v3457 = vadd.f32 %v3368, %v3456
    %v3458 = vpop.f32.mrf.mxu0
    %v3459 = vadd.f32 %v3370, %v3458
    %3460 = vmatmul.bf16.gmra.mxu0 %v1333
    %v3461 = vpop.f32.mrf.mxu0
    %v3462 = vadd.f32 %v3373, %v3461
    %v3463 = vpop.f32.mrf.mxu0
    %v3464 = vadd.f32 %v3375, %v3463
    %3465 = vmatmul.bf16.gmra.mxu0 %v1340
    %v3466 = vpop.f32.mrf.mxu0
    %v3467 = vadd.f32 %v3378, %v3466
    %v3468 = vpop.f32.mrf.mxu0
    %v3469 = vadd.f32 %v3380, %v3468
    %3470 = vmatmul.bf16.gmra.mxu0 %v1347
    %v3471 = vpop.f32.mrf.mxu0
    %v3472 = vadd.f32 %v3383, %v3471
    %v3473 = vpop.f32.mrf.mxu0
    %v3474 = vadd.f32 %v3385, %v3473
    %3475 = vmatmul.bf16.gmra.mxu0 %v1354
    %v3476 = vpop.f32.mrf.mxu0
    %v3477 = vadd.f32 %v3388, %v3476
    %v3478 = vpop.f32.mrf.mxu0
    %v3479 = vadd.f32 %v3390, %v3478
    %3480 = vdwg.mxu0
    %3481 = vmatpush.bf16.msra.mxu0 %v2268
    %3482 = vmatpush.bf16.msra.mxu0 %v2264
    %3483 = vmatpush.bf16.msra.mxu0 %v2260
    %3484 = vmatpush.bf16.msra.mxu0 %v2256
    %3485 = vmatpush.bf16.msra.mxu0 %v2252
    %3486 = vmatpush.bf16.msra.mxu0 %v2248
    %3487 = vmatpush.bf16.msra.mxu0 %v2244
    %3488 = vmatpush.bf16.msra.mxu0 %v2240
    %3489 = vmatmul.bf16.gmra.mxu0 %v1250
    %v3490 = vpop.f32.mrf.mxu0
    %v3491 = vadd.f32 %v3402, %v3490
    %v3492 = vpop.f32.mrf.mxu0
    %v3493 = vadd.f32 %v3404, %v3492
    %3494 = vmatmul.bf16.gmra.mxu0 %v1257
    %v3495 = vpop.f32.mrf.mxu0
    %v3496 = vadd.f32 %v3407, %v3495
    %v3497 = vpop.f32.mrf.mxu0
    %v3498 = vadd.f32 %v3409, %v3497
    %3499 = vmatmul.bf16.gmra.mxu0 %v1264
    %v3500 = vpop.f32.mrf.mxu0
    %v3501 = vadd.f32 %v3412, %v3500
    %v3502 = vpop.f32.mrf.mxu0
    %v3503 = vadd.f32 %v3414, %v3502
    %3504 = vmatmul.bf16.gmra.mxu0 %v1271
    %v3505 = vpop.f32.mrf.mxu0
    %v3506 = vadd.f32 %v3417, %v3505
    %v3507 = vpop.f32.mrf.mxu0
    %v3508 = vadd.f32 %v3419, %v3507
    %3509 = vmatmul.bf16.gmra.mxu0 %v1278
    %v3510 = vpop.f32.mrf.mxu0
    %v3511 = vadd.f32 %v3422, %v3510
    %v3512 = vpop.f32.mrf.mxu0
    %v3513 = vadd.f32 %v3424, %v3512
    %3514 = vmatmul.bf16.gmra.mxu0 %v1285
    %v3515 = vpop.f32.mrf.mxu0
    %v3516 = vadd.f32 %v3427, %v3515
    %v3517 = vpop.f32.mrf.mxu0
    %v3518 = vadd.f32 %v3429, %v3517
    %3519 = vmatmul.bf16.gmra.mxu0 %v1292
    %v3520 = vpop.f32.mrf.mxu0
    %v3521 = vadd.f32 %v3432, %v3520
    %v3522 = vpop.f32.mrf.mxu0
    %v3523 = vadd.f32 %v3434, %v3522
    %3524 = vmatmul.bf16.gmra.mxu0 %v1299
    %v3525 = vpop.f32.mrf.mxu0
    %v3526 = vadd.f32 %v3437, %v3525
    %v3527 = vpop.f32.mrf.mxu0
    %v3528 = vadd.f32 %v3439, %v3527
    %3529 = vmatmul.bf16.gmra.mxu0 %v1306
    %v3530 = vpop.f32.mrf.mxu0
    %v3531 = vadd.f32 %v3442, %v3530
    %v3532 = vpop.f32.mrf.mxu0
    %v3533 = vadd.f32 %v3444, %v3532
    %3534 = vmatmul.bf16.gmra.mxu0 %v1313
    %v3535 = vpop.f32.mrf.mxu0
    %v3536 = vadd.f32 %v3447, %v3535
    %v3537 = vpop.f32.mrf.mxu0
    %v3538 = vadd.f32 %v3449, %v3537
    %3539 = vmatmul.bf16.gmra.mxu0 %v1320
    %v3540 = vpop.f32.mrf.mxu0
    %v3541 = vadd.f32 %v3452, %v3540
    %v3542 = vpop.f32.mrf.mxu0
    %v3543 = vadd.f32 %v3454, %v3542
    %3544 = vmatmul.bf16.gmra.mxu0 %v1327
    %v3545 = vpop.f32.mrf.mxu0
    %v3546 = vadd.f32 %v3457, %v3545
    %v3547 = vpop.f32.mrf.mxu0
    %v3548 = vadd.f32 %v3459, %v3547
    %3549 = vmatmul.bf16.gmra.mxu0 %v1334
    %v3550 = vpop.f32.mrf.mxu0
    %v3551 = vadd.f32 %v3462, %v3550
    %v3552 = vpop.f32.mrf.mxu0
    %v3553 = vadd.f32 %v3464, %v3552
    %3554 = vmatmul.bf16.gmra.mxu0 %v1341
    %v3555 = vpop.f32.mrf.mxu0
    %v3556 = vadd.f32 %v3467, %v3555
    %v3557 = vpop.f32.mrf.mxu0
    %v3558 = vadd.f32 %v3469, %v3557
    %3559 = vmatmul.bf16.gmra.mxu0 %v1348
    %v3560 = vpop.f32.mrf.mxu0
    %v3561 = vadd.f32 %v3472, %v3560
    %v3562 = vpop.f32.mrf.mxu0
    %v3563 = vadd.f32 %v3474, %v3562
    %3564 = vmatmul.bf16.gmra.mxu0 %v1355
    %v3565 = vpop.f32.mrf.mxu0
    %v3566 = vadd.f32 %v3477, %v3565
    %v3567 = vpop.f32.mrf.mxu0
    %v3568 = vadd.f32 %v3479, %v3567
    %3569 = vdwg.mxu0
    %3570 = vmatpush.bf16.msra.mxu0 %v2300
    %3571 = vmatpush.bf16.msra.mxu0 %v2296
    %3572 = vmatpush.bf16.msra.mxu0 %v2292
    %3573 = vmatpush.bf16.msra.mxu0 %v2288
    %3574 = vmatpush.bf16.msra.mxu0 %v2284
    %3575 = vmatpush.bf16.msra.mxu0 %v2280
    %3576 = vmatpush.bf16.msra.mxu0 %v2276
    %3577 = vmatpush.bf16.msra.mxu0 %v2272
    %3578 = vmatmul.bf16.gmra.mxu0 %v1251
    %v3579 = vpop.f32.mrf.mxu0
    %v3580 = vadd.f32 %v3491, %v3579
    %v3581 = vpop.f32.mrf.mxu0
    %v3582 = vadd.f32 %v3493, %v3581
    %3583 = vmatmul.bf16.gmra.mxu0 %v1258
    %v3584 = vpop.f32.mrf.mxu0
    %v3585 = vadd.f32 %v3496, %v3584
    %v3586 = vpop.f32.mrf.mxu0
    %v3587 = vadd.f32 %v3498, %v3586
    %3588 = vmatmul.bf16.gmra.mxu0 %v1265
    %v3589 = vpop.f32.mrf.mxu0
    %v3590 = vadd.f32 %v3501, %v3589
    %v3591 = vpop.f32.mrf.mxu0
    %v3592 = vadd.f32 %v3503, %v3591
    %3593 = vmatmul.bf16.gmra.mxu0 %v1272
    %v3594 = vpop.f32.mrf.mxu0
    %v3595 = vadd.f32 %v3506, %v3594
    %v3596 = vpop.f32.mrf.mxu0
    %v3597 = vadd.f32 %v3508, %v3596
    %3598 = vmatmul.bf16.gmra.mxu0 %v1279
    %v3599 = vpop.f32.mrf.mxu0
    %v3600 = vadd.f32 %v3511, %v3599
    %v3601 = vpop.f32.mrf.mxu0
    %v3602 = vadd.f32 %v3513, %v3601
    %3603 = vmatmul.bf16.gmra.mxu0 %v1286
    %v3604 = vpop.f32.mrf.mxu0
    %v3605 = vadd.f32 %v3516, %v3604
    %v3606 = vpop.f32.mrf.mxu0
    %v3607 = vadd.f32 %v3518, %v3606
    %3608 = vmatmul.bf16.gmra.mxu0 %v1293
    %v3609 = vpop.f32.mrf.mxu0
    %v3610 = vadd.f32 %v3521, %v3609
    %v3611 = vpop.f32.mrf.mxu0
    %v3612 = vadd.f32 %v3523, %v3611
    %3613 = vmatmul.bf16.gmra.mxu0 %v1300
    %v3614 = vpop.f32.mrf.mxu0
    %v3615 = vadd.f32 %v3526, %v3614
    %v3616 = vpop.f32.mrf.mxu0
    %v3617 = vadd.f32 %v3528, %v3616
    %3618 = vmatmul.bf16.gmra.mxu0 %v1307
    %v3619 = vpop.f32.mrf.mxu0
    %v3620 = vadd.f32 %v3531, %v3619
    %v3621 = vpop.f32.mrf.mxu0
    %v3622 = vadd.f32 %v3533, %v3621
    %3623 = vmatmul.bf16.gmra.mxu0 %v1314
    %v3624 = vpop.f32.mrf.mxu0
    %v3625 = vadd.f32 %v3536, %v3624
    %v3626 = vpop.f32.mrf.mxu0
    %v3627 = vadd.f32 %v3538, %v3626
    %3628 = vmatmul.bf16.gmra.mxu0 %v1321
    %v3629 = vpop.f32.mrf.mxu0
    %v3630 = vadd.f32 %v3541, %v3629
    %v3631 = vpop.f32.mrf.mxu0
    %v3632 = vadd.f32 %v3543, %v3631
    %3633 = vmatmul.bf16.gmra.mxu0 %v1328
    %v3634 = vpop.f32.mrf.mxu0
    %v3635 = vadd.f32 %v3546, %v3634
    %v3636 = vpop.f32.mrf.mxu0
    %v3637 = vadd.f32 %v3548, %v3636
    %3638 = vmatmul.bf16.gmra.mxu0 %v1335
    %v3639 = vpop.f32.mrf.mxu0
    %v3640 = vadd.f32 %v3551, %v3639
    %v3641 = vpop.f32.mrf.mxu0
    %v3642 = vadd.f32 %v3553, %v3641
    %3643 = vmatmul.bf16.gmra.mxu0 %v1342
    %v3644 = vpop.f32.mrf.mxu0
    %v3645 = vadd.f32 %v3556, %v3644
    %v3646 = vpop.f32.mrf.mxu0
    %v3647 = vadd.f32 %v3558, %v3646
    %3648 = vmatmul.bf16.gmra.mxu0 %v1349
    %v3649 = vpop.f32.mrf.mxu0
    %v3650 = vadd.f32 %v3561, %v3649
    %v3651 = vpop.f32.mrf.mxu0
    %v3652 = vadd.f32 %v3563, %v3651
    %3653 = vmatmul.bf16.gmra.mxu0 %v1356
    %v3654 = vpop.f32.mrf.mxu0
    %v3655 = vadd.f32 %v3566, %v3654
    %v3656 = vpop.f32.mrf.mxu0
    %v3657 = vadd.f32 %v3568, %v3656
    %3658 = vdwg.mxu0
    %3659 = vmatpush.bf16.msra.mxu0 %v2332
    %3660 = vmatpush.bf16.msra.mxu0 %v2328
    %3661 = vmatpush.bf16.msra.mxu0 %v2324
    %3662 = vmatpush.bf16.msra.mxu0 %v2320
    %3663 = vmatpush.bf16.msra.mxu0 %v2316
    %3664 = vmatpush.bf16.msra.mxu0 %v2312
    %3665 = vmatpush.bf16.msra.mxu0 %v2308
    %3666 = vmatpush.bf16.msra.mxu0 %v2304
    %3667 = vmatmul.bf16.gmra.mxu0 %v1252
    %v3668 = vpop.f32.mrf.mxu0
    %v3669 = vadd.f32 %v3580, %v3668
    %v3670 = vpop.f32.mrf.mxu0
    %v3671 = vadd.f32 %v3582, %v3670
    %3672 = vmatmul.bf16.gmra.mxu0 %v1259
    %v3673 = vpop.f32.mrf.mxu0
    %v3674 = vadd.f32 %v3585, %v3673
    %v3675 = vpop.f32.mrf.mxu0
    %v3676 = vadd.f32 %v3587, %v3675
    %3677 = vmatmul.bf16.gmra.mxu0 %v1266
    %v3678 = vpop.f32.mrf.mxu0
    %v3679 = vadd.f32 %v3590, %v3678
    %v3680 = vpop.f32.mrf.mxu0
    %v3681 = vadd.f32 %v3592, %v3680
    %3682 = vmatmul.bf16.gmra.mxu0 %v1273
    %v3683 = vpop.f32.mrf.mxu0
    %v3684 = vadd.f32 %v3595, %v3683
    %v3685 = vpop.f32.mrf.mxu0
    %v3686 = vadd.f32 %v3597, %v3685
    %3687 = vmatmul.bf16.gmra.mxu0 %v1280
    %v3688 = vpop.f32.mrf.mxu0
    %v3689 = vadd.f32 %v3600, %v3688
    %v3690 = vpop.f32.mrf.mxu0
    %v3691 = vadd.f32 %v3602, %v3690
    %3692 = vmatmul.bf16.gmra.mxu0 %v1287
    %v3693 = vpop.f32.mrf.mxu0
    %v3694 = vadd.f32 %v3605, %v3693
    %v3695 = vpop.f32.mrf.mxu0
    %v3696 = vadd.f32 %v3607, %v3695
    %3697 = vmatmul.bf16.gmra.mxu0 %v1294
    %v3698 = vpop.f32.mrf.mxu0
    %v3699 = vadd.f32 %v3610, %v3698
    %v3700 = vpop.f32.mrf.mxu0
    %v3701 = vadd.f32 %v3612, %v3700
    %3702 = vmatmul.bf16.gmra.mxu0 %v1301
    %v3703 = vpop.f32.mrf.mxu0
    %v3704 = vadd.f32 %v3615, %v3703
    %v3705 = vpop.f32.mrf.mxu0
    %v3706 = vadd.f32 %v3617, %v3705
    %3707 = vmatmul.bf16.gmra.mxu0 %v1308
    %v3708 = vpop.f32.mrf.mxu0
    %v3709 = vadd.f32 %v3620, %v3708
    %v3710 = vpop.f32.mrf.mxu0
    %v3711 = vadd.f32 %v3622, %v3710
    %3712 = vmatmul.bf16.gmra.mxu0 %v1315
    %v3713 = vpop.f32.mrf.mxu0
    %v3714 = vadd.f32 %v3625, %v3713
    %v3715 = vpop.f32.mrf.mxu0
    %v3716 = vadd.f32 %v3627, %v3715
    %3717 = vmatmul.bf16.gmra.mxu0 %v1322
    %v3718 = vpop.f32.mrf.mxu0
    %v3719 = vadd.f32 %v3630, %v3718
    %v3720 = vpop.f32.mrf.mxu0
    %v3721 = vadd.f32 %v3632, %v3720
    %3722 = vmatmul.bf16.gmra.mxu0 %v1329
    %v3723 = vpop.f32.mrf.mxu0
    %v3724 = vadd.f32 %v3635, %v3723
    %v3725 = vpop.f32.mrf.mxu0
    %v3726 = vadd.f32 %v3637, %v3725
    %3727 = vmatmul.bf16.gmra.mxu0 %v1336
    %v3728 = vpop.f32.mrf.mxu0
    %v3729 = vadd.f32 %v3640, %v3728
    %v3730 = vpop.f32.mrf.mxu0
    %v3731 = vadd.f32 %v3642, %v3730
    %3732 = vmatmul.bf16.gmra.mxu0 %v1343
    %v3733 = vpop.f32.mrf.mxu0
    %v3734 = vadd.f32 %v3645, %v3733
    %v3735 = vpop.f32.mrf.mxu0
    %v3736 = vadd.f32 %v3647, %v3735
    %3737 = vmatmul.bf16.gmra.mxu0 %v1350
    %v3738 = vpop.f32.mrf.mxu0
    %v3739 = vadd.f32 %v3650, %v3738
    %v3740 = vpop.f32.mrf.mxu0
    %v3741 = vadd.f32 %v3652, %v3740
    %3742 = vmatmul.bf16.gmra.mxu0 %v1357
    %v3743 = vpop.f32.mrf.mxu0
    %v3744 = vadd.f32 %v3655, %v3743
    %v3745 = vpop.f32.mrf.mxu0
    %v3746 = vadd.f32 %v3657, %v3745
    %3747 = vdwg.mxu0
    %3748 = vmatpush.bf16.msra.mxu0 %v2364
    %3749 = vmatpush.bf16.msra.mxu0 %v2360
    %3750 = vmatpush.bf16.msra.mxu0 %v2356
    %3751 = vmatpush.bf16.msra.mxu0 %v2352
    %3752 = vmatpush.bf16.msra.mxu0 %v2348
    %3753 = vmatpush.bf16.msra.mxu0 %v2344
    %3754 = vmatpush.bf16.msra.mxu0 %v2340
    %3755 = vmatpush.bf16.msra.mxu0 %v2336
    %3756 = vmatmul.bf16.gmra.mxu0 %v1253
    %v3757 = vpop.f32.mrf.mxu0
    %v3758 = vadd.f32 %v3669, %v3757
    %v3759 = vpop.f32.mrf.mxu0
    %v3760 = vadd.f32 %v3671, %v3759
    %3761 = vmatmul.bf16.gmra.mxu0 %v1260
    %v3762 = vpop.f32.mrf.mxu0
    %v3763 = vadd.f32 %v3674, %v3762
    %v3764 = vpop.f32.mrf.mxu0
    %v3765 = vadd.f32 %v3676, %v3764
    %3766 = vmatmul.bf16.gmra.mxu0 %v1267
    %v3767 = vpop.f32.mrf.mxu0
    %v3768 = vadd.f32 %v3679, %v3767
    %v3769 = vpop.f32.mrf.mxu0
    %v3770 = vadd.f32 %v3681, %v3769
    %3771 = vmatmul.bf16.gmra.mxu0 %v1274
    %v3772 = vpop.f32.mrf.mxu0
    %v3773 = vadd.f32 %v3684, %v3772
    %v3774 = vpop.f32.mrf.mxu0
    %v3775 = vadd.f32 %v3686, %v3774
    %3776 = vmatmul.bf16.gmra.mxu0 %v1281
    %v3777 = vpop.f32.mrf.mxu0
    %v3778 = vadd.f32 %v3689, %v3777
    %v3779 = vpop.f32.mrf.mxu0
    %v3780 = vadd.f32 %v3691, %v3779
    %3781 = vmatmul.bf16.gmra.mxu0 %v1288
    %v3782 = vpop.f32.mrf.mxu0
    %v3783 = vadd.f32 %v3694, %v3782
    %v3784 = vpop.f32.mrf.mxu0
    %v3785 = vadd.f32 %v3696, %v3784
    %3786 = vmatmul.bf16.gmra.mxu0 %v1295
    %v3787 = vpop.f32.mrf.mxu0
    %v3788 = vadd.f32 %v3699, %v3787
    %v3789 = vpop.f32.mrf.mxu0
    %v3790 = vadd.f32 %v3701, %v3789
    %3791 = vmatmul.bf16.gmra.mxu0 %v1302
    %v3792 = vpop.f32.mrf.mxu0
    %v3793 = vadd.f32 %v3704, %v3792
    %v3794 = vpop.f32.mrf.mxu0
    %v3795 = vadd.f32 %v3706, %v3794
    %3796 = vmatmul.bf16.gmra.mxu0 %v1309
    %v3797 = vpop.f32.mrf.mxu0
    %v3798 = vadd.f32 %v3709, %v3797
    %v3799 = vpop.f32.mrf.mxu0
    %v3800 = vadd.f32 %v3711, %v3799
    %3801 = vmatmul.bf16.gmra.mxu0 %v1316
    %v3802 = vpop.f32.mrf.mxu0
    %v3803 = vadd.f32 %v3714, %v3802
    %v3804 = vpop.f32.mrf.mxu0
    %v3805 = vadd.f32 %v3716, %v3804
    %3806 = vmatmul.bf16.gmra.mxu0 %v1323
    %v3807 = vpop.f32.mrf.mxu0
    %v3808 = vadd.f32 %v3719, %v3807
    %v3809 = vpop.f32.mrf.mxu0
    %v3810 = vadd.f32 %v3721, %v3809
    %3811 = vmatmul.bf16.gmra.mxu0 %v1330
    %v3812 = vpop.f32.mrf.mxu0
    %v3813 = vadd.f32 %v3724, %v3812
    %v3814 = vpop.f32.mrf.mxu0
    %v3815 = vadd.f32 %v3726, %v3814
    %3816 = vmatmul.bf16.gmra.mxu0 %v1337
    %v3817 = vpop.f32.mrf.mxu0
    %v3818 = vadd.f32 %v3729, %v3817
    %v3819 = vpop.f32.mrf.mxu0
    %v3820 = vadd.f32 %v3731, %v3819
    %3821 = vmatmul.bf16.gmra.mxu0 %v1344
    %v3822 = vpop.f32.mrf.mxu0
    %v3823 = vadd.f32 %v3734, %v3822
    %v3824 = vpop.f32.mrf.mxu0
    %v3825 = vadd.f32 %v3736, %v3824
    %3826 = vmatmul.bf16.gmra.mxu0 %v1351
    %v3827 = vpop.f32.mrf.mxu0
    %v3828 = vadd.f32 %v3739, %v3827
    %v3829 = vpop.f32.mrf.mxu0
    %v3830 = vadd.f32 %v3741, %v3829
    %3831 = vmatmul.bf16.gmra.mxu0 %v1358
    %v3832 = vpop.f32.mrf.mxu0
    %v3833 = vadd.f32 %v3744, %v3832
    %v3834 = vpop.f32.mrf.mxu0
    %v3835 = vadd.f32 %v3746, %v3834
    %3836 = vdwg.mxu0
    %3837 = vmatpush.bf16.msra.mxu0 %v2173
    %3838 = vmatpush.bf16.msra.mxu0 %v2169
    %3839 = vmatpush.bf16.msra.mxu0 %v2165
    %3840 = vmatpush.bf16.msra.mxu0 %v2161
    %3841 = vmatpush.bf16.msra.mxu0 %v2157
    %3842 = vmatpush.bf16.msra.mxu0 %v2153
    %3843 = vmatpush.bf16.msra.mxu0 %v2149
    %3844 = vmatpush.bf16.msra.mxu0 %v2145
    %3845 = vmatmul.bf16.gmra.mxu0 %v1247
    %v3846 = vpop.f32.mrf.mxu0
    %v3847 = vadd.f32 0.0, %v3846
    %v3848 = vpop.f32.mrf.mxu0
    %v3849 = vadd.f32 0.0, %v3848
    %3850 = vmatmul.bf16.gmra.mxu0 %v1254
    %v3851 = vpop.f32.mrf.mxu0
    %v3852 = vadd.f32 0.0, %v3851
    %v3853 = vpop.f32.mrf.mxu0
    %v3854 = vadd.f32 0.0, %v3853
    %3855 = vmatmul.bf16.gmra.mxu0 %v1261
    %v3856 = vpop.f32.mrf.mxu0
    %v3857 = vadd.f32 0.0, %v3856
    %v3858 = vpop.f32.mrf.mxu0
    %v3859 = vadd.f32 0.0, %v3858
    %3860 = vmatmul.bf16.gmra.mxu0 %v1268
    %v3861 = vpop.f32.mrf.mxu0
    %v3862 = vadd.f32 0.0, %v3861
    %v3863 = vpop.f32.mrf.mxu0
    %v3864 = vadd.f32 0.0, %v3863
    %3865 = vmatmul.bf16.gmra.mxu0 %v1275
    %v3866 = vpop.f32.mrf.mxu0
    %v3867 = vadd.f32 0.0, %v3866
    %v3868 = vpop.f32.mrf.mxu0
    %v3869 = vadd.f32 0.0, %v3868
    %3870 = vmatmul.bf16.gmra.mxu0 %v1282
    %v3871 = vpop.f32.mrf.mxu0
    %v3872 = vadd.f32 0.0, %v3871
    %v3873 = vpop.f32.mrf.mxu0
    %v3874 = vadd.f32 0.0, %v3873
    %3875 = vmatmul.bf16.gmra.mxu0 %v1289
    %v3876 = vpop.f32.mrf.mxu0
    %v3877 = vadd.f32 0.0, %v3876
    %v3878 = vpop.f32.mrf.mxu0
    %v3879 = vadd.f32 0.0, %v3878
    %3880 = vmatmul.bf16.gmra.mxu0 %v1296
    %v3881 = vpop.f32.mrf.mxu0
    %v3882 = vadd.f32 0.0, %v3881
    %v3883 = vpop.f32.mrf.mxu0
    %v3884 = vadd.f32 0.0, %v3883
    %3885 = vmatmul.bf16.gmra.mxu0 %v1303
    %v3886 = vpop.f32.mrf.mxu0
    %v3887 = vadd.f32 0.0, %v3886
    %v3888 = vpop.f32.mrf.mxu0
    %v3889 = vadd.f32 0.0, %v3888
    %3890 = vmatmul.bf16.gmra.mxu0 %v1310
    %v3891 = vpop.f32.mrf.mxu0
    %v3892 = vadd.f32 0.0, %v3891
    %v3893 = vpop.f32.mrf.mxu0
    %v3894 = vadd.f32 0.0, %v3893
    %3895 = vmatmul.bf16.gmra.mxu0 %v1317
    %v3896 = vpop.f32.mrf.mxu0
    %v3897 = vadd.f32 0.0, %v3896
    %v3898 = vpop.f32.mrf.mxu0
    %v3899 = vadd.f32 0.0, %v3898
    %3900 = vmatmul.bf16.gmra.mxu0 %v1324
    %v3901 = vpop.f32.mrf.mxu0
    %v3902 = vadd.f32 0.0, %v3901
    %v3903 = vpop.f32.mrf.mxu0
    %v3904 = vadd.f32 0.0, %v3903
    %3905 = vmatmul.bf16.gmra.mxu0 %v1331
    %v3906 = vpop.f32.mrf.mxu0
    %v3907 = vadd.f32 0.0, %v3906
    %v3908 = vpop.f32.mrf.mxu0
    %v3909 = vadd.f32 0.0, %v3908
    %3910 = vmatmul.bf16.gmra.mxu0 %v1338
    %v3911 = vpop.f32.mrf.mxu0
    %v3912 = vadd.f32 0.0, %v3911
    %v3913 = vpop.f32.mrf.mxu0
    %v3914 = vadd.f32 0.0, %v3913
    %3915 = vmatmul.bf16.gmra.mxu0 %v1345
    %v3916 = vpop.f32.mrf.mxu0
    %v3917 = vadd.f32 0.0, %v3916
    %v3918 = vpop.f32.mrf.mxu0
    %v3919 = vadd.f32 0.0, %v3918
    %3920 = vmatmul.bf16.gmra.mxu0 %v1352
    %v3921 = vpop.f32.mrf.mxu0
    %v3922 = vadd.f32 0.0, %v3921
    %v3923 = vpop.f32.mrf.mxu0
    %v3924 = vadd.f32 0.0, %v3923
    %3925 = vdwg.mxu0
    %3926 = vmatpush.bf16.msra.mxu0 %v2205
    %3927 = vmatpush.bf16.msra.mxu0 %v2201
    %3928 = vmatpush.bf16.msra.mxu0 %v2197
    %3929 = vmatpush.bf16.msra.mxu0 %v2193
    %3930 = vmatpush.bf16.msra.mxu0 %v2189
    %3931 = vmatpush.bf16.msra.mxu0 %v2185
    %3932 = vmatpush.bf16.msra.mxu0 %v2181
    %3933 = vmatpush.bf16.msra.mxu0 %v2177
    %3934 = vmatmul.bf16.gmra.mxu0 %v1248
    %v3935 = vpop.f32.mrf.mxu0
    %v3936 = vadd.f32 %v3847, %v3935
    %v3937 = vpop.f32.mrf.mxu0
    %v3938 = vadd.f32 %v3849, %v3937
    %3939 = vmatmul.bf16.gmra.mxu0 %v1255
    %v3940 = vpop.f32.mrf.mxu0
    %v3941 = vadd.f32 %v3852, %v3940
    %v3942 = vpop.f32.mrf.mxu0
    %v3943 = vadd.f32 %v3854, %v3942
    %3944 = vmatmul.bf16.gmra.mxu0 %v1262
    %v3945 = vpop.f32.mrf.mxu0
    %v3946 = vadd.f32 %v3857, %v3945
    %v3947 = vpop.f32.mrf.mxu0
    %v3948 = vadd.f32 %v3859, %v3947
    %3949 = vmatmul.bf16.gmra.mxu0 %v1269
    %v3950 = vpop.f32.mrf.mxu0
    %v3951 = vadd.f32 %v3862, %v3950
    %v3952 = vpop.f32.mrf.mxu0
    %v3953 = vadd.f32 %v3864, %v3952
    %3954 = vmatmul.bf16.gmra.mxu0 %v1276
    %v3955 = vpop.f32.mrf.mxu0
    %v3956 = vadd.f32 %v3867, %v3955
    %v3957 = vpop.f32.mrf.mxu0
    %v3958 = vadd.f32 %v3869, %v3957
    %3959 = vmatmul.bf16.gmra.mxu0 %v1283
    %v3960 = vpop.f32.mrf.mxu0
    %v3961 = vadd.f32 %v3872, %v3960
    %v3962 = vpop.f32.mrf.mxu0
    %v3963 = vadd.f32 %v3874, %v3962
    %3964 = vmatmul.bf16.gmra.mxu0 %v1290
    %v3965 = vpop.f32.mrf.mxu0
    %v3966 = vadd.f32 %v3877, %v3965
    %v3967 = vpop.f32.mrf.mxu0
    %v3968 = vadd.f32 %v3879, %v3967
    %3969 = vmatmul.bf16.gmra.mxu0 %v1297
    %v3970 = vpop.f32.mrf.mxu0
    %v3971 = vadd.f32 %v3882, %v3970
    %v3972 = vpop.f32.mrf.mxu0
    %v3973 = vadd.f32 %v3884, %v3972
    %3974 = vmatmul.bf16.gmra.mxu0 %v1304
    %v3975 = vpop.f32.mrf.mxu0
    %v3976 = vadd.f32 %v3887, %v3975
    %v3977 = vpop.f32.mrf.mxu0
    %v3978 = vadd.f32 %v3889, %v3977
    %3979 = vmatmul.bf16.gmra.mxu0 %v1311
    %v3980 = vpop.f32.mrf.mxu0
    %v3981 = vadd.f32 %v3892, %v3980
    %v3982 = vpop.f32.mrf.mxu0
    %v3983 = vadd.f32 %v3894, %v3982
    %3984 = vmatmul.bf16.gmra.mxu0 %v1318
    %v3985 = vpop.f32.mrf.mxu0
    %v3986 = vadd.f32 %v3897, %v3985
    %v3987 = vpop.f32.mrf.mxu0
    %v3988 = vadd.f32 %v3899, %v3987
    %3989 = vmatmul.bf16.gmra.mxu0 %v1325
    %v3990 = vpop.f32.mrf.mxu0
    %v3991 = vadd.f32 %v3902, %v3990
    %v3992 = vpop.f32.mrf.mxu0
    %v3993 = vadd.f32 %v3904, %v3992
    %3994 = vmatmul.bf16.gmra.mxu0 %v1332
    %v3995 = vpop.f32.mrf.mxu0
    %v3996 = vadd.f32 %v3907, %v3995
    %v3997 = vpop.f32.mrf.mxu0
    %v3998 = vadd.f32 %v3909, %v3997
    %3999 = vmatmul.bf16.gmra.mxu0 %v1339
    %v4000 = vpop.f32.mrf.mxu0
    %v4001 = vadd.f32 %v3912, %v4000
    %v4002 = vpop.f32.mrf.mxu0
    %v4003 = vadd.f32 %v3914, %v4002
    %4004 = vmatmul.bf16.gmra.mxu0 %v1346
    %v4005 = vpop.f32.mrf.mxu0
    %v4006 = vadd.f32 %v3917, %v4005
    %v4007 = vpop.f32.mrf.mxu0
    %v4008 = vadd.f32 %v3919, %v4007
    %4009 = vmatmul.bf16.gmra.mxu0 %v1353
    %v4010 = vpop.f32.mrf.mxu0
    %v4011 = vadd.f32 %v3922, %v4010
    %v4012 = vpop.f32.mrf.mxu0
    %v4013 = vadd.f32 %v3924, %v4012
    %4014 = vdwg.mxu0
    %4015 = vmatpush.bf16.msra.mxu0 %v2237
    %4016 = vmatpush.bf16.msra.mxu0 %v2233
    %4017 = vmatpush.bf16.msra.mxu0 %v2229
    %4018 = vmatpush.bf16.msra.mxu0 %v2225
    %4019 = vmatpush.bf16.msra.mxu0 %v2221
    %4020 = vmatpush.bf16.msra.mxu0 %v2217
    %4021 = vmatpush.bf16.msra.mxu0 %v2213
    %4022 = vmatpush.bf16.msra.mxu0 %v2209
    %4023 = vmatmul.bf16.gmra.mxu0 %v1249
    %v4024 = vpop.f32.mrf.mxu0
    %v4025 = vadd.f32 %v3936, %v4024
    %v4026 = vpop.f32.mrf.mxu0
    %v4027 = vadd.f32 %v3938, %v4026
    %4028 = vmatmul.bf16.gmra.mxu0 %v1256
    %v4029 = vpop.f32.mrf.mxu0
    %v4030 = vadd.f32 %v3941, %v4029
    %v4031 = vpop.f32.mrf.mxu0
    %v4032 = vadd.f32 %v3943, %v4031
    %4033 = vmatmul.bf16.gmra.mxu0 %v1263
    %v4034 = vpop.f32.mrf.mxu0
    %v4035 = vadd.f32 %v3946, %v4034
    %v4036 = vpop.f32.mrf.mxu0
    %v4037 = vadd.f32 %v3948, %v4036
    %4038 = vmatmul.bf16.gmra.mxu0 %v1270
    %v4039 = vpop.f32.mrf.mxu0
    %v4040 = vadd.f32 %v3951, %v4039
    %v4041 = vpop.f32.mrf.mxu0
    %v4042 = vadd.f32 %v3953, %v4041
    %4043 = vmatmul.bf16.gmra.mxu0 %v1277
    %v4044 = vpop.f32.mrf.mxu0
    %v4045 = vadd.f32 %v3956, %v4044
    %v4046 = vpop.f32.mrf.mxu0
    %v4047 = vadd.f32 %v3958, %v4046
    %4048 = vmatmul.bf16.gmra.mxu0 %v1284
    %v4049 = vpop.f32.mrf.mxu0
    %v4050 = vadd.f32 %v3961, %v4049
    %v4051 = vpop.f32.mrf.mxu0
    %v4052 = vadd.f32 %v3963, %v4051
    %4053 = vmatmul.bf16.gmra.mxu0 %v1291
    %v4054 = vpop.f32.mrf.mxu0
    %v4055 = vadd.f32 %v3966, %v4054
    %v4056 = vpop.f32.mrf.mxu0
    %v4057 = vadd.f32 %v3968, %v4056
    %4058 = vmatmul.bf16.gmra.mxu0 %v1298
    %v4059 = vpop.f32.mrf.mxu0
    %v4060 = vadd.f32 %v3971, %v4059
    %v4061 = vpop.f32.mrf.mxu0
    %v4062 = vadd.f32 %v3973, %v4061
    %4063 = vmatmul.bf16.gmra.mxu0 %v1305
    %v4064 = vpop.f32.mrf.mxu0
    %v4065 = vadd.f32 %v3976, %v4064
    %v4066 = vpop.f32.mrf.mxu0
    %v4067 = vadd.f32 %v3978, %v4066
    %4068 = vmatmul.bf16.gmra.mxu0 %v1312
    %v4069 = vpop.f32.mrf.mxu0
    %v4070 = vadd.f32 %v3981, %v4069
    %v4071 = vpop.f32.mrf.mxu0
    %v4072 = vadd.f32 %v3983, %v4071
    %4073 = vmatmul.bf16.gmra.mxu0 %v1319
    %v4074 = vpop.f32.mrf.mxu0
    %v4075 = vadd.f32 %v3986, %v4074
    %v4076 = vpop.f32.mrf.mxu0
    %v4077 = vadd.f32 %v3988, %v4076
    %4078 = vmatmul.bf16.gmra.mxu0 %v1326
    %v4079 = vpop.f32.mrf.mxu0
    %v4080 = vadd.f32 %v3991, %v4079
    %v4081 = vpop.f32.mrf.mxu0
    %v4082 = vadd.f32 %v3993, %v4081
    %4083 = vmatmul.bf16.gmra.mxu0 %v1333
    %v4084 = vpop.f32.mrf.mxu0
    %v4085 = vadd.f32 %v3996, %v4084
    %v4086 = vpop.f32.mrf.mxu0
    %v4087 = vadd.f32 %v3998, %v4086
    %4088 = vmatmul.bf16.gmra.mxu0 %v1340
    %v4089 = vpop.f32.mrf.mxu0
    %v4090 = vadd.f32 %v4001, %v4089
    %v4091 = vpop.f32.mrf.mxu0
    %v4092 = vadd.f32 %v4003, %v4091
    %4093 = vmatmul.bf16.gmra.mxu0 %v1347
    %v4094 = vpop.f32.mrf.mxu0
    %v4095 = vadd.f32 %v4006, %v4094
    %v4096 = vpop.f32.mrf.mxu0
    %v4097 = vadd.f32 %v4008, %v4096
    %4098 = vmatmul.bf16.gmra.mxu0 %v1354
    %v4099 = vpop.f32.mrf.mxu0
    %v4100 = vadd.f32 %v4011, %v4099
    %v4101 = vpop.f32.mrf.mxu0
    %v4102 = vadd.f32 %v4013, %v4101
    %4103 = vdwg.mxu0
    %4104 = vmatpush.bf16.msra.mxu0 %v2269
    %4105 = vmatpush.bf16.msra.mxu0 %v2265
    %4106 = vmatpush.bf16.msra.mxu0 %v2261
    %4107 = vmatpush.bf16.msra.mxu0 %v2257
    %4108 = vmatpush.bf16.msra.mxu0 %v2253
    %4109 = vmatpush.bf16.msra.mxu0 %v2249
    %4110 = vmatpush.bf16.msra.mxu0 %v2245
    %4111 = vmatpush.bf16.msra.mxu0 %v2241
    %4112 = vmatmul.bf16.gmra.mxu0 %v1250
    %v4113 = vpop.f32.mrf.mxu0
    %v4114 = vadd.f32 %v4025, %v4113
    %v4115 = vpop.f32.mrf.mxu0
    %v4116 = vadd.f32 %v4027, %v4115
    %4117 = vmatmul.bf16.gmra.mxu0 %v1257
    %v4118 = vpop.f32.mrf.mxu0
    %v4119 = vadd.f32 %v4030, %v4118
    %v4120 = vpop.f32.mrf.mxu0
    %v4121 = vadd.f32 %v4032, %v4120
    %4122 = vmatmul.bf16.gmra.mxu0 %v1264
    %v4123 = vpop.f32.mrf.mxu0
    %v4124 = vadd.f32 %v4035, %v4123
    %v4125 = vpop.f32.mrf.mxu0
    %v4126 = vadd.f32 %v4037, %v4125
    %4127 = vmatmul.bf16.gmra.mxu0 %v1271
    %v4128 = vpop.f32.mrf.mxu0
    %v4129 = vadd.f32 %v4040, %v4128
    %v4130 = vpop.f32.mrf.mxu0
    %v4131 = vadd.f32 %v4042, %v4130
    %4132 = vmatmul.bf16.gmra.mxu0 %v1278
    %v4133 = vpop.f32.mrf.mxu0
    %v4134 = vadd.f32 %v4045, %v4133
    %v4135 = vpop.f32.mrf.mxu0
    %v4136 = vadd.f32 %v4047, %v4135
    %4137 = vmatmul.bf16.gmra.mxu0 %v1285
    %v4138 = vpop.f32.mrf.mxu0
    %v4139 = vadd.f32 %v4050, %v4138
    %v4140 = vpop.f32.mrf.mxu0
    %v4141 = vadd.f32 %v4052, %v4140
    %4142 = vmatmul.bf16.gmra.mxu0 %v1292
    %v4143 = vpop.f32.mrf.mxu0
    %v4144 = vadd.f32 %v4055, %v4143
    %v4145 = vpop.f32.mrf.mxu0
    %v4146 = vadd.f32 %v4057, %v4145
    %4147 = vmatmul.bf16.gmra.mxu0 %v1299
    %v4148 = vpop.f32.mrf.mxu0
    %v4149 = vadd.f32 %v4060, %v4148
    %v4150 = vpop.f32.mrf.mxu0
    %v4151 = vadd.f32 %v4062, %v4150
    %4152 = vmatmul.bf16.gmra.mxu0 %v1306
    %v4153 = vpop.f32.mrf.mxu0
    %v4154 = vadd.f32 %v4065, %v4153
    %v4155 = vpop.f32.mrf.mxu0
    %v4156 = vadd.f32 %v4067, %v4155
    %4157 = vmatmul.bf16.gmra.mxu0 %v1313
    %v4158 = vpop.f32.mrf.mxu0
    %v4159 = vadd.f32 %v4070, %v4158
    %v4160 = vpop.f32.mrf.mxu0
    %v4161 = vadd.f32 %v4072, %v4160
    %4162 = vmatmul.bf16.gmra.mxu0 %v1320
    %v4163 = vpop.f32.mrf.mxu0
    %v4164 = vadd.f32 %v4075, %v4163
    %v4165 = vpop.f32.mrf.mxu0
    %v4166 = vadd.f32 %v4077, %v4165
    %4167 = vmatmul.bf16.gmra.mxu0 %v1327
    %v4168 = vpop.f32.mrf.mxu0
    %v4169 = vadd.f32 %v4080, %v4168
    %v4170 = vpop.f32.mrf.mxu0
    %v4171 = vadd.f32 %v4082, %v4170
    %4172 = vmatmul.bf16.gmra.mxu0 %v1334
    %v4173 = vpop.f32.mrf.mxu0
    %v4174 = vadd.f32 %v4085, %v4173
    %v4175 = vpop.f32.mrf.mxu0
    %v4176 = vadd.f32 %v4087, %v4175
    %4177 = vmatmul.bf16.gmra.mxu0 %v1341
    %v4178 = vpop.f32.mrf.mxu0
    %v4179 = vadd.f32 %v4090, %v4178
    %v4180 = vpop.f32.mrf.mxu0
    %v4181 = vadd.f32 %v4092, %v4180
    %4182 = vmatmul.bf16.gmra.mxu0 %v1348
    %v4183 = vpop.f32.mrf.mxu0
    %v4184 = vadd.f32 %v4095, %v4183
    %v4185 = vpop.f32.mrf.mxu0
    %v4186 = vadd.f32 %v4097, %v4185
    %4187 = vmatmul.bf16.gmra.mxu0 %v1355
    %v4188 = vpop.f32.mrf.mxu0
    %v4189 = vadd.f32 %v4100, %v4188
    %v4190 = vpop.f32.mrf.mxu0
    %v4191 = vadd.f32 %v4102, %v4190
    %4192 = vdwg.mxu0
    %4193 = vmatpush.bf16.msra.mxu0 %v2301
    %4194 = vmatpush.bf16.msra.mxu0 %v2297
    %4195 = vmatpush.bf16.msra.mxu0 %v2293
    %4196 = vmatpush.bf16.msra.mxu0 %v2289
    %4197 = vmatpush.bf16.msra.mxu0 %v2285
    %4198 = vmatpush.bf16.msra.mxu0 %v2281
    %4199 = vmatpush.bf16.msra.mxu0 %v2277
    %4200 = vmatpush.bf16.msra.mxu0 %v2273
    %4201 = vmatmul.bf16.gmra.mxu0 %v1251
    %v4202 = vpop.f32.mrf.mxu0
    %v4203 = vadd.f32 %v4114, %v4202
    %v4204 = vpop.f32.mrf.mxu0
    %v4205 = vadd.f32 %v4116, %v4204
    %4206 = vmatmul.bf16.gmra.mxu0 %v1258
    %v4207 = vpop.f32.mrf.mxu0
    %v4208 = vadd.f32 %v4119, %v4207
    %v4209 = vpop.f32.mrf.mxu0
    %v4210 = vadd.f32 %v4121, %v4209
    %4211 = vmatmul.bf16.gmra.mxu0 %v1265
    %v4212 = vpop.f32.mrf.mxu0
    %v4213 = vadd.f32 %v4124, %v4212
    %v4214 = vpop.f32.mrf.mxu0
    %v4215 = vadd.f32 %v4126, %v4214
    %4216 = vmatmul.bf16.gmra.mxu0 %v1272
    %v4217 = vpop.f32.mrf.mxu0
    %v4218 = vadd.f32 %v4129, %v4217
    %v4219 = vpop.f32.mrf.mxu0
    %v4220 = vadd.f32 %v4131, %v4219
    %4221 = vmatmul.bf16.gmra.mxu0 %v1279
    %v4222 = vpop.f32.mrf.mxu0
    %v4223 = vadd.f32 %v4134, %v4222
    %v4224 = vpop.f32.mrf.mxu0
    %v4225 = vadd.f32 %v4136, %v4224
    %4226 = vmatmul.bf16.gmra.mxu0 %v1286
    %v4227 = vpop.f32.mrf.mxu0
    %v4228 = vadd.f32 %v4139, %v4227
    %v4229 = vpop.f32.mrf.mxu0
    %v4230 = vadd.f32 %v4141, %v4229
    %4231 = vmatmul.bf16.gmra.mxu0 %v1293
    %v4232 = vpop.f32.mrf.mxu0
    %v4233 = vadd.f32 %v4144, %v4232
    %v4234 = vpop.f32.mrf.mxu0
    %v4235 = vadd.f32 %v4146, %v4234
    %4236 = vmatmul.bf16.gmra.mxu0 %v1300
    %v4237 = vpop.f32.mrf.mxu0
    %v4238 = vadd.f32 %v4149, %v4237
    %v4239 = vpop.f32.mrf.mxu0
    %v4240 = vadd.f32 %v4151, %v4239
    %4241 = vmatmul.bf16.gmra.mxu0 %v1307
    %v4242 = vpop.f32.mrf.mxu0
    %v4243 = vadd.f32 %v4154, %v4242
    %v4244 = vpop.f32.mrf.mxu0
    %v4245 = vadd.f32 %v4156, %v4244
    %4246 = vmatmul.bf16.gmra.mxu0 %v1314
    %v4247 = vpop.f32.mrf.mxu0
    %v4248 = vadd.f32 %v4159, %v4247
    %v4249 = vpop.f32.mrf.mxu0
    %v4250 = vadd.f32 %v4161, %v4249
    %4251 = vmatmul.bf16.gmra.mxu0 %v1321
    %v4252 = vpop.f32.mrf.mxu0
    %v4253 = vadd.f32 %v4164, %v4252
    %v4254 = vpop.f32.mrf.mxu0
    %v4255 = vadd.f32 %v4166, %v4254
    %4256 = vmatmul.bf16.gmra.mxu0 %v1328
    %v4257 = vpop.f32.mrf.mxu0
    %v4258 = vadd.f32 %v4169, %v4257
    %v4259 = vpop.f32.mrf.mxu0
    %v4260 = vadd.f32 %v4171, %v4259
    %4261 = vmatmul.bf16.gmra.mxu0 %v1335
    %v4262 = vpop.f32.mrf.mxu0
    %v4263 = vadd.f32 %v4174, %v4262
    %v4264 = vpop.f32.mrf.mxu0
    %v4265 = vadd.f32 %v4176, %v4264
    %4266 = vmatmul.bf16.gmra.mxu0 %v1342
    %v4267 = vpop.f32.mrf.mxu0
    %v4268 = vadd.f32 %v4179, %v4267
    %v4269 = vpop.f32.mrf.mxu0
    %v4270 = vadd.f32 %v4181, %v4269
    %4271 = vmatmul.bf16.gmra.mxu0 %v1349
    %v4272 = vpop.f32.mrf.mxu0
    %v4273 = vadd.f32 %v4184, %v4272
    %v4274 = vpop.f32.mrf.mxu0
    %v4275 = vadd.f32 %v4186, %v4274
    %4276 = vmatmul.bf16.gmra.mxu0 %v1356
    %v4277 = vpop.f32.mrf.mxu0
    %v4278 = vadd.f32 %v4189, %v4277
    %v4279 = vpop.f32.mrf.mxu0
    %v4280 = vadd.f32 %v4191, %v4279
    %4281 = vdwg.mxu0
    %4282 = vmatpush.bf16.msra.mxu0 %v2333
    %4283 = vmatpush.bf16.msra.mxu0 %v2329
    %4284 = vmatpush.bf16.msra.mxu0 %v2325
    %4285 = vmatpush.bf16.msra.mxu0 %v2321
    %4286 = vmatpush.bf16.msra.mxu0 %v2317
    %4287 = vmatpush.bf16.msra.mxu0 %v2313
    %4288 = vmatpush.bf16.msra.mxu0 %v2309
    %4289 = vmatpush.bf16.msra.mxu0 %v2305
    %4290 = vmatmul.bf16.gmra.mxu0 %v1252
    %v4291 = vpop.f32.mrf.mxu0
    %v4292 = vadd.f32 %v4203, %v4291
    %v4293 = vpop.f32.mrf.mxu0
    %v4294 = vadd.f32 %v4205, %v4293
    %4295 = vmatmul.bf16.gmra.mxu0 %v1259
    %v4296 = vpop.f32.mrf.mxu0
    %v4297 = vadd.f32 %v4208, %v4296
    %v4298 = vpop.f32.mrf.mxu0
    %v4299 = vadd.f32 %v4210, %v4298
    %4300 = vmatmul.bf16.gmra.mxu0 %v1266
    %v4301 = vpop.f32.mrf.mxu0
    %v4302 = vadd.f32 %v4213, %v4301
    %v4303 = vpop.f32.mrf.mxu0
    %v4304 = vadd.f32 %v4215, %v4303
    %4305 = vmatmul.bf16.gmra.mxu0 %v1273
    %v4306 = vpop.f32.mrf.mxu0
    %v4307 = vadd.f32 %v4218, %v4306
    %v4308 = vpop.f32.mrf.mxu0
    %v4309 = vadd.f32 %v4220, %v4308
    %4310 = vmatmul.bf16.gmra.mxu0 %v1280
    %v4311 = vpop.f32.mrf.mxu0
    %v4312 = vadd.f32 %v4223, %v4311
    %v4313 = vpop.f32.mrf.mxu0
    %v4314 = vadd.f32 %v4225, %v4313
    %4315 = vmatmul.bf16.gmra.mxu0 %v1287
    %v4316 = vpop.f32.mrf.mxu0
    %v4317 = vadd.f32 %v4228, %v4316
    %v4318 = vpop.f32.mrf.mxu0
    %v4319 = vadd.f32 %v4230, %v4318
    %4320 = vmatmul.bf16.gmra.mxu0 %v1294
    %v4321 = vpop.f32.mrf.mxu0
    %v4322 = vadd.f32 %v4233, %v4321
    %v4323 = vpop.f32.mrf.mxu0
    %v4324 = vadd.f32 %v4235, %v4323
    %4325 = vmatmul.bf16.gmra.mxu0 %v1301
    %v4326 = vpop.f32.mrf.mxu0
    %v4327 = vadd.f32 %v4238, %v4326
    %v4328 = vpop.f32.mrf.mxu0
    %v4329 = vadd.f32 %v4240, %v4328
    %4330 = vmatmul.bf16.gmra.mxu0 %v1308
    %v4331 = vpop.f32.mrf.mxu0
    %v4332 = vadd.f32 %v4243, %v4331
    %v4333 = vpop.f32.mrf.mxu0
    %v4334 = vadd.f32 %v4245, %v4333
    %4335 = vmatmul.bf16.gmra.mxu0 %v1315
    %v4336 = vpop.f32.mrf.mxu0
    %v4337 = vadd.f32 %v4248, %v4336
    %v4338 = vpop.f32.mrf.mxu0
    %v4339 = vadd.f32 %v4250, %v4338
    %4340 = vmatmul.bf16.gmra.mxu0 %v1322
    %v4341 = vpop.f32.mrf.mxu0
    %v4342 = vadd.f32 %v4253, %v4341
    %v4343 = vpop.f32.mrf.mxu0
    %v4344 = vadd.f32 %v4255, %v4343
    %4345 = vmatmul.bf16.gmra.mxu0 %v1329
    %v4346 = vpop.f32.mrf.mxu0
    %v4347 = vadd.f32 %v4258, %v4346
    %v4348 = vpop.f32.mrf.mxu0
    %v4349 = vadd.f32 %v4260, %v4348
    %4350 = vmatmul.bf16.gmra.mxu0 %v1336
    %v4351 = vpop.f32.mrf.mxu0
    %v4352 = vadd.f32 %v4263, %v4351
    %v4353 = vpop.f32.mrf.mxu0
    %v4354 = vadd.f32 %v4265, %v4353
    %4355 = vmatmul.bf16.gmra.mxu0 %v1343
    %v4356 = vpop.f32.mrf.mxu0
    %v4357 = vadd.f32 %v4268, %v4356
    %v4358 = vpop.f32.mrf.mxu0
    %v4359 = vadd.f32 %v4270, %v4358
    %4360 = vmatmul.bf16.gmra.mxu0 %v1350
    %v4361 = vpop.f32.mrf.mxu0
    %v4362 = vadd.f32 %v4273, %v4361
    %v4363 = vpop.f32.mrf.mxu0
    %v4364 = vadd.f32 %v4275, %v4363
    %4365 = vmatmul.bf16.gmra.mxu0 %v1357
    %v4366 = vpop.f32.mrf.mxu0
    %v4367 = vadd.f32 %v4278, %v4366
    %v4368 = vpop.f32.mrf.mxu0
    %v4369 = vadd.f32 %v4280, %v4368
    %4370 = vdwg.mxu0
    %4371 = vmatpush.bf16.msra.mxu0 %v2365
    %4372 = vmatpush.bf16.msra.mxu0 %v2361
    %4373 = vmatpush.bf16.msra.mxu0 %v2357
    %4374 = vmatpush.bf16.msra.mxu0 %v2353
    %4375 = vmatpush.bf16.msra.mxu0 %v2349
    %4376 = vmatpush.bf16.msra.mxu0 %v2345
    %4377 = vmatpush.bf16.msra.mxu0 %v2341
    %4378 = vmatpush.bf16.msra.mxu0 %v2337
    %4379 = vmatmul.bf16.gmra.mxu0 %v1253
    %v4380 = vpop.f32.mrf.mxu0
    %v4381 = vadd.f32 %v4292, %v4380
    %v4382 = vpop.f32.mrf.mxu0
    %v4383 = vadd.f32 %v4294, %v4382
    %4384 = vmatmul.bf16.gmra.mxu0 %v1260
    %v4385 = vpop.f32.mrf.mxu0
    %v4386 = vadd.f32 %v4297, %v4385
    %v4387 = vpop.f32.mrf.mxu0
    %v4388 = vadd.f32 %v4299, %v4387
    %4389 = vmatmul.bf16.gmra.mxu0 %v1267
    %v4390 = vpop.f32.mrf.mxu0
    %v4391 = vadd.f32 %v4302, %v4390
    %v4392 = vpop.f32.mrf.mxu0
    %v4393 = vadd.f32 %v4304, %v4392
    %4394 = vmatmul.bf16.gmra.mxu0 %v1274
    %v4395 = vpop.f32.mrf.mxu0
    %v4396 = vadd.f32 %v4307, %v4395
    %v4397 = vpop.f32.mrf.mxu0
    %v4398 = vadd.f32 %v4309, %v4397
    %4399 = vmatmul.bf16.gmra.mxu0 %v1281
    %v4400 = vpop.f32.mrf.mxu0
    %v4401 = vadd.f32 %v4312, %v4400
    %v4402 = vpop.f32.mrf.mxu0
    %v4403 = vadd.f32 %v4314, %v4402
    %4404 = vmatmul.bf16.gmra.mxu0 %v1288
    %v4405 = vpop.f32.mrf.mxu0
    %v4406 = vadd.f32 %v4317, %v4405
    %v4407 = vpop.f32.mrf.mxu0
    %v4408 = vadd.f32 %v4319, %v4407
    %4409 = vmatmul.bf16.gmra.mxu0 %v1295
    %v4410 = vpop.f32.mrf.mxu0
    %v4411 = vadd.f32 %v4322, %v4410
    %v4412 = vpop.f32.mrf.mxu0
    %v4413 = vadd.f32 %v4324, %v4412
    %4414 = vmatmul.bf16.gmra.mxu0 %v1302
    %v4415 = vpop.f32.mrf.mxu0
    %v4416 = vadd.f32 %v4327, %v4415
    %v4417 = vpop.f32.mrf.mxu0
    %v4418 = vadd.f32 %v4329, %v4417
    %4419 = vmatmul.bf16.gmra.mxu0 %v1309
    %v4420 = vpop.f32.mrf.mxu0
    %v4421 = vadd.f32 %v4332, %v4420
    %v4422 = vpop.f32.mrf.mxu0
    %v4423 = vadd.f32 %v4334, %v4422
    %4424 = vmatmul.bf16.gmra.mxu0 %v1316
    %v4425 = vpop.f32.mrf.mxu0
    %v4426 = vadd.f32 %v4337, %v4425
    %v4427 = vpop.f32.mrf.mxu0
    %v4428 = vadd.f32 %v4339, %v4427
    %4429 = vmatmul.bf16.gmra.mxu0 %v1323
    %v4430 = vpop.f32.mrf.mxu0
    %v4431 = vadd.f32 %v4342, %v4430
    %v4432 = vpop.f32.mrf.mxu0
    %v4433 = vadd.f32 %v4344, %v4432
    %4434 = vmatmul.bf16.gmra.mxu0 %v1330
    %v4435 = vpop.f32.mrf.mxu0
    %v4436 = vadd.f32 %v4347, %v4435
    %v4437 = vpop.f32.mrf.mxu0
    %v4438 = vadd.f32 %v4349, %v4437
    %4439 = vmatmul.bf16.gmra.mxu0 %v1337
    %v4440 = vpop.f32.mrf.mxu0
    %v4441 = vadd.f32 %v4352, %v4440
    %v4442 = vpop.f32.mrf.mxu0
    %v4443 = vadd.f32 %v4354, %v4442
    %4444 = vmatmul.bf16.gmra.mxu0 %v1344
    %v4445 = vpop.f32.mrf.mxu0
    %v4446 = vadd.f32 %v4357, %v4445
    %v4447 = vpop.f32.mrf.mxu0
    %v4448 = vadd.f32 %v4359, %v4447
    %4449 = vmatmul.bf16.gmra.mxu0 %v1351
    %v4450 = vpop.f32.mrf.mxu0
    %v4451 = vadd.f32 %v4362, %v4450
    %v4452 = vpop.f32.mrf.mxu0
    %v4453 = vadd.f32 %v4364, %v4452
    %4454 = vmatmul.bf16.gmra.mxu0 %v1358
    %v4455 = vpop.f32.mrf.mxu0
    %v4456 = vadd.f32 %v4367, %v4455
    %v4457 = vpop.f32.mrf.mxu0
    %v4458 = vadd.f32 %v4369, %v4457
    %4459 = vdwg.mxu0
    %4460 = vmatpush.bf16.msra.mxu0 %v2174
    %4461 = vmatpush.bf16.msra.mxu0 %v2170
    %4462 = vmatpush.bf16.msra.mxu0 %v2166
    %4463 = vmatpush.bf16.msra.mxu0 %v2162
    %4464 = vmatpush.bf16.msra.mxu0 %v2158
    %4465 = vmatpush.bf16.msra.mxu0 %v2154
    %4466 = vmatpush.bf16.msra.mxu0 %v2150
    %4467 = vmatpush.bf16.msra.mxu0 %v2146
    %4468 = vmatmul.bf16.gmra.mxu0 %v1247
    %v4469 = vpop.f32.mrf.mxu0
    %v4470 = vadd.f32 0.0, %v4469
    %v4471 = vpop.f32.mrf.mxu0
    %v4472 = vadd.f32 0.0, %v4471
    %4473 = vmatmul.bf16.gmra.mxu0 %v1254
    %v4474 = vpop.f32.mrf.mxu0
    %v4475 = vadd.f32 0.0, %v4474
    %v4476 = vpop.f32.mrf.mxu0
    %v4477 = vadd.f32 0.0, %v4476
    %4478 = vmatmul.bf16.gmra.mxu0 %v1261
    %v4479 = vpop.f32.mrf.mxu0
    %v4480 = vadd.f32 0.0, %v4479
    %v4481 = vpop.f32.mrf.mxu0
    %v4482 = vadd.f32 0.0, %v4481
    %4483 = vmatmul.bf16.gmra.mxu0 %v1268
    %v4484 = vpop.f32.mrf.mxu0
    %v4485 = vadd.f32 0.0, %v4484
    %v4486 = vpop.f32.mrf.mxu0
    %v4487 = vadd.f32 0.0, %v4486
    %4488 = vmatmul.bf16.gmra.mxu0 %v1275
    %v4489 = vpop.f32.mrf.mxu0
    %v4490 = vadd.f32 0.0, %v4489
    %v4491 = vpop.f32.mrf.mxu0
    %v4492 = vadd.f32 0.0, %v4491
    %4493 = vmatmul.bf16.gmra.mxu0 %v1282
    %v4494 = vpop.f32.mrf.mxu0
    %v4495 = vadd.f32 0.0, %v4494
    %v4496 = vpop.f32.mrf.mxu0
    %v4497 = vadd.f32 0.0, %v4496
    %4498 = vmatmul.bf16.gmra.mxu0 %v1289
    %v4499 = vpop.f32.mrf.mxu0
    %v4500 = vadd.f32 0.0, %v4499
    %v4501 = vpop.f32.mrf.mxu0
    %v4502 = vadd.f32 0.0, %v4501
    %4503 = vmatmul.bf16.gmra.mxu0 %v1296
    %v4504 = vpop.f32.mrf.mxu0
    %v4505 = vadd.f32 0.0, %v4504
    %v4506 = vpop.f32.mrf.mxu0
    %v4507 = vadd.f32 0.0, %v4506
    %4508 = vmatmul.bf16.gmra.mxu0 %v1303
    %v4509 = vpop.f32.mrf.mxu0
    %v4510 = vadd.f32 0.0, %v4509
    %v4511 = vpop.f32.mrf.mxu0
    %v4512 = vadd.f32 0.0, %v4511
    %4513 = vmatmul.bf16.gmra.mxu0 %v1310
    %v4514 = vpop.f32.mrf.mxu0
    %v4515 = vadd.f32 0.0, %v4514
    %v4516 = vpop.f32.mrf.mxu0
    %v4517 = vadd.f32 0.0, %v4516
    %4518 = vmatmul.bf16.gmra.mxu0 %v1317
    %v4519 = vpop.f32.mrf.mxu0
    %v4520 = vadd.f32 0.0, %v4519
    %v4521 = vpop.f32.mrf.mxu0
    %v4522 = vadd.f32 0.0, %v4521
    %4523 = vmatmul.bf16.gmra.mxu0 %v1324
    %v4524 = vpop.f32.mrf.mxu0
    %v4525 = vadd.f32 0.0, %v4524
    %v4526 = vpop.f32.mrf.mxu0
    %v4527 = vadd.f32 0.0, %v4526
    %4528 = vmatmul.bf16.gmra.mxu0 %v1331
    %v4529 = vpop.f32.mrf.mxu0
    %v4530 = vadd.f32 0.0, %v4529
    %v4531 = vpop.f32.mrf.mxu0
    %v4532 = vadd.f32 0.0, %v4531
    %4533 = vmatmul.bf16.gmra.mxu0 %v1338
    %v4534 = vpop.f32.mrf.mxu0
    %v4535 = vadd.f32 0.0, %v4534
    %v4536 = vpop.f32.mrf.mxu0
    %v4537 = vadd.f32 0.0, %v4536
    %4538 = vmatmul.bf16.gmra.mxu0 %v1345
    %v4539 = vpop.f32.mrf.mxu0
    %v4540 = vadd.f32 0.0, %v4539
    %v4541 = vpop.f32.mrf.mxu0
    %v4542 = vadd.f32 0.0, %v4541
    %4543 = vmatmul.bf16.gmra.mxu0 %v1352
    %v4544 = vpop.f32.mrf.mxu0
    %v4545 = vadd.f32 0.0, %v4544
    %v4546 = vpop.f32.mrf.mxu0
    %v4547 = vadd.f32 0.0, %v4546
    %4548 = vdwg.mxu0
    %4549 = vmatpush.bf16.msra.mxu0 %v2206
    %4550 = vmatpush.bf16.msra.mxu0 %v2202
    %4551 = vmatpush.bf16.msra.mxu0 %v2198
    %4552 = vmatpush.bf16.msra.mxu0 %v2194
    %4553 = vmatpush.bf16.msra.mxu0 %v2190
    %4554 = vmatpush.bf16.msra.mxu0 %v2186
    %4555 = vmatpush.bf16.msra.mxu0 %v2182
    %4556 = vmatpush.bf16.msra.mxu0 %v2178
    %4557 = vmatmul.bf16.gmra.mxu0 %v1248
    %v4558 = vpop.f32.mrf.mxu0
    %v4559 = vadd.f32 %v4470, %v4558
    %v4560 = vpop.f32.mrf.mxu0
    %v4561 = vadd.f32 %v4472, %v4560
    %4562 = vmatmul.bf16.gmra.mxu0 %v1255
    %v4563 = vpop.f32.mrf.mxu0
    %v4564 = vadd.f32 %v4475, %v4563
    %v4565 = vpop.f32.mrf.mxu0
    %v4566 = vadd.f32 %v4477, %v4565
    %4567 = vmatmul.bf16.gmra.mxu0 %v1262
    %v4568 = vpop.f32.mrf.mxu0
    %v4569 = vadd.f32 %v4480, %v4568
    %v4570 = vpop.f32.mrf.mxu0
    %v4571 = vadd.f32 %v4482, %v4570
    %4572 = vmatmul.bf16.gmra.mxu0 %v1269
    %v4573 = vpop.f32.mrf.mxu0
    %v4574 = vadd.f32 %v4485, %v4573
    %v4575 = vpop.f32.mrf.mxu0
    %v4576 = vadd.f32 %v4487, %v4575
    %4577 = vmatmul.bf16.gmra.mxu0 %v1276
    %v4578 = vpop.f32.mrf.mxu0
    %v4579 = vadd.f32 %v4490, %v4578
    %v4580 = vpop.f32.mrf.mxu0
    %v4581 = vadd.f32 %v4492, %v4580
    %4582 = vmatmul.bf16.gmra.mxu0 %v1283
    %v4583 = vpop.f32.mrf.mxu0
    %v4584 = vadd.f32 %v4495, %v4583
    %v4585 = vpop.f32.mrf.mxu0
    %v4586 = vadd.f32 %v4497, %v4585
    %4587 = vmatmul.bf16.gmra.mxu0 %v1290
    %v4588 = vpop.f32.mrf.mxu0
    %v4589 = vadd.f32 %v4500, %v4588
    %v4590 = vpop.f32.mrf.mxu0
    %v4591 = vadd.f32 %v4502, %v4590
    %4592 = vmatmul.bf16.gmra.mxu0 %v1297
    %v4593 = vpop.f32.mrf.mxu0
    %v4594 = vadd.f32 %v4505, %v4593
    %v4595 = vpop.f32.mrf.mxu0
    %v4596 = vadd.f32 %v4507, %v4595
    %4597 = vmatmul.bf16.gmra.mxu0 %v1304
    %v4598 = vpop.f32.mrf.mxu0
    %v4599 = vadd.f32 %v4510, %v4598
    %v4600 = vpop.f32.mrf.mxu0
    %v4601 = vadd.f32 %v4512, %v4600
    %4602 = vmatmul.bf16.gmra.mxu0 %v1311
    %v4603 = vpop.f32.mrf.mxu0
    %v4604 = vadd.f32 %v4515, %v4603
    %v4605 = vpop.f32.mrf.mxu0
    %v4606 = vadd.f32 %v4517, %v4605
    %4607 = vmatmul.bf16.gmra.mxu0 %v1318
    %v4608 = vpop.f32.mrf.mxu0
    %v4609 = vadd.f32 %v4520, %v4608
    %v4610 = vpop.f32.mrf.mxu0
    %v4611 = vadd.f32 %v4522, %v4610
    %4612 = vmatmul.bf16.gmra.mxu0 %v1325
    %v4613 = vpop.f32.mrf.mxu0
    %v4614 = vadd.f32 %v4525, %v4613
    %v4615 = vpop.f32.mrf.mxu0
    %v4616 = vadd.f32 %v4527, %v4615
    %4617 = vmatmul.bf16.gmra.mxu0 %v1332
    %v4618 = vpop.f32.mrf.mxu0
    %v4619 = vadd.f32 %v4530, %v4618
    %v4620 = vpop.f32.mrf.mxu0
    %v4621 = vadd.f32 %v4532, %v4620
    %4622 = vmatmul.bf16.gmra.mxu0 %v1339
    %v4623 = vpop.f32.mrf.mxu0
    %v4624 = vadd.f32 %v4535, %v4623
    %v4625 = vpop.f32.mrf.mxu0
    %v4626 = vadd.f32 %v4537, %v4625
    %4627 = vmatmul.bf16.gmra.mxu0 %v1346
    %v4628 = vpop.f32.mrf.mxu0
    %v4629 = vadd.f32 %v4540, %v4628
    %v4630 = vpop.f32.mrf.mxu0
    %v4631 = vadd.f32 %v4542, %v4630
    %4632 = vmatmul.bf16.gmra.mxu0 %v1353
    %v4633 = vpop.f32.mrf.mxu0
    %v4634 = vadd.f32 %v4545, %v4633
    %v4635 = vpop.f32.mrf.mxu0
    %v4636 = vadd.f32 %v4547, %v4635
    %4637 = vdwg.mxu0
    %4638 = vmatpush.bf16.msra.mxu0 %v2238
    %4639 = vmatpush.bf16.msra.mxu0 %v2234
    %4640 = vmatpush.bf16.msra.mxu0 %v2230
    %4641 = vmatpush.bf16.msra.mxu0 %v2226
    %4642 = vmatpush.bf16.msra.mxu0 %v2222
    %4643 = vmatpush.bf16.msra.mxu0 %v2218
    %4644 = vmatpush.bf16.msra.mxu0 %v2214
    %4645 = vmatpush.bf16.msra.mxu0 %v2210
    %4646 = vmatmul.bf16.gmra.mxu0 %v1249
    %v4647 = vpop.f32.mrf.mxu0
    %v4648 = vadd.f32 %v4559, %v4647
    %v4649 = vpop.f32.mrf.mxu0
    %v4650 = vadd.f32 %v4561, %v4649
    %4651 = vmatmul.bf16.gmra.mxu0 %v1256
    %v4652 = vpop.f32.mrf.mxu0
    %v4653 = vadd.f32 %v4564, %v4652
    %v4654 = vpop.f32.mrf.mxu0
    %v4655 = vadd.f32 %v4566, %v4654
    %4656 = vmatmul.bf16.gmra.mxu0 %v1263
    %v4657 = vpop.f32.mrf.mxu0
    %v4658 = vadd.f32 %v4569, %v4657
    %v4659 = vpop.f32.mrf.mxu0
    %v4660 = vadd.f32 %v4571, %v4659
    %4661 = vmatmul.bf16.gmra.mxu0 %v1270
    %v4662 = vpop.f32.mrf.mxu0
    %v4663 = vadd.f32 %v4574, %v4662
    %v4664 = vpop.f32.mrf.mxu0
    %v4665 = vadd.f32 %v4576, %v4664
    %4666 = vmatmul.bf16.gmra.mxu0 %v1277
    %v4667 = vpop.f32.mrf.mxu0
    %v4668 = vadd.f32 %v4579, %v4667
    %v4669 = vpop.f32.mrf.mxu0
    %v4670 = vadd.f32 %v4581, %v4669
    %4671 = vmatmul.bf16.gmra.mxu0 %v1284
    %v4672 = vpop.f32.mrf.mxu0
    %v4673 = vadd.f32 %v4584, %v4672
    %v4674 = vpop.f32.mrf.mxu0
    %v4675 = vadd.f32 %v4586, %v4674
    %4676 = vmatmul.bf16.gmra.mxu0 %v1291
    %v4677 = vpop.f32.mrf.mxu0
    %v4678 = vadd.f32 %v4589, %v4677
    %v4679 = vpop.f32.mrf.mxu0
    %v4680 = vadd.f32 %v4591, %v4679
    %4681 = vmatmul.bf16.gmra.mxu0 %v1298
    %v4682 = vpop.f32.mrf.mxu0
    %v4683 = vadd.f32 %v4594, %v4682
    %v4684 = vpop.f32.mrf.mxu0
    %v4685 = vadd.f32 %v4596, %v4684
    %4686 = vmatmul.bf16.gmra.mxu0 %v1305
    %v4687 = vpop.f32.mrf.mxu0
    %v4688 = vadd.f32 %v4599, %v4687
    %v4689 = vpop.f32.mrf.mxu0
    %v4690 = vadd.f32 %v4601, %v4689
    %4691 = vmatmul.bf16.gmra.mxu0 %v1312
    %v4692 = vpop.f32.mrf.mxu0
    %v4693 = vadd.f32 %v4604, %v4692
    %v4694 = vpop.f32.mrf.mxu0
    %v4695 = vadd.f32 %v4606, %v4694
    %4696 = vmatmul.bf16.gmra.mxu0 %v1319
    %v4697 = vpop.f32.mrf.mxu0
    %v4698 = vadd.f32 %v4609, %v4697
    %v4699 = vpop.f32.mrf.mxu0
    %v4700 = vadd.f32 %v4611, %v4699
    %4701 = vmatmul.bf16.gmra.mxu0 %v1326
    %v4702 = vpop.f32.mrf.mxu0
    %v4703 = vadd.f32 %v4614, %v4702
    %v4704 = vpop.f32.mrf.mxu0
    %v4705 = vadd.f32 %v4616, %v4704
    %4706 = vmatmul.bf16.gmra.mxu0 %v1333
    %v4707 = vpop.f32.mrf.mxu0
    %v4708 = vadd.f32 %v4619, %v4707
    %v4709 = vpop.f32.mrf.mxu0
    %v4710 = vadd.f32 %v4621, %v4709
    %4711 = vmatmul.bf16.gmra.mxu0 %v1340
    %v4712 = vpop.f32.mrf.mxu0
    %v4713 = vadd.f32 %v4624, %v4712
    %v4714 = vpop.f32.mrf.mxu0
    %v4715 = vadd.f32 %v4626, %v4714
    %4716 = vmatmul.bf16.gmra.mxu0 %v1347
    %v4717 = vpop.f32.mrf.mxu0
    %v4718 = vadd.f32 %v4629, %v4717
    %v4719 = vpop.f32.mrf.mxu0
    %v4720 = vadd.f32 %v4631, %v4719
    %4721 = vmatmul.bf16.gmra.mxu0 %v1354
    %v4722 = vpop.f32.mrf.mxu0
    %v4723 = vadd.f32 %v4634, %v4722
    %v4724 = vpop.f32.mrf.mxu0
    %v4725 = vadd.f32 %v4636, %v4724
    %4726 = vdwg.mxu0
    %4727 = vmatpush.bf16.msra.mxu0 %v2270
    %4728 = vmatpush.bf16.msra.mxu0 %v2266
    %4729 = vmatpush.bf16.msra.mxu0 %v2262
    %4730 = vmatpush.bf16.msra.mxu0 %v2258
    %4731 = vmatpush.bf16.msra.mxu0 %v2254
    %4732 = vmatpush.bf16.msra.mxu0 %v2250
    %4733 = vmatpush.bf16.msra.mxu0 %v2246
    %4734 = vmatpush.bf16.msra.mxu0 %v2242
    %4735 = vmatmul.bf16.gmra.mxu0 %v1250
    %v4736 = vpop.f32.mrf.mxu0
    %v4737 = vadd.f32 %v4648, %v4736
    %v4738 = vpop.f32.mrf.mxu0
    %v4739 = vadd.f32 %v4650, %v4738
    %4740 = vmatmul.bf16.gmra.mxu0 %v1257
    %v4741 = vpop.f32.mrf.mxu0
    %v4742 = vadd.f32 %v4653, %v4741
    %v4743 = vpop.f32.mrf.mxu0
    %v4744 = vadd.f32 %v4655, %v4743
    %4745 = vmatmul.bf16.gmra.mxu0 %v1264
    %v4746 = vpop.f32.mrf.mxu0
    %v4747 = vadd.f32 %v4658, %v4746
    %v4748 = vpop.f32.mrf.mxu0
    %v4749 = vadd.f32 %v4660, %v4748
    %4750 = vmatmul.bf16.gmra.mxu0 %v1271
    %v4751 = vpop.f32.mrf.mxu0
    %v4752 = vadd.f32 %v4663, %v4751
    %v4753 = vpop.f32.mrf.mxu0
    %v4754 = vadd.f32 %v4665, %v4753
    %4755 = vmatmul.bf16.gmra.mxu0 %v1278
    %v4756 = vpop.f32.mrf.mxu0
    %v4757 = vadd.f32 %v4668, %v4756
    %v4758 = vpop.f32.mrf.mxu0
    %v4759 = vadd.f32 %v4670, %v4758
    %4760 = vmatmul.bf16.gmra.mxu0 %v1285
    %v4761 = vpop.f32.mrf.mxu0
    %v4762 = vadd.f32 %v4673, %v4761
    %v4763 = vpop.f32.mrf.mxu0
    %v4764 = vadd.f32 %v4675, %v4763
    %4765 = vmatmul.bf16.gmra.mxu0 %v1292
    %v4766 = vpop.f32.mrf.mxu0
    %v4767 = vadd.f32 %v4678, %v4766
    %v4768 = vpop.f32.mrf.mxu0
    %v4769 = vadd.f32 %v4680, %v4768
    %4770 = vmatmul.bf16.gmra.mxu0 %v1299
    %v4771 = vpop.f32.mrf.mxu0
    %v4772 = vadd.f32 %v4683, %v4771
    %v4773 = vpop.f32.mrf.mxu0
    %v4774 = vadd.f32 %v4685, %v4773
    %4775 = vmatmul.bf16.gmra.mxu0 %v1306
    %v4776 = vpop.f32.mrf.mxu0
    %v4777 = vadd.f32 %v4688, %v4776
    %v4778 = vpop.f32.mrf.mxu0
    %v4779 = vadd.f32 %v4690, %v4778
    %4780 = vmatmul.bf16.gmra.mxu0 %v1313
    %v4781 = vpop.f32.mrf.mxu0
    %v4782 = vadd.f32 %v4693, %v4781
    %v4783 = vpop.f32.mrf.mxu0
    %v4784 = vadd.f32 %v4695, %v4783
    %4785 = vmatmul.bf16.gmra.mxu0 %v1320
    %v4786 = vpop.f32.mrf.mxu0
    %v4787 = vadd.f32 %v4698, %v4786
    %v4788 = vpop.f32.mrf.mxu0
    %v4789 = vadd.f32 %v4700, %v4788
    %4790 = vmatmul.bf16.gmra.mxu0 %v1327
    %v4791 = vpop.f32.mrf.mxu0
    %v4792 = vadd.f32 %v4703, %v4791
    %v4793 = vpop.f32.mrf.mxu0
    %v4794 = vadd.f32 %v4705, %v4793
    %4795 = vmatmul.bf16.gmra.mxu0 %v1334
    %v4796 = vpop.f32.mrf.mxu0
    %v4797 = vadd.f32 %v4708, %v4796
    %v4798 = vpop.f32.mrf.mxu0
    %v4799 = vadd.f32 %v4710, %v4798
    %4800 = vmatmul.bf16.gmra.mxu0 %v1341
    %v4801 = vpop.f32.mrf.mxu0
    %v4802 = vadd.f32 %v4713, %v4801
    %v4803 = vpop.f32.mrf.mxu0
    %v4804 = vadd.f32 %v4715, %v4803
    %4805 = vmatmul.bf16.gmra.mxu0 %v1348
    %v4806 = vpop.f32.mrf.mxu0
    %v4807 = vadd.f32 %v4718, %v4806
    %v4808 = vpop.f32.mrf.mxu0
    %v4809 = vadd.f32 %v4720, %v4808
    %4810 = vmatmul.bf16.gmra.mxu0 %v1355
    %v4811 = vpop.f32.mrf.mxu0
    %v4812 = vadd.f32 %v4723, %v4811
    %v4813 = vpop.f32.mrf.mxu0
    %v4814 = vadd.f32 %v4725, %v4813
    %4815 = vdwg.mxu0
    %4816 = vmatpush.bf16.msra.mxu0 %v2302
    %4817 = vmatpush.bf16.msra.mxu0 %v2298
    %4818 = vmatpush.bf16.msra.mxu0 %v2294
    %4819 = vmatpush.bf16.msra.mxu0 %v2290
    %4820 = vmatpush.bf16.msra.mxu0 %v2286
    %4821 = vmatpush.bf16.msra.mxu0 %v2282
    %4822 = vmatpush.bf16.msra.mxu0 %v2278
    %4823 = vmatpush.bf16.msra.mxu0 %v2274
    %4824 = vmatmul.bf16.gmra.mxu0 %v1251
    %v4825 = vpop.f32.mrf.mxu0
    %v4826 = vadd.f32 %v4737, %v4825
    %v4827 = vpop.f32.mrf.mxu0
    %v4828 = vadd.f32 %v4739, %v4827
    %4829 = vmatmul.bf16.gmra.mxu0 %v1258
    %v4830 = vpop.f32.mrf.mxu0
    %v4831 = vadd.f32 %v4742, %v4830
    %v4832 = vpop.f32.mrf.mxu0
    %v4833 = vadd.f32 %v4744, %v4832
    %4834 = vmatmul.bf16.gmra.mxu0 %v1265
    %v4835 = vpop.f32.mrf.mxu0
    %v4836 = vadd.f32 %v4747, %v4835
    %v4837 = vpop.f32.mrf.mxu0
    %v4838 = vadd.f32 %v4749, %v4837
    %4839 = vmatmul.bf16.gmra.mxu0 %v1272
    %v4840 = vpop.f32.mrf.mxu0
    %v4841 = vadd.f32 %v4752, %v4840
    %v4842 = vpop.f32.mrf.mxu0
    %v4843 = vadd.f32 %v4754, %v4842
    %4844 = vmatmul.bf16.gmra.mxu0 %v1279
    %v4845 = vpop.f32.mrf.mxu0
    %v4846 = vadd.f32 %v4757, %v4845
    %v4847 = vpop.f32.mrf.mxu0
    %v4848 = vadd.f32 %v4759, %v4847
    %4849 = vmatmul.bf16.gmra.mxu0 %v1286
    %v4850 = vpop.f32.mrf.mxu0
    %v4851 = vadd.f32 %v4762, %v4850
    %v4852 = vpop.f32.mrf.mxu0
    %v4853 = vadd.f32 %v4764, %v4852
    %4854 = vmatmul.bf16.gmra.mxu0 %v1293
    %v4855 = vpop.f32.mrf.mxu0
    %v4856 = vadd.f32 %v4767, %v4855
    %v4857 = vpop.f32.mrf.mxu0
    %v4858 = vadd.f32 %v4769, %v4857
    %4859 = vmatmul.bf16.gmra.mxu0 %v1300
    %v4860 = vpop.f32.mrf.mxu0
    %v4861 = vadd.f32 %v4772, %v4860
    %v4862 = vpop.f32.mrf.mxu0
    %v4863 = vadd.f32 %v4774, %v4862
    %4864 = vmatmul.bf16.gmra.mxu0 %v1307
    %v4865 = vpop.f32.mrf.mxu0
    %v4866 = vadd.f32 %v4777, %v4865
    %v4867 = vpop.f32.mrf.mxu0
    %v4868 = vadd.f32 %v4779, %v4867
    %4869 = vmatmul.bf16.gmra.mxu0 %v1314
    %v4870 = vpop.f32.mrf.mxu0
    %v4871 = vadd.f32 %v4782, %v4870
    %v4872 = vpop.f32.mrf.mxu0
    %v4873 = vadd.f32 %v4784, %v4872
    %4874 = vmatmul.bf16.gmra.mxu0 %v1321
    %v4875 = vpop.f32.mrf.mxu0
    %v4876 = vadd.f32 %v4787, %v4875
    %v4877 = vpop.f32.mrf.mxu0
    %v4878 = vadd.f32 %v4789, %v4877
    %4879 = vmatmul.bf16.gmra.mxu0 %v1328
    %v4880 = vpop.f32.mrf.mxu0
    %v4881 = vadd.f32 %v4792, %v4880
    %v4882 = vpop.f32.mrf.mxu0
    %v4883 = vadd.f32 %v4794, %v4882
    %4884 = vmatmul.bf16.gmra.mxu0 %v1335
    %v4885 = vpop.f32.mrf.mxu0
    %v4886 = vadd.f32 %v4797, %v4885
    %v4887 = vpop.f32.mrf.mxu0
    %v4888 = vadd.f32 %v4799, %v4887
    %4889 = vmatmul.bf16.gmra.mxu0 %v1342
    %v4890 = vpop.f32.mrf.mxu0
    %v4891 = vadd.f32 %v4802, %v4890
    %v4892 = vpop.f32.mrf.mxu0
    %v4893 = vadd.f32 %v4804, %v4892
    %4894 = vmatmul.bf16.gmra.mxu0 %v1349
    %v4895 = vpop.f32.mrf.mxu0
    %v4896 = vadd.f32 %v4807, %v4895
    %v4897 = vpop.f32.mrf.mxu0
    %v4898 = vadd.f32 %v4809, %v4897
    %4899 = vmatmul.bf16.gmra.mxu0 %v1356
    %v4900 = vpop.f32.mrf.mxu0
    %v4901 = vadd.f32 %v4812, %v4900
    %v4902 = vpop.f32.mrf.mxu0
    %v4903 = vadd.f32 %v4814, %v4902
    %4904 = vdwg.mxu0
    %4905 = vmatpush.bf16.msra.mxu0 %v2334
    %4906 = vmatpush.bf16.msra.mxu0 %v2330
    %4907 = vmatpush.bf16.msra.mxu0 %v2326
    %4908 = vmatpush.bf16.msra.mxu0 %v2322
    %4909 = vmatpush.bf16.msra.mxu0 %v2318
    %4910 = vmatpush.bf16.msra.mxu0 %v2314
    %4911 = vmatpush.bf16.msra.mxu0 %v2310
    %4912 = vmatpush.bf16.msra.mxu0 %v2306
    %4913 = vmatmul.bf16.gmra.mxu0 %v1252
    %v4914 = vpop.f32.mrf.mxu0
    %v4915 = vadd.f32 %v4826, %v4914
    %v4916 = vpop.f32.mrf.mxu0
    %v4917 = vadd.f32 %v4828, %v4916
    %4918 = vmatmul.bf16.gmra.mxu0 %v1259
    %v4919 = vpop.f32.mrf.mxu0
    %v4920 = vadd.f32 %v4831, %v4919
    %v4921 = vpop.f32.mrf.mxu0
    %v4922 = vadd.f32 %v4833, %v4921
    %4923 = vmatmul.bf16.gmra.mxu0 %v1266
    %v4924 = vpop.f32.mrf.mxu0
    %v4925 = vadd.f32 %v4836, %v4924
    %v4926 = vpop.f32.mrf.mxu0
    %v4927 = vadd.f32 %v4838, %v4926
    %4928 = vmatmul.bf16.gmra.mxu0 %v1273
    %v4929 = vpop.f32.mrf.mxu0
    %v4930 = vadd.f32 %v4841, %v4929
    %v4931 = vpop.f32.mrf.mxu0
    %v4932 = vadd.f32 %v4843, %v4931
    %4933 = vmatmul.bf16.gmra.mxu0 %v1280
    %v4934 = vpop.f32.mrf.mxu0
    %v4935 = vadd.f32 %v4846, %v4934
    %v4936 = vpop.f32.mrf.mxu0
    %v4937 = vadd.f32 %v4848, %v4936
    %4938 = vmatmul.bf16.gmra.mxu0 %v1287
    %v4939 = vpop.f32.mrf.mxu0
    %v4940 = vadd.f32 %v4851, %v4939
    %v4941 = vpop.f32.mrf.mxu0
    %v4942 = vadd.f32 %v4853, %v4941
    %4943 = vmatmul.bf16.gmra.mxu0 %v1294
    %v4944 = vpop.f32.mrf.mxu0
    %v4945 = vadd.f32 %v4856, %v4944
    %v4946 = vpop.f32.mrf.mxu0
    %v4947 = vadd.f32 %v4858, %v4946
    %4948 = vmatmul.bf16.gmra.mxu0 %v1301
    %v4949 = vpop.f32.mrf.mxu0
    %v4950 = vadd.f32 %v4861, %v4949
    %v4951 = vpop.f32.mrf.mxu0
    %v4952 = vadd.f32 %v4863, %v4951
    %4953 = vmatmul.bf16.gmra.mxu0 %v1308
    %v4954 = vpop.f32.mrf.mxu0
    %v4955 = vadd.f32 %v4866, %v4954
    %v4956 = vpop.f32.mrf.mxu0
    %v4957 = vadd.f32 %v4868, %v4956
    %4958 = vmatmul.bf16.gmra.mxu0 %v1315
    %v4959 = vpop.f32.mrf.mxu0
    %v4960 = vadd.f32 %v4871, %v4959
    %v4961 = vpop.f32.mrf.mxu0
    %v4962 = vadd.f32 %v4873, %v4961
    %4963 = vmatmul.bf16.gmra.mxu0 %v1322
    %v4964 = vpop.f32.mrf.mxu0
    %v4965 = vadd.f32 %v4876, %v4964
    %v4966 = vpop.f32.mrf.mxu0
    %v4967 = vadd.f32 %v4878, %v4966
    %4968 = vmatmul.bf16.gmra.mxu0 %v1329
    %v4969 = vpop.f32.mrf.mxu0
    %v4970 = vadd.f32 %v4881, %v4969
    %v4971 = vpop.f32.mrf.mxu0
    %v4972 = vadd.f32 %v4883, %v4971
    %4973 = vmatmul.bf16.gmra.mxu0 %v1336
    %v4974 = vpop.f32.mrf.mxu0
    %v4975 = vadd.f32 %v4886, %v4974
    %v4976 = vpop.f32.mrf.mxu0
    %v4977 = vadd.f32 %v4888, %v4976
    %4978 = vmatmul.bf16.gmra.mxu0 %v1343
    %v4979 = vpop.f32.mrf.mxu0
    %v4980 = vadd.f32 %v4891, %v4979
    %v4981 = vpop.f32.mrf.mxu0
    %v4982 = vadd.f32 %v4893, %v4981
    %4983 = vmatmul.bf16.gmra.mxu0 %v1350
    %v4984 = vpop.f32.mrf.mxu0
    %v4985 = vadd.f32 %v4896, %v4984
    %v4986 = vpop.f32.mrf.mxu0
    %v4987 = vadd.f32 %v4898, %v4986
    %4988 = vmatmul.bf16.gmra.mxu0 %v1357
    %v4989 = vpop.f32.mrf.mxu0
    %v4990 = vadd.f32 %v4901, %v4989
    %v4991 = vpop.f32.mrf.mxu0
    %v4992 = vadd.f32 %v4903, %v4991
    %4993 = vdwg.mxu0
    %4994 = vmatpush.bf16.msra.mxu0 %v2366
    %4995 = vmatpush.bf16.msra.mxu0 %v2362
    %4996 = vmatpush.bf16.msra.mxu0 %v2358
    %4997 = vmatpush.bf16.msra.mxu0 %v2354
    %4998 = vmatpush.bf16.msra.mxu0 %v2350
    %4999 = vmatpush.bf16.msra.mxu0 %v2346
    %5000 = vmatpush.bf16.msra.mxu0 %v2342
    %5001 = vmatpush.bf16.msra.mxu0 %v2338
    %5002 = vmatmul.bf16.gmra.mxu0 %v1253
    %v5003 = vpop.f32.mrf.mxu0
    %v5004 = vadd.f32 %v4915, %v5003
    %v5005 = vpop.f32.mrf.mxu0
    %v5006 = vadd.f32 %v4917, %v5005
    %5007 = vmatmul.bf16.gmra.mxu0 %v1260
    %v5008 = vpop.f32.mrf.mxu0
    %v5009 = vadd.f32 %v4920, %v5008
    %v5010 = vpop.f32.mrf.mxu0
    %v5011 = vadd.f32 %v4922, %v5010
    %5012 = vmatmul.bf16.gmra.mxu0 %v1267
    %v5013 = vpop.f32.mrf.mxu0
    %v5014 = vadd.f32 %v4925, %v5013
    %v5015 = vpop.f32.mrf.mxu0
    %v5016 = vadd.f32 %v4927, %v5015
    %5017 = vmatmul.bf16.gmra.mxu0 %v1274
    %v5018 = vpop.f32.mrf.mxu0
    %v5019 = vadd.f32 %v4930, %v5018
    %v5020 = vpop.f32.mrf.mxu0
    %v5021 = vadd.f32 %v4932, %v5020
    %5022 = vmatmul.bf16.gmra.mxu0 %v1281
    %v5023 = vpop.f32.mrf.mxu0
    %v5024 = vadd.f32 %v4935, %v5023
    %v5025 = vpop.f32.mrf.mxu0
    %v5026 = vadd.f32 %v4937, %v5025
    %5027 = vmatmul.bf16.gmra.mxu0 %v1288
    %v5028 = vpop.f32.mrf.mxu0
    %v5029 = vadd.f32 %v4940, %v5028
    %v5030 = vpop.f32.mrf.mxu0
    %v5031 = vadd.f32 %v4942, %v5030
    %5032 = vmatmul.bf16.gmra.mxu0 %v1295
    %v5033 = vpop.f32.mrf.mxu0
    %v5034 = vadd.f32 %v4945, %v5033
    %v5035 = vpop.f32.mrf.mxu0
    %v5036 = vadd.f32 %v4947, %v5035
    %5037 = vmatmul.bf16.gmra.mxu0 %v1302
    %v5038 = vpop.f32.mrf.mxu0
    %v5039 = vadd.f32 %v4950, %v5038
    %v5040 = vpop.f32.mrf.mxu0
    %v5041 = vadd.f32 %v4952, %v5040
    %5042 = vmatmul.bf16.gmra.mxu0 %v1309
    %v5043 = vpop.f32.mrf.mxu0
    %v5044 = vadd.f32 %v4955, %v5043
    %v5045 = vpop.f32.mrf.mxu0
    %v5046 = vadd.f32 %v4957, %v5045
    %5047 = vmatmul.bf16.gmra.mxu0 %v1316
    %v5048 = vpop.f32.mrf.mxu0
    %v5049 = vadd.f32 %v4960, %v5048
    %v5050 = vpop.f32.mrf.mxu0
    %v5051 = vadd.f32 %v4962, %v5050
    %5052 = vmatmul.bf16.gmra.mxu0 %v1323
    %v5053 = vpop.f32.mrf.mxu0
    %v5054 = vadd.f32 %v4965, %v5053
    %v5055 = vpop.f32.mrf.mxu0
    %v5056 = vadd.f32 %v4967, %v5055
    %5057 = vmatmul.bf16.gmra.mxu0 %v1330
    %v5058 = vpop.f32.mrf.mxu0
    %v5059 = vadd.f32 %v4970, %v5058
    %v5060 = vpop.f32.mrf.mxu0
    %v5061 = vadd.f32 %v4972, %v5060
    %5062 = vmatmul.bf16.gmra.mxu0 %v1337
    %v5063 = vpop.f32.mrf.mxu0
    %v5064 = vadd.f32 %v4975, %v5063
    %v5065 = vpop.f32.mrf.mxu0
    %v5066 = vadd.f32 %v4977, %v5065
    %5067 = vmatmul.bf16.gmra.mxu0 %v1344
    %v5068 = vpop.f32.mrf.mxu0
    %v5069 = vadd.f32 %v4980, %v5068
    %v5070 = vpop.f32.mrf.mxu0
    %v5071 = vadd.f32 %v4982, %v5070
    %5072 = vmatmul.bf16.gmra.mxu0 %v1351
    %v5073 = vpop.f32.mrf.mxu0
    %v5074 = vadd.f32 %v4985, %v5073
    %v5075 = vpop.f32.mrf.mxu0
    %v5076 = vadd.f32 %v4987, %v5075
    %5077 = vmatmul.bf16.gmra.mxu0 %v1358
    %v5078 = vpop.f32.mrf.mxu0
    %v5079 = vadd.f32 %v4990, %v5078
    %v5080 = vpop.f32.mrf.mxu0
    %v5081 = vadd.f32 %v4992, %v5080
    %5082 = vdwg.mxu0
    %v5083 = vpack.c.bf16 %v3758, %v3135
    %v5084 = vpack.c.bf16 %v5004, %v4381
    %v5085 = vpack.c.bf16 %v3760, %v3137
    %v5086 = vpack.c.bf16 %v5006, %v4383
    %v5087 = vpack.c.bf16 %v3763, %v3140
    %v5088 = vpack.c.bf16 %v5009, %v4386
    %v5089 = vpack.c.bf16 %v3765, %v3142
    %v5090 = vpack.c.bf16 %v5011, %v4388
    %v5091 = vpack.c.bf16 %v3768, %v3145
    %v5092 = vpack.c.bf16 %v5014, %v4391
    %v5093 = vpack.c.bf16 %v3770, %v3147
    %v5094 = vpack.c.bf16 %v5016, %v4393
    %v5095 = vpack.c.bf16 %v3773, %v3150
    %v5096 = vpack.c.bf16 %v5019, %v4396
    %v5097 = vpack.c.bf16 %v3775, %v3152
    %v5098 = vpack.c.bf16 %v5021, %v4398
    %v5099 = vpack.c.bf16 %v3778, %v3155
    %v5100 = vpack.c.bf16 %v5024, %v4401
    %v5101 = vpack.c.bf16 %v3780, %v3157
    %v5102 = vpack.c.bf16 %v5026, %v4403
    %v5103 = vpack.c.bf16 %v3783, %v3160
    %v5104 = vpack.c.bf16 %v5029, %v4406
    %v5105 = vpack.c.bf16 %v3785, %v3162
    %v5106 = vpack.c.bf16 %v5031, %v4408
    %v5107 = vpack.c.bf16 %v3788, %v3165
    %v5108 = vpack.c.bf16 %v5034, %v4411
    %v5109 = vpack.c.bf16 %v3790, %v3167
    %v5110 = vpack.c.bf16 %v5036, %v4413
    %v5111 = vpack.c.bf16 %v3793, %v3170
    %v5112 = vpack.c.bf16 %v5039, %v4416
    %v5113 = vpack.c.bf16 %v3795, %v3172
    %v5114 = vpack.c.bf16 %v5041, %v4418
    %v5115 = vpack.c.bf16 %v3798, %v3175
    %v5116 = vpack.c.bf16 %v5044, %v4421
    %v5117 = vpack.c.bf16 %v3800, %v3177
    %v5118 = vpack.c.bf16 %v5046, %v4423
    %v5119 = vpack.c.bf16 %v3803, %v3180
    %v5120 = vpack.c.bf16 %v5049, %v4426
    %v5121 = vpack.c.bf16 %v3805, %v3182
    %v5122 = vpack.c.bf16 %v5051, %v4428
    %v5123 = vpack.c.bf16 %v3808, %v3185
    %v5124 = vpack.c.bf16 %v5054, %v4431
    %v5125 = vpack.c.bf16 %v3810, %v3187
    %v5126 = vpack.c.bf16 %v5056, %v4433
    %v5127 = vpack.c.bf16 %v3813, %v3190
    %v5128 = vpack.c.bf16 %v5059, %v4436
    %v5129 = vpack.c.bf16 %v3815, %v3192
    %v5130 = vpack.c.bf16 %v5061, %v4438
    %v5131 = vpack.c.bf16 %v3818, %v3195
    %v5132 = vpack.c.bf16 %v5064, %v4441
    %v5133 = vpack.c.bf16 %v3820, %v3197
    %v5134 = vpack.c.bf16 %v5066, %v4443
    %v5135 = vpack.c.bf16 %v3823, %v3200
    %v5136 = vpack.c.bf16 %v5069, %v4446
    %v5137 = vpack.c.bf16 %v3825, %v3202
    %v5138 = vpack.c.bf16 %v5071, %v4448
    %v5139 = vpack.c.bf16 %v3828, %v3205
    %v5140 = vpack.c.bf16 %v5074, %v4451
    %v5141 = vpack.c.bf16 %v3830, %v3207
    %v5142 = vpack.c.bf16 %v5076, %v4453
    %v5143 = vpack.c.bf16 %v3833, %v3210
    %v5144 = vpack.c.bf16 %v5079, %v4456
    %v5145 = vpack.c.bf16 %v3835, %v3212
    %v5146 = vpack.c.bf16 %v5081, %v4458
    %v5147 = vld [vmem:[%s2] sm:$0xf]
    %5149 = vst [vmem:[#allocation1] ss:$9 sm:$0xff] %v5147
    %v5150 = vld [vmem:[#allocation1] sm:$0xff]
    %v5151 = vld [vmem:[#allocation1 + $0x9] sm:$0xff]
    %v5152 = vld [vmem:[#allocation1 + $0x12] sm:$0xff]
    %v5153 = vld [vmem:[#allocation1 + $0x1b] sm:$0xff]
    %v5154 = vpack.i.b16 %v5150, %v5150
    %v5156 = vperm.slane %v5154, 0
    %v5157 = vpack.i.b16 %v5151, %v5151
    %v5159 = vperm.slane %v5157, 0
    %v5160 = vpack.i.b16 %v5152, %v5152
    %v5162 = vperm.slane %v5160, 0
    %v5163 = vpack.i.b16 %v5153, %v5153
    %v5165 = vperm.slane %v5163, 0
    %v5166 = vunpack.c.l.bf16 %v5083
    %v5167 = vunpack.c.h.bf16 %v5083
    %v5168 = vunpack.c.l.bf16 %v5084
    %v5169 = vunpack.c.h.bf16 %v5084
    %v5170 = vunpack.c.l.bf16 %v5085
    %v5171 = vunpack.c.h.bf16 %v5085
    %v5172 = vunpack.c.l.bf16 %v5086
    %v5173 = vunpack.c.h.bf16 %v5086
    %v5174 = vunpack.c.l.bf16 %v5087
    %v5175 = vunpack.c.h.bf16 %v5087
    %v5176 = vunpack.c.l.bf16 %v5088
    %v5177 = vunpack.c.h.bf16 %v5088
    %v5178 = vunpack.c.l.bf16 %v5089
    %v5179 = vunpack.c.h.bf16 %v5089
    %v5180 = vunpack.c.l.bf16 %v5090
    %v5181 = vunpack.c.h.bf16 %v5090
    %v5182 = vunpack.c.l.bf16 %v5091
    %v5183 = vunpack.c.h.bf16 %v5091
    %v5184 = vunpack.c.l.bf16 %v5092
    %v5185 = vunpack.c.h.bf16 %v5092
    %v5186 = vunpack.c.l.bf16 %v5093
    %v5187 = vunpack.c.h.bf16 %v5093
    %v5188 = vunpack.c.l.bf16 %v5094
    %v5189 = vunpack.c.h.bf16 %v5094
    %v5190 = vunpack.c.l.bf16 %v5095
    %v5191 = vunpack.c.h.bf16 %v5095
    %v5192 = vunpack.c.l.bf16 %v5096
    %v5193 = vunpack.c.h.bf16 %v5096
    %v5194 = vunpack.c.l.bf16 %v5097
    %v5195 = vunpack.c.h.bf16 %v5097
    %v5196 = vunpack.c.l.bf16 %v5098
    %v5197 = vunpack.c.h.bf16 %v5098
    %v5198 = vunpack.c.l.bf16 %v5099
    %v5199 = vunpack.c.h.bf16 %v5099
    %v5200 = vunpack.c.l.bf16 %v5100
    %v5201 = vunpack.c.h.bf16 %v5100
    %v5202 = vunpack.c.l.bf16 %v5101
    %v5203 = vunpack.c.h.bf16 %v5101
    %v5204 = vunpack.c.l.bf16 %v5102
    %v5205 = vunpack.c.h.bf16 %v5102
    %v5206 = vunpack.c.l.bf16 %v5103
    %v5207 = vunpack.c.h.bf16 %v5103
    %v5208 = vunpack.c.l.bf16 %v5104
    %v5209 = vunpack.c.h.bf16 %v5104
    %v5210 = vunpack.c.l.bf16 %v5105
    %v5211 = vunpack.c.h.bf16 %v5105
    %v5212 = vunpack.c.l.bf16 %v5106
    %v5213 = vunpack.c.h.bf16 %v5106
    %v5214 = vunpack.c.l.bf16 %v5107
    %v5215 = vunpack.c.h.bf16 %v5107
    %v5216 = vunpack.c.l.bf16 %v5108
    %v5217 = vunpack.c.h.bf16 %v5108
    %v5218 = vunpack.c.l.bf16 %v5109
    %v5219 = vunpack.c.h.bf16 %v5109
    %v5220 = vunpack.c.l.bf16 %v5110
    %v5221 = vunpack.c.h.bf16 %v5110
    %v5222 = vunpack.c.l.bf16 %v5111
    %v5223 = vunpack.c.h.bf16 %v5111
    %v5224 = vunpack.c.l.bf16 %v5112
    %v5225 = vunpack.c.h.bf16 %v5112
    %v5226 = vunpack.c.l.bf16 %v5113
    %v5227 = vunpack.c.h.bf16 %v5113
    %v5228 = vunpack.c.l.bf16 %v5114
    %v5229 = vunpack.c.h.bf16 %v5114
    %v5230 = vunpack.c.l.bf16 %v5115
    %v5231 = vunpack.c.h.bf16 %v5115
    %v5232 = vunpack.c.l.bf16 %v5116
    %v5233 = vunpack.c.h.bf16 %v5116
    %v5234 = vunpack.c.l.bf16 %v5117
    %v5235 = vunpack.c.h.bf16 %v5117
    %v5236 = vunpack.c.l.bf16 %v5118
    %v5237 = vunpack.c.h.bf16 %v5118
    %v5238 = vunpack.c.l.bf16 %v5119
    %v5239 = vunpack.c.h.bf16 %v5119
    %v5240 = vunpack.c.l.bf16 %v5120
    %v5241 = vunpack.c.h.bf16 %v5120
    %v5242 = vunpack.c.l.bf16 %v5121
    %v5243 = vunpack.c.h.bf16 %v5121
    %v5244 = vunpack.c.l.bf16 %v5122
    %v5245 = vunpack.c.h.bf16 %v5122
    %v5246 = vunpack.c.l.bf16 %v5123
    %v5247 = vunpack.c.h.bf16 %v5123
    %v5248 = vunpack.c.l.bf16 %v5124
    %v5249 = vunpack.c.h.bf16 %v5124
    %v5250 = vunpack.c.l.bf16 %v5125
    %v5251 = vunpack.c.h.bf16 %v5125
    %v5252 = vunpack.c.l.bf16 %v5126
    %v5253 = vunpack.c.h.bf16 %v5126
    %v5254 = vunpack.c.l.bf16 %v5127
    %v5255 = vunpack.c.h.bf16 %v5127
    %v5256 = vunpack.c.l.bf16 %v5128
    %v5257 = vunpack.c.h.bf16 %v5128
    %v5258 = vunpack.c.l.bf16 %v5129
    %v5259 = vunpack.c.h.bf16 %v5129
    %v5260 = vunpack.c.l.bf16 %v5130
    %v5261 = vunpack.c.h.bf16 %v5130
    %v5262 = vunpack.c.l.bf16 %v5131
    %v5263 = vunpack.c.h.bf16 %v5131
    %v5264 = vunpack.c.l.bf16 %v5132
    %v5265 = vunpack.c.h.bf16 %v5132
    %v5266 = vunpack.c.l.bf16 %v5133
    %v5267 = vunpack.c.h.bf16 %v5133
    %v5268 = vunpack.c.l.bf16 %v5134
    %v5269 = vunpack.c.h.bf16 %v5134
    %v5270 = vunpack.c.l.bf16 %v5135
    %v5271 = vunpack.c.h.bf16 %v5135
    %v5272 = vunpack.c.l.bf16 %v5136
    %v5273 = vunpack.c.h.bf16 %v5136
    %v5274 = vunpack.c.l.bf16 %v5137
    %v5275 = vunpack.c.h.bf16 %v5137
    %v5276 = vunpack.c.l.bf16 %v5138
    %v5277 = vunpack.c.h.bf16 %v5138
    %v5278 = vunpack.c.l.bf16 %v5139
    %v5279 = vunpack.c.h.bf16 %v5139
    %v5280 = vunpack.c.l.bf16 %v5140
    %v5281 = vunpack.c.h.bf16 %v5140
    %v5282 = vunpack.c.l.bf16 %v5141
    %v5283 = vunpack.c.h.bf16 %v5141
    %v5284 = vunpack.c.l.bf16 %v5142
    %v5285 = vunpack.c.h.bf16 %v5142
    %v5286 = vunpack.c.l.bf16 %v5143
    %v5287 = vunpack.c.h.bf16 %v5143
    %v5288 = vunpack.c.l.bf16 %v5144
    %v5289 = vunpack.c.h.bf16 %v5144
    %v5290 = vunpack.c.l.bf16 %v5145
    %v5291 = vunpack.c.h.bf16 %v5145
    %v5292 = vunpack.c.l.bf16 %v5146
    %v5293 = vunpack.c.h.bf16 %v5146
    %v5294 = vunpack.c.l.bf16 %v5156
    %v5295 = vunpack.c.l.bf16 %v5159
    %v5296 = vunpack.c.l.bf16 %v5162
    %v5297 = vunpack.c.l.bf16 %v5165
    %v5298 = vadd.f32 %v5166, %v5294
    %v5299 = vadd.f32 %v5167, %v5295
    %v5300 = vadd.f32 %v5168, %v5296
    %v5301 = vadd.f32 %v5169, %v5297
    %v5302 = vadd.f32 %v5170, %v5294
    %v5303 = vadd.f32 %v5171, %v5295
    %v5304 = vadd.f32 %v5172, %v5296
    %v5305 = vadd.f32 %v5173, %v5297
    %v5306 = vadd.f32 %v5174, %v5294
    %v5307 = vadd.f32 %v5175, %v5295
    %v5308 = vadd.f32 %v5176, %v5296
    %v5309 = vadd.f32 %v5177, %v5297
    %v5310 = vadd.f32 %v5178, %v5294
    %v5311 = vadd.f32 %v5179, %v5295
    %v5312 = vadd.f32 %v5180, %v5296
    %v5313 = vadd.f32 %v5181, %v5297
    %v5314 = vadd.f32 %v5182, %v5294
    %v5315 = vadd.f32 %v5183, %v5295
    %v5316 = vadd.f32 %v5184, %v5296
    %v5317 = vadd.f32 %v5185, %v5297
    %v5318 = vadd.f32 %v5186, %v5294
    %v5319 = vadd.f32 %v5187, %v5295
    %v5320 = vadd.f32 %v5188, %v5296
    %v5321 = vadd.f32 %v5189, %v5297
    %v5322 = vadd.f32 %v5190, %v5294
    %v5323 = vadd.f32 %v5191, %v5295
    %v5324 = vadd.f32 %v5192, %v5296
    %v5325 = vadd.f32 %v5193, %v5297
    %v5326 = vadd.f32 %v5194, %v5294
    %v5327 = vadd.f32 %v5195, %v5295
    %v5328 = vadd.f32 %v5196, %v5296
    %v5329 = vadd.f32 %v5197, %v5297
    %v5330 = vadd.f32 %v5198, %v5294
    %v5331 = vadd.f32 %v5199, %v5295
    %v5332 = vadd.f32 %v5200, %v5296
    %v5333 = vadd.f32 %v5201, %v5297
    %v5334 = vadd.f32 %v5202, %v5294
    %v5335 = vadd.f32 %v5203, %v5295
    %v5336 = vadd.f32 %v5204, %v5296
    %v5337 = vadd.f32 %v5205, %v5297
    %v5338 = vadd.f32 %v5206, %v5294
    %v5339 = vadd.f32 %v5207, %v5295
    %v5340 = vadd.f32 %v5208, %v5296
    %v5341 = vadd.f32 %v5209, %v5297
    %v5342 = vadd.f32 %v5210, %v5294
    %v5343 = vadd.f32 %v5211, %v5295
    %v5344 = vadd.f32 %v5212, %v5296
    %v5345 = vadd.f32 %v5213, %v5297
    %v5346 = vadd.f32 %v5214, %v5294
    %v5347 = vadd.f32 %v5215, %v5295
    %v5348 = vadd.f32 %v5216, %v5296
    %v5349 = vadd.f32 %v5217, %v5297
    %v5350 = vadd.f32 %v5218, %v5294
    %v5351 = vadd.f32 %v5219, %v5295
    %v5352 = vadd.f32 %v5220, %v5296
    %v5353 = vadd.f32 %v5221, %v5297
    %v5354 = vadd.f32 %v5222, %v5294
    %v5355 = vadd.f32 %v5223, %v5295
    %v5356 = vadd.f32 %v5224, %v5296
    %v5357 = vadd.f32 %v5225, %v5297
    %v5358 = vadd.f32 %v5226, %v5294
    %v5359 = vadd.f32 %v5227, %v5295
    %v5360 = vadd.f32 %v5228, %v5296
    %v5361 = vadd.f32 %v5229, %v5297
    %v5362 = vadd.f32 %v5230, %v5294
    %v5363 = vadd.f32 %v5231, %v5295
    %v5364 = vadd.f32 %v5232, %v5296
    %v5365 = vadd.f32 %v5233, %v5297
    %v5366 = vadd.f32 %v5234, %v5294
    %v5367 = vadd.f32 %v5235, %v5295
    %v5368 = vadd.f32 %v5236, %v5296
    %v5369 = vadd.f32 %v5237, %v5297
    %v5370 = vadd.f32 %v5238, %v5294
    %v5371 = vadd.f32 %v5239, %v5295
    %v5372 = vadd.f32 %v5240, %v5296
    %v5373 = vadd.f32 %v5241, %v5297
    %v5374 = vadd.f32 %v5242, %v5294
    %v5375 = vadd.f32 %v5243, %v5295
    %v5376 = vadd.f32 %v5244, %v5296
    %v5377 = vadd.f32 %v5245, %v5297
    %v5378 = vadd.f32 %v5246, %v5294
    %v5379 = vadd.f32 %v5247, %v5295
    %v5380 = vadd.f32 %v5248, %v5296
    %v5381 = vadd.f32 %v5249, %v5297
    %v5382 = vadd.f32 %v5250, %v5294
    %v5383 = vadd.f32 %v5251, %v5295
    %v5384 = vadd.f32 %v5252, %v5296
    %v5385 = vadd.f32 %v5253, %v5297
    %v5386 = vadd.f32 %v5254, %v5294
    %v5387 = vadd.f32 %v5255, %v5295
    %v5388 = vadd.f32 %v5256, %v5296
    %v5389 = vadd.f32 %v5257, %v5297
    %v5390 = vadd.f32 %v5258, %v5294
    %v5391 = vadd.f32 %v5259, %v5295
    %v5392 = vadd.f32 %v5260, %v5296
    %v5393 = vadd.f32 %v5261, %v5297
    %v5394 = vadd.f32 %v5262, %v5294
    %v5395 = vadd.f32 %v5263, %v5295
    %v5396 = vadd.f32 %v5264, %v5296
    %v5397 = vadd.f32 %v5265, %v5297
    %v5398 = vadd.f32 %v5266, %v5294
    %v5399 = vadd.f32 %v5267, %v5295
    %v5400 = vadd.f32 %v5268, %v5296
    %v5401 = vadd.f32 %v5269, %v5297
    %v5402 = vadd.f32 %v5270, %v5294
    %v5403 = vadd.f32 %v5271, %v5295
    %v5404 = vadd.f32 %v5272, %v5296
    %v5405 = vadd.f32 %v5273, %v5297
    %v5406 = vadd.f32 %v5274, %v5294
    %v5407 = vadd.f32 %v5275, %v5295
    %v5408 = vadd.f32 %v5276, %v5296
    %v5409 = vadd.f32 %v5277, %v5297
    %v5410 = vadd.f32 %v5278, %v5294
    %v5411 = vadd.f32 %v5279, %v5295
    %v5412 = vadd.f32 %v5280, %v5296
    %v5413 = vadd.f32 %v5281, %v5297
    %v5414 = vadd.f32 %v5282, %v5294
    %v5415 = vadd.f32 %v5283, %v5295
    %v5416 = vadd.f32 %v5284, %v5296
    %v5417 = vadd.f32 %v5285, %v5297
    %v5418 = vadd.f32 %v5286, %v5294
    %v5419 = vadd.f32 %v5287, %v5295
    %v5420 = vadd.f32 %v5288, %v5296
    %v5421 = vadd.f32 %v5289, %v5297
    %v5422 = vadd.f32 %v5290, %v5294
    %v5423 = vadd.f32 %v5291, %v5295
    %v5424 = vadd.f32 %v5292, %v5296
    %v5425 = vadd.f32 %v5293, %v5297
    %v5426 = vpack.c.bf16 %v5299, %v5298
    %v5427 = vpack.c.bf16 %v5301, %v5300
    %v5428 = vpack.c.bf16 %v5303, %v5302
    %v5429 = vpack.c.bf16 %v5305, %v5304
    %v5430 = vpack.c.bf16 %v5307, %v5306
    %v5431 = vpack.c.bf16 %v5309, %v5308
    %v5432 = vpack.c.bf16 %v5311, %v5310
    %v5433 = vpack.c.bf16 %v5313, %v5312
    %v5434 = vpack.c.bf16 %v5315, %v5314
    %v5435 = vpack.c.bf16 %v5317, %v5316
    %v5436 = vpack.c.bf16 %v5319, %v5318
    %v5437 = vpack.c.bf16 %v5321, %v5320
    %v5438 = vpack.c.bf16 %v5323, %v5322
    %v5439 = vpack.c.bf16 %v5325, %v5324
    %v5440 = vpack.c.bf16 %v5327, %v5326
    %v5441 = vpack.c.bf16 %v5329, %v5328
    %v5442 = vpack.c.bf16 %v5331, %v5330
    %v5443 = vpack.c.bf16 %v5333, %v5332
    %v5444 = vpack.c.bf16 %v5335, %v5334
    %v5445 = vpack.c.bf16 %v5337, %v5336
    %v5446 = vpack.c.bf16 %v5339, %v5338
    %v5447 = vpack.c.bf16 %v5341, %v5340
    %v5448 = vpack.c.bf16 %v5343, %v5342
    %v5449 = vpack.c.bf16 %v5345, %v5344
    %v5450 = vpack.c.bf16 %v5347, %v5346
    %v5451 = vpack.c.bf16 %v5349, %v5348
    %v5452 = vpack.c.bf16 %v5351, %v5350
    %v5453 = vpack.c.bf16 %v5353, %v5352
    %v5454 = vpack.c.bf16 %v5355, %v5354
    %v5455 = vpack.c.bf16 %v5357, %v5356
    %v5456 = vpack.c.bf16 %v5359, %v5358
    %v5457 = vpack.c.bf16 %v5361, %v5360
    %v5458 = vpack.c.bf16 %v5363, %v5362
    %v5459 = vpack.c.bf16 %v5365, %v5364
    %v5460 = vpack.c.bf16 %v5367, %v5366
    %v5461 = vpack.c.bf16 %v5369, %v5368
    %v5462 = vpack.c.bf16 %v5371, %v5370
    %v5463 = vpack.c.bf16 %v5373, %v5372
    %v5464 = vpack.c.bf16 %v5375, %v5374
    %v5465 = vpack.c.bf16 %v5377, %v5376
    %v5466 = vpack.c.bf16 %v5379, %v5378
    %v5467 = vpack.c.bf16 %v5381, %v5380
    %v5468 = vpack.c.bf16 %v5383, %v5382
    %v5469 = vpack.c.bf16 %v5385, %v5384
    %v5470 = vpack.c.bf16 %v5387, %v5386
    %v5471 = vpack.c.bf16 %v5389, %v5388
    %v5472 = vpack.c.bf16 %v5391, %v5390
    %v5473 = vpack.c.bf16 %v5393, %v5392
    %v5474 = vpack.c.bf16 %v5395, %v5394
    %v5475 = vpack.c.bf16 %v5397, %v5396
    %v5476 = vpack.c.bf16 %v5399, %v5398
    %v5477 = vpack.c.bf16 %v5401, %v5400
    %v5478 = vpack.c.bf16 %v5403, %v5402
    %v5479 = vpack.c.bf16 %v5405, %v5404
    %v5480 = vpack.c.bf16 %v5407, %v5406
    %v5481 = vpack.c.bf16 %v5409, %v5408
    %v5482 = vpack.c.bf16 %v5411, %v5410
    %v5483 = vpack.c.bf16 %v5413, %v5412
    %v5484 = vpack.c.bf16 %v5415, %v5414
    %v5485 = vpack.c.bf16 %v5417, %v5416
    %v5486 = vpack.c.bf16 %v5419, %v5418
    %v5487 = vpack.c.bf16 %v5421, %v5420
    %v5488 = vpack.c.bf16 %v5423, %v5422
    %v5489 = vpack.c.bf16 %v5425, %v5424
    %v5490 = vunpack.c.l.bf16 %v5426
    %v5491 = vunpack.c.h.bf16 %v5426
    %v5492 = vunpack.c.l.bf16 %v5427
    %v5493 = vunpack.c.h.bf16 %v5427
    %v5494 = vunpack.c.l.bf16 %v5428
    %v5495 = vunpack.c.h.bf16 %v5428
    %v5496 = vunpack.c.l.bf16 %v5429
    %v5497 = vunpack.c.h.bf16 %v5429
    %v5498 = vunpack.c.l.bf16 %v5430
    %v5499 = vunpack.c.h.bf16 %v5430
    %v5500 = vunpack.c.l.bf16 %v5431
    %v5501 = vunpack.c.h.bf16 %v5431
    %v5502 = vunpack.c.l.bf16 %v5432
    %v5503 = vunpack.c.h.bf16 %v5432
    %v5504 = vunpack.c.l.bf16 %v5433
    %v5505 = vunpack.c.h.bf16 %v5433
    %v5506 = vunpack.c.l.bf16 %v5434
    %v5507 = vunpack.c.h.bf16 %v5434
    %v5508 = vunpack.c.l.bf16 %v5435
    %v5509 = vunpack.c.h.bf16 %v5435
    %v5510 = vunpack.c.l.bf16 %v5436
    %v5511 = vunpack.c.h.bf16 %v5436
    %v5512 = vunpack.c.l.bf16 %v5437
    %v5513 = vunpack.c.h.bf16 %v5437
    %v5514 = vunpack.c.l.bf16 %v5438
    %v5515 = vunpack.c.h.bf16 %v5438
    %v5516 = vunpack.c.l.bf16 %v5439
    %v5517 = vunpack.c.h.bf16 %v5439
    %v5518 = vunpack.c.l.bf16 %v5440
    %v5519 = vunpack.c.h.bf16 %v5440
    %v5520 = vunpack.c.l.bf16 %v5441
    %v5521 = vunpack.c.h.bf16 %v5441
    %v5522 = vunpack.c.l.bf16 %v5442
    %v5523 = vunpack.c.h.bf16 %v5442
    %v5524 = vunpack.c.l.bf16 %v5443
    %v5525 = vunpack.c.h.bf16 %v5443
    %v5526 = vunpack.c.l.bf16 %v5444
    %v5527 = vunpack.c.h.bf16 %v5444
    %v5528 = vunpack.c.l.bf16 %v5445
    %v5529 = vunpack.c.h.bf16 %v5445
    %v5530 = vunpack.c.l.bf16 %v5446
    %v5531 = vunpack.c.h.bf16 %v5446
    %v5532 = vunpack.c.l.bf16 %v5447
    %v5533 = vunpack.c.h.bf16 %v5447
    %v5534 = vunpack.c.l.bf16 %v5448
    %v5535 = vunpack.c.h.bf16 %v5448
    %v5536 = vunpack.c.l.bf16 %v5449
    %v5537 = vunpack.c.h.bf16 %v5449
    %v5538 = vunpack.c.l.bf16 %v5450
    %v5539 = vunpack.c.h.bf16 %v5450
    %v5540 = vunpack.c.l.bf16 %v5451
    %v5541 = vunpack.c.h.bf16 %v5451
    %v5542 = vunpack.c.l.bf16 %v5452
    %v5543 = vunpack.c.h.bf16 %v5452
    %v5544 = vunpack.c.l.bf16 %v5453
    %v5545 = vunpack.c.h.bf16 %v5453
    %v5546 = vunpack.c.l.bf16 %v5454
    %v5547 = vunpack.c.h.bf16 %v5454
    %v5548 = vunpack.c.l.bf16 %v5455
    %v5549 = vunpack.c.h.bf16 %v5455
    %v5550 = vunpack.c.l.bf16 %v5456
    %v5551 = vunpack.c.h.bf16 %v5456
    %v5552 = vunpack.c.l.bf16 %v5457
    %v5553 = vunpack.c.h.bf16 %v5457
    %v5554 = vunpack.c.l.bf16 %v5458
    %v5555 = vunpack.c.h.bf16 %v5458
    %v5556 = vunpack.c.l.bf16 %v5459
    %v5557 = vunpack.c.h.bf16 %v5459
    %v5558 = vunpack.c.l.bf16 %v5460
    %v5559 = vunpack.c.h.bf16 %v5460
    %v5560 = vunpack.c.l.bf16 %v5461
    %v5561 = vunpack.c.h.bf16 %v5461
    %v5562 = vunpack.c.l.bf16 %v5462
    %v5563 = vunpack.c.h.bf16 %v5462
    %v5564 = vunpack.c.l.bf16 %v5463
    %v5565 = vunpack.c.h.bf16 %v5463
    %v5566 = vunpack.c.l.bf16 %v5464
    %v5567 = vunpack.c.h.bf16 %v5464
    %v5568 = vunpack.c.l.bf16 %v5465
    %v5569 = vunpack.c.h.bf16 %v5465
    %v5570 = vunpack.c.l.bf16 %v5466
    %v5571 = vunpack.c.h.bf16 %v5466
    %v5572 = vunpack.c.l.bf16 %v5467
    %v5573 = vunpack.c.h.bf16 %v5467
    %v5574 = vunpack.c.l.bf16 %v5468
    %v5575 = vunpack.c.h.bf16 %v5468
    %v5576 = vunpack.c.l.bf16 %v5469
    %v5577 = vunpack.c.h.bf16 %v5469
    %v5578 = vunpack.c.l.bf16 %v5470
    %v5579 = vunpack.c.h.bf16 %v5470
    %v5580 = vunpack.c.l.bf16 %v5471
    %v5581 = vunpack.c.h.bf16 %v5471
    %v5582 = vunpack.c.l.bf16 %v5472
    %v5583 = vunpack.c.h.bf16 %v5472
    %v5584 = vunpack.c.l.bf16 %v5473
    %v5585 = vunpack.c.h.bf16 %v5473
    %v5586 = vunpack.c.l.bf16 %v5474
    %v5587 = vunpack.c.h.bf16 %v5474
    %v5588 = vunpack.c.l.bf16 %v5475
    %v5589 = vunpack.c.h.bf16 %v5475
    %v5590 = vunpack.c.l.bf16 %v5476
    %v5591 = vunpack.c.h.bf16 %v5476
    %v5592 = vunpack.c.l.bf16 %v5477
    %v5593 = vunpack.c.h.bf16 %v5477
    %v5594 = vunpack.c.l.bf16 %v5478
    %v5595 = vunpack.c.h.bf16 %v5478
    %v5596 = vunpack.c.l.bf16 %v5479
    %v5597 = vunpack.c.h.bf16 %v5479
    %v5598 = vunpack.c.l.bf16 %v5480
    %v5599 = vunpack.c.h.bf16 %v5480
    %v5600 = vunpack.c.l.bf16 %v5481
    %v5601 = vunpack.c.h.bf16 %v5481
    %v5602 = vunpack.c.l.bf16 %v5482
    %v5603 = vunpack.c.h.bf16 %v5482
    %v5604 = vunpack.c.l.bf16 %v5483
    %v5605 = vunpack.c.h.bf16 %v5483
    %v5606 = vunpack.c.l.bf16 %v5484
    %v5607 = vunpack.c.h.bf16 %v5484
    %v5608 = vunpack.c.l.bf16 %v5485
    %v5609 = vunpack.c.h.bf16 %v5485
    %v5610 = vunpack.c.l.bf16 %v5486
    %v5611 = vunpack.c.h.bf16 %v5486
    %v5612 = vunpack.c.l.bf16 %v5487
    %v5613 = vunpack.c.h.bf16 %v5487
    %v5614 = vunpack.c.l.bf16 %v5488
    %v5615 = vunpack.c.h.bf16 %v5488
    %v5616 = vunpack.c.l.bf16 %v5489
    %v5617 = vunpack.c.h.bf16 %v5489
    %vm5618 = vcmp.gt.f32.partialorder %v5490, 0.0
    %vm5619 = vcmp.gt.f32.partialorder %v5491, 0.0
    %vm5620 = vcmp.gt.f32.partialorder %v5492, 0.0
    %vm5621 = vcmp.gt.f32.partialorder %v5493, 0.0
    %vm5622 = vcmp.gt.f32.partialorder %v5494, 0.0
    %vm5623 = vcmp.gt.f32.partialorder %v5495, 0.0
    %vm5624 = vcmp.gt.f32.partialorder %v5496, 0.0
    %vm5625 = vcmp.gt.f32.partialorder %v5497, 0.0
    %vm5626 = vcmp.gt.f32.partialorder %v5498, 0.0
    %vm5627 = vcmp.gt.f32.partialorder %v5499, 0.0
    %vm5628 = vcmp.gt.f32.partialorder %v5500, 0.0
    %vm5629 = vcmp.gt.f32.partialorder %v5501, 0.0
    %vm5630 = vcmp.gt.f32.partialorder %v5502, 0.0
    %vm5631 = vcmp.gt.f32.partialorder %v5503, 0.0
    %vm5632 = vcmp.gt.f32.partialorder %v5504, 0.0
    %vm5633 = vcmp.gt.f32.partialorder %v5505, 0.0
    %vm5634 = vcmp.gt.f32.partialorder %v5506, 0.0
    %vm5635 = vcmp.gt.f32.partialorder %v5507, 0.0
    %vm5636 = vcmp.gt.f32.partialorder %v5508, 0.0
    %vm5637 = vcmp.gt.f32.partialorder %v5509, 0.0
    %vm5638 = vcmp.gt.f32.partialorder %v5510, 0.0
    %vm5639 = vcmp.gt.f32.partialorder %v5511, 0.0
    %vm5640 = vcmp.gt.f32.partialorder %v5512, 0.0
    %vm5641 = vcmp.gt.f32.partialorder %v5513, 0.0
    %vm5642 = vcmp.gt.f32.partialorder %v5514, 0.0
    %vm5643 = vcmp.gt.f32.partialorder %v5515, 0.0
    %vm5644 = vcmp.gt.f32.partialorder %v5516, 0.0
    %vm5645 = vcmp.gt.f32.partialorder %v5517, 0.0
    %vm5646 = vcmp.gt.f32.partialorder %v5518, 0.0
    %vm5647 = vcmp.gt.f32.partialorder %v5519, 0.0
    %vm5648 = vcmp.gt.f32.partialorder %v5520, 0.0
    %vm5649 = vcmp.gt.f32.partialorder %v5521, 0.0
    %vm5650 = vcmp.gt.f32.partialorder %v5522, 0.0
    %vm5651 = vcmp.gt.f32.partialorder %v5523, 0.0
    %vm5652 = vcmp.gt.f32.partialorder %v5524, 0.0
    %vm5653 = vcmp.gt.f32.partialorder %v5525, 0.0
    %vm5654 = vcmp.gt.f32.partialorder %v5526, 0.0
    %vm5655 = vcmp.gt.f32.partialorder %v5527, 0.0
    %vm5656 = vcmp.gt.f32.partialorder %v5528, 0.0
    %vm5657 = vcmp.gt.f32.partialorder %v5529, 0.0
    %vm5658 = vcmp.gt.f32.partialorder %v5530, 0.0
    %vm5659 = vcmp.gt.f32.partialorder %v5531, 0.0
    %vm5660 = vcmp.gt.f32.partialorder %v5532, 0.0
    %vm5661 = vcmp.gt.f32.partialorder %v5533, 0.0
    %vm5662 = vcmp.gt.f32.partialorder %v5534, 0.0
    %vm5663 = vcmp.gt.f32.partialorder %v5535, 0.0
    %vm5664 = vcmp.gt.f32.partialorder %v5536, 0.0
    %vm5665 = vcmp.gt.f32.partialorder %v5537, 0.0
    %vm5666 = vcmp.gt.f32.partialorder %v5538, 0.0
    %vm5667 = vcmp.gt.f32.partialorder %v5539, 0.0
    %vm5668 = vcmp.gt.f32.partialorder %v5540, 0.0
    %vm5669 = vcmp.gt.f32.partialorder %v5541, 0.0
    %vm5670 = vcmp.gt.f32.partialorder %v5542, 0.0
    %vm5671 = vcmp.gt.f32.partialorder %v5543, 0.0
    %vm5672 = vcmp.gt.f32.partialorder %v5544, 0.0
    %vm5673 = vcmp.gt.f32.partialorder %v5545, 0.0
    %vm5674 = vcmp.gt.f32.partialorder %v5546, 0.0
    %vm5675 = vcmp.gt.f32.partialorder %v5547, 0.0
    %vm5676 = vcmp.gt.f32.partialorder %v5548, 0.0
    %vm5677 = vcmp.gt.f32.partialorder %v5549, 0.0
    %vm5678 = vcmp.gt.f32.partialorder %v5550, 0.0
    %vm5679 = vcmp.gt.f32.partialorder %v5551, 0.0
    %vm5680 = vcmp.gt.f32.partialorder %v5552, 0.0
    %vm5681 = vcmp.gt.f32.partialorder %v5553, 0.0
    %vm5682 = vcmp.gt.f32.partialorder %v5554, 0.0
    %vm5683 = vcmp.gt.f32.partialorder %v5555, 0.0
    %vm5684 = vcmp.gt.f32.partialorder %v5556, 0.0
    %vm5685 = vcmp.gt.f32.partialorder %v5557, 0.0
    %vm5686 = vcmp.gt.f32.partialorder %v5558, 0.0
    %vm5687 = vcmp.gt.f32.partialorder %v5559, 0.0
    %vm5688 = vcmp.gt.f32.partialorder %v5560, 0.0
    %vm5689 = vcmp.gt.f32.partialorder %v5561, 0.0
    %vm5690 = vcmp.gt.f32.partialorder %v5562, 0.0
    %vm5691 = vcmp.gt.f32.partialorder %v5563, 0.0
    %vm5692 = vcmp.gt.f32.partialorder %v5564, 0.0
    %vm5693 = vcmp.gt.f32.partialorder %v5565, 0.0
    %vm5694 = vcmp.gt.f32.partialorder %v5566, 0.0
    %vm5695 = vcmp.gt.f32.partialorder %v5567, 0.0
    %vm5696 = vcmp.gt.f32.partialorder %v5568, 0.0
    %vm5697 = vcmp.gt.f32.partialorder %v5569, 0.0
    %vm5698 = vcmp.gt.f32.partialorder %v5570, 0.0
    %vm5699 = vcmp.gt.f32.partialorder %v5571, 0.0
    %vm5700 = vcmp.gt.f32.partialorder %v5572, 0.0
    %vm5701 = vcmp.gt.f32.partialorder %v5573, 0.0
    %vm5702 = vcmp.gt.f32.partialorder %v5574, 0.0
    %vm5703 = vcmp.gt.f32.partialorder %v5575, 0.0
    %vm5704 = vcmp.gt.f32.partialorder %v5576, 0.0
    %vm5705 = vcmp.gt.f32.partialorder %v5577, 0.0
    %vm5706 = vcmp.gt.f32.partialorder %v5578, 0.0
    %vm5707 = vcmp.gt.f32.partialorder %v5579, 0.0
    %vm5708 = vcmp.gt.f32.partialorder %v5580, 0.0
    %vm5709 = vcmp.gt.f32.partialorder %v5581, 0.0
    %vm5710 = vcmp.gt.f32.partialorder %v5582, 0.0
    %vm5711 = vcmp.gt.f32.partialorder %v5583, 0.0
    %vm5712 = vcmp.gt.f32.partialorder %v5584, 0.0
    %vm5713 = vcmp.gt.f32.partialorder %v5585, 0.0
    %vm5714 = vcmp.gt.f32.partialorder %v5586, 0.0
    %vm5715 = vcmp.gt.f32.partialorder %v5587, 0.0
    %vm5716 = vcmp.gt.f32.partialorder %v5588, 0.0
    %vm5717 = vcmp.gt.f32.partialorder %v5589, 0.0
    %vm5718 = vcmp.gt.f32.partialorder %v5590, 0.0
    %vm5719 = vcmp.gt.f32.partialorder %v5591, 0.0
    %vm5720 = vcmp.gt.f32.partialorder %v5592, 0.0
    %vm5721 = vcmp.gt.f32.partialorder %v5593, 0.0
    %vm5722 = vcmp.gt.f32.partialorder %v5594, 0.0
    %vm5723 = vcmp.gt.f32.partialorder %v5595, 0.0
    %vm5724 = vcmp.gt.f32.partialorder %v5596, 0.0
    %vm5725 = vcmp.gt.f32.partialorder %v5597, 0.0
    %vm5726 = vcmp.gt.f32.partialorder %v5598, 0.0
    %vm5727 = vcmp.gt.f32.partialorder %v5599, 0.0
    %vm5728 = vcmp.gt.f32.partialorder %v5600, 0.0
    %vm5729 = vcmp.gt.f32.partialorder %v5601, 0.0
    %vm5730 = vcmp.gt.f32.partialorder %v5602, 0.0
    %vm5731 = vcmp.gt.f32.partialorder %v5603, 0.0
    %vm5732 = vcmp.gt.f32.partialorder %v5604, 0.0
    %vm5733 = vcmp.gt.f32.partialorder %v5605, 0.0
    %vm5734 = vcmp.gt.f32.partialorder %v5606, 0.0
    %vm5735 = vcmp.gt.f32.partialorder %v5607, 0.0
    %vm5736 = vcmp.gt.f32.partialorder %v5608, 0.0
    %vm5737 = vcmp.gt.f32.partialorder %v5609, 0.0
    %vm5738 = vcmp.gt.f32.partialorder %v5610, 0.0
    %vm5739 = vcmp.gt.f32.partialorder %v5611, 0.0
    %vm5740 = vcmp.gt.f32.partialorder %v5612, 0.0
    %vm5741 = vcmp.gt.f32.partialorder %v5613, 0.0
    %vm5742 = vcmp.gt.f32.partialorder %v5614, 0.0
    %vm5743 = vcmp.gt.f32.partialorder %v5615, 0.0
    %vm5744 = vcmp.gt.f32.partialorder %v5616, 0.0
    %vm5745 = vcmp.gt.f32.partialorder %v5617, 0.0
    %v5746 = vmul.f32 %v5490, 0.20019531
    %v5747 = vmul.f32 %v5491, 0.20019531
    %v5748 = vmul.f32 %v5492, 0.20019531
    %v5749 = vmul.f32 %v5493, 0.20019531
    %v5750 = vmul.f32 %v5494, 0.20019531
    %v5751 = vmul.f32 %v5495, 0.20019531
    %v5752 = vmul.f32 %v5496, 0.20019531
    %v5753 = vmul.f32 %v5497, 0.20019531
    %v5754 = vmul.f32 %v5498, 0.20019531
    %v5755 = vmul.f32 %v5499, 0.20019531
    %v5756 = vmul.f32 %v5500, 0.20019531
    %v5757 = vmul.f32 %v5501, 0.20019531
    %v5758 = vmul.f32 %v5502, 0.20019531
    %v5759 = vmul.f32 %v5503, 0.20019531
    %v5760 = vmul.f32 %v5504, 0.20019531
    %v5761 = vmul.f32 %v5505, 0.20019531
    %v5762 = vmul.f32 %v5506, 0.20019531
    %v5763 = vmul.f32 %v5507, 0.20019531
    %v5764 = vmul.f32 %v5508, 0.20019531
    %v5765 = vmul.f32 %v5509, 0.20019531
    %v5766 = vmul.f32 %v5510, 0.20019531
    %v5767 = vmul.f32 %v5511, 0.20019531
    %v5768 = vmul.f32 %v5512, 0.20019531
    %v5769 = vmul.f32 %v5513, 0.20019531
    %v5770 = vmul.f32 %v5514, 0.20019531
    %v5771 = vmul.f32 %v5515, 0.20019531
    %v5772 = vmul.f32 %v5516, 0.20019531
    %v5773 = vmul.f32 %v5517, 0.20019531
    %v5774 = vmul.f32 %v5518, 0.20019531
    %v5775 = vmul.f32 %v5519, 0.20019531
    %v5776 = vmul.f32 %v5520, 0.20019531
    %v5777 = vmul.f32 %v5521, 0.20019531
    %v5778 = vmul.f32 %v5522, 0.20019531
    %v5779 = vmul.f32 %v5523, 0.20019531
    %v5780 = vmul.f32 %v5524, 0.20019531
    %v5781 = vmul.f32 %v5525, 0.20019531
    %v5782 = vmul.f32 %v5526, 0.20019531
    %v5783 = vmul.f32 %v5527, 0.20019531
    %v5784 = vmul.f32 %v5528, 0.20019531
    %v5785 = vmul.f32 %v5529, 0.20019531
    %v5786 = vmul.f32 %v5530, 0.20019531
    %v5787 = vmul.f32 %v5531, 0.20019531
    %v5788 = vmul.f32 %v5532, 0.20019531
    %v5789 = vmul.f32 %v5533, 0.20019531
    %v5790 = vmul.f32 %v5534, 0.20019531
    %v5791 = vmul.f32 %v5535, 0.20019531
    %v5792 = vmul.f32 %v5536, 0.20019531
    %v5793 = vmul.f32 %v5537, 0.20019531
    %v5794 = vmul.f32 %v5538, 0.20019531
    %v5795 = vmul.f32 %v5539, 0.20019531
    %v5796 = vmul.f32 %v5540, 0.20019531
    %v5797 = vmul.f32 %v5541, 0.20019531
    %v5798 = vmul.f32 %v5542, 0.20019531
    %v5799 = vmul.f32 %v5543, 0.20019531
    %v5800 = vmul.f32 %v5544, 0.20019531
    %v5801 = vmul.f32 %v5545, 0.20019531
    %v5802 = vmul.f32 %v5546, 0.20019531
    %v5803 = vmul.f32 %v5547, 0.20019531
    %v5804 = vmul.f32 %v5548, 0.20019531
    %v5805 = vmul.f32 %v5549, 0.20019531
    %v5806 = vmul.f32 %v5550, 0.20019531
    %v5807 = vmul.f32 %v5551, 0.20019531
    %v5808 = vmul.f32 %v5552, 0.20019531
    %v5809 = vmul.f32 %v5553, 0.20019531
    %v5810 = vmul.f32 %v5554, 0.20019531
    %v5811 = vmul.f32 %v5555, 0.20019531
    %v5812 = vmul.f32 %v5556, 0.20019531
    %v5813 = vmul.f32 %v5557, 0.20019531
    %v5814 = vmul.f32 %v5558, 0.20019531
    %v5815 = vmul.f32 %v5559, 0.20019531
    %v5816 = vmul.f32 %v5560, 0.20019531
    %v5817 = vmul.f32 %v5561, 0.20019531
    %v5818 = vmul.f32 %v5562, 0.20019531
    %v5819 = vmul.f32 %v5563, 0.20019531
    %v5820 = vmul.f32 %v5564, 0.20019531
    %v5821 = vmul.f32 %v5565, 0.20019531
    %v5822 = vmul.f32 %v5566, 0.20019531
    %v5823 = vmul.f32 %v5567, 0.20019531
    %v5824 = vmul.f32 %v5568, 0.20019531
    %v5825 = vmul.f32 %v5569, 0.20019531
    %v5826 = vmul.f32 %v5570, 0.20019531
    %v5827 = vmul.f32 %v5571, 0.20019531
    %v5828 = vmul.f32 %v5572, 0.20019531
    %v5829 = vmul.f32 %v5573, 0.20019531
    %v5830 = vmul.f32 %v5574, 0.20019531
    %v5831 = vmul.f32 %v5575, 0.20019531
    %v5832 = vmul.f32 %v5576, 0.20019531
    %v5833 = vmul.f32 %v5577, 0.20019531
    %v5834 = vmul.f32 %v5578, 0.20019531
    %v5835 = vmul.f32 %v5579, 0.20019531
    %v5836 = vmul.f32 %v5580, 0.20019531
    %v5837 = vmul.f32 %v5581, 0.20019531
    %v5838 = vmul.f32 %v5582, 0.20019531
    %v5839 = vmul.f32 %v5583, 0.20019531
    %v5840 = vmul.f32 %v5584, 0.20019531
    %v5841 = vmul.f32 %v5585, 0.20019531
    %v5842 = vmul.f32 %v5586, 0.20019531
    %v5843 = vmul.f32 %v5587, 0.20019531
    %v5844 = vmul.f32 %v5588, 0.20019531
    %v5845 = vmul.f32 %v5589, 0.20019531
    %v5846 = vmul.f32 %v5590, 0.20019531
    %v5847 = vmul.f32 %v5591, 0.20019531
    %v5848 = vmul.f32 %v5592, 0.20019531
    %v5849 = vmul.f32 %v5593, 0.20019531
    %v5850 = vmul.f32 %v5594, 0.20019531
    %v5851 = vmul.f32 %v5595, 0.20019531
    %v5852 = vmul.f32 %v5596, 0.20019531
    %v5853 = vmul.f32 %v5597, 0.20019531
    %v5854 = vmul.f32 %v5598, 0.20019531
    %v5855 = vmul.f32 %v5599, 0.20019531
    %v5856 = vmul.f32 %v5600, 0.20019531
    %v5857 = vmul.f32 %v5601, 0.20019531
    %v5858 = vmul.f32 %v5602, 0.20019531
    %v5859 = vmul.f32 %v5603, 0.20019531
    %v5860 = vmul.f32 %v5604, 0.20019531
    %v5861 = vmul.f32 %v5605, 0.20019531
    %v5862 = vmul.f32 %v5606, 0.20019531
    %v5863 = vmul.f32 %v5607, 0.20019531
    %v5864 = vmul.f32 %v5608, 0.20019531
    %v5865 = vmul.f32 %v5609, 0.20019531
    %v5866 = vmul.f32 %v5610, 0.20019531
    %v5867 = vmul.f32 %v5611, 0.20019531
    %v5868 = vmul.f32 %v5612, 0.20019531
    %v5869 = vmul.f32 %v5613, 0.20019531
    %v5870 = vmul.f32 %v5614, 0.20019531
    %v5871 = vmul.f32 %v5615, 0.20019531
    %v5872 = vmul.f32 %v5616, 0.20019531
    %v5873 = vmul.f32 %v5617, 0.20019531
    %v5874 = vpack.c.bf16 %v5747, %v5746
    %v5875 = vpack.c.bf16 %v5749, %v5748
    %v5876 = vpack.c.bf16 %v5751, %v5750
    %v5877 = vpack.c.bf16 %v5753, %v5752
    %v5878 = vpack.c.bf16 %v5755, %v5754
    %v5879 = vpack.c.bf16 %v5757, %v5756
    %v5880 = vpack.c.bf16 %v5759, %v5758
    %v5881 = vpack.c.bf16 %v5761, %v5760
    %v5882 = vpack.c.bf16 %v5763, %v5762
    %v5883 = vpack.c.bf16 %v5765, %v5764
    %v5884 = vpack.c.bf16 %v5767, %v5766
    %v5885 = vpack.c.bf16 %v5769, %v5768
    %v5886 = vpack.c.bf16 %v5771, %v5770
    %v5887 = vpack.c.bf16 %v5773, %v5772
    %v5888 = vpack.c.bf16 %v5775, %v5774
    %v5889 = vpack.c.bf16 %v5777, %v5776
    %v5890 = vpack.c.bf16 %v5779, %v5778
    %v5891 = vpack.c.bf16 %v5781, %v5780
    %v5892 = vpack.c.bf16 %v5783, %v5782
    %v5893 = vpack.c.bf16 %v5785, %v5784
    %v5894 = vpack.c.bf16 %v5787, %v5786
    %v5895 = vpack.c.bf16 %v5789, %v5788
    %v5896 = vpack.c.bf16 %v5791, %v5790
    %v5897 = vpack.c.bf16 %v5793, %v5792
    %v5898 = vpack.c.bf16 %v5795, %v5794
    %v5899 = vpack.c.bf16 %v5797, %v5796
    %v5900 = vpack.c.bf16 %v5799, %v5798
    %v5901 = vpack.c.bf16 %v5801, %v5800
    %v5902 = vpack.c.bf16 %v5803, %v5802
    %v5903 = vpack.c.bf16 %v5805, %v5804
    %v5904 = vpack.c.bf16 %v5807, %v5806
    %v5905 = vpack.c.bf16 %v5809, %v5808
    %v5906 = vpack.c.bf16 %v5811, %v5810
    %v5907 = vpack.c.bf16 %v5813, %v5812
    %v5908 = vpack.c.bf16 %v5815, %v5814
    %v5909 = vpack.c.bf16 %v5817, %v5816
    %v5910 = vpack.c.bf16 %v5819, %v5818
    %v5911 = vpack.c.bf16 %v5821, %v5820
    %v5912 = vpack.c.bf16 %v5823, %v5822
    %v5913 = vpack.c.bf16 %v5825, %v5824
    %v5914 = vpack.c.bf16 %v5827, %v5826
    %v5915 = vpack.c.bf16 %v5829, %v5828
    %v5916 = vpack.c.bf16 %v5831, %v5830
    %v5917 = vpack.c.bf16 %v5833, %v5832
    %v5918 = vpack.c.bf16 %v5835, %v5834
    %v5919 = vpack.c.bf16 %v5837, %v5836
    %v5920 = vpack.c.bf16 %v5839, %v5838
    %v5921 = vpack.c.bf16 %v5841, %v5840
    %v5922 = vpack.c.bf16 %v5843, %v5842
    %v5923 = vpack.c.bf16 %v5845, %v5844
    %v5924 = vpack.c.bf16 %v5847, %v5846
    %v5925 = vpack.c.bf16 %v5849, %v5848
    %v5926 = vpack.c.bf16 %v5851, %v5850
    %v5927 = vpack.c.bf16 %v5853, %v5852
    %v5928 = vpack.c.bf16 %v5855, %v5854
    %v5929 = vpack.c.bf16 %v5857, %v5856
    %v5930 = vpack.c.bf16 %v5859, %v5858
    %v5931 = vpack.c.bf16 %v5861, %v5860
    %v5932 = vpack.c.bf16 %v5863, %v5862
    %v5933 = vpack.c.bf16 %v5865, %v5864
    %v5934 = vpack.c.bf16 %v5867, %v5866
    %v5935 = vpack.c.bf16 %v5869, %v5868
    %v5936 = vpack.c.bf16 %v5871, %v5870
    %v5937 = vpack.c.bf16 %v5873, %v5872
    %vm5938 = vmpackc.low %vm5619, %vm5618
    %vm5939 = vmpackc.low %vm5621, %vm5620
    %vm5940 = vmpackc.low %vm5623, %vm5622
    %vm5941 = vmpackc.low %vm5625, %vm5624
    %vm5942 = vmpackc.low %vm5627, %vm5626
    %vm5943 = vmpackc.low %vm5629, %vm5628
    %vm5944 = vmpackc.low %vm5631, %vm5630
    %vm5945 = vmpackc.low %vm5633, %vm5632
    %vm5946 = vmpackc.low %vm5635, %vm5634
    %vm5947 = vmpackc.low %vm5637, %vm5636
    %vm5948 = vmpackc.low %vm5639, %vm5638
    %vm5949 = vmpackc.low %vm5641, %vm5640
    %vm5950 = vmpackc.low %vm5643, %vm5642
    %vm5951 = vmpackc.low %vm5645, %vm5644
    %vm5952 = vmpackc.low %vm5647, %vm5646
    %vm5953 = vmpackc.low %vm5649, %vm5648
    %vm5954 = vmpackc.low %vm5651, %vm5650
    %vm5955 = vmpackc.low %vm5653, %vm5652
    %vm5956 = vmpackc.low %vm5655, %vm5654
    %vm5957 = vmpackc.low %vm5657, %vm5656
    %vm5958 = vmpackc.low %vm5659, %vm5658
    %vm5959 = vmpackc.low %vm5661, %vm5660
    %vm5960 = vmpackc.low %vm5663, %vm5662
    %vm5961 = vmpackc.low %vm5665, %vm5664
    %vm5962 = vmpackc.low %vm5667, %vm5666
    %vm5963 = vmpackc.low %vm5669, %vm5668
    %vm5964 = vmpackc.low %vm5671, %vm5670
    %vm5965 = vmpackc.low %vm5673, %vm5672
    %vm5966 = vmpackc.low %vm5675, %vm5674
    %vm5967 = vmpackc.low %vm5677, %vm5676
    %vm5968 = vmpackc.low %vm5679, %vm5678
    %vm5969 = vmpackc.low %vm5681, %vm5680
    %vm5970 = vmpackc.low %vm5683, %vm5682
    %vm5971 = vmpackc.low %vm5685, %vm5684
    %vm5972 = vmpackc.low %vm5687, %vm5686
    %vm5973 = vmpackc.low %vm5689, %vm5688
    %vm5974 = vmpackc.low %vm5691, %vm5690
    %vm5975 = vmpackc.low %vm5693, %vm5692
    %vm5976 = vmpackc.low %vm5695, %vm5694
    %vm5977 = vmpackc.low %vm5697, %vm5696
    %vm5978 = vmpackc.low %vm5699, %vm5698
    %vm5979 = vmpackc.low %vm5701, %vm5700
    %vm5980 = vmpackc.low %vm5703, %vm5702
    %vm5981 = vmpackc.low %vm5705, %vm5704
    %vm5982 = vmpackc.low %vm5707, %vm5706
    %vm5983 = vmpackc.low %vm5709, %vm5708
    %vm5984 = vmpackc.low %vm5711, %vm5710
    %vm5985 = vmpackc.low %vm5713, %vm5712
    %vm5986 = vmpackc.low %vm5715, %vm5714
    %vm5987 = vmpackc.low %vm5717, %vm5716
    %vm5988 = vmpackc.low %vm5719, %vm5718
    %vm5989 = vmpackc.low %vm5721, %vm5720
    %vm5990 = vmpackc.low %vm5723, %vm5722
    %vm5991 = vmpackc.low %vm5725, %vm5724
    %vm5992 = vmpackc.low %vm5727, %vm5726
    %vm5993 = vmpackc.low %vm5729, %vm5728
    %vm5994 = vmpackc.low %vm5731, %vm5730
    %vm5995 = vmpackc.low %vm5733, %vm5732
    %vm5996 = vmpackc.low %vm5735, %vm5734
    %vm5997 = vmpackc.low %vm5737, %vm5736
    %vm5998 = vmpackc.low %vm5739, %vm5738
    %vm5999 = vmpackc.low %vm5741, %vm5740
    %vm6000 = vmpackc.low %vm5743, %vm5742
    %vm6001 = vmpackc.low %vm5745, %vm5744
    %v6002 = vsel %vm5938, %v5426, %v5874
    %v6003 = vsel %vm5939, %v5427, %v5875
    %v6004 = vsel %vm5940, %v5428, %v5876
    %v6005 = vsel %vm5941, %v5429, %v5877
    %v6006 = vsel %vm5942, %v5430, %v5878
    %v6007 = vsel %vm5943, %v5431, %v5879
    %v6008 = vsel %vm5944, %v5432, %v5880
    %v6009 = vsel %vm5945, %v5433, %v5881
    %v6010 = vsel %vm5946, %v5434, %v5882
    %v6011 = vsel %vm5947, %v5435, %v5883
    %v6012 = vsel %vm5948, %v5436, %v5884
    %v6013 = vsel %vm5949, %v5437, %v5885
    %v6014 = vsel %vm5950, %v5438, %v5886
    %v6015 = vsel %vm5951, %v5439, %v5887
    %v6016 = vsel %vm5952, %v5440, %v5888
    %v6017 = vsel %vm5953, %v5441, %v5889
    %v6018 = vsel %vm5954, %v5442, %v5890
    %v6019 = vsel %vm5955, %v5443, %v5891
    %v6020 = vsel %vm5956, %v5444, %v5892
    %v6021 = vsel %vm5957, %v5445, %v5893
    %v6022 = vsel %vm5958, %v5446, %v5894
    %v6023 = vsel %vm5959, %v5447, %v5895
    %v6024 = vsel %vm5960, %v5448, %v5896
    %v6025 = vsel %vm5961, %v5449, %v5897
    %v6026 = vsel %vm5962, %v5450, %v5898
    %v6027 = vsel %vm5963, %v5451, %v5899
    %v6028 = vsel %vm5964, %v5452, %v5900
    %v6029 = vsel %vm5965, %v5453, %v5901
    %v6030 = vsel %vm5966, %v5454, %v5902
    %v6031 = vsel %vm5967, %v5455, %v5903
    %v6032 = vsel %vm5968, %v5456, %v5904
    %v6033 = vsel %vm5969, %v5457, %v5905
    %v6034 = vsel %vm5970, %v5458, %v5906
    %v6035 = vsel %vm5971, %v5459, %v5907
    %v6036 = vsel %vm5972, %v5460, %v5908
    %v6037 = vsel %vm5973, %v5461, %v5909
    %v6038 = vsel %vm5974, %v5462, %v5910
    %v6039 = vsel %vm5975, %v5463, %v5911
    %v6040 = vsel %vm5976, %v5464, %v5912
    %v6041 = vsel %vm5977, %v5465, %v5913
    %v6042 = vsel %vm5978, %v5466, %v5914
    %v6043 = vsel %vm5979, %v5467, %v5915
    %v6044 = vsel %vm5980, %v5468, %v5916
    %v6045 = vsel %vm5981, %v5469, %v5917
    %v6046 = vsel %vm5982, %v5470, %v5918
    %v6047 = vsel %vm5983, %v5471, %v5919
    %v6048 = vsel %vm5984, %v5472, %v5920
    %v6049 = vsel %vm5985, %v5473, %v5921
    %v6050 = vsel %vm5986, %v5474, %v5922
    %v6051 = vsel %vm5987, %v5475, %v5923
    %v6052 = vsel %vm5988, %v5476, %v5924
    %v6053 = vsel %vm5989, %v5477, %v5925
    %v6054 = vsel %vm5990, %v5478, %v5926
    %v6055 = vsel %vm5991, %v5479, %v5927
    %v6056 = vsel %vm5992, %v5480, %v5928
    %v6057 = vsel %vm5993, %v5481, %v5929
    %v6058 = vsel %vm5994, %v5482, %v5930
    %v6059 = vsel %vm5995, %v5483, %v5931
    %v6060 = vsel %vm5996, %v5484, %v5932
    %v6061 = vsel %vm5997, %v5485, %v5933
    %v6062 = vsel %vm5998, %v5486, %v5934
    %v6063 = vsel %vm5999, %v5487, %v5935
    %v6064 = vsel %vm6000, %v5488, %v5936
    %v6065 = vsel %vm6001, %v5489, %v5937
    %v6066 = vld [vmem:[%s3] sm:$0xff]
    %v6067 = vld [vmem:[%s3 + $0x8] sm:$0xff]
    %v6068 = vld [vmem:[%s3 + $0x10] sm:$0xff]
    %v6069 = vld [vmem:[%s3 + $0x18] sm:$0xff]
    %v6070 = vld [vmem:[%s3 + $0x20] sm:$0xff]
    %v6071 = vld [vmem:[%s3 + $0x28] sm:$0xff]
    %v6072 = vld [vmem:[%s3 + $0x30] sm:$0xff]
    %v6073 = vld [vmem:[%s3 + $0x38] sm:$0xff]
    %v6074 = vld [vmem:[%s3 + $0x40] sm:$0xff]
    %v6075 = vld [vmem:[%s3 + $0x48] sm:$0xff]
    %v6076 = vld [vmem:[%s3 + $0x50] sm:$0xff]
    %v6077 = vld [vmem:[%s3 + $0x58] sm:$0xff]
    %v6078 = vld [vmem:[%s3 + $0x60] sm:$0xff]
    %v6079 = vld [vmem:[%s3 + $0x68] sm:$0xff]
    %v6080 = vld [vmem:[%s3 + $0x70] sm:$0xff]
    %v6081 = vld [vmem:[%s3 + $0x78] sm:$0xff]
    %v6082 = vld [vmem:[%s3 + $0x80] sm:$0xff]
    %v6083 = vld [vmem:[%s3 + $0x88] sm:$0xff]
    %v6084 = vld [vmem:[%s3 + $0x90] sm:$0xff]
    %v6085 = vld [vmem:[%s3 + $0x98] sm:$0xff]
    %v6086 = vld [vmem:[%s3 + $0xa0] sm:$0xff]
    %v6087 = vld [vmem:[%s3 + $0xa8] sm:$0xff]
    %v6088 = vld [vmem:[%s3 + $0xb0] sm:$0xff]
    %v6089 = vld [vmem:[%s3 + $0xb8] sm:$0xff]
    %v6090 = vld [vmem:[%s3 + $0xc0] sm:$0xff]
    %v6091 = vld [vmem:[%s3 + $0xc8] sm:$0xff]
    %v6092 = vld [vmem:[%s3 + $0xd0] sm:$0xff]
    %v6093 = vld [vmem:[%s3 + $0xd8] sm:$0xff]
    %v6094 = vld [vmem:[%s3 + $0xe0] sm:$0xff]
    %v6095 = vld [vmem:[%s3 + $0xe8] sm:$0xff]
    %v6096 = vld [vmem:[%s3 + $0xf0] sm:$0xff]
    %v6097 = vld [vmem:[%s3 + $0xf8] sm:$0xff]
    %v6098 = vld [vmem:[%s3 + $0x100] sm:$0xff]
    %v6099 = vld [vmem:[%s3 + $0x108] sm:$0xff]
    %v6100 = vld [vmem:[%s3 + $0x110] sm:$0xff]
    %v6101 = vld [vmem:[%s3 + $0x118] sm:$0xff]
    %v6102 = vld [vmem:[%s3 + $0x120] sm:$0xff]
    %v6103 = vld [vmem:[%s3 + $0x128] sm:$0xff]
    %v6104 = vld [vmem:[%s3 + $0x130] sm:$0xff]
    %v6105 = vld [vmem:[%s3 + $0x138] sm:$0xff]
    %v6106 = vld [vmem:[%s3 + $0x140] sm:$0xff]
    %v6107 = vld [vmem:[%s3 + $0x148] sm:$0xff]
    %v6108 = vld [vmem:[%s3 + $0x150] sm:$0xff]
    %v6109 = vld [vmem:[%s3 + $0x158] sm:$0xff]
    %v6110 = vld [vmem:[%s3 + $0x160] sm:$0xff]
    %v6111 = vld [vmem:[%s3 + $0x168] sm:$0xff]
    %v6112 = vld [vmem:[%s3 + $0x170] sm:$0xff]
    %v6113 = vld [vmem:[%s3 + $0x178] sm:$0xff]
    %v6114 = vld [vmem:[%s3 + $0x180] sm:$0xff]
    %v6115 = vld [vmem:[%s3 + $0x188] sm:$0xff]
    %v6116 = vld [vmem:[%s3 + $0x190] sm:$0xff]
    %v6117 = vld [vmem:[%s3 + $0x198] sm:$0xff]
    %v6118 = vld [vmem:[%s3 + $0x1a0] sm:$0xff]
    %v6119 = vld [vmem:[%s3 + $0x1a8] sm:$0xff]
    %v6120 = vld [vmem:[%s3 + $0x1b0] sm:$0xff]
    %v6121 = vld [vmem:[%s3 + $0x1b8] sm:$0xff]
    %v6122 = vld [vmem:[%s3 + $0x1c0] sm:$0xff]
    %v6123 = vld [vmem:[%s3 + $0x1c8] sm:$0xff]
    %v6124 = vld [vmem:[%s3 + $0x1d0] sm:$0xff]
    %v6125 = vld [vmem:[%s3 + $0x1d8] sm:$0xff]
    %v6126 = vld [vmem:[%s3 + $0x1e0] sm:$0xff]
    %v6127 = vld [vmem:[%s3 + $0x1e8] sm:$0xff]
    %v6128 = vld [vmem:[%s3 + $0x1f0] sm:$0xff]
    %v6129 = vld [vmem:[%s3 + $0x1f8] sm:$0xff]
    %v6194 = vunpack.c.l.b16 %v6002
    %v6195 = vunpack.c.h.b16 %v6002
    %v6196 = vunpack.c.l.b16 %v6003
    %v6197 = vunpack.c.h.b16 %v6003
    %v6198 = vunpack.c.l.b16 %v6004
    %v6199 = vunpack.c.h.b16 %v6004
    %v6200 = vunpack.c.l.b16 %v6005
    %v6201 = vunpack.c.h.b16 %v6005
    %v6202 = vunpack.c.l.b16 %v6006
    %v6203 = vunpack.c.h.b16 %v6006
    %v6204 = vunpack.c.l.b16 %v6007
    %v6205 = vunpack.c.h.b16 %v6007
    %v6206 = vunpack.c.l.b16 %v6008
    %v6207 = vunpack.c.h.b16 %v6008
    %v6208 = vunpack.c.l.b16 %v6009
    %v6209 = vunpack.c.h.b16 %v6009
    %v6210 = vunpack.c.l.b16 %v6010
    %v6211 = vunpack.c.h.b16 %v6010
    %v6212 = vunpack.c.l.b16 %v6011
    %v6213 = vunpack.c.h.b16 %v6011
    %v6214 = vunpack.c.l.b16 %v6012
    %v6215 = vunpack.c.h.b16 %v6012
    %v6216 = vunpack.c.l.b16 %v6013
    %v6217 = vunpack.c.h.b16 %v6013
    %v6218 = vunpack.c.l.b16 %v6014
    %v6219 = vunpack.c.h.b16 %v6014
    %v6220 = vunpack.c.l.b16 %v6015
    %v6221 = vunpack.c.h.b16 %v6015
    %v6222 = vunpack.c.l.b16 %v6016
    %v6223 = vunpack.c.h.b16 %v6016
    %v6224 = vunpack.c.l.b16 %v6017
    %v6225 = vunpack.c.h.b16 %v6017
    %v6226 = vunpack.c.l.b16 %v6018
    %v6227 = vunpack.c.h.b16 %v6018
    %v6228 = vunpack.c.l.b16 %v6019
    %v6229 = vunpack.c.h.b16 %v6019
    %v6230 = vunpack.c.l.b16 %v6020
    %v6231 = vunpack.c.h.b16 %v6020
    %v6232 = vunpack.c.l.b16 %v6021
    %v6233 = vunpack.c.h.b16 %v6021
    %v6234 = vunpack.c.l.b16 %v6022
    %v6235 = vunpack.c.h.b16 %v6022
    %v6236 = vunpack.c.l.b16 %v6023
    %v6237 = vunpack.c.h.b16 %v6023
    %v6238 = vunpack.c.l.b16 %v6024
    %v6239 = vunpack.c.h.b16 %v6024
    %v6240 = vunpack.c.l.b16 %v6025
    %v6241 = vunpack.c.h.b16 %v6025
    %v6242 = vunpack.c.l.b16 %v6026
    %v6243 = vunpack.c.h.b16 %v6026
    %v6244 = vunpack.c.l.b16 %v6027
    %v6245 = vunpack.c.h.b16 %v6027
    %v6246 = vunpack.c.l.b16 %v6028
    %v6247 = vunpack.c.h.b16 %v6028
    %v6248 = vunpack.c.l.b16 %v6029
    %v6249 = vunpack.c.h.b16 %v6029
    %v6250 = vunpack.c.l.b16 %v6030
    %v6251 = vunpack.c.h.b16 %v6030
    %v6252 = vunpack.c.l.b16 %v6031
    %v6253 = vunpack.c.h.b16 %v6031
    %v6254 = vunpack.c.l.b16 %v6032
    %v6255 = vunpack.c.h.b16 %v6032
    %v6256 = vunpack.c.l.b16 %v6033
    %v6257 = vunpack.c.h.b16 %v6033
    %v6258 = vunpack.c.l.b16 %v6034
    %v6259 = vunpack.c.h.b16 %v6034
    %v6260 = vunpack.c.l.b16 %v6035
    %v6261 = vunpack.c.h.b16 %v6035
    %v6262 = vunpack.c.l.b16 %v6036
    %v6263 = vunpack.c.h.b16 %v6036
    %v6264 = vunpack.c.l.b16 %v6037
    %v6265 = vunpack.c.h.b16 %v6037
    %v6266 = vunpack.c.l.b16 %v6038
    %v6267 = vunpack.c.h.b16 %v6038
    %v6268 = vunpack.c.l.b16 %v6039
    %v6269 = vunpack.c.h.b16 %v6039
    %v6270 = vunpack.c.l.b16 %v6040
    %v6271 = vunpack.c.h.b16 %v6040
    %v6272 = vunpack.c.l.b16 %v6041
    %v6273 = vunpack.c.h.b16 %v6041
    %v6274 = vunpack.c.l.b16 %v6042
    %v6275 = vunpack.c.h.b16 %v6042
    %v6276 = vunpack.c.l.b16 %v6043
    %v6277 = vunpack.c.h.b16 %v6043
    %v6278 = vunpack.c.l.b16 %v6044
    %v6279 = vunpack.c.h.b16 %v6044
    %v6280 = vunpack.c.l.b16 %v6045
    %v6281 = vunpack.c.h.b16 %v6045
    %v6282 = vunpack.c.l.b16 %v6046
    %v6283 = vunpack.c.h.b16 %v6046
    %v6284 = vunpack.c.l.b16 %v6047
    %v6285 = vunpack.c.h.b16 %v6047
    %v6286 = vunpack.c.l.b16 %v6048
    %v6287 = vunpack.c.h.b16 %v6048
    %v6288 = vunpack.c.l.b16 %v6049
    %v6289 = vunpack.c.h.b16 %v6049
    %v6290 = vunpack.c.l.b16 %v6050
    %v6291 = vunpack.c.h.b16 %v6050
    %v6292 = vunpack.c.l.b16 %v6051
    %v6293 = vunpack.c.h.b16 %v6051
    %v6294 = vunpack.c.l.b16 %v6052
    %v6295 = vunpack.c.h.b16 %v6052
    %v6296 = vunpack.c.l.b16 %v6053
    %v6297 = vunpack.c.h.b16 %v6053
    %v6298 = vunpack.c.l.b16 %v6054
    %v6299 = vunpack.c.h.b16 %v6054
    %v6300 = vunpack.c.l.b16 %v6055
    %v6301 = vunpack.c.h.b16 %v6055
    %v6302 = vunpack.c.l.b16 %v6056
    %v6303 = vunpack.c.h.b16 %v6056
    %v6304 = vunpack.c.l.b16 %v6057
    %v6305 = vunpack.c.h.b16 %v6057
    %v6306 = vunpack.c.l.b16 %v6058
    %v6307 = vunpack.c.h.b16 %v6058
    %v6308 = vunpack.c.l.b16 %v6059
    %v6309 = vunpack.c.h.b16 %v6059
    %v6310 = vunpack.c.l.b16 %v6060
    %v6311 = vunpack.c.h.b16 %v6060
    %v6312 = vunpack.c.l.b16 %v6061
    %v6313 = vunpack.c.h.b16 %v6061
    %v6314 = vunpack.c.l.b16 %v6062
    %v6315 = vunpack.c.h.b16 %v6062
    %v6316 = vunpack.c.l.b16 %v6063
    %v6317 = vunpack.c.h.b16 %v6063
    %v6318 = vunpack.c.l.b16 %v6064
    %v6319 = vunpack.c.h.b16 %v6064
    %v6320 = vunpack.c.l.b16 %v6065
    %v6321 = vunpack.c.h.b16 %v6065
    %v6322 = vpack.c.b16 %v6198, %v6194
    %v6323 = vpack.c.b16 %v6199, %v6195
    %v6324 = vpack.c.b16 %v6200, %v6196
    %v6325 = vpack.c.b16 %v6201, %v6197
    %v6326 = vpack.c.b16 %v6206, %v6202
    %v6327 = vpack.c.b16 %v6207, %v6203
    %v6328 = vpack.c.b16 %v6208, %v6204
    %v6329 = vpack.c.b16 %v6209, %v6205
    %v6330 = vpack.c.b16 %v6214, %v6210
    %v6331 = vpack.c.b16 %v6215, %v6211
    %v6332 = vpack.c.b16 %v6216, %v6212
    %v6333 = vpack.c.b16 %v6217, %v6213
    %v6334 = vpack.c.b16 %v6222, %v6218
    %v6335 = vpack.c.b16 %v6223, %v6219
    %v6336 = vpack.c.b16 %v6224, %v6220
    %v6337 = vpack.c.b16 %v6225, %v6221
    %v6338 = vpack.c.b16 %v6230, %v6226
    %v6339 = vpack.c.b16 %v6231, %v6227
    %v6340 = vpack.c.b16 %v6232, %v6228
    %v6341 = vpack.c.b16 %v6233, %v6229
    %v6342 = vpack.c.b16 %v6238, %v6234
    %v6343 = vpack.c.b16 %v6239, %v6235
    %v6344 = vpack.c.b16 %v6240, %v6236
    %v6345 = vpack.c.b16 %v6241, %v6237
    %v6346 = vpack.c.b16 %v6246, %v6242
    %v6347 = vpack.c.b16 %v6247, %v6243
    %v6348 = vpack.c.b16 %v6248, %v6244
    %v6349 = vpack.c.b16 %v6249, %v6245
    %v6350 = vpack.c.b16 %v6254, %v6250
    %v6351 = vpack.c.b16 %v6255, %v6251
    %v6352 = vpack.c.b16 %v6256, %v6252
    %v6353 = vpack.c.b16 %v6257, %v6253
    %v6354 = vpack.c.b16 %v6262, %v6258
    %v6355 = vpack.c.b16 %v6263, %v6259
    %v6356 = vpack.c.b16 %v6264, %v6260
    %v6357 = vpack.c.b16 %v6265, %v6261
    %v6358 = vpack.c.b16 %v6270, %v6266
    %v6359 = vpack.c.b16 %v6271, %v6267
    %v6360 = vpack.c.b16 %v6272, %v6268
    %v6361 = vpack.c.b16 %v6273, %v6269
    %v6362 = vpack.c.b16 %v6278, %v6274
    %v6363 = vpack.c.b16 %v6279, %v6275
    %v6364 = vpack.c.b16 %v6280, %v6276
    %v6365 = vpack.c.b16 %v6281, %v6277
    %v6366 = vpack.c.b16 %v6286, %v6282
    %v6367 = vpack.c.b16 %v6287, %v6283
    %v6368 = vpack.c.b16 %v6288, %v6284
    %v6369 = vpack.c.b16 %v6289, %v6285
    %v6370 = vpack.c.b16 %v6294, %v6290
    %v6371 = vpack.c.b16 %v6295, %v6291
    %v6372 = vpack.c.b16 %v6296, %v6292
    %v6373 = vpack.c.b16 %v6297, %v6293
    %v6374 = vpack.c.b16 %v6302, %v6298
    %v6375 = vpack.c.b16 %v6303, %v6299
    %v6376 = vpack.c.b16 %v6304, %v6300
    %v6377 = vpack.c.b16 %v6305, %v6301
    %v6378 = vpack.c.b16 %v6310, %v6306
    %v6379 = vpack.c.b16 %v6311, %v6307
    %v6380 = vpack.c.b16 %v6312, %v6308
    %v6381 = vpack.c.b16 %v6313, %v6309
    %v6382 = vpack.c.b16 %v6318, %v6314
    %v6383 = vpack.c.b16 %v6319, %v6315
    %v6384 = vpack.c.b16 %v6320, %v6316
    %v6385 = vpack.c.b16 %v6321, %v6317
    %v6514 = vunpack.c.l.b16 %v6066
    %v6515 = vunpack.c.h.b16 %v6066
    %v6516 = vunpack.c.l.b16 %v6067
    %v6517 = vunpack.c.h.b16 %v6067
    %v6518 = vunpack.c.l.b16 %v6068
    %v6519 = vunpack.c.h.b16 %v6068
    %v6520 = vunpack.c.l.b16 %v6069
    %v6521 = vunpack.c.h.b16 %v6069
    %v6522 = vunpack.c.l.b16 %v6070
    %v6523 = vunpack.c.h.b16 %v6070
    %v6524 = vunpack.c.l.b16 %v6071
    %v6525 = vunpack.c.h.b16 %v6071
    %v6526 = vunpack.c.l.b16 %v6072
    %v6527 = vunpack.c.h.b16 %v6072
    %v6528 = vunpack.c.l.b16 %v6073
    %v6529 = vunpack.c.h.b16 %v6073
    %v6530 = vunpack.c.l.b16 %v6074
    %v6531 = vunpack.c.h.b16 %v6074
    %v6532 = vunpack.c.l.b16 %v6075
    %v6533 = vunpack.c.h.b16 %v6075
    %v6534 = vunpack.c.l.b16 %v6076
    %v6535 = vunpack.c.h.b16 %v6076
    %v6536 = vunpack.c.l.b16 %v6077
    %v6537 = vunpack.c.h.b16 %v6077
    %v6538 = vunpack.c.l.b16 %v6078
    %v6539 = vunpack.c.h.b16 %v6078
    %v6540 = vunpack.c.l.b16 %v6079
    %v6541 = vunpack.c.h.b16 %v6079
    %v6542 = vunpack.c.l.b16 %v6080
    %v6543 = vunpack.c.h.b16 %v6080
    %v6544 = vunpack.c.l.b16 %v6081
    %v6545 = vunpack.c.h.b16 %v6081
    %v6546 = vunpack.c.l.b16 %v6082
    %v6547 = vunpack.c.h.b16 %v6082
    %v6548 = vunpack.c.l.b16 %v6083
    %v6549 = vunpack.c.h.b16 %v6083
    %v6550 = vunpack.c.l.b16 %v6084
    %v6551 = vunpack.c.h.b16 %v6084
    %v6552 = vunpack.c.l.b16 %v6085
    %v6553 = vunpack.c.h.b16 %v6085
    %v6554 = vunpack.c.l.b16 %v6086
    %v6555 = vunpack.c.h.b16 %v6086
    %v6556 = vunpack.c.l.b16 %v6087
    %v6557 = vunpack.c.h.b16 %v6087
    %v6558 = vunpack.c.l.b16 %v6088
    %v6559 = vunpack.c.h.b16 %v6088
    %v6560 = vunpack.c.l.b16 %v6089
    %v6561 = vunpack.c.h.b16 %v6089
    %v6562 = vunpack.c.l.b16 %v6090
    %v6563 = vunpack.c.h.b16 %v6090
    %v6564 = vunpack.c.l.b16 %v6091
    %v6565 = vunpack.c.h.b16 %v6091
    %v6566 = vunpack.c.l.b16 %v6092
    %v6567 = vunpack.c.h.b16 %v6092
    %v6568 = vunpack.c.l.b16 %v6093
    %v6569 = vunpack.c.h.b16 %v6093
    %v6570 = vunpack.c.l.b16 %v6094
    %v6571 = vunpack.c.h.b16 %v6094
    %v6572 = vunpack.c.l.b16 %v6095
    %v6573 = vunpack.c.h.b16 %v6095
    %v6574 = vunpack.c.l.b16 %v6096
    %v6575 = vunpack.c.h.b16 %v6096
    %v6576 = vunpack.c.l.b16 %v6097
    %v6577 = vunpack.c.h.b16 %v6097
    %v6578 = vunpack.c.l.b16 %v6098
    %v6579 = vunpack.c.h.b16 %v6098
    %v6580 = vunpack.c.l.b16 %v6099
    %v6581 = vunpack.c.h.b16 %v6099
    %v6582 = vunpack.c.l.b16 %v6100
    %v6583 = vunpack.c.h.b16 %v6100
    %v6584 = vunpack.c.l.b16 %v6101
    %v6585 = vunpack.c.h.b16 %v6101
    %v6586 = vunpack.c.l.b16 %v6102
    %v6587 = vunpack.c.h.b16 %v6102
    %v6588 = vunpack.c.l.b16 %v6103
    %v6589 = vunpack.c.h.b16 %v6103
    %v6590 = vunpack.c.l.b16 %v6104
    %v6591 = vunpack.c.h.b16 %v6104
    %v6592 = vunpack.c.l.b16 %v6105
    %v6593 = vunpack.c.h.b16 %v6105
    %v6594 = vunpack.c.l.b16 %v6106
    %v6595 = vunpack.c.h.b16 %v6106
    %v6596 = vunpack.c.l.b16 %v6107
    %v6597 = vunpack.c.h.b16 %v6107
    %v6598 = vunpack.c.l.b16 %v6108
    %v6599 = vunpack.c.h.b16 %v6108
    %v6600 = vunpack.c.l.b16 %v6109
    %v6601 = vunpack.c.h.b16 %v6109
    %v6602 = vunpack.c.l.b16 %v6110
    %v6603 = vunpack.c.h.b16 %v6110
    %v6604 = vunpack.c.l.b16 %v6111
    %v6605 = vunpack.c.h.b16 %v6111
    %v6606 = vunpack.c.l.b16 %v6112
    %v6607 = vunpack.c.h.b16 %v6112
    %v6608 = vunpack.c.l.b16 %v6113
    %v6609 = vunpack.c.h.b16 %v6113
    %v6610 = vunpack.c.l.b16 %v6114
    %v6611 = vunpack.c.h.b16 %v6114
    %v6612 = vunpack.c.l.b16 %v6115
    %v6613 = vunpack.c.h.b16 %v6115
    %v6614 = vunpack.c.l.b16 %v6116
    %v6615 = vunpack.c.h.b16 %v6116
    %v6616 = vunpack.c.l.b16 %v6117
    %v6617 = vunpack.c.h.b16 %v6117
    %v6618 = vunpack.c.l.b16 %v6118
    %v6619 = vunpack.c.h.b16 %v6118
    %v6620 = vunpack.c.l.b16 %v6119
    %v6621 = vunpack.c.h.b16 %v6119
    %v6622 = vunpack.c.l.b16 %v6120
    %v6623 = vunpack.c.h.b16 %v6120
    %v6624 = vunpack.c.l.b16 %v6121
    %v6625 = vunpack.c.h.b16 %v6121
    %v6626 = vunpack.c.l.b16 %v6122
    %v6627 = vunpack.c.h.b16 %v6122
    %v6628 = vunpack.c.l.b16 %v6123
    %v6629 = vunpack.c.h.b16 %v6123
    %v6630 = vunpack.c.l.b16 %v6124
    %v6631 = vunpack.c.h.b16 %v6124
    %v6632 = vunpack.c.l.b16 %v6125
    %v6633 = vunpack.c.h.b16 %v6125
    %v6634 = vunpack.c.l.b16 %v6126
    %v6635 = vunpack.c.h.b16 %v6126
    %v6636 = vunpack.c.l.b16 %v6127
    %v6637 = vunpack.c.h.b16 %v6127
    %v6638 = vunpack.c.l.b16 %v6128
    %v6639 = vunpack.c.h.b16 %v6128
    %v6640 = vunpack.c.l.b16 %v6129
    %v6641 = vunpack.c.h.b16 %v6129
    %v6642 = vpack.c.b16 %v6516, %v6514
    %v6643 = vpack.c.b16 %v6517, %v6515
    %v6644 = vpack.c.b16 %v6520, %v6518
    %v6645 = vpack.c.b16 %v6521, %v6519
    %v6646 = vpack.c.b16 %v6524, %v6522
    %v6647 = vpack.c.b16 %v6525, %v6523
    %v6648 = vpack.c.b16 %v6528, %v6526
    %v6649 = vpack.c.b16 %v6529, %v6527
    %v6650 = vpack.c.b16 %v6532, %v6530
    %v6651 = vpack.c.b16 %v6533, %v6531
    %v6652 = vpack.c.b16 %v6536, %v6534
    %v6653 = vpack.c.b16 %v6537, %v6535
    %v6654 = vpack.c.b16 %v6540, %v6538
    %v6655 = vpack.c.b16 %v6541, %v6539
    %v6656 = vpack.c.b16 %v6544, %v6542
    %v6657 = vpack.c.b16 %v6545, %v6543
    %v6658 = vpack.c.b16 %v6548, %v6546
    %v6659 = vpack.c.b16 %v6549, %v6547
    %v6660 = vpack.c.b16 %v6552, %v6550
    %v6661 = vpack.c.b16 %v6553, %v6551
    %v6662 = vpack.c.b16 %v6556, %v6554
    %v6663 = vpack.c.b16 %v6557, %v6555
    %v6664 = vpack.c.b16 %v6560, %v6558
    %v6665 = vpack.c.b16 %v6561, %v6559
    %v6666 = vpack.c.b16 %v6564, %v6562
    %v6667 = vpack.c.b16 %v6565, %v6563
    %v6668 = vpack.c.b16 %v6568, %v6566
    %v6669 = vpack.c.b16 %v6569, %v6567
    %v6670 = vpack.c.b16 %v6572, %v6570
    %v6671 = vpack.c.b16 %v6573, %v6571
    %v6672 = vpack.c.b16 %v6576, %v6574
    %v6673 = vpack.c.b16 %v6577, %v6575
    %v6674 = vpack.c.b16 %v6580, %v6578
    %v6675 = vpack.c.b16 %v6581, %v6579
    %v6676 = vpack.c.b16 %v6584, %v6582
    %v6677 = vpack.c.b16 %v6585, %v6583
    %v6678 = vpack.c.b16 %v6588, %v6586
    %v6679 = vpack.c.b16 %v6589, %v6587
    %v6680 = vpack.c.b16 %v6592, %v6590
    %v6681 = vpack.c.b16 %v6593, %v6591
    %v6682 = vpack.c.b16 %v6596, %v6594
    %v6683 = vpack.c.b16 %v6597, %v6595
    %v6684 = vpack.c.b16 %v6600, %v6598
    %v6685 = vpack.c.b16 %v6601, %v6599
    %v6686 = vpack.c.b16 %v6604, %v6602
    %v6687 = vpack.c.b16 %v6605, %v6603
    %v6688 = vpack.c.b16 %v6608, %v6606
    %v6689 = vpack.c.b16 %v6609, %v6607
    %v6690 = vpack.c.b16 %v6612, %v6610
    %v6691 = vpack.c.b16 %v6613, %v6611
    %v6692 = vpack.c.b16 %v6616, %v6614
    %v6693 = vpack.c.b16 %v6617, %v6615
    %v6694 = vpack.c.b16 %v6620, %v6618
    %v6695 = vpack.c.b16 %v6621, %v6619
    %v6696 = vpack.c.b16 %v6624, %v6622
    %v6697 = vpack.c.b16 %v6625, %v6623
    %v6698 = vpack.c.b16 %v6628, %v6626
    %v6699 = vpack.c.b16 %v6629, %v6627
    %v6700 = vpack.c.b16 %v6632, %v6630
    %v6701 = vpack.c.b16 %v6633, %v6631
    %v6702 = vpack.c.b16 %v6636, %v6634
    %v6703 = vpack.c.b16 %v6637, %v6635
    %v6704 = vpack.c.b16 %v6640, %v6638
    %v6705 = vpack.c.b16 %v6641, %v6639
    %6770 = vmatpush.bf16.msra.mxu0 %v6656
    %6771 = vmatpush.bf16.msra.mxu0 %v6654
    %6772 = vmatpush.bf16.msra.mxu0 %v6652
    %6773 = vmatpush.bf16.msra.mxu0 %v6650
    %6774 = vmatpush.bf16.msra.mxu0 %v6648
    %6775 = vmatpush.bf16.msra.mxu0 %v6646
    %6776 = vmatpush.bf16.msra.mxu0 %v6644
    %6777 = vmatpush.bf16.msra.mxu0 %v6642
    %6778 = vmatmul.bf16.gmra.mxu0 %v6322
    %v6779 = vpop.f32.mrf.mxu0
    %v6780 = vadd.f32 0.0, %v6779
    %v6781 = vpop.f32.mrf.mxu0
    %v6782 = vadd.f32 0.0, %v6781
    %6783 = vmatmul.bf16.gmra.mxu0 %v6326
    %v6784 = vpop.f32.mrf.mxu0
    %v6785 = vadd.f32 0.0, %v6784
    %v6786 = vpop.f32.mrf.mxu0
    %v6787 = vadd.f32 0.0, %v6786
    %6788 = vmatmul.bf16.gmra.mxu0 %v6330
    %v6789 = vpop.f32.mrf.mxu0
    %v6790 = vadd.f32 0.0, %v6789
    %v6791 = vpop.f32.mrf.mxu0
    %v6792 = vadd.f32 0.0, %v6791
    %6793 = vmatmul.bf16.gmra.mxu0 %v6334
    %v6794 = vpop.f32.mrf.mxu0
    %v6795 = vadd.f32 0.0, %v6794
    %v6796 = vpop.f32.mrf.mxu0
    %v6797 = vadd.f32 0.0, %v6796
    %6798 = vmatmul.bf16.gmra.mxu0 %v6338
    %v6799 = vpop.f32.mrf.mxu0
    %v6800 = vadd.f32 0.0, %v6799
    %v6801 = vpop.f32.mrf.mxu0
    %v6802 = vadd.f32 0.0, %v6801
    %6803 = vmatmul.bf16.gmra.mxu0 %v6342
    %v6804 = vpop.f32.mrf.mxu0
    %v6805 = vadd.f32 0.0, %v6804
    %v6806 = vpop.f32.mrf.mxu0
    %v6807 = vadd.f32 0.0, %v6806
    %6808 = vmatmul.bf16.gmra.mxu0 %v6346
    %v6809 = vpop.f32.mrf.mxu0
    %v6810 = vadd.f32 0.0, %v6809
    %v6811 = vpop.f32.mrf.mxu0
    %v6812 = vadd.f32 0.0, %v6811
    %6813 = vmatmul.bf16.gmra.mxu0 %v6350
    %v6814 = vpop.f32.mrf.mxu0
    %v6815 = vadd.f32 0.0, %v6814
    %v6816 = vpop.f32.mrf.mxu0
    %v6817 = vadd.f32 0.0, %v6816
    %6818 = vmatmul.bf16.gmra.mxu0 %v6354
    %v6819 = vpop.f32.mrf.mxu0
    %v6820 = vadd.f32 0.0, %v6819
    %v6821 = vpop.f32.mrf.mxu0
    %v6822 = vadd.f32 0.0, %v6821
    %6823 = vmatmul.bf16.gmra.mxu0 %v6358
    %v6824 = vpop.f32.mrf.mxu0
    %v6825 = vadd.f32 0.0, %v6824
    %v6826 = vpop.f32.mrf.mxu0
    %v6827 = vadd.f32 0.0, %v6826
    %6828 = vmatmul.bf16.gmra.mxu0 %v6362
    %v6829 = vpop.f32.mrf.mxu0
    %v6830 = vadd.f32 0.0, %v6829
    %v6831 = vpop.f32.mrf.mxu0
    %v6832 = vadd.f32 0.0, %v6831
    %6833 = vmatmul.bf16.gmra.mxu0 %v6366
    %v6834 = vpop.f32.mrf.mxu0
    %v6835 = vadd.f32 0.0, %v6834
    %v6836 = vpop.f32.mrf.mxu0
    %v6837 = vadd.f32 0.0, %v6836
    %6838 = vmatmul.bf16.gmra.mxu0 %v6370
    %v6839 = vpop.f32.mrf.mxu0
    %v6840 = vadd.f32 0.0, %v6839
    %v6841 = vpop.f32.mrf.mxu0
    %v6842 = vadd.f32 0.0, %v6841
    %6843 = vmatmul.bf16.gmra.mxu0 %v6374
    %v6844 = vpop.f32.mrf.mxu0
    %v6845 = vadd.f32 0.0, %v6844
    %v6846 = vpop.f32.mrf.mxu0
    %v6847 = vadd.f32 0.0, %v6846
    %6848 = vmatmul.bf16.gmra.mxu0 %v6378
    %v6849 = vpop.f32.mrf.mxu0
    %v6850 = vadd.f32 0.0, %v6849
    %v6851 = vpop.f32.mrf.mxu0
    %v6852 = vadd.f32 0.0, %v6851
    %6853 = vmatmul.bf16.gmra.mxu0 %v6382
    %v6854 = vpop.f32.mrf.mxu0
    %v6855 = vadd.f32 0.0, %v6854
    %v6856 = vpop.f32.mrf.mxu0
    %v6857 = vadd.f32 0.0, %v6856
    %6858 = vdwg.mxu0
    %6859 = vmatpush.bf16.msra.mxu0 %v6672
    %6860 = vmatpush.bf16.msra.mxu0 %v6670
    %6861 = vmatpush.bf16.msra.mxu0 %v6668
    %6862 = vmatpush.bf16.msra.mxu0 %v6666
    %6863 = vmatpush.bf16.msra.mxu0 %v6664
    %6864 = vmatpush.bf16.msra.mxu0 %v6662
    %6865 = vmatpush.bf16.msra.mxu0 %v6660
    %6866 = vmatpush.bf16.msra.mxu0 %v6658
    %6867 = vmatmul.bf16.gmra.mxu0 %v6323
    %v6868 = vpop.f32.mrf.mxu0
    %v6869 = vadd.f32 %v6780, %v6868
    %v6870 = vpop.f32.mrf.mxu0
    %v6871 = vadd.f32 %v6782, %v6870
    %6872 = vmatmul.bf16.gmra.mxu0 %v6327
    %v6873 = vpop.f32.mrf.mxu0
    %v6874 = vadd.f32 %v6785, %v6873
    %v6875 = vpop.f32.mrf.mxu0
    %v6876 = vadd.f32 %v6787, %v6875
    %6877 = vmatmul.bf16.gmra.mxu0 %v6331
    %v6878 = vpop.f32.mrf.mxu0
    %v6879 = vadd.f32 %v6790, %v6878
    %v6880 = vpop.f32.mrf.mxu0
    %v6881 = vadd.f32 %v6792, %v6880
    %6882 = vmatmul.bf16.gmra.mxu0 %v6335
    %v6883 = vpop.f32.mrf.mxu0
    %v6884 = vadd.f32 %v6795, %v6883
    %v6885 = vpop.f32.mrf.mxu0
    %v6886 = vadd.f32 %v6797, %v6885
    %6887 = vmatmul.bf16.gmra.mxu0 %v6339
    %v6888 = vpop.f32.mrf.mxu0
    %v6889 = vadd.f32 %v6800, %v6888
    %v6890 = vpop.f32.mrf.mxu0
    %v6891 = vadd.f32 %v6802, %v6890
    %6892 = vmatmul.bf16.gmra.mxu0 %v6343
    %v6893 = vpop.f32.mrf.mxu0
    %v6894 = vadd.f32 %v6805, %v6893
    %v6895 = vpop.f32.mrf.mxu0
    %v6896 = vadd.f32 %v6807, %v6895
    %6897 = vmatmul.bf16.gmra.mxu0 %v6347
    %v6898 = vpop.f32.mrf.mxu0
    %v6899 = vadd.f32 %v6810, %v6898
    %v6900 = vpop.f32.mrf.mxu0
    %v6901 = vadd.f32 %v6812, %v6900
    %6902 = vmatmul.bf16.gmra.mxu0 %v6351
    %v6903 = vpop.f32.mrf.mxu0
    %v6904 = vadd.f32 %v6815, %v6903
    %v6905 = vpop.f32.mrf.mxu0
    %v6906 = vadd.f32 %v6817, %v6905
    %6907 = vmatmul.bf16.gmra.mxu0 %v6355
    %v6908 = vpop.f32.mrf.mxu0
    %v6909 = vadd.f32 %v6820, %v6908
    %v6910 = vpop.f32.mrf.mxu0
    %v6911 = vadd.f32 %v6822, %v6910
    %6912 = vmatmul.bf16.gmra.mxu0 %v6359
    %v6913 = vpop.f32.mrf.mxu0
    %v6914 = vadd.f32 %v6825, %v6913
    %v6915 = vpop.f32.mrf.mxu0
    %v6916 = vadd.f32 %v6827, %v6915
    %6917 = vmatmul.bf16.gmra.mxu0 %v6363
    %v6918 = vpop.f32.mrf.mxu0
    %v6919 = vadd.f32 %v6830, %v6918
    %v6920 = vpop.f32.mrf.mxu0
    %v6921 = vadd.f32 %v6832, %v6920
    %6922 = vmatmul.bf16.gmra.mxu0 %v6367
    %v6923 = vpop.f32.mrf.mxu0
    %v6924 = vadd.f32 %v6835, %v6923
    %v6925 = vpop.f32.mrf.mxu0
    %v6926 = vadd.f32 %v6837, %v6925
    %6927 = vmatmul.bf16.gmra.mxu0 %v6371
    %v6928 = vpop.f32.mrf.mxu0
    %v6929 = vadd.f32 %v6840, %v6928
    %v6930 = vpop.f32.mrf.mxu0
    %v6931 = vadd.f32 %v6842, %v6930
    %6932 = vmatmul.bf16.gmra.mxu0 %v6375
    %v6933 = vpop.f32.mrf.mxu0
    %v6934 = vadd.f32 %v6845, %v6933
    %v6935 = vpop.f32.mrf.mxu0
    %v6936 = vadd.f32 %v6847, %v6935
    %6937 = vmatmul.bf16.gmra.mxu0 %v6379
    %v6938 = vpop.f32.mrf.mxu0
    %v6939 = vadd.f32 %v6850, %v6938
    %v6940 = vpop.f32.mrf.mxu0
    %v6941 = vadd.f32 %v6852, %v6940
    %6942 = vmatmul.bf16.gmra.mxu0 %v6383
    %v6943 = vpop.f32.mrf.mxu0
    %v6944 = vadd.f32 %v6855, %v6943
    %v6945 = vpop.f32.mrf.mxu0
    %v6946 = vadd.f32 %v6857, %v6945
    %6947 = vdwg.mxu0
    %6948 = vmatpush.bf16.msra.mxu0 %v6688
    %6949 = vmatpush.bf16.msra.mxu0 %v6686
    %6950 = vmatpush.bf16.msra.mxu0 %v6684
    %6951 = vmatpush.bf16.msra.mxu0 %v6682
    %6952 = vmatpush.bf16.msra.mxu0 %v6680
    %6953 = vmatpush.bf16.msra.mxu0 %v6678
    %6954 = vmatpush.bf16.msra.mxu0 %v6676
    %6955 = vmatpush.bf16.msra.mxu0 %v6674
    %6956 = vmatmul.bf16.gmra.mxu0 %v6324
    %v6957 = vpop.f32.mrf.mxu0
    %v6958 = vadd.f32 %v6869, %v6957
    %v6959 = vpop.f32.mrf.mxu0
    %v6960 = vadd.f32 %v6871, %v6959
    %6961 = vmatmul.bf16.gmra.mxu0 %v6328
    %v6962 = vpop.f32.mrf.mxu0
    %v6963 = vadd.f32 %v6874, %v6962
    %v6964 = vpop.f32.mrf.mxu0
    %v6965 = vadd.f32 %v6876, %v6964
    %6966 = vmatmul.bf16.gmra.mxu0 %v6332
    %v6967 = vpop.f32.mrf.mxu0
    %v6968 = vadd.f32 %v6879, %v6967
    %v6969 = vpop.f32.mrf.mxu0
    %v6970 = vadd.f32 %v6881, %v6969
    %6971 = vmatmul.bf16.gmra.mxu0 %v6336
    %v6972 = vpop.f32.mrf.mxu0
    %v6973 = vadd.f32 %v6884, %v6972
    %v6974 = vpop.f32.mrf.mxu0
    %v6975 = vadd.f32 %v6886, %v6974
    %6976 = vmatmul.bf16.gmra.mxu0 %v6340
    %v6977 = vpop.f32.mrf.mxu0
    %v6978 = vadd.f32 %v6889, %v6977
    %v6979 = vpop.f32.mrf.mxu0
    %v6980 = vadd.f32 %v6891, %v6979
    %6981 = vmatmul.bf16.gmra.mxu0 %v6344
    %v6982 = vpop.f32.mrf.mxu0
    %v6983 = vadd.f32 %v6894, %v6982
    %v6984 = vpop.f32.mrf.mxu0
    %v6985 = vadd.f32 %v6896, %v6984
    %6986 = vmatmul.bf16.gmra.mxu0 %v6348
    %v6987 = vpop.f32.mrf.mxu0
    %v6988 = vadd.f32 %v6899, %v6987
    %v6989 = vpop.f32.mrf.mxu0
    %v6990 = vadd.f32 %v6901, %v6989
    %6991 = vmatmul.bf16.gmra.mxu0 %v6352
    %v6992 = vpop.f32.mrf.mxu0
    %v6993 = vadd.f32 %v6904, %v6992
    %v6994 = vpop.f32.mrf.mxu0
    %v6995 = vadd.f32 %v6906, %v6994
    %6996 = vmatmul.bf16.gmra.mxu0 %v6356
    %v6997 = vpop.f32.mrf.mxu0
    %v6998 = vadd.f32 %v6909, %v6997
    %v6999 = vpop.f32.mrf.mxu0
    %v7000 = vadd.f32 %v6911, %v6999
    %7001 = vmatmul.bf16.gmra.mxu0 %v6360
    %v7002 = vpop.f32.mrf.mxu0
    %v7003 = vadd.f32 %v6914, %v7002
    %v7004 = vpop.f32.mrf.mxu0
    %v7005 = vadd.f32 %v6916, %v7004
    %7006 = vmatmul.bf16.gmra.mxu0 %v6364
    %v7007 = vpop.f32.mrf.mxu0
    %v7008 = vadd.f32 %v6919, %v7007
    %v7009 = vpop.f32.mrf.mxu0
    %v7010 = vadd.f32 %v6921, %v7009
    %7011 = vmatmul.bf16.gmra.mxu0 %v6368
    %v7012 = vpop.f32.mrf.mxu0
    %v7013 = vadd.f32 %v6924, %v7012
    %v7014 = vpop.f32.mrf.mxu0
    %v7015 = vadd.f32 %v6926, %v7014
    %7016 = vmatmul.bf16.gmra.mxu0 %v6372
    %v7017 = vpop.f32.mrf.mxu0
    %v7018 = vadd.f32 %v6929, %v7017
    %v7019 = vpop.f32.mrf.mxu0
    %v7020 = vadd.f32 %v6931, %v7019
    %7021 = vmatmul.bf16.gmra.mxu0 %v6376
    %v7022 = vpop.f32.mrf.mxu0
    %v7023 = vadd.f32 %v6934, %v7022
    %v7024 = vpop.f32.mrf.mxu0
    %v7025 = vadd.f32 %v6936, %v7024
    %7026 = vmatmul.bf16.gmra.mxu0 %v6380
    %v7027 = vpop.f32.mrf.mxu0
    %v7028 = vadd.f32 %v6939, %v7027
    %v7029 = vpop.f32.mrf.mxu0
    %v7030 = vadd.f32 %v6941, %v7029
    %7031 = vmatmul.bf16.gmra.mxu0 %v6384
    %v7032 = vpop.f32.mrf.mxu0
    %v7033 = vadd.f32 %v6944, %v7032
    %v7034 = vpop.f32.mrf.mxu0
    %v7035 = vadd.f32 %v6946, %v7034
    %7036 = vdwg.mxu0
    %7037 = vmatpush.bf16.msra.mxu0 %v6704
    %7038 = vmatpush.bf16.msra.mxu0 %v6702
    %7039 = vmatpush.bf16.msra.mxu0 %v6700
    %7040 = vmatpush.bf16.msra.mxu0 %v6698
    %7041 = vmatpush.bf16.msra.mxu0 %v6696
    %7042 = vmatpush.bf16.msra.mxu0 %v6694
    %7043 = vmatpush.bf16.msra.mxu0 %v6692
    %7044 = vmatpush.bf16.msra.mxu0 %v6690
    %7045 = vmatmul.bf16.gmra.mxu0 %v6325
    %v7046 = vpop.f32.mrf.mxu0
    %v7047 = vadd.f32 %v6958, %v7046
    %v7048 = vpop.f32.mrf.mxu0
    %v7049 = vadd.f32 %v6960, %v7048
    %7050 = vmatmul.bf16.gmra.mxu0 %v6329
    %v7051 = vpop.f32.mrf.mxu0
    %v7052 = vadd.f32 %v6963, %v7051
    %v7053 = vpop.f32.mrf.mxu0
    %v7054 = vadd.f32 %v6965, %v7053
    %7055 = vmatmul.bf16.gmra.mxu0 %v6333
    %v7056 = vpop.f32.mrf.mxu0
    %v7057 = vadd.f32 %v6968, %v7056
    %v7058 = vpop.f32.mrf.mxu0
    %v7059 = vadd.f32 %v6970, %v7058
    %7060 = vmatmul.bf16.gmra.mxu0 %v6337
    %v7061 = vpop.f32.mrf.mxu0
    %v7062 = vadd.f32 %v6973, %v7061
    %v7063 = vpop.f32.mrf.mxu0
    %v7064 = vadd.f32 %v6975, %v7063
    %7065 = vmatmul.bf16.gmra.mxu0 %v6341
    %v7066 = vpop.f32.mrf.mxu0
    %v7067 = vadd.f32 %v6978, %v7066
    %v7068 = vpop.f32.mrf.mxu0
    %v7069 = vadd.f32 %v6980, %v7068
    %7070 = vmatmul.bf16.gmra.mxu0 %v6345
    %v7071 = vpop.f32.mrf.mxu0
    %v7072 = vadd.f32 %v6983, %v7071
    %v7073 = vpop.f32.mrf.mxu0
    %v7074 = vadd.f32 %v6985, %v7073
    %7075 = vmatmul.bf16.gmra.mxu0 %v6349
    %v7076 = vpop.f32.mrf.mxu0
    %v7077 = vadd.f32 %v6988, %v7076
    %v7078 = vpop.f32.mrf.mxu0
    %v7079 = vadd.f32 %v6990, %v7078
    %7080 = vmatmul.bf16.gmra.mxu0 %v6353
    %v7081 = vpop.f32.mrf.mxu0
    %v7082 = vadd.f32 %v6993, %v7081
    %v7083 = vpop.f32.mrf.mxu0
    %v7084 = vadd.f32 %v6995, %v7083
    %7085 = vmatmul.bf16.gmra.mxu0 %v6357
    %v7086 = vpop.f32.mrf.mxu0
    %v7087 = vadd.f32 %v6998, %v7086
    %v7088 = vpop.f32.mrf.mxu0
    %v7089 = vadd.f32 %v7000, %v7088
    %7090 = vmatmul.bf16.gmra.mxu0 %v6361
    %v7091 = vpop.f32.mrf.mxu0
    %v7092 = vadd.f32 %v7003, %v7091
    %v7093 = vpop.f32.mrf.mxu0
    %v7094 = vadd.f32 %v7005, %v7093
    %7095 = vmatmul.bf16.gmra.mxu0 %v6365
    %v7096 = vpop.f32.mrf.mxu0
    %v7097 = vadd.f32 %v7008, %v7096
    %v7098 = vpop.f32.mrf.mxu0
    %v7099 = vadd.f32 %v7010, %v7098
    %7100 = vmatmul.bf16.gmra.mxu0 %v6369
    %v7101 = vpop.f32.mrf.mxu0
    %v7102 = vadd.f32 %v7013, %v7101
    %v7103 = vpop.f32.mrf.mxu0
    %v7104 = vadd.f32 %v7015, %v7103
    %7105 = vmatmul.bf16.gmra.mxu0 %v6373
    %v7106 = vpop.f32.mrf.mxu0
    %v7107 = vadd.f32 %v7018, %v7106
    %v7108 = vpop.f32.mrf.mxu0
    %v7109 = vadd.f32 %v7020, %v7108
    %7110 = vmatmul.bf16.gmra.mxu0 %v6377
    %v7111 = vpop.f32.mrf.mxu0
    %v7112 = vadd.f32 %v7023, %v7111
    %v7113 = vpop.f32.mrf.mxu0
    %v7114 = vadd.f32 %v7025, %v7113
    %7115 = vmatmul.bf16.gmra.mxu0 %v6381
    %v7116 = vpop.f32.mrf.mxu0
    %v7117 = vadd.f32 %v7028, %v7116
    %v7118 = vpop.f32.mrf.mxu0
    %v7119 = vadd.f32 %v7030, %v7118
    %7120 = vmatmul.bf16.gmra.mxu0 %v6385
    %v7121 = vpop.f32.mrf.mxu0
    %v7122 = vadd.f32 %v7033, %v7121
    %v7123 = vpop.f32.mrf.mxu0
    %v7124 = vadd.f32 %v7035, %v7123
    %7125 = vdwg.mxu0
    %7126 = vmatpush.bf16.msra.mxu0 %v6657
    %7127 = vmatpush.bf16.msra.mxu0 %v6655
    %7128 = vmatpush.bf16.msra.mxu0 %v6653
    %7129 = vmatpush.bf16.msra.mxu0 %v6651
    %7130 = vmatpush.bf16.msra.mxu0 %v6649
    %7131 = vmatpush.bf16.msra.mxu0 %v6647
    %7132 = vmatpush.bf16.msra.mxu0 %v6645
    %7133 = vmatpush.bf16.msra.mxu0 %v6643
    %7134 = vmatmul.bf16.gmra.mxu0 %v6322
    %v7135 = vpop.f32.mrf.mxu0
    %v7136 = vadd.f32 0.0, %v7135
    %v7137 = vpop.f32.mrf.mxu0
    %v7138 = vadd.f32 0.0, %v7137
    %7139 = vmatmul.bf16.gmra.mxu0 %v6326
    %v7140 = vpop.f32.mrf.mxu0
    %v7141 = vadd.f32 0.0, %v7140
    %v7142 = vpop.f32.mrf.mxu0
    %v7143 = vadd.f32 0.0, %v7142
    %7144 = vmatmul.bf16.gmra.mxu0 %v6330
    %v7145 = vpop.f32.mrf.mxu0
    %v7146 = vadd.f32 0.0, %v7145
    %v7147 = vpop.f32.mrf.mxu0
    %v7148 = vadd.f32 0.0, %v7147
    %7149 = vmatmul.bf16.gmra.mxu0 %v6334
    %v7150 = vpop.f32.mrf.mxu0
    %v7151 = vadd.f32 0.0, %v7150
    %v7152 = vpop.f32.mrf.mxu0
    %v7153 = vadd.f32 0.0, %v7152
    %7154 = vmatmul.bf16.gmra.mxu0 %v6338
    %v7155 = vpop.f32.mrf.mxu0
    %v7156 = vadd.f32 0.0, %v7155
    %v7157 = vpop.f32.mrf.mxu0
    %v7158 = vadd.f32 0.0, %v7157
    %7159 = vmatmul.bf16.gmra.mxu0 %v6342
    %v7160 = vpop.f32.mrf.mxu0
    %v7161 = vadd.f32 0.0, %v7160
    %v7162 = vpop.f32.mrf.mxu0
    %v7163 = vadd.f32 0.0, %v7162
    %7164 = vmatmul.bf16.gmra.mxu0 %v6346
    %v7165 = vpop.f32.mrf.mxu0
    %v7166 = vadd.f32 0.0, %v7165
    %v7167 = vpop.f32.mrf.mxu0
    %v7168 = vadd.f32 0.0, %v7167
    %7169 = vmatmul.bf16.gmra.mxu0 %v6350
    %v7170 = vpop.f32.mrf.mxu0
    %v7171 = vadd.f32 0.0, %v7170
    %v7172 = vpop.f32.mrf.mxu0
    %v7173 = vadd.f32 0.0, %v7172
    %7174 = vmatmul.bf16.gmra.mxu0 %v6354
    %v7175 = vpop.f32.mrf.mxu0
    %v7176 = vadd.f32 0.0, %v7175
    %v7177 = vpop.f32.mrf.mxu0
    %v7178 = vadd.f32 0.0, %v7177
    %7179 = vmatmul.bf16.gmra.mxu0 %v6358
    %v7180 = vpop.f32.mrf.mxu0
    %v7181 = vadd.f32 0.0, %v7180
    %v7182 = vpop.f32.mrf.mxu0
    %v7183 = vadd.f32 0.0, %v7182
    %7184 = vmatmul.bf16.gmra.mxu0 %v6362
    %v7185 = vpop.f32.mrf.mxu0
    %v7186 = vadd.f32 0.0, %v7185
    %v7187 = vpop.f32.mrf.mxu0
    %v7188 = vadd.f32 0.0, %v7187
    %7189 = vmatmul.bf16.gmra.mxu0 %v6366
    %v7190 = vpop.f32.mrf.mxu0
    %v7191 = vadd.f32 0.0, %v7190
    %v7192 = vpop.f32.mrf.mxu0
    %v7193 = vadd.f32 0.0, %v7192
    %7194 = vmatmul.bf16.gmra.mxu0 %v6370
    %v7195 = vpop.f32.mrf.mxu0
    %v7196 = vadd.f32 0.0, %v7195
    %v7197 = vpop.f32.mrf.mxu0
    %v7198 = vadd.f32 0.0, %v7197
    %7199 = vmatmul.bf16.gmra.mxu0 %v6374
    %v7200 = vpop.f32.mrf.mxu0
    %v7201 = vadd.f32 0.0, %v7200
    %v7202 = vpop.f32.mrf.mxu0
    %v7203 = vadd.f32 0.0, %v7202
    %7204 = vmatmul.bf16.gmra.mxu0 %v6378
    %v7205 = vpop.f32.mrf.mxu0
    %v7206 = vadd.f32 0.0, %v7205
    %v7207 = vpop.f32.mrf.mxu0
    %v7208 = vadd.f32 0.0, %v7207
    %7209 = vmatmul.bf16.gmra.mxu0 %v6382
    %v7210 = vpop.f32.mrf.mxu0
    %v7211 = vadd.f32 0.0, %v7210
    %v7212 = vpop.f32.mrf.mxu0
    %v7213 = vadd.f32 0.0, %v7212
    %7214 = vdwg.mxu0
    %7215 = vmatpush.bf16.msra.mxu0 %v6673
    %7216 = vmatpush.bf16.msra.mxu0 %v6671
    %7217 = vmatpush.bf16.msra.mxu0 %v6669
    %7218 = vmatpush.bf16.msra.mxu0 %v6667
    %7219 = vmatpush.bf16.msra.mxu0 %v6665
    %7220 = vmatpush.bf16.msra.mxu0 %v6663
    %7221 = vmatpush.bf16.msra.mxu0 %v6661
    %7222 = vmatpush.bf16.msra.mxu0 %v6659
    %7223 = vmatmul.bf16.gmra.mxu0 %v6323
    %v7224 = vpop.f32.mrf.mxu0
    %v7225 = vadd.f32 %v7136, %v7224
    %v7226 = vpop.f32.mrf.mxu0
    %v7227 = vadd.f32 %v7138, %v7226
    %7228 = vmatmul.bf16.gmra.mxu0 %v6327
    %v7229 = vpop.f32.mrf.mxu0
    %v7230 = vadd.f32 %v7141, %v7229
    %v7231 = vpop.f32.mrf.mxu0
    %v7232 = vadd.f32 %v7143, %v7231
    %7233 = vmatmul.bf16.gmra.mxu0 %v6331
    %v7234 = vpop.f32.mrf.mxu0
    %v7235 = vadd.f32 %v7146, %v7234
    %v7236 = vpop.f32.mrf.mxu0
    %v7237 = vadd.f32 %v7148, %v7236
    %7238 = vmatmul.bf16.gmra.mxu0 %v6335
    %v7239 = vpop.f32.mrf.mxu0
    %v7240 = vadd.f32 %v7151, %v7239
    %v7241 = vpop.f32.mrf.mxu0
    %v7242 = vadd.f32 %v7153, %v7241
    %7243 = vmatmul.bf16.gmra.mxu0 %v6339
    %v7244 = vpop.f32.mrf.mxu0
    %v7245 = vadd.f32 %v7156, %v7244
    %v7246 = vpop.f32.mrf.mxu0
    %v7247 = vadd.f32 %v7158, %v7246
    %7248 = vmatmul.bf16.gmra.mxu0 %v6343
    %v7249 = vpop.f32.mrf.mxu0
    %v7250 = vadd.f32 %v7161, %v7249
    %v7251 = vpop.f32.mrf.mxu0
    %v7252 = vadd.f32 %v7163, %v7251
    %7253 = vmatmul.bf16.gmra.mxu0 %v6347
    %v7254 = vpop.f32.mrf.mxu0
    %v7255 = vadd.f32 %v7166, %v7254
    %v7256 = vpop.f32.mrf.mxu0
    %v7257 = vadd.f32 %v7168, %v7256
    %7258 = vmatmul.bf16.gmra.mxu0 %v6351
    %v7259 = vpop.f32.mrf.mxu0
    %v7260 = vadd.f32 %v7171, %v7259
    %v7261 = vpop.f32.mrf.mxu0
    %v7262 = vadd.f32 %v7173, %v7261
    %7263 = vmatmul.bf16.gmra.mxu0 %v6355
    %v7264 = vpop.f32.mrf.mxu0
    %v7265 = vadd.f32 %v7176, %v7264
    %v7266 = vpop.f32.mrf.mxu0
    %v7267 = vadd.f32 %v7178, %v7266
    %7268 = vmatmul.bf16.gmra.mxu0 %v6359
    %v7269 = vpop.f32.mrf.mxu0
    %v7270 = vadd.f32 %v7181, %v7269
    %v7271 = vpop.f32.mrf.mxu0
    %v7272 = vadd.f32 %v7183, %v7271
    %7273 = vmatmul.bf16.gmra.mxu0 %v6363
    %v7274 = vpop.f32.mrf.mxu0
    %v7275 = vadd.f32 %v7186, %v7274
    %v7276 = vpop.f32.mrf.mxu0
    %v7277 = vadd.f32 %v7188, %v7276
    %7278 = vmatmul.bf16.gmra.mxu0 %v6367
    %v7279 = vpop.f32.mrf.mxu0
    %v7280 = vadd.f32 %v7191, %v7279
    %v7281 = vpop.f32.mrf.mxu0
    %v7282 = vadd.f32 %v7193, %v7281
    %7283 = vmatmul.bf16.gmra.mxu0 %v6371
    %v7284 = vpop.f32.mrf.mxu0
    %v7285 = vadd.f32 %v7196, %v7284
    %v7286 = vpop.f32.mrf.mxu0
    %v7287 = vadd.f32 %v7198, %v7286
    %7288 = vmatmul.bf16.gmra.mxu0 %v6375
    %v7289 = vpop.f32.mrf.mxu0
    %v7290 = vadd.f32 %v7201, %v7289
    %v7291 = vpop.f32.mrf.mxu0
    %v7292 = vadd.f32 %v7203, %v7291
    %7293 = vmatmul.bf16.gmra.mxu0 %v6379
    %v7294 = vpop.f32.mrf.mxu0
    %v7295 = vadd.f32 %v7206, %v7294
    %v7296 = vpop.f32.mrf.mxu0
    %v7297 = vadd.f32 %v7208, %v7296
    %7298 = vmatmul.bf16.gmra.mxu0 %v6383
    %v7299 = vpop.f32.mrf.mxu0
    %v7300 = vadd.f32 %v7211, %v7299
    %v7301 = vpop.f32.mrf.mxu0
    %v7302 = vadd.f32 %v7213, %v7301
    %7303 = vdwg.mxu0
    %7304 = vmatpush.bf16.msra.mxu0 %v6689
    %7305 = vmatpush.bf16.msra.mxu0 %v6687
    %7306 = vmatpush.bf16.msra.mxu0 %v6685
    %7307 = vmatpush.bf16.msra.mxu0 %v6683
    %7308 = vmatpush.bf16.msra.mxu0 %v6681
    %7309 = vmatpush.bf16.msra.mxu0 %v6679
    %7310 = vmatpush.bf16.msra.mxu0 %v6677
    %7311 = vmatpush.bf16.msra.mxu0 %v6675
    %7312 = vmatmul.bf16.gmra.mxu0 %v6324
    %v7313 = vpop.f32.mrf.mxu0
    %v7314 = vadd.f32 %v7225, %v7313
    %v7315 = vpop.f32.mrf.mxu0
    %v7316 = vadd.f32 %v7227, %v7315
    %7317 = vmatmul.bf16.gmra.mxu0 %v6328
    %v7318 = vpop.f32.mrf.mxu0
    %v7319 = vadd.f32 %v7230, %v7318
    %v7320 = vpop.f32.mrf.mxu0
    %v7321 = vadd.f32 %v7232, %v7320
    %7322 = vmatmul.bf16.gmra.mxu0 %v6332
    %v7323 = vpop.f32.mrf.mxu0
    %v7324 = vadd.f32 %v7235, %v7323
    %v7325 = vpop.f32.mrf.mxu0
    %v7326 = vadd.f32 %v7237, %v7325
    %7327 = vmatmul.bf16.gmra.mxu0 %v6336
    %v7328 = vpop.f32.mrf.mxu0
    %v7329 = vadd.f32 %v7240, %v7328
    %v7330 = vpop.f32.mrf.mxu0
    %v7331 = vadd.f32 %v7242, %v7330
    %7332 = vmatmul.bf16.gmra.mxu0 %v6340
    %v7333 = vpop.f32.mrf.mxu0
    %v7334 = vadd.f32 %v7245, %v7333
    %v7335 = vpop.f32.mrf.mxu0
    %v7336 = vadd.f32 %v7247, %v7335
    %7337 = vmatmul.bf16.gmra.mxu0 %v6344
    %v7338 = vpop.f32.mrf.mxu0
    %v7339 = vadd.f32 %v7250, %v7338
    %v7340 = vpop.f32.mrf.mxu0
    %v7341 = vadd.f32 %v7252, %v7340
    %7342 = vmatmul.bf16.gmra.mxu0 %v6348
    %v7343 = vpop.f32.mrf.mxu0
    %v7344 = vadd.f32 %v7255, %v7343
    %v7345 = vpop.f32.mrf.mxu0
    %v7346 = vadd.f32 %v7257, %v7345
    %7347 = vmatmul.bf16.gmra.mxu0 %v6352
    %v7348 = vpop.f32.mrf.mxu0
    %v7349 = vadd.f32 %v7260, %v7348
    %v7350 = vpop.f32.mrf.mxu0
    %v7351 = vadd.f32 %v7262, %v7350
    %7352 = vmatmul.bf16.gmra.mxu0 %v6356
    %v7353 = vpop.f32.mrf.mxu0
    %v7354 = vadd.f32 %v7265, %v7353
    %v7355 = vpop.f32.mrf.mxu0
    %v7356 = vadd.f32 %v7267, %v7355
    %7357 = vmatmul.bf16.gmra.mxu0 %v6360
    %v7358 = vpop.f32.mrf.mxu0
    %v7359 = vadd.f32 %v7270, %v7358
    %v7360 = vpop.f32.mrf.mxu0
    %v7361 = vadd.f32 %v7272, %v7360
    %7362 = vmatmul.bf16.gmra.mxu0 %v6364
    %v7363 = vpop.f32.mrf.mxu0
    %v7364 = vadd.f32 %v7275, %v7363
    %v7365 = vpop.f32.mrf.mxu0
    %v7366 = vadd.f32 %v7277, %v7365
    %7367 = vmatmul.bf16.gmra.mxu0 %v6368
    %v7368 = vpop.f32.mrf.mxu0
    %v7369 = vadd.f32 %v7280, %v7368
    %v7370 = vpop.f32.mrf.mxu0
    %v7371 = vadd.f32 %v7282, %v7370
    %7372 = vmatmul.bf16.gmra.mxu0 %v6372
    %v7373 = vpop.f32.mrf.mxu0
    %v7374 = vadd.f32 %v7285, %v7373
    %v7375 = vpop.f32.mrf.mxu0
    %v7376 = vadd.f32 %v7287, %v7375
    %7377 = vmatmul.bf16.gmra.mxu0 %v6376
    %v7378 = vpop.f32.mrf.mxu0
    %v7379 = vadd.f32 %v7290, %v7378
    %v7380 = vpop.f32.mrf.mxu0
    %v7381 = vadd.f32 %v7292, %v7380
    %7382 = vmatmul.bf16.gmra.mxu0 %v6380
    %v7383 = vpop.f32.mrf.mxu0
    %v7384 = vadd.f32 %v7295, %v7383
    %v7385 = vpop.f32.mrf.mxu0
    %v7386 = vadd.f32 %v7297, %v7385
    %7387 = vmatmul.bf16.gmra.mxu0 %v6384
    %v7388 = vpop.f32.mrf.mxu0
    %v7389 = vadd.f32 %v7300, %v7388
    %v7390 = vpop.f32.mrf.mxu0
    %v7391 = vadd.f32 %v7302, %v7390
    %7392 = vdwg.mxu0
    %7393 = vmatpush.bf16.msra.mxu0 %v6705
    %7394 = vmatpush.bf16.msra.mxu0 %v6703
    %7395 = vmatpush.bf16.msra.mxu0 %v6701
    %7396 = vmatpush.bf16.msra.mxu0 %v6699
    %7397 = vmatpush.bf16.msra.mxu0 %v6697
    %7398 = vmatpush.bf16.msra.mxu0 %v6695
    %7399 = vmatpush.bf16.msra.mxu0 %v6693
    %7400 = vmatpush.bf16.msra.mxu0 %v6691
    %7401 = vmatmul.bf16.gmra.mxu0 %v6325
    %v7402 = vpop.f32.mrf.mxu0
    %v7403 = vadd.f32 %v7314, %v7402
    %v7404 = vpop.f32.mrf.mxu0
    %v7405 = vadd.f32 %v7316, %v7404
    %7406 = vmatmul.bf16.gmra.mxu0 %v6329
    %v7407 = vpop.f32.mrf.mxu0
    %v7408 = vadd.f32 %v7319, %v7407
    %v7409 = vpop.f32.mrf.mxu0
    %v7410 = vadd.f32 %v7321, %v7409
    %7411 = vmatmul.bf16.gmra.mxu0 %v6333
    %v7412 = vpop.f32.mrf.mxu0
    %v7413 = vadd.f32 %v7324, %v7412
    %v7414 = vpop.f32.mrf.mxu0
    %v7415 = vadd.f32 %v7326, %v7414
    %7416 = vmatmul.bf16.gmra.mxu0 %v6337
    %v7417 = vpop.f32.mrf.mxu0
    %v7418 = vadd.f32 %v7329, %v7417
    %v7419 = vpop.f32.mrf.mxu0
    %v7420 = vadd.f32 %v7331, %v7419
    %7421 = vmatmul.bf16.gmra.mxu0 %v6341
    %v7422 = vpop.f32.mrf.mxu0
    %v7423 = vadd.f32 %v7334, %v7422
    %v7424 = vpop.f32.mrf.mxu0
    %v7425 = vadd.f32 %v7336, %v7424
    %7426 = vmatmul.bf16.gmra.mxu0 %v6345
    %v7427 = vpop.f32.mrf.mxu0
    %v7428 = vadd.f32 %v7339, %v7427
    %v7429 = vpop.f32.mrf.mxu0
    %v7430 = vadd.f32 %v7341, %v7429
    %7431 = vmatmul.bf16.gmra.mxu0 %v6349
    %v7432 = vpop.f32.mrf.mxu0
    %v7433 = vadd.f32 %v7344, %v7432
    %v7434 = vpop.f32.mrf.mxu0
    %v7435 = vadd.f32 %v7346, %v7434
    %7436 = vmatmul.bf16.gmra.mxu0 %v6353
    %v7437 = vpop.f32.mrf.mxu0
    %v7438 = vadd.f32 %v7349, %v7437
    %v7439 = vpop.f32.mrf.mxu0
    %v7440 = vadd.f32 %v7351, %v7439
    %7441 = vmatmul.bf16.gmra.mxu0 %v6357
    %v7442 = vpop.f32.mrf.mxu0
    %v7443 = vadd.f32 %v7354, %v7442
    %v7444 = vpop.f32.mrf.mxu0
    %v7445 = vadd.f32 %v7356, %v7444
    %7446 = vmatmul.bf16.gmra.mxu0 %v6361
    %v7447 = vpop.f32.mrf.mxu0
    %v7448 = vadd.f32 %v7359, %v7447
    %v7449 = vpop.f32.mrf.mxu0
    %v7450 = vadd.f32 %v7361, %v7449
    %7451 = vmatmul.bf16.gmra.mxu0 %v6365
    %v7452 = vpop.f32.mrf.mxu0
    %v7453 = vadd.f32 %v7364, %v7452
    %v7454 = vpop.f32.mrf.mxu0
    %v7455 = vadd.f32 %v7366, %v7454
    %7456 = vmatmul.bf16.gmra.mxu0 %v6369
    %v7457 = vpop.f32.mrf.mxu0
    %v7458 = vadd.f32 %v7369, %v7457
    %v7459 = vpop.f32.mrf.mxu0
    %v7460 = vadd.f32 %v7371, %v7459
    %7461 = vmatmul.bf16.gmra.mxu0 %v6373
    %v7462 = vpop.f32.mrf.mxu0
    %v7463 = vadd.f32 %v7374, %v7462
    %v7464 = vpop.f32.mrf.mxu0
    %v7465 = vadd.f32 %v7376, %v7464
    %7466 = vmatmul.bf16.gmra.mxu0 %v6377
    %v7467 = vpop.f32.mrf.mxu0
    %v7468 = vadd.f32 %v7379, %v7467
    %v7469 = vpop.f32.mrf.mxu0
    %v7470 = vadd.f32 %v7381, %v7469
    %7471 = vmatmul.bf16.gmra.mxu0 %v6381
    %v7472 = vpop.f32.mrf.mxu0
    %v7473 = vadd.f32 %v7384, %v7472
    %v7474 = vpop.f32.mrf.mxu0
    %v7475 = vadd.f32 %v7386, %v7474
    %7476 = vmatmul.bf16.gmra.mxu0 %v6385
    %v7477 = vpop.f32.mrf.mxu0
    %v7478 = vadd.f32 %v7389, %v7477
    %v7479 = vpop.f32.mrf.mxu0
    %v7480 = vadd.f32 %v7391, %v7479
    %7481 = vdwg.mxu0
    %v7482 = vpack.c.bf16 %v7403, %v7047
    %v7483 = vpack.c.bf16 %v7405, %v7049
    %v7484 = vpack.c.bf16 %v7408, %v7052
    %v7485 = vpack.c.bf16 %v7410, %v7054
    %v7486 = vpack.c.bf16 %v7413, %v7057
    %v7487 = vpack.c.bf16 %v7415, %v7059
    %v7488 = vpack.c.bf16 %v7418, %v7062
    %v7489 = vpack.c.bf16 %v7420, %v7064
    %v7490 = vpack.c.bf16 %v7423, %v7067
    %v7491 = vpack.c.bf16 %v7425, %v7069
    %v7492 = vpack.c.bf16 %v7428, %v7072
    %v7493 = vpack.c.bf16 %v7430, %v7074
    %v7494 = vpack.c.bf16 %v7433, %v7077
    %v7495 = vpack.c.bf16 %v7435, %v7079
    %v7496 = vpack.c.bf16 %v7438, %v7082
    %v7497 = vpack.c.bf16 %v7440, %v7084
    %v7498 = vpack.c.bf16 %v7443, %v7087
    %v7499 = vpack.c.bf16 %v7445, %v7089
    %v7500 = vpack.c.bf16 %v7448, %v7092
    %v7501 = vpack.c.bf16 %v7450, %v7094
    %v7502 = vpack.c.bf16 %v7453, %v7097
    %v7503 = vpack.c.bf16 %v7455, %v7099
    %v7504 = vpack.c.bf16 %v7458, %v7102
    %v7505 = vpack.c.bf16 %v7460, %v7104
    %v7506 = vpack.c.bf16 %v7463, %v7107
    %v7507 = vpack.c.bf16 %v7465, %v7109
    %v7508 = vpack.c.bf16 %v7468, %v7112
    %v7509 = vpack.c.bf16 %v7470, %v7114
    %v7510 = vpack.c.bf16 %v7473, %v7117
    %v7511 = vpack.c.bf16 %v7475, %v7119
    %v7512 = vpack.c.bf16 %v7478, %v7122
    %v7513 = vpack.c.bf16 %v7480, %v7124
    %v7514 = vld [vmem:[%s4] sm:$0x3]
    %7516 = vst [vmem:[#allocation1] ss:$9 sm:$0xff] %v7514
    %v7517 = vld [vmem:[#allocation1] sm:$0xff]
    %v7518 = vld [vmem:[#allocation1 + $0x9] sm:$0xff]
    %v7519 = vpack.i.b16 %v7517, %v7517
    %v7521 = vperm.slane %v7519, 0
    %v7522 = vpack.i.b16 %v7518, %v7518
    %v7524 = vperm.slane %v7522, 0
    %v7525 = vunpack.c.l.bf16 %v7482
    %v7526 = vunpack.c.h.bf16 %v7482
    %v7527 = vunpack.c.l.bf16 %v7483
    %v7528 = vunpack.c.h.bf16 %v7483
    %v7529 = vunpack.c.l.bf16 %v7484
    %v7530 = vunpack.c.h.bf16 %v7484
    %v7531 = vunpack.c.l.bf16 %v7485
    %v7532 = vunpack.c.h.bf16 %v7485
    %v7533 = vunpack.c.l.bf16 %v7486
    %v7534 = vunpack.c.h.bf16 %v7486
    %v7535 = vunpack.c.l.bf16 %v7487
    %v7536 = vunpack.c.h.bf16 %v7487
    %v7537 = vunpack.c.l.bf16 %v7488
    %v7538 = vunpack.c.h.bf16 %v7488
    %v7539 = vunpack.c.l.bf16 %v7489
    %v7540 = vunpack.c.h.bf16 %v7489
    %v7541 = vunpack.c.l.bf16 %v7490
    %v7542 = vunpack.c.h.bf16 %v7490
    %v7543 = vunpack.c.l.bf16 %v7491
    %v7544 = vunpack.c.h.bf16 %v7491
    %v7545 = vunpack.c.l.bf16 %v7492
    %v7546 = vunpack.c.h.bf16 %v7492
    %v7547 = vunpack.c.l.bf16 %v7493
    %v7548 = vunpack.c.h.bf16 %v7493
    %v7549 = vunpack.c.l.bf16 %v7494
    %v7550 = vunpack.c.h.bf16 %v7494
    %v7551 = vunpack.c.l.bf16 %v7495
    %v7552 = vunpack.c.h.bf16 %v7495
    %v7553 = vunpack.c.l.bf16 %v7496
    %v7554 = vunpack.c.h.bf16 %v7496
    %v7555 = vunpack.c.l.bf16 %v7497
    %v7556 = vunpack.c.h.bf16 %v7497
    %v7557 = vunpack.c.l.bf16 %v7498
    %v7558 = vunpack.c.h.bf16 %v7498
    %v7559 = vunpack.c.l.bf16 %v7499
    %v7560 = vunpack.c.h.bf16 %v7499
    %v7561 = vunpack.c.l.bf16 %v7500
    %v7562 = vunpack.c.h.bf16 %v7500
    %v7563 = vunpack.c.l.bf16 %v7501
    %v7564 = vunpack.c.h.bf16 %v7501
    %v7565 = vunpack.c.l.bf16 %v7502
    %v7566 = vunpack.c.h.bf16 %v7502
    %v7567 = vunpack.c.l.bf16 %v7503
    %v7568 = vunpack.c.h.bf16 %v7503
    %v7569 = vunpack.c.l.bf16 %v7504
    %v7570 = vunpack.c.h.bf16 %v7504
    %v7571 = vunpack.c.l.bf16 %v7505
    %v7572 = vunpack.c.h.bf16 %v7505
    %v7573 = vunpack.c.l.bf16 %v7506
    %v7574 = vunpack.c.h.bf16 %v7506
    %v7575 = vunpack.c.l.bf16 %v7507
    %v7576 = vunpack.c.h.bf16 %v7507
    %v7577 = vunpack.c.l.bf16 %v7508
    %v7578 = vunpack.c.h.bf16 %v7508
    %v7579 = vunpack.c.l.bf16 %v7509
    %v7580 = vunpack.c.h.bf16 %v7509
    %v7581 = vunpack.c.l.bf16 %v7510
    %v7582 = vunpack.c.h.bf16 %v7510
    %v7583 = vunpack.c.l.bf16 %v7511
    %v7584 = vunpack.c.h.bf16 %v7511
    %v7585 = vunpack.c.l.bf16 %v7512
    %v7586 = vunpack.c.h.bf16 %v7512
    %v7587 = vunpack.c.l.bf16 %v7513
    %v7588 = vunpack.c.h.bf16 %v7513
    %v7589 = vunpack.c.l.bf16 %v7521
    %v7590 = vunpack.c.l.bf16 %v7524
    %v7591 = vadd.f32 %v7525, %v7589
    %v7592 = vadd.f32 %v7526, %v7590
    %v7593 = vadd.f32 %v7527, %v7589
    %v7594 = vadd.f32 %v7528, %v7590
    %v7595 = vadd.f32 %v7529, %v7589
    %v7596 = vadd.f32 %v7530, %v7590
    %v7597 = vadd.f32 %v7531, %v7589
    %v7598 = vadd.f32 %v7532, %v7590
    %v7599 = vadd.f32 %v7533, %v7589
    %v7600 = vadd.f32 %v7534, %v7590
    %v7601 = vadd.f32 %v7535, %v7589
    %v7602 = vadd.f32 %v7536, %v7590
    %v7603 = vadd.f32 %v7537, %v7589
    %v7604 = vadd.f32 %v7538, %v7590
    %v7605 = vadd.f32 %v7539, %v7589
    %v7606 = vadd.f32 %v7540, %v7590
    %v7607 = vadd.f32 %v7541, %v7589
    %v7608 = vadd.f32 %v7542, %v7590
    %v7609 = vadd.f32 %v7543, %v7589
    %v7610 = vadd.f32 %v7544, %v7590
    %v7611 = vadd.f32 %v7545, %v7589
    %v7612 = vadd.f32 %v7546, %v7590
    %v7613 = vadd.f32 %v7547, %v7589
    %v7614 = vadd.f32 %v7548, %v7590
    %v7615 = vadd.f32 %v7549, %v7589
    %v7616 = vadd.f32 %v7550, %v7590
    %v7617 = vadd.f32 %v7551, %v7589
    %v7618 = vadd.f32 %v7552, %v7590
    %v7619 = vadd.f32 %v7553, %v7589
    %v7620 = vadd.f32 %v7554, %v7590
    %v7621 = vadd.f32 %v7555, %v7589
    %v7622 = vadd.f32 %v7556, %v7590
    %v7623 = vadd.f32 %v7557, %v7589
    %v7624 = vadd.f32 %v7558, %v7590
    %v7625 = vadd.f32 %v7559, %v7589
    %v7626 = vadd.f32 %v7560, %v7590
    %v7627 = vadd.f32 %v7561, %v7589
    %v7628 = vadd.f32 %v7562, %v7590
    %v7629 = vadd.f32 %v7563, %v7589
    %v7630 = vadd.f32 %v7564, %v7590
    %v7631 = vadd.f32 %v7565, %v7589
    %v7632 = vadd.f32 %v7566, %v7590
    %v7633 = vadd.f32 %v7567, %v7589
    %v7634 = vadd.f32 %v7568, %v7590
    %v7635 = vadd.f32 %v7569, %v7589
    %v7636 = vadd.f32 %v7570, %v7590
    %v7637 = vadd.f32 %v7571, %v7589
    %v7638 = vadd.f32 %v7572, %v7590
    %v7639 = vadd.f32 %v7573, %v7589
    %v7640 = vadd.f32 %v7574, %v7590
    %v7641 = vadd.f32 %v7575, %v7589
    %v7642 = vadd.f32 %v7576, %v7590
    %v7643 = vadd.f32 %v7577, %v7589
    %v7644 = vadd.f32 %v7578, %v7590
    %v7645 = vadd.f32 %v7579, %v7589
    %v7646 = vadd.f32 %v7580, %v7590
    %v7647 = vadd.f32 %v7581, %v7589
    %v7648 = vadd.f32 %v7582, %v7590
    %v7649 = vadd.f32 %v7583, %v7589
    %v7650 = vadd.f32 %v7584, %v7590
    %v7651 = vadd.f32 %v7585, %v7589
    %v7652 = vadd.f32 %v7586, %v7590
    %v7653 = vadd.f32 %v7587, %v7589
    %v7654 = vadd.f32 %v7588, %v7590
    %v7655 = vpack.c.bf16 %v7592, %v7591
    %v7656 = vpack.c.bf16 %v7594, %v7593
    %v7657 = vpack.c.bf16 %v7596, %v7595
    %v7658 = vpack.c.bf16 %v7598, %v7597
    %v7659 = vpack.c.bf16 %v7600, %v7599
    %v7660 = vpack.c.bf16 %v7602, %v7601
    %v7661 = vpack.c.bf16 %v7604, %v7603
    %v7662 = vpack.c.bf16 %v7606, %v7605
    %v7663 = vpack.c.bf16 %v7608, %v7607
    %v7664 = vpack.c.bf16 %v7610, %v7609
    %v7665 = vpack.c.bf16 %v7612, %v7611
    %v7666 = vpack.c.bf16 %v7614, %v7613
    %v7667 = vpack.c.bf16 %v7616, %v7615
    %v7668 = vpack.c.bf16 %v7618, %v7617
    %v7669 = vpack.c.bf16 %v7620, %v7619
    %v7670 = vpack.c.bf16 %v7622, %v7621
    %v7671 = vpack.c.bf16 %v7624, %v7623
    %v7672 = vpack.c.bf16 %v7626, %v7625
    %v7673 = vpack.c.bf16 %v7628, %v7627
    %v7674 = vpack.c.bf16 %v7630, %v7629
    %v7675 = vpack.c.bf16 %v7632, %v7631
    %v7676 = vpack.c.bf16 %v7634, %v7633
    %v7677 = vpack.c.bf16 %v7636, %v7635
    %v7678 = vpack.c.bf16 %v7638, %v7637
    %v7679 = vpack.c.bf16 %v7640, %v7639
    %v7680 = vpack.c.bf16 %v7642, %v7641
    %v7681 = vpack.c.bf16 %v7644, %v7643
    %v7682 = vpack.c.bf16 %v7646, %v7645
    %v7683 = vpack.c.bf16 %v7648, %v7647
    %v7684 = vpack.c.bf16 %v7650, %v7649
    %v7685 = vpack.c.bf16 %v7652, %v7651
    %v7686 = vpack.c.bf16 %v7654, %v7653
    %v7687 = vunpack.c.l.bf16 %v7655
    %v7688 = vunpack.c.h.bf16 %v7655
    %v7689 = vunpack.c.l.bf16 %v7656
    %v7690 = vunpack.c.h.bf16 %v7656
    %v7691 = vunpack.c.l.bf16 %v7657
    %v7692 = vunpack.c.h.bf16 %v7657
    %v7693 = vunpack.c.l.bf16 %v7658
    %v7694 = vunpack.c.h.bf16 %v7658
    %v7695 = vunpack.c.l.bf16 %v7659
    %v7696 = vunpack.c.h.bf16 %v7659
    %v7697 = vunpack.c.l.bf16 %v7660
    %v7698 = vunpack.c.h.bf16 %v7660
    %v7699 = vunpack.c.l.bf16 %v7661
    %v7700 = vunpack.c.h.bf16 %v7661
    %v7701 = vunpack.c.l.bf16 %v7662
    %v7702 = vunpack.c.h.bf16 %v7662
    %v7703 = vunpack.c.l.bf16 %v7663
    %v7704 = vunpack.c.h.bf16 %v7663
    %v7705 = vunpack.c.l.bf16 %v7664
    %v7706 = vunpack.c.h.bf16 %v7664
    %v7707 = vunpack.c.l.bf16 %v7665
    %v7708 = vunpack.c.h.bf16 %v7665
    %v7709 = vunpack.c.l.bf16 %v7666
    %v7710 = vunpack.c.h.bf16 %v7666
    %v7711 = vunpack.c.l.bf16 %v7667
    %v7712 = vunpack.c.h.bf16 %v7667
    %v7713 = vunpack.c.l.bf16 %v7668
    %v7714 = vunpack.c.h.bf16 %v7668
    %v7715 = vunpack.c.l.bf16 %v7669
    %v7716 = vunpack.c.h.bf16 %v7669
    %v7717 = vunpack.c.l.bf16 %v7670
    %v7718 = vunpack.c.h.bf16 %v7670
    %v7719 = vunpack.c.l.bf16 %v7671
    %v7720 = vunpack.c.h.bf16 %v7671
    %v7721 = vunpack.c.l.bf16 %v7672
    %v7722 = vunpack.c.h.bf16 %v7672
    %v7723 = vunpack.c.l.bf16 %v7673
    %v7724 = vunpack.c.h.bf16 %v7673
    %v7725 = vunpack.c.l.bf16 %v7674
    %v7726 = vunpack.c.h.bf16 %v7674
    %v7727 = vunpack.c.l.bf16 %v7675
    %v7728 = vunpack.c.h.bf16 %v7675
    %v7729 = vunpack.c.l.bf16 %v7676
    %v7730 = vunpack.c.h.bf16 %v7676
    %v7731 = vunpack.c.l.bf16 %v7677
    %v7732 = vunpack.c.h.bf16 %v7677
    %v7733 = vunpack.c.l.bf16 %v7678
    %v7734 = vunpack.c.h.bf16 %v7678
    %v7735 = vunpack.c.l.bf16 %v7679
    %v7736 = vunpack.c.h.bf16 %v7679
    %v7737 = vunpack.c.l.bf16 %v7680
    %v7738 = vunpack.c.h.bf16 %v7680
    %v7739 = vunpack.c.l.bf16 %v7681
    %v7740 = vunpack.c.h.bf16 %v7681
    %v7741 = vunpack.c.l.bf16 %v7682
    %v7742 = vunpack.c.h.bf16 %v7682
    %v7743 = vunpack.c.l.bf16 %v7683
    %v7744 = vunpack.c.h.bf16 %v7683
    %v7745 = vunpack.c.l.bf16 %v7684
    %v7746 = vunpack.c.h.bf16 %v7684
    %v7747 = vunpack.c.l.bf16 %v7685
    %v7748 = vunpack.c.h.bf16 %v7685
    %v7749 = vunpack.c.l.bf16 %v7686
    %v7750 = vunpack.c.h.bf16 %v7686
    %vm7751 = vcmp.gt.f32.partialorder %v7687, 0.0
    %vm7752 = vcmp.gt.f32.partialorder %v7688, 0.0
    %vm7753 = vcmp.gt.f32.partialorder %v7689, 0.0
    %vm7754 = vcmp.gt.f32.partialorder %v7690, 0.0
    %vm7755 = vcmp.gt.f32.partialorder %v7691, 0.0
    %vm7756 = vcmp.gt.f32.partialorder %v7692, 0.0
    %vm7757 = vcmp.gt.f32.partialorder %v7693, 0.0
    %vm7758 = vcmp.gt.f32.partialorder %v7694, 0.0
    %vm7759 = vcmp.gt.f32.partialorder %v7695, 0.0
    %vm7760 = vcmp.gt.f32.partialorder %v7696, 0.0
    %vm7761 = vcmp.gt.f32.partialorder %v7697, 0.0
    %vm7762 = vcmp.gt.f32.partialorder %v7698, 0.0
    %vm7763 = vcmp.gt.f32.partialorder %v7699, 0.0
    %vm7764 = vcmp.gt.f32.partialorder %v7700, 0.0
    %vm7765 = vcmp.gt.f32.partialorder %v7701, 0.0
    %vm7766 = vcmp.gt.f32.partialorder %v7702, 0.0
    %vm7767 = vcmp.gt.f32.partialorder %v7703, 0.0
    %vm7768 = vcmp.gt.f32.partialorder %v7704, 0.0
    %vm7769 = vcmp.gt.f32.partialorder %v7705, 0.0
    %vm7770 = vcmp.gt.f32.partialorder %v7706, 0.0
    %vm7771 = vcmp.gt.f32.partialorder %v7707, 0.0
    %vm7772 = vcmp.gt.f32.partialorder %v7708, 0.0
    %vm7773 = vcmp.gt.f32.partialorder %v7709, 0.0
    %vm7774 = vcmp.gt.f32.partialorder %v7710, 0.0
    %vm7775 = vcmp.gt.f32.partialorder %v7711, 0.0
    %vm7776 = vcmp.gt.f32.partialorder %v7712, 0.0
    %vm7777 = vcmp.gt.f32.partialorder %v7713, 0.0
    %vm7778 = vcmp.gt.f32.partialorder %v7714, 0.0
    %vm7779 = vcmp.gt.f32.partialorder %v7715, 0.0
    %vm7780 = vcmp.gt.f32.partialorder %v7716, 0.0
    %vm7781 = vcmp.gt.f32.partialorder %v7717, 0.0
    %vm7782 = vcmp.gt.f32.partialorder %v7718, 0.0
    %vm7783 = vcmp.gt.f32.partialorder %v7719, 0.0
    %vm7784 = vcmp.gt.f32.partialorder %v7720, 0.0
    %vm7785 = vcmp.gt.f32.partialorder %v7721, 0.0
    %vm7786 = vcmp.gt.f32.partialorder %v7722, 0.0
    %vm7787 = vcmp.gt.f32.partialorder %v7723, 0.0
    %vm7788 = vcmp.gt.f32.partialorder %v7724, 0.0
    %vm7789 = vcmp.gt.f32.partialorder %v7725, 0.0
    %vm7790 = vcmp.gt.f32.partialorder %v7726, 0.0
    %vm7791 = vcmp.gt.f32.partialorder %v7727, 0.0
    %vm7792 = vcmp.gt.f32.partialorder %v7728, 0.0
    %vm7793 = vcmp.gt.f32.partialorder %v7729, 0.0
    %vm7794 = vcmp.gt.f32.partialorder %v7730, 0.0
    %vm7795 = vcmp.gt.f32.partialorder %v7731, 0.0
    %vm7796 = vcmp.gt.f32.partialorder %v7732, 0.0
    %vm7797 = vcmp.gt.f32.partialorder %v7733, 0.0
    %vm7798 = vcmp.gt.f32.partialorder %v7734, 0.0
    %vm7799 = vcmp.gt.f32.partialorder %v7735, 0.0
    %vm7800 = vcmp.gt.f32.partialorder %v7736, 0.0
    %vm7801 = vcmp.gt.f32.partialorder %v7737, 0.0
    %vm7802 = vcmp.gt.f32.partialorder %v7738, 0.0
    %vm7803 = vcmp.gt.f32.partialorder %v7739, 0.0
    %vm7804 = vcmp.gt.f32.partialorder %v7740, 0.0
    %vm7805 = vcmp.gt.f32.partialorder %v7741, 0.0
    %vm7806 = vcmp.gt.f32.partialorder %v7742, 0.0
    %vm7807 = vcmp.gt.f32.partialorder %v7743, 0.0
    %vm7808 = vcmp.gt.f32.partialorder %v7744, 0.0
    %vm7809 = vcmp.gt.f32.partialorder %v7745, 0.0
    %vm7810 = vcmp.gt.f32.partialorder %v7746, 0.0
    %vm7811 = vcmp.gt.f32.partialorder %v7747, 0.0
    %vm7812 = vcmp.gt.f32.partialorder %v7748, 0.0
    %vm7813 = vcmp.gt.f32.partialorder %v7749, 0.0
    %vm7814 = vcmp.gt.f32.partialorder %v7750, 0.0
    %v7815 = vmul.f32 %v7687, 0.20019531
    %v7816 = vmul.f32 %v7688, 0.20019531
    %v7817 = vmul.f32 %v7689, 0.20019531
    %v7818 = vmul.f32 %v7690, 0.20019531
    %v7819 = vmul.f32 %v7691, 0.20019531
    %v7820 = vmul.f32 %v7692, 0.20019531
    %v7821 = vmul.f32 %v7693, 0.20019531
    %v7822 = vmul.f32 %v7694, 0.20019531
    %v7823 = vmul.f32 %v7695, 0.20019531
    %v7824 = vmul.f32 %v7696, 0.20019531
    %v7825 = vmul.f32 %v7697, 0.20019531
    %v7826 = vmul.f32 %v7698, 0.20019531
    %v7827 = vmul.f32 %v7699, 0.20019531
    %v7828 = vmul.f32 %v7700, 0.20019531
    %v7829 = vmul.f32 %v7701, 0.20019531
    %v7830 = vmul.f32 %v7702, 0.20019531
    %v7831 = vmul.f32 %v7703, 0.20019531
    %v7832 = vmul.f32 %v7704, 0.20019531
    %v7833 = vmul.f32 %v7705, 0.20019531
    %v7834 = vmul.f32 %v7706, 0.20019531
    %v7835 = vmul.f32 %v7707, 0.20019531
    %v7836 = vmul.f32 %v7708, 0.20019531
    %v7837 = vmul.f32 %v7709, 0.20019531
    %v7838 = vmul.f32 %v7710, 0.20019531
    %v7839 = vmul.f32 %v7711, 0.20019531
    %v7840 = vmul.f32 %v7712, 0.20019531
    %v7841 = vmul.f32 %v7713, 0.20019531
    %v7842 = vmul.f32 %v7714, 0.20019531
    %v7843 = vmul.f32 %v7715, 0.20019531
    %v7844 = vmul.f32 %v7716, 0.20019531
    %v7845 = vmul.f32 %v7717, 0.20019531
    %v7846 = vmul.f32 %v7718, 0.20019531
    %v7847 = vmul.f32 %v7719, 0.20019531
    %v7848 = vmul.f32 %v7720, 0.20019531
    %v7849 = vmul.f32 %v7721, 0.20019531
    %v7850 = vmul.f32 %v7722, 0.20019531
    %v7851 = vmul.f32 %v7723, 0.20019531
    %v7852 = vmul.f32 %v7724, 0.20019531
    %v7853 = vmul.f32 %v7725, 0.20019531
    %v7854 = vmul.f32 %v7726, 0.20019531
    %v7855 = vmul.f32 %v7727, 0.20019531
    %v7856 = vmul.f32 %v7728, 0.20019531
    %v7857 = vmul.f32 %v7729, 0.20019531
    %v7858 = vmul.f32 %v7730, 0.20019531
    %v7859 = vmul.f32 %v7731, 0.20019531
    %v7860 = vmul.f32 %v7732, 0.20019531
    %v7861 = vmul.f32 %v7733, 0.20019531
    %v7862 = vmul.f32 %v7734, 0.20019531
    %v7863 = vmul.f32 %v7735, 0.20019531
    %v7864 = vmul.f32 %v7736, 0.20019531
    %v7865 = vmul.f32 %v7737, 0.20019531
    %v7866 = vmul.f32 %v7738, 0.20019531
    %v7867 = vmul.f32 %v7739, 0.20019531
    %v7868 = vmul.f32 %v7740, 0.20019531
    %v7869 = vmul.f32 %v7741, 0.20019531
    %v7870 = vmul.f32 %v7742, 0.20019531
    %v7871 = vmul.f32 %v7743, 0.20019531
    %v7872 = vmul.f32 %v7744, 0.20019531
    %v7873 = vmul.f32 %v7745, 0.20019531
    %v7874 = vmul.f32 %v7746, 0.20019531
    %v7875 = vmul.f32 %v7747, 0.20019531
    %v7876 = vmul.f32 %v7748, 0.20019531
    %v7877 = vmul.f32 %v7749, 0.20019531
    %v7878 = vmul.f32 %v7750, 0.20019531
    %v7879 = vpack.c.bf16 %v7816, %v7815
    %v7880 = vpack.c.bf16 %v7818, %v7817
    %v7881 = vpack.c.bf16 %v7820, %v7819
    %v7882 = vpack.c.bf16 %v7822, %v7821
    %v7883 = vpack.c.bf16 %v7824, %v7823
    %v7884 = vpack.c.bf16 %v7826, %v7825
    %v7885 = vpack.c.bf16 %v7828, %v7827
    %v7886 = vpack.c.bf16 %v7830, %v7829
    %v7887 = vpack.c.bf16 %v7832, %v7831
    %v7888 = vpack.c.bf16 %v7834, %v7833
    %v7889 = vpack.c.bf16 %v7836, %v7835
    %v7890 = vpack.c.bf16 %v7838, %v7837
    %v7891 = vpack.c.bf16 %v7840, %v7839
    %v7892 = vpack.c.bf16 %v7842, %v7841
    %v7893 = vpack.c.bf16 %v7844, %v7843
    %v7894 = vpack.c.bf16 %v7846, %v7845
    %v7895 = vpack.c.bf16 %v7848, %v7847
    %v7896 = vpack.c.bf16 %v7850, %v7849
    %v7897 = vpack.c.bf16 %v7852, %v7851
    %v7898 = vpack.c.bf16 %v7854, %v7853
    %v7899 = vpack.c.bf16 %v7856, %v7855
    %v7900 = vpack.c.bf16 %v7858, %v7857
    %v7901 = vpack.c.bf16 %v7860, %v7859
    %v7902 = vpack.c.bf16 %v7862, %v7861
    %v7903 = vpack.c.bf16 %v7864, %v7863
    %v7904 = vpack.c.bf16 %v7866, %v7865
    %v7905 = vpack.c.bf16 %v7868, %v7867
    %v7906 = vpack.c.bf16 %v7870, %v7869
    %v7907 = vpack.c.bf16 %v7872, %v7871
    %v7908 = vpack.c.bf16 %v7874, %v7873
    %v7909 = vpack.c.bf16 %v7876, %v7875
    %v7910 = vpack.c.bf16 %v7878, %v7877
    %vm7911 = vmpackc.low %vm7752, %vm7751
    %vm7912 = vmpackc.low %vm7754, %vm7753
    %vm7913 = vmpackc.low %vm7756, %vm7755
    %vm7914 = vmpackc.low %vm7758, %vm7757
    %vm7915 = vmpackc.low %vm7760, %vm7759
    %vm7916 = vmpackc.low %vm7762, %vm7761
    %vm7917 = vmpackc.low %vm7764, %vm7763
    %vm7918 = vmpackc.low %vm7766, %vm7765
    %vm7919 = vmpackc.low %vm7768, %vm7767
    %vm7920 = vmpackc.low %vm7770, %vm7769
    %vm7921 = vmpackc.low %vm7772, %vm7771
    %vm7922 = vmpackc.low %vm7774, %vm7773
    %vm7923 = vmpackc.low %vm7776, %vm7775
    %vm7924 = vmpackc.low %vm7778, %vm7777
    %vm7925 = vmpackc.low %vm7780, %vm7779
    %vm7926 = vmpackc.low %vm7782, %vm7781
    %vm7927 = vmpackc.low %vm7784, %vm7783
    %vm7928 = vmpackc.low %vm7786, %vm7785
    %vm7929 = vmpackc.low %vm7788, %vm7787
    %vm7930 = vmpackc.low %vm7790, %vm7789
    %vm7931 = vmpackc.low %vm7792, %vm7791
    %vm7932 = vmpackc.low %vm7794, %vm7793
    %vm7933 = vmpackc.low %vm7796, %vm7795
    %vm7934 = vmpackc.low %vm7798, %vm7797
    %vm7935 = vmpackc.low %vm7800, %vm7799
    %vm7936 = vmpackc.low %vm7802, %vm7801
    %vm7937 = vmpackc.low %vm7804, %vm7803
    %vm7938 = vmpackc.low %vm7806, %vm7805
    %vm7939 = vmpackc.low %vm7808, %vm7807
    %vm7940 = vmpackc.low %vm7810, %vm7809
    %vm7941 = vmpackc.low %vm7812, %vm7811
    %vm7942 = vmpackc.low %vm7814, %vm7813
    %v7943 = vsel %vm7911, %v7655, %v7879
    %v7944 = vsel %vm7912, %v7656, %v7880
    %v7945 = vsel %vm7913, %v7657, %v7881
    %v7946 = vsel %vm7914, %v7658, %v7882
    %v7947 = vsel %vm7915, %v7659, %v7883
    %v7948 = vsel %vm7916, %v7660, %v7884
    %v7949 = vsel %vm7917, %v7661, %v7885
    %v7950 = vsel %vm7918, %v7662, %v7886
    %v7951 = vsel %vm7919, %v7663, %v7887
    %v7952 = vsel %vm7920, %v7664, %v7888
    %v7953 = vsel %vm7921, %v7665, %v7889
    %v7954 = vsel %vm7922, %v7666, %v7890
    %v7955 = vsel %vm7923, %v7667, %v7891
    %v7956 = vsel %vm7924, %v7668, %v7892
    %v7957 = vsel %vm7925, %v7669, %v7893
    %v7958 = vsel %vm7926, %v7670, %v7894
    %v7959 = vsel %vm7927, %v7671, %v7895
    %v7960 = vsel %vm7928, %v7672, %v7896
    %v7961 = vsel %vm7929, %v7673, %v7897
    %v7962 = vsel %vm7930, %v7674, %v7898
    %v7963 = vsel %vm7931, %v7675, %v7899
    %v7964 = vsel %vm7932, %v7676, %v7900
    %v7965 = vsel %vm7933, %v7677, %v7901
    %v7966 = vsel %vm7934, %v7678, %v7902
    %v7967 = vsel %vm7935, %v7679, %v7903
    %v7968 = vsel %vm7936, %v7680, %v7904
    %v7969 = vsel %vm7937, %v7681, %v7905
    %v7970 = vsel %vm7938, %v7682, %v7906
    %v7971 = vsel %vm7939, %v7683, %v7907
    %v7972 = vsel %vm7940, %v7684, %v7908
    %v7973 = vsel %vm7941, %v7685, %v7909
    %v7974 = vsel %vm7942, %v7686, %v7910
    %v7975 = vld [vmem:[%s5] sm:$0x3]
    %7977 = vst [vmem:[#allocation1] ss:$9 sm:$0xff] %v7975
    %v7978 = vld [vmem:[#allocation1] sm:$0xff]
    %v7979 = vld [vmem:[#allocation1 + $0x9] sm:$0xff]
    %v7980 = vpack.i.b16 %v7978, %v7978
    %v7982 = vperm.slane %v7980, 0
    %v7983 = vpack.i.b16 %v7979, %v7979
    %v7985 = vperm.slane %v7983, 0
    %v7986 = vunpack.c.l.bf16 %v7943
    %v7987 = vunpack.c.h.bf16 %v7943
    %v7988 = vunpack.c.l.bf16 %v7944
    %v7989 = vunpack.c.h.bf16 %v7944
    %v7990 = vunpack.c.l.bf16 %v7945
    %v7991 = vunpack.c.h.bf16 %v7945
    %v7992 = vunpack.c.l.bf16 %v7946
    %v7993 = vunpack.c.h.bf16 %v7946
    %v7994 = vunpack.c.l.bf16 %v7947
    %v7995 = vunpack.c.h.bf16 %v7947
    %v7996 = vunpack.c.l.bf16 %v7948
    %v7997 = vunpack.c.h.bf16 %v7948
    %v7998 = vunpack.c.l.bf16 %v7949
    %v7999 = vunpack.c.h.bf16 %v7949
    %v8000 = vunpack.c.l.bf16 %v7950
    %v8001 = vunpack.c.h.bf16 %v7950
    %v8002 = vunpack.c.l.bf16 %v7951
    %v8003 = vunpack.c.h.bf16 %v7951
    %v8004 = vunpack.c.l.bf16 %v7952
    %v8005 = vunpack.c.h.bf16 %v7952
    %v8006 = vunpack.c.l.bf16 %v7953
    %v8007 = vunpack.c.h.bf16 %v7953
    %v8008 = vunpack.c.l.bf16 %v7954
    %v8009 = vunpack.c.h.bf16 %v7954
    %v8010 = vunpack.c.l.bf16 %v7955
    %v8011 = vunpack.c.h.bf16 %v7955
    %v8012 = vunpack.c.l.bf16 %v7956
    %v8013 = vunpack.c.h.bf16 %v7956
    %v8014 = vunpack.c.l.bf16 %v7957
    %v8015 = vunpack.c.h.bf16 %v7957
    %v8016 = vunpack.c.l.bf16 %v7958
    %v8017 = vunpack.c.h.bf16 %v7958
    %v8018 = vunpack.c.l.bf16 %v7959
    %v8019 = vunpack.c.h.bf16 %v7959
    %v8020 = vunpack.c.l.bf16 %v7960
    %v8021 = vunpack.c.h.bf16 %v7960
    %v8022 = vunpack.c.l.bf16 %v7961
    %v8023 = vunpack.c.h.bf16 %v7961
    %v8024 = vunpack.c.l.bf16 %v7962
    %v8025 = vunpack.c.h.bf16 %v7962
    %v8026 = vunpack.c.l.bf16 %v7963
    %v8027 = vunpack.c.h.bf16 %v7963
    %v8028 = vunpack.c.l.bf16 %v7964
    %v8029 = vunpack.c.h.bf16 %v7964
    %v8030 = vunpack.c.l.bf16 %v7965
    %v8031 = vunpack.c.h.bf16 %v7965
    %v8032 = vunpack.c.l.bf16 %v7966
    %v8033 = vunpack.c.h.bf16 %v7966
    %v8034 = vunpack.c.l.bf16 %v7967
    %v8035 = vunpack.c.h.bf16 %v7967
    %v8036 = vunpack.c.l.bf16 %v7968
    %v8037 = vunpack.c.h.bf16 %v7968
    %v8038 = vunpack.c.l.bf16 %v7969
    %v8039 = vunpack.c.h.bf16 %v7969
    %v8040 = vunpack.c.l.bf16 %v7970
    %v8041 = vunpack.c.h.bf16 %v7970
    %v8042 = vunpack.c.l.bf16 %v7971
    %v8043 = vunpack.c.h.bf16 %v7971
    %v8044 = vunpack.c.l.bf16 %v7972
    %v8045 = vunpack.c.h.bf16 %v7972
    %v8046 = vunpack.c.l.bf16 %v7973
    %v8047 = vunpack.c.h.bf16 %v7973
    %v8048 = vunpack.c.l.bf16 %v7974
    %v8049 = vunpack.c.h.bf16 %v7974
    %v8050 = vunpack.c.l.bf16 %v7982
    %v8051 = vunpack.c.l.bf16 %v7985
    %v8052 = vmul.f32 %v7986, %v8050
    %v8053 = vmul.f32 %v7987, %v8051
    %v8054 = vmul.f32 %v7988, %v8050
    %v8055 = vmul.f32 %v7989, %v8051
    %v8056 = vmul.f32 %v7990, %v8050
    %v8057 = vmul.f32 %v7991, %v8051
    %v8058 = vmul.f32 %v7992, %v8050
    %v8059 = vmul.f32 %v7993, %v8051
    %v8060 = vmul.f32 %v7994, %v8050
    %v8061 = vmul.f32 %v7995, %v8051
    %v8062 = vmul.f32 %v7996, %v8050
    %v8063 = vmul.f32 %v7997, %v8051
    %v8064 = vmul.f32 %v7998, %v8050
    %v8065 = vmul.f32 %v7999, %v8051
    %v8066 = vmul.f32 %v8000, %v8050
    %v8067 = vmul.f32 %v8001, %v8051
    %v8068 = vmul.f32 %v8002, %v8050
    %v8069 = vmul.f32 %v8003, %v8051
    %v8070 = vmul.f32 %v8004, %v8050
    %v8071 = vmul.f32 %v8005, %v8051
    %v8072 = vmul.f32 %v8006, %v8050
    %v8073 = vmul.f32 %v8007, %v8051
    %v8074 = vmul.f32 %v8008, %v8050
    %v8075 = vmul.f32 %v8009, %v8051
    %v8076 = vmul.f32 %v8010, %v8050
    %v8077 = vmul.f32 %v8011, %v8051
    %v8078 = vmul.f32 %v8012, %v8050
    %v8079 = vmul.f32 %v8013, %v8051
    %v8080 = vmul.f32 %v8014, %v8050
    %v8081 = vmul.f32 %v8015, %v8051
    %v8082 = vmul.f32 %v8016, %v8050
    %v8083 = vmul.f32 %v8017, %v8051
    %v8084 = vmul.f32 %v8018, %v8050
    %v8085 = vmul.f32 %v8019, %v8051
    %v8086 = vmul.f32 %v8020, %v8050
    %v8087 = vmul.f32 %v8021, %v8051
    %v8088 = vmul.f32 %v8022, %v8050
    %v8089 = vmul.f32 %v8023, %v8051
    %v8090 = vmul.f32 %v8024, %v8050
    %v8091 = vmul.f32 %v8025, %v8051
    %v8092 = vmul.f32 %v8026, %v8050
    %v8093 = vmul.f32 %v8027, %v8051
    %v8094 = vmul.f32 %v8028, %v8050
    %v8095 = vmul.f32 %v8029, %v8051
    %v8096 = vmul.f32 %v8030, %v8050
    %v8097 = vmul.f32 %v8031, %v8051
    %v8098 = vmul.f32 %v8032, %v8050
    %v8099 = vmul.f32 %v8033, %v8051
    %v8100 = vmul.f32 %v8034, %v8050
    %v8101 = vmul.f32 %v8035, %v8051
    %v8102 = vmul.f32 %v8036, %v8050
    %v8103 = vmul.f32 %v8037, %v8051
    %v8104 = vmul.f32 %v8038, %v8050
    %v8105 = vmul.f32 %v8039, %v8051
    %v8106 = vmul.f32 %v8040, %v8050
    %v8107 = vmul.f32 %v8041, %v8051
    %v8108 = vmul.f32 %v8042, %v8050
    %v8109 = vmul.f32 %v8043, %v8051
    %v8110 = vmul.f32 %v8044, %v8050
    %v8111 = vmul.f32 %v8045, %v8051
    %v8112 = vmul.f32 %v8046, %v8050
    %v8113 = vmul.f32 %v8047, %v8051
    %v8114 = vmul.f32 %v8048, %v8050
    %v8115 = vmul.f32 %v8049, %v8051
    %v8116 = vpack.c.bf16 %v8054, %v8052
    %v8117 = vpack.c.bf16 %v8055, %v8053
    %v8118 = vpack.c.bf16 %v8058, %v8056
    %v8119 = vpack.c.bf16 %v8059, %v8057
    %v8120 = vpack.c.bf16 %v8062, %v8060
    %v8121 = vpack.c.bf16 %v8063, %v8061
    %v8122 = vpack.c.bf16 %v8066, %v8064
    %v8123 = vpack.c.bf16 %v8067, %v8065
    %v8124 = vpack.c.bf16 %v8070, %v8068
    %v8125 = vpack.c.bf16 %v8071, %v8069
    %v8126 = vpack.c.bf16 %v8074, %v8072
    %v8127 = vpack.c.bf16 %v8075, %v8073
    %v8128 = vpack.c.bf16 %v8078, %v8076
    %v8129 = vpack.c.bf16 %v8079, %v8077
    %v8130 = vpack.c.bf16 %v8082, %v8080
    %v8131 = vpack.c.bf16 %v8083, %v8081
    %v8132 = vpack.c.bf16 %v8086, %v8084
    %v8133 = vpack.c.bf16 %v8087, %v8085
    %v8134 = vpack.c.bf16 %v8090, %v8088
    %v8135 = vpack.c.bf16 %v8091, %v8089
    %v8136 = vpack.c.bf16 %v8094, %v8092
    %v8137 = vpack.c.bf16 %v8095, %v8093
    %v8138 = vpack.c.bf16 %v8098, %v8096
    %v8139 = vpack.c.bf16 %v8099, %v8097
    %v8140 = vpack.c.bf16 %v8102, %v8100
    %v8141 = vpack.c.bf16 %v8103, %v8101
    %v8142 = vpack.c.bf16 %v8106, %v8104
    %v8143 = vpack.c.bf16 %v8107, %v8105
    %v8144 = vpack.c.bf16 %v8110, %v8108
    %v8145 = vpack.c.bf16 %v8111, %v8109
    %v8146 = vpack.c.bf16 %v8114, %v8112
    %v8147 = vpack.c.bf16 %v8115, %v8113
    %8148 = vxpose.binary.xlu0.c.b16.start [1/16] %v8117, %v8116, 128
    %8149 = vxpose.binary.xlu0.c.b16.cont [2/16] %v8119, %v8118, 128
    %8150 = vxpose.binary.xlu0.c.b16.cont [3/16] %v8121, %v8120, 128
    %8151 = vxpose.binary.xlu0.c.b16.cont [4/16] %v8123, %v8122, 128
    %8152 = vxpose.binary.xlu0.c.b16.cont [5/16] %v8125, %v8124, 128
    %8153 = vxpose.binary.xlu0.c.b16.cont [6/16] %v8127, %v8126, 128
    %8154 = vxpose.binary.xlu0.c.b16.cont [7/16] %v8129, %v8128, 128
    %8155 = vxpose.binary.xlu0.c.b16.end [8/16] %v8131, %v8130, 128
    %v8156 = vpop.trf.xlu0
    %v8157 = vpop.trf.xlu0
    %v8158 = vpop.trf.xlu0
    %v8159 = vpop.trf.xlu0
    %v8160 = vpop.trf.xlu0
    %v8161 = vpop.trf.xlu0
    %v8162 = vpop.trf.xlu0
    %v8163 = vpop.trf.xlu0
    %v8164 = vpop.trf.xlu0
    %v8165 = vpop.trf.xlu0
    %v8166 = vpop.trf.xlu0
    %v8167 = vpop.trf.xlu0
    %v8168 = vpop.trf.xlu0
    %v8169 = vpop.trf.xlu0
    %v8170 = vpop.trf.xlu0
    %v8171 = vpop.trf.xlu0
    %8172 = vxpose.binary.xlu0.c.b16.start [1/16] %v8133, %v8132, 128
    %8173 = vxpose.binary.xlu0.c.b16.cont [2/16] %v8135, %v8134, 128
    %8174 = vxpose.binary.xlu0.c.b16.cont [3/16] %v8137, %v8136, 128
    %8175 = vxpose.binary.xlu0.c.b16.cont [4/16] %v8139, %v8138, 128
    %8176 = vxpose.binary.xlu0.c.b16.cont [5/16] %v8141, %v8140, 128
    %8177 = vxpose.binary.xlu0.c.b16.cont [6/16] %v8143, %v8142, 128
    %8178 = vxpose.binary.xlu0.c.b16.cont [7/16] %v8145, %v8144, 128
    %8179 = vxpose.binary.xlu0.c.b16.end [8/16] %v8147, %v8146, 128
    %v8180 = vpop.trf.xlu0
    %v8181 = vpop.trf.xlu0
    %v8182 = vpop.trf.xlu0
    %v8183 = vpop.trf.xlu0
    %v8184 = vpop.trf.xlu0
    %v8185 = vpop.trf.xlu0
    %v8186 = vpop.trf.xlu0
    %v8187 = vpop.trf.xlu0
    %v8188 = vpop.trf.xlu0
    %v8189 = vpop.trf.xlu0
    %v8190 = vpop.trf.xlu0
    %v8191 = vpop.trf.xlu0
    %v8192 = vpop.trf.xlu0
    %v8193 = vpop.trf.xlu0
    %v8194 = vpop.trf.xlu0
    %v8195 = vpop.trf.xlu0
    %v8196 = vunpack.c.l.bf16 %v8156
    %v8197 = vunpack.c.l.bf16 %v8180
    %v8198 = vunpack.c.h.bf16 %v8156
    %v8199 = vunpack.c.h.bf16 %v8180
    %v8200 = vunpack.c.l.bf16 %v8158
    %v8201 = vunpack.c.l.bf16 %v8182
    %v8202 = vunpack.c.h.bf16 %v8158
    %v8203 = vunpack.c.h.bf16 %v8182
    %v8204 = vunpack.c.l.bf16 %v8160
    %v8205 = vunpack.c.l.bf16 %v8184
    %v8206 = vunpack.c.h.bf16 %v8160
    %v8207 = vunpack.c.h.bf16 %v8184
    %v8208 = vunpack.c.l.bf16 %v8162
    %v8209 = vunpack.c.l.bf16 %v8186
    %v8210 = vunpack.c.h.bf16 %v8162
    %v8211 = vunpack.c.h.bf16 %v8186
    %v8212 = vunpack.c.l.bf16 %v8164
    %v8213 = vunpack.c.l.bf16 %v8188
    %v8214 = vunpack.c.h.bf16 %v8164
    %v8215 = vunpack.c.h.bf16 %v8188
    %v8216 = vunpack.c.l.bf16 %v8166
    %v8217 = vunpack.c.l.bf16 %v8190
    %v8218 = vunpack.c.h.bf16 %v8166
    %v8219 = vunpack.c.h.bf16 %v8190
    %v8220 = vunpack.c.l.bf16 %v8168
    %v8221 = vunpack.c.l.bf16 %v8192
    %v8222 = vunpack.c.h.bf16 %v8168
    %v8223 = vunpack.c.h.bf16 %v8192
    %v8224 = vunpack.c.l.bf16 %v8170
    %v8225 = vunpack.c.l.bf16 %v8194
    %v8226 = vunpack.c.h.bf16 %v8170
    %v8227 = vunpack.c.h.bf16 %v8194
    %v8228 = vunpack.c.l.bf16 %v8157
    %v8229 = vunpack.c.l.bf16 %v8181
    %v8230 = vunpack.c.h.bf16 %v8157
    %v8231 = vunpack.c.h.bf16 %v8181
    %v8232 = vunpack.c.l.bf16 %v8159
    %v8233 = vunpack.c.l.bf16 %v8183
    %v8234 = vunpack.c.h.bf16 %v8159
    %v8235 = vunpack.c.h.bf16 %v8183
    %v8236 = vunpack.c.l.bf16 %v8161
    %v8237 = vunpack.c.l.bf16 %v8185
    %v8238 = vunpack.c.h.bf16 %v8161
    %v8239 = vunpack.c.h.bf16 %v8185
    %v8240 = vunpack.c.l.bf16 %v8163
    %v8241 = vunpack.c.l.bf16 %v8187
    %v8242 = vunpack.c.h.bf16 %v8163
    %v8243 = vunpack.c.h.bf16 %v8187
    %v8244 = vunpack.c.l.bf16 %v8165
    %v8245 = vunpack.c.l.bf16 %v8189
    %v8246 = vunpack.c.h.bf16 %v8165
    %v8247 = vunpack.c.h.bf16 %v8189
    %v8248 = vunpack.c.l.bf16 %v8167
    %v8249 = vunpack.c.l.bf16 %v8191
    %v8250 = vunpack.c.h.bf16 %v8167
    %v8251 = vunpack.c.h.bf16 %v8191
    %v8252 = vunpack.c.l.bf16 %v8169
    %v8253 = vunpack.c.l.bf16 %v8193
    %v8254 = vunpack.c.h.bf16 %v8169
    %v8255 = vunpack.c.h.bf16 %v8193
    %v8256 = vunpack.c.l.bf16 %v8171
    %v8257 = vunpack.c.l.bf16 %v8195
    %v8258 = vunpack.c.h.bf16 %v8171
    %v8259 = vunpack.c.h.bf16 %v8195
    %v8260 = vadd.f32 %v8196, %v8198
    %v8261 = vadd.f32 %v8260, %v8200
    %v8262 = vadd.f32 %v8261, %v8202
    %v8263 = vadd.f32 %v8262, %v8204
    %v8264 = vadd.f32 %v8263, %v8206
    %v8265 = vadd.f32 %v8264, %v8208
    %v8266 = vadd.f32 %v8265, %v8210
    %v8267 = vadd.f32 %v8266, %v8212
    %v8268 = vadd.f32 %v8267, %v8214
    %v8269 = vadd.f32 %v8268, %v8216
    %v8270 = vadd.f32 %v8269, %v8218
    %v8271 = vadd.f32 %v8270, %v8220
    %v8272 = vadd.f32 %v8271, %v8222
    %v8273 = vadd.f32 %v8272, %v8224
    %v8274 = vadd.f32 %v8273, %v8226
    %v8275 = vadd.f32 %v8274, %v8228
    %v8276 = vadd.f32 %v8275, %v8230
    %v8277 = vadd.f32 %v8276, %v8232
    %v8278 = vadd.f32 %v8277, %v8234
    %v8279 = vadd.f32 %v8278, %v8236
    %v8280 = vadd.f32 %v8279, %v8238
    %v8281 = vadd.f32 %v8280, %v8240
    %v8282 = vadd.f32 %v8281, %v8242
    %v8283 = vadd.f32 %v8282, %v8244
    %v8284 = vadd.f32 %v8283, %v8246
    %v8285 = vadd.f32 %v8284, %v8248
    %v8286 = vadd.f32 %v8285, %v8250
    %v8287 = vadd.f32 %v8286, %v8252
    %v8288 = vadd.f32 %v8287, %v8254
    %v8289 = vadd.f32 %v8288, %v8256
    %v8290 = vadd.f32 %v8289, %v8258
    %v8291 = vrot.slane %v8290, 4
    %v8292 = vadd.f32 %v8290, %v8291
    %v8293 = vrot.slane %v8292, 2
    %v8294 = vadd.f32 %v8292, %v8293
    %v8295 = vrot.slane %v8294, 1
    %v8296 = vadd.f32 %v8294, %v8295
    %v8297 = vadd.f32 %v8197, %v8199
    %v8298 = vadd.f32 %v8297, %v8201
    %v8299 = vadd.f32 %v8298, %v8203
    %v8300 = vadd.f32 %v8299, %v8205
    %v8301 = vadd.f32 %v8300, %v8207
    %v8302 = vadd.f32 %v8301, %v8209
    %v8303 = vadd.f32 %v8302, %v8211
    %v8304 = vadd.f32 %v8303, %v8213
    %v8305 = vadd.f32 %v8304, %v8215
    %v8306 = vadd.f32 %v8305, %v8217
    %v8307 = vadd.f32 %v8306, %v8219
    %v8308 = vadd.f32 %v8307, %v8221
    %v8309 = vadd.f32 %v8308, %v8223
    %v8310 = vadd.f32 %v8309, %v8225
    %v8311 = vadd.f32 %v8310, %v8227
    %v8312 = vadd.f32 %v8311, %v8229
    %v8313 = vadd.f32 %v8312, %v8231
    %v8314 = vadd.f32 %v8313, %v8233
    %v8315 = vadd.f32 %v8314, %v8235
    %v8316 = vadd.f32 %v8315, %v8237
    %v8317 = vadd.f32 %v8316, %v8239
    %v8318 = vadd.f32 %v8317, %v8241
    %v8319 = vadd.f32 %v8318, %v8243
    %v8320 = vadd.f32 %v8319, %v8245
    %v8321 = vadd.f32 %v8320, %v8247
    %v8322 = vadd.f32 %v8321, %v8249
    %v8323 = vadd.f32 %v8322, %v8251
    %v8324 = vadd.f32 %v8323, %v8253
    %v8325 = vadd.f32 %v8324, %v8255
    %v8326 = vadd.f32 %v8325, %v8257
    %v8327 = vadd.f32 %v8326, %v8259
    %v8328 = vrot.slane %v8327, 4
    %v8329 = vadd.f32 %v8327, %v8328
    %v8330 = vrot.slane %v8329, 2
    %v8331 = vadd.f32 %v8329, %v8330
    %v8332 = vrot.slane %v8331, 1
    %v8333 = vadd.f32 %v8331, %v8332
    %s8334 = sld [smem:[#allocation3]]
    %v8335 = vstv %s8334
    %v8336 = vadd.f32 %v8296, %v8335
    %v8337 = vadd.f32 %v8333, %v8335
    %v8338 = vxor.u32 %v8336, 2147483648
    %v8339 = vxor.u32 %v8337, 2147483648
    %v8340 = vmul.f32 %v8338, 1.442695
    %v8341 = vpow.pop %v8340
    %v8342 = vmul.f32 %v8339, 1.442695
    %v8343 = vpow.pop %v8342
    %v8344 = vadd.f32 %v8341, 1.0
    %v8345 = vadd.f32 %v8343, 1.0
    %v8346 = vrcp.pop %v8344
    %v8347 = vmul.f32 %v8344, %v8346
    %v8348 = vsub.f32 1.0, %v8347
    %v8349 = vmul.f32 %v8346, %v8348
    %v8350 = vadd.f32 %v8346, %v8349
    %vm8351 = vweird.f32 %v8344
    %vm8352 = vweird.f32 %v8346
    %vm8353 = vmor %vm8351, %vm8352
    %v8354 = vsel %vm8353, %v8346, %v8350
    %v8355 = vand.u32 2147483647, %v8344
    %vm8356 = vcmp.eq.f32.partialorder %v8355, 8.507059e+37
    %v8357 = vand.u32 %v8344, 2147483648
    %v8358 = vor.u32 1.1754944e-38, %v8357
    %v8359 = vsel %vm8356, %v8358, %v8354
    %v8360 = vmul.f32 1.0, %v8359
    %v8361 = vrcp.pop %v8345
    %v8362 = vmul.f32 %v8345, %v8361
    %v8363 = vsub.f32 1.0, %v8362
    %v8364 = vmul.f32 %v8361, %v8363
    %v8365 = vadd.f32 %v8361, %v8364
    %vm8366 = vweird.f32 %v8345
    %vm8367 = vweird.f32 %v8361
    %vm8368 = vmor %vm8366, %vm8367
    %v8369 = vsel %vm8368, %v8361, %v8365
    %v8370 = vand.u32 2147483647, %v8345
    %vm8371 = vcmp.eq.f32.partialorder %v8370, 8.507059e+37
    %v8372 = vand.u32 %v8345, 2147483648
    %v8373 = vor.u32 1.1754944e-38, %v8372
    %v8374 = vsel %vm8371, %v8373, %v8369
    %v8375 = vmul.f32 1.0, %v8374
    %v8378 = vrot.slane %v8375, 7
    %vm8379 = vcmask 1040384
    %v8380 = vsel %vm8379, %v8360, %v8378
    %v8382 = vlaneseq
    %vm8383 = vcmp.ge.s32.totalorder %v8382, 0
    %vm8384 = vcmp.lt.s32.totalorder %v8382, 256
    %vm8385 = vmand %vm8383, %vm8384
    %8386 = vst.msk [vmem:[#allocation4] sm:$0x3] %vm8385, %v8380
    // Predicated region
    $region30: #{tpu_custom_call.1} parent=1 // pred_check
      _
    $region31: #{tpu_custom_call.1} parent=1 // pred_check_branch
      %8388 = sbr.rel (0) target = $region33
    $region32: #{tpu_custom_call.1} parent=1 // pred_region
      %8390 = vsyncadd [#allocation5], 0
      %s8392 = sshll.u32 [#allocation4], 4
      %s8393 = int_to_ptr.vmem [resolvable:$true] %s8392
      %s8394 = sshll.u32 %s7, 4
      %s8395 = int_to_ptr.hbm [resolvable:$true] %s8394
      %8397 = dma.vmem_to_hbm [thread:$0]  %s8393, 32, %s8395, [#allocation5]
    $region33: #{tpu_custom_call.1} parent=1 // pred_fallthru
      _
    // Predicated region
    $region34: #{tpu_custom_call.1} parent=1 // pred_check
      _
    $region35: #{tpu_custom_call.1} parent=1 // pred_check_branch
      %8399 = sbr.rel (0) target = $region37
    $region36: #{tpu_custom_call.1} parent=1 // pred_region
      %8401 = dma.done [#allocation5], 32
    $region37: #{tpu_custom_call.1} parent=1 // pred_fallthru
      _
    %8402 = vsyncpa [#allocation5], 1

</llo_original>
